<compile_context>
chip_gen: v7x
topology: tpu7x:2x2x1
jax: 0.10.0
libtpu: 0.0.40
codegen_flags: <defaults>
</compile_context>

<pallas_src>
import functools

import jax
import jax.numpy as jnp
from jax.experimental import pallas as pl
from jax.experimental.pallas import tpu as pltpu


# -----------------------------------------------------------------------------
# Helpers
# -----------------------------------------------------------------------------
def _round_up(x, m):
    return ((x + m - 1) // m) * m


def _epilogue(r, act):
    if act == "lrelu":
        return jnp.where(r >= 0, r, 0.2 * r)
    if act == "sigmoid":
        return 1.0 / (1.0 + jnp.exp(-r))
    return r


def _pick_tm(M):
    Mp = _round_up(M, 16)                      # bf16 sublane packing
    for t in (256, 128, 64, 32, 16):
        if Mp % t == 0:
            return t, Mp
    return 16, Mp


def _pick_tn(Np):
    for t in (512, 256, 128):
        if Np % t == 0:
            return t
    return 128


def _pick_tk(Kp):
    if Kp <= 2048:
        return Kp
    for t in (2048, 1024, 512, 256, 128):
        if Kp % t == 0:
            return t
    return 128


# -----------------------------------------------------------------------------
# Pallas kernels: fused matmul + bias + activation (bf16 in, f32 accumulation)
# -----------------------------------------------------------------------------
def _mm_kernel_nored(x_ref, w_ref, b_ref, o_ref, *, act):
    # Single K block: no accumulator scratch, no zero-init, direct store.
    r = jnp.dot(x_ref[...], w_ref[...], preferred_element_type=jnp.float32)
    o_ref[...] = _epilogue(r + b_ref[...], act).astype(o_ref.dtype)


def _mm_kernel_reduce(x_ref, w_ref, b_ref, o_ref, acc_ref, *, act):
    k = pl.program_id(2)

    @pl.when(k == 0)
    def _():
        acc_ref[...] = jnp.zeros_like(acc_ref)

    acc_ref[...] += jnp.dot(x_ref[...], w_ref[...],
                            preferred_element_type=jnp.float32)

    @pl.when(k == pl.num_programs(2) - 1)
    def _():
        o_ref[...] = _epilogue(acc_ref[...] + b_ref[...], act).astype(o_ref.dtype)


def matmul_bias_act(x, w_p, b_p, *, act=None):
    """act(x @ w_p + b_p) -> (M, Np) f32.

    x:   (M, K)  float (cast to bf16 internally)
    w_p: (Kp, Np) bf16, pre-packed/padded (Kp, Np multiples of 128)
    b_p: (1, Np)  f32, pre-packed/padded
    Padded output columns are garbage-free (zeros through lrelu) and are sliced
    by the caller.
    """
    M, K = x.shape
    Kp, Np = w_p.shape
    assert Kp >= K and Kp % 128 == 0 and Np % 128 == 0

    tm, Mp = _pick_tm(M)
    tn = _pick_tn(Np)
    tk = _pick_tk(Kp)
    nk = Kp // tk

    # Keep >= 2 parallel grid tiles when possible (v7x has 2 TensorCores).
    if Mp // tm == 1 and Np // tn == 1 and tm >= 32:
        tm //= 2

    xp = x
    if Mp != M or Kp != K:
        xp = jnp.pad(x, ((0, Mp - M), (0, Kp - K)))
    xp = xp.astype(jnp.bfloat16)

    cost = pl.CostEstimate(
        flops=2 * Mp * Kp * Np,
        transcendentals=Mp * Np if act == "sigmoid" else 0,
        bytes_accessed=Mp * Kp * 2 + Kp * Np * 2 + Np * 4 + Mp * Np * 4)

    if nk == 1:
        out = pl.pallas_call(
            functools.partial(_mm_kernel_nored, act=act),
            out_shape=jax.ShapeDtypeStruct((Mp, Np), jnp.float32),
            grid_spec=pltpu.PrefetchScalarGridSpec(
                num_scalar_prefetch=0,
                grid=(Mp // tm, Np // tn),
                in_specs=[
                    pl.BlockSpec((tm, Kp), lambda i, j: (i, 0)),
                    pl.BlockSpec((Kp, tn), lambda i, j: (0, j)),
                    pl.BlockSpec((1, tn), lambda i, j: (0, j)),
                ],
                out_specs=pl.BlockSpec((tm, tn), lambda i, j: (i, j)),
            ),
            compiler_params=pltpu.CompilerParams(
                dimension_semantics=("parallel", "parallel")),
            cost_estimate=cost,
        )(xp, w_p, b_p)
    else:
        out = pl.pallas_call(
            functools.partial(_mm_kernel_reduce, act=act),
            out_shape=jax.ShapeDtypeStruct((Mp, Np), jnp.float32),
            grid_spec=pltpu.PrefetchScalarGridSpec(
                num_scalar_prefetch=0,
                grid=(Mp // tm, Np // tn, nk),
                in_specs=[
                    pl.BlockSpec((tm, tk), lambda i, j, k: (i, k)),
                    pl.BlockSpec((tk, tn), lambda i, j, k: (k, j)),
                    pl.BlockSpec((1, tn), lambda i, j, k: (0, j)),
                ],
                out_specs=pl.BlockSpec((tm, tn), lambda i, j, k: (i, j)),
                scratch_shapes=[pltpu.VMEM((tm, tn), jnp.float32)],
            ),
            compiler_params=pltpu.CompilerParams(
                dimension_semantics=("parallel", "parallel", "arbitrary")),
            cost_estimate=cost,
        )(xp, w_p, b_p)

    return out[:M]          # drop M padding; caller slices columns


# -----------------------------------------------------------------------------
# ConvTranspose2d  ==  zero-dilate + edge-pad + stride-1 conv (flipped kernel)
# -----------------------------------------------------------------------------
def _im2col(x, kh, kw):
    """Stride-1 patches; column order ((a*kw + b)*C + c)."""
    n, h, w, c = x.shape
    ho, wo = h - kh + 1, w - kw + 1
    cols = [x[:, a:a + ho, b:b + wo, :] for a in range(kh) for b in range(kw)]
    patches = jnp.concatenate(cols, axis=-1)
    return patches.reshape(n * ho * wo, kh * kw * c), ho, wo


def tconv_act(x, w_p, b_p, *, kh, kw, sh, sw, ph, pw, c_out, act):
    """Transposed conv on NHWC input using the packed im2col weight matrix."""
    n = x.shape[0]
    x = x.astype(jnp.bfloat16)                      # halve im2col/DMA bytes
    # lax.pad does zero-dilation (interior) + edge padding in one fused op.
    y = jax.lax.pad(
        x, jnp.zeros((), x.dtype),
        [(0, 0, 0),
         (kh - 1 - ph, kh - 1 - ph, sh - 1),
         (kw - 1 - pw, kw - 1 - pw, sw - 1),
         (0, 0, 0)])
    patches, ho, wo = _im2col(y, kh, kw)
    out = matmul_bias_act(patches, w_p, b_p, act=act)
    return out[:, :c_out].reshape(n, ho, wo, c_out)


# -----------------------------------------------------------------------------
# Weight pre-packing (done once, outside the jitted forward)
# -----------------------------------------------------------------------------
def _pack_matmul(wmat, bvec):
    K, N = wmat.shape
    Kp, Np = _round_up(K, 128), _round_up(N, 128)
    wm = jnp.pad(wmat, ((0, Kp - K), (0, Np - N))).astype(jnp.bfloat16)
    bv = jnp.pad(bvec, (0, Np - N)).reshape(1, Np).astype(jnp.float32)
    return wm, bv


def pack_weights(raw):
    w = {}

    # fc_z: ConvTranspose2d(k=4, s=1, p=0) on a 1x1 input == dense matmul
    #   out[n, i, j, co] = sum_ci z[n, ci] * W[ci, co, i, j] + b[co]
    ci, co, kh, kw = raw["fc_z_w"].shape
    wmat = jnp.transpose(raw["fc_z_w"], (0, 2, 3, 1)).reshape(ci, kh * kw * co)
    bvec = jnp.tile(raw["fc_z_b"], kh * kw)
    w["fcz_wm"], w["fcz_bv"] = _pack_matmul(wmat, bvec)

    # Deconv layers: regular conv with spatially-flipped, channel-swapped kernel.
    #   W_conv[co, ci, a, b] = W_t[ci, co, kh-1-a, kw-1-b]
    #   im2col row index: ((a*kw + b)*C_in + ci)
    def pack_tconv(name, wkey, bkey):
        wt = raw[wkey]                              # (C_in, C_out, kH, kW)
        ci_, co_, kh_, kw_ = wt.shape
        wflip = wt[:, :, ::-1, ::-1]
        wmat_ = jnp.transpose(wflip, (2, 3, 0, 1)).reshape(kh_ * kw_ * ci_, co_)
        w[name + "_wm"], w[name + "_bv"] = _pack_matmul(wmat_, raw[bkey])

    pack_tconv("d1", "deconv1_w", "deconv1_b")
    pack_tconv("d2", "deconv2_w", "deconv2_b")
    pack_tconv("d3", "deconv3_w", "deconv3_b")
    pack_tconv("d4", "deconv4_w", "deconv4_b")
    return w


# -----------------------------------------------------------------------------
# Generator forward (jitted)
# -----------------------------------------------------------------------------
def make_generator_forward(data_size, classes_size):
    c4, c2, c1 = data_size * 4, data_size * 2, data_size

    def forward(w, z, meta):
        del meta  # NOTE: PyTorch module computes fc_meta but discards it (fc = fc_z).
        n = z.shape[0]
        # fc_z + leaky ReLU
        zf = z.reshape(n, -1)
        x = matmul_bias_act(zf, w["fcz_wm"], w["fcz_bv"], act="lrelu")
        x = x[:, :16 * c4].reshape(n, 4, 4, c4)                       # NHWC
        # deconv stack
        x = tconv_act(x, w["d1_wm"], w["d1_bv"], kh=4, kw=4, sh=2, sw=2,
                      ph=1, pw=1, c_out=c4, act="lrelu")              # (n, 8, 8, c4)
        x = tconv_act(x, w["d2_wm"], w["d2_bv"], kh=4, kw=4, sh=2, sw=2,
                      ph=1, pw=1, c_out=c2, act="lrelu")              # (n,16,16, c2)
        x = tconv_act(x, w["d3_wm"], w["d3_bv"], kh=4, kw=1, sh=2, sw=1,
                      ph=1, pw=0, c_out=c1, act="lrelu")              # (n,32,16, c1)
        x = tconv_act(x, w["d4_wm"], w["d4_bv"], kh=4, kw=1, sh=2, sw=1,
                      ph=1, pw=0, c_out=classes_size, act="sigmoid")  # (n,64,16, cls)
        return jnp.transpose(x, (0, 3, 1, 2))                         # -> NCHW

    return jax.jit(forward)


# -----------------------------------------------------------------------------
# Pure-JAX reference (correctness check only)
# -----------------------------------------------------------------------------
def reference_forward(raw, z):
    def tconv_ref(x, wt, b, stride, pad):
        ci, co, kh, kw = wt.shape
        w_conv = jnp.transpose(wt[:, :, ::-1, ::-1], (1, 0, 2, 3))  # (co, ci, kh, kw)
        y = jax.lax.conv_general_dilated(
            x, w_conv, window_strides=(1, 1),
            padding=[(kh - 1 - pad[0], kh - 1 - pad[0]),
                     (kw - 1 - pad[1], kw - 1 - pad[1])],
            lhs_dilation=stride,
            dimension_numbers=("NCHW", "OIHW", "NCHW"))
        return y + b.reshape(1, -1, 1, 1)

    lrelu = lambda v: jnp.where(v >= 0, v, 0.2 * v)
    x = lrelu(tconv_ref(z, raw["fc_z_w"], raw["fc_z_b"], (1, 1), (0, 0)))
    # fc_meta branch is dead in the PyTorch module (fc = fc_z): skipped.
    x = lrelu(tconv_ref(x, raw["deconv1_w"], raw["deconv1_b"], (2, 2), (1, 1)))
    x = lrelu(tconv_ref(x, raw["deconv2_w"], raw["deconv2_b"], (2, 2), (1, 1)))
    x = lrelu(tconv_ref(x, raw["deconv3_w"], raw["deconv3_b"], (2, 1), (1, 0)))
    x = 1.0 / (1.0 + jnp.exp(-tconv_ref(x, raw["deconv4_w"], raw["deconv4_b"],
                                        (2, 1), (1, 0))))
    return x


# -----------------------------------------------------------------------------
# Deterministic parameter init + run
# -----------------------------------------------------------------------------
def init_raw_params(key, instances_size, classes_size, meta_length, z_length):
    ds = instances_size
    # PyTorch ConvTranspose2d weight layout: (C_in, C_out, kH, kW)
    shapes = {
        "fc_z_w": (z_length, ds * 4, 4, 4),     "fc_z_b": (ds * 4,),
        "fc_meta_w": (meta_length, ds * 4, 4, 4), "fc_meta_b": (ds * 4,),  # dead branch
        "deconv1_w": (ds * 4, ds * 4, 4, 4),    "deconv1_b": (ds * 4,),
        "deconv2_w": (ds * 4, ds * 2, 4, 4),    "deconv2_b": (ds * 2,),
        "deconv3_w": (ds * 2, ds, 4, 1),        "deconv3_b": (ds,),
        "deconv4_w": (ds, classes_size, 4, 1),  "deconv4_b": (classes_size,),
    }
    params = {}
    keys = jax.random.split(key, len(shapes))
    for (name, shape), k in zip(sorted(shapes.items()), keys):
        params[name] = 0.05 * jax.random.normal(k, shape, dtype=jnp.float32)
    return params


if __name__ == "__main__":
    features_size = 16      # output W is architecturally 16
    instances_size = 32     # data_size (channel multiplier); output H is 64
    classes_size = 3
    meta_length = 27
    z_length = 100
    batch = 2

    key = jax.random.PRNGKey(0)
    k_p, k_z, k_m = jax.random.split(key, 3)

    raw = init_raw_params(k_p, instances_size, classes_size, meta_length, z_length)
    z = jax.random.normal(k_z, (batch, z_length, 1, 1), dtype=jnp.float32)
    meta = jax.random.normal(k_m, (batch, meta_length, 1, 1), dtype=jnp.float32)

    weights = pack_weights(raw)                     # packed once, reused per call
    forward = make_generator_forward(instances_size, classes_size)

    out = jax.block_until_ready(forward(weights, z, meta))

    ref = reference_forward(raw, z)
    assert out.shape == (batch, classes_size, 64, 16), out.shape
    err = float(jnp.max(jnp.abs(out - ref)))
    # bf16 MXU inputs with f32 accumulation -> small numeric drift vs f32 ref.
    assert err < 2e-2, f"mismatch vs reference: max abs err {err}"

    print("KERNEL_OK")
</pallas_src>

<mosaic_0001>
module attributes {stable_mosaic.version = 11 : i64} {
  func.func @_mm_kernel_nored(%arg0: i32, %arg1: i32, %arg2: memref<16x128xbf16, #tpu.memory_space<vmem>>, %arg3: memref<128x512xbf16, #tpu.memory_space<vmem>>, %arg4: memref<1x512xf32, #tpu.memory_space<vmem>>, %arg5: memref<16x512xf32, #tpu.memory_space<vmem>>) attributes {dimension_semantics = [#tpu.dimension_semantics<parallel>, #tpu.dimension_semantics<parallel>], iteration_bounds = array<i64: 1, 4>, scalar_prefetch = 0 : i64, scratch_operands = 0 : i64, tpu.core_type = #tpu.core_type<tc>, window_params = [{transform_indices = @transform_0, window_bounds = array<i64: 16, 128>}, {transform_indices = @transform_1, window_bounds = array<i64: 128, 512>}, {transform_indices = @transform_2, window_bounds = array<i64: 1, 512>}, {transform_indices = @transform_3, window_bounds = array<i64: 16, 512>}]} {
    %c0 = arith.constant 0 : index
    %c0_0 = arith.constant 0 : index
    %0 = vector.load %arg2[%c0, %c0_0] : memref<16x128xbf16, #tpu.memory_space<vmem>>, vector<16x128xbf16>
    %c0_1 = arith.constant 0 : index
    %c0_2 = arith.constant 0 : index
    %1 = vector.load %arg3[%c0_1, %c0_2] : memref<128x512xbf16, #tpu.memory_space<vmem>>, vector<128x512xbf16>
    %cst = arith.constant dense<0.000000e+00> : vector<16x512xf32>
    %2 = tpu.matmul %0, %1, %cst {dimension_numbers = #tpu.dot_dimension_numbers<[1], [0], [0], [1], [0, 0, 1, 1], [], []>} : vector<16x128xbf16>, vector<128x512xbf16>, vector<16x512xf32> -> vector<16x512xf32>
    %c0_3 = arith.constant 0 : index
    %c0_4 = arith.constant 0 : index
    %3 = vector.load %arg4[%c0_3, %c0_4] : memref<1x512xf32, #tpu.memory_space<vmem>>, vector<1x512xf32>
    %4 = vector.broadcast %3 : vector<1x512xf32> to vector<16x512xf32>
    %5 = arith.addf %2, %4 : vector<16x512xf32>
    %cst_5 = arith.constant 0.000000e+00 : f32
    %6 = vector.broadcast %cst_5 : f32 to vector<16x512xf32>
    %7 = arith.cmpf oge, %5, %6 : vector<16x512xf32>
    %cst_6 = arith.constant 2.000000e-01 : f32
    %8 = vector.broadcast %cst_6 : f32 to vector<16x512xf32>
    %9 = arith.mulf %8, %5 : vector<16x512xf32>
    %10 = arith.select %7, %5, %9 : vector<16x512xi1>, vector<16x512xf32>
    %c0_7 = arith.constant 0 : index
    %c0_8 = arith.constant 0 : index
    %11 = vector.load %arg5[%c0_7, %c0_8] : memref<16x512xf32, #tpu.memory_space<vmem>>, vector<16x512xf32>
    tpu.vector_store %arg5[%c0_7, %c0_8], %10 {strides = array<i32>} : memref<16x512xf32, #tpu.memory_space<vmem>>, vector<16x512xf32>,
    return
  }
  func.func @transform_0(%arg0: i32, %arg1: i32) -> (i32, i32) {
    %c0_i32 = arith.constant 0 : i32
    %c0_i32_0 = arith.constant 0 : i32
    return %arg0, %c0_i32 : i32, i32
  }
  func.func @transform_1(%arg0: i32, %arg1: i32) -> (i32, i32) {
    %c0_i32 = arith.constant 0 : i32
    %c0_i32_0 = arith.constant 0 : i32
    return %c0_i32, %arg1 : i32, i32
  }
  func.func @transform_2(%arg0: i32, %arg1: i32) -> (i32, i32) {
    %c0_i32 = arith.constant 0 : i32
    %c0_i32_0 = arith.constant 0 : i32
    return %c0_i32, %arg1 : i32, i32
  }
  func.func @transform_3(%arg0: i32, %arg1: i32) -> (i32, i32) {
    %c0_i32 = arith.constant 0 : i32
    return %arg0, %arg1 : i32, i32
  }
}

module attributes {stable_mosaic.version = 11 : i64} {
  func.func @_mm_kernel_nored(%arg0: i32, %arg1: i32, %arg2: memref<64x2048xbf16, #tpu.memory_space<vmem>>, %arg3: memref<2048x128xbf16, #tpu.memory_space<vmem>>, %arg4: memref<1x128xf32, #tpu.memory_space<vmem>>, %arg5: memref<64x128xf32, #tpu.memory_space<vmem>>) attributes {dimension_semantics = [#tpu.dimension_semantics<parallel>, #tpu.dimension_semantics<parallel>], iteration_bounds = array<i64: 2, 1>, scalar_prefetch = 0 : i64, scratch_operands = 0 : i64, tpu.core_type = #tpu.core_type<tc>, window_params = [{transform_indices = @transform_0, window_bounds = array<i64: 64, 2048>}, {transform_indices = @transform_1, window_bounds = array<i64: 2048, 128>}, {transform_indices = @transform_2, window_bounds = array<i64: 1, 128>}, {transform_indices = @transform_3, window_bounds = array<i64: 64, 128>}]} {
    %c0 = arith.constant 0 : index
    %c0_0 = arith.constant 0 : index
    %0 = vector.load %arg2[%c0, %c0_0] : memref<64x2048xbf16, #tpu.memory_space<vmem>>, vector<64x2048xbf16>
    %c0_1 = arith.constant 0 : index
    %c0_2 = arith.constant 0 : index
    %1 = vector.load %arg3[%c0_1, %c0_2] : memref<2048x128xbf16, #tpu.memory_space<vmem>>, vector<2048x128xbf16>
    %cst = arith.constant dense<0.000000e+00> : vector<64x128xf32>
    %2 = tpu.matmul %0, %1, %cst {dimension_numbers = #tpu.dot_dimension_numbers<[1], [0], [0], [1], [0, 0, 1, 1], [], []>} : vector<64x2048xbf16>, vector<2048x128xbf16>, vector<64x128xf32> -> vector<64x128xf32>
    %c0_3 = arith.constant 0 : index
    %c0_4 = arith.constant 0 : index
    %3 = vector.load %arg4[%c0_3, %c0_4] : memref<1x128xf32, #tpu.memory_space<vmem>>, vector<1x128xf32>
    %4 = vector.broadcast %3 : vector<1x128xf32> to vector<64x128xf32>
    %5 = arith.addf %2, %4 : vector<64x128xf32>
    %cst_5 = arith.constant 0.000000e+00 : f32
    %6 = vector.broadcast %cst_5 : f32 to vector<64x128xf32>
    %7 = arith.cmpf oge, %5, %6 : vector<64x128xf32>
    %cst_6 = arith.constant 2.000000e-01 : f32
    %8 = vector.broadcast %cst_6 : f32 to vector<64x128xf32>
    %9 = arith.mulf %8, %5 : vector<64x128xf32>
    %10 = arith.select %7, %5, %9 : vector<64x128xi1>, vector<64x128xf32>
    %c0_7 = arith.constant 0 : index
    %c0_8 = arith.constant 0 : index
    %11 = vector.load %arg5[%c0_7, %c0_8] : memref<64x128xf32, #tpu.memory_space<vmem>>, vector<64x128xf32>
    tpu.vector_store %arg5[%c0_7, %c0_8], %10 {strides = array<i32>} : memref<64x128xf32, #tpu.memory_space<vmem>>, vector<64x128xf32>,
    return
  }
  func.func @transform_0(%arg0: i32, %arg1: i32) -> (i32, i32) {
    %c0_i32 = arith.constant 0 : i32
    %c0_i32_0 = arith.constant 0 : i32
    return %arg0, %c0_i32 : i32, i32
  }
  func.func @transform_1(%arg0: i32, %arg1: i32) -> (i32, i32) {
    %c0_i32 = arith.constant 0 : i32
    %c0_i32_0 = arith.constant 0 : i32
    return %c0_i32, %arg1 : i32, i32
  }
  func.func @transform_2(%arg0: i32, %arg1: i32) -> (i32, i32) {
    %c0_i32 = arith.constant 0 : i32
    %c0_i32_0 = arith.constant 0 : i32
    return %c0_i32, %arg1 : i32, i32
  }
  func.func @transform_3(%arg0: i32, %arg1: i32) -> (i32, i32) {
    %c0_i32 = arith.constant 0 : i32
    return %arg0, %arg1 : i32, i32
  }
}

module attributes {stable_mosaic.version = 11 : i64} {
  func.func @_mm_kernel_nored(%arg0: i32, %arg1: i32, %arg2: memref<256x2048xbf16, #tpu.memory_space<vmem>>, %arg3: memref<2048x128xbf16, #tpu.memory_space<vmem>>, %arg4: memref<1x128xf32, #tpu.memory_space<vmem>>, %arg5: memref<256x128xf32, #tpu.memory_space<vmem>>) attributes {dimension_semantics = [#tpu.dimension_semantics<parallel>, #tpu.dimension_semantics<parallel>], iteration_bounds = array<i64: 2, 1>, scalar_prefetch = 0 : i64, scratch_operands = 0 : i64, tpu.core_type = #tpu.core_type<tc>, window_params = [{transform_indices = @transform_0, window_bounds = array<i64: 256, 2048>}, {transform_indices = @transform_1, window_bounds = array<i64: 2048, 128>}, {transform_indices = @transform_2, window_bounds = array<i64: 1, 128>}, {transform_indices = @transform_3, window_bounds = array<i64: 256, 128>}]} {
    %c0 = arith.constant 0 : index
    %c0_0 = arith.constant 0 : index
    %0 = vector.load %arg2[%c0, %c0_0] : memref<256x2048xbf16, #tpu.memory_space<vmem>>, vector<256x2048xbf16>
    %c0_1 = arith.constant 0 : index
    %c0_2 = arith.constant 0 : index
    %1 = vector.load %arg3[%c0_1, %c0_2] : memref<2048x128xbf16, #tpu.memory_space<vmem>>, vector<2048x128xbf16>
    %cst = arith.constant dense<0.000000e+00> : vector<256x128xf32>
    %2 = tpu.matmul %0, %1, %cst {dimension_numbers = #tpu.dot_dimension_numbers<[1], [0], [0], [1], [0, 0, 1, 1], [], []>} : vector<256x2048xbf16>, vector<2048x128xbf16>, vector<256x128xf32> -> vector<256x128xf32>
    %c0_3 = arith.constant 0 : index
    %c0_4 = arith.constant 0 : index
    %3 = vector.load %arg4[%c0_3, %c0_4] : memref<1x128xf32, #tpu.memory_space<vmem>>, vector<1x128xf32>
    %4 = vector.broadcast %3 : vector<1x128xf32> to vector<256x128xf32>
    %5 = arith.addf %2, %4 : vector<256x128xf32>
    %cst_5 = arith.constant 0.000000e+00 : f32
    %6 = vector.broadcast %cst_5 : f32 to vector<256x128xf32>
    %7 = arith.cmpf oge, %5, %6 : vector<256x128xf32>
    %cst_6 = arith.constant 2.000000e-01 : f32
    %8 = vector.broadcast %cst_6 : f32 to vector<256x128xf32>
    %9 = arith.mulf %8, %5 : vector<256x128xf32>
    %10 = arith.select %7, %5, %9 : vector<256x128xi1>, vector<256x128xf32>
    %c0_7 = arith.constant 0 : index
    %c0_8 = arith.constant 0 : index
    %11 = vector.load %arg5[%c0_7, %c0_8] : memref<256x128xf32, #tpu.memory_space<vmem>>, vector<256x128xf32>
    tpu.vector_store %arg5[%c0_7, %c0_8], %10 {strides = array<i32>} : memref<256x128xf32, #tpu.memory_space<vmem>>, vector<256x128xf32>,
    return
  }
  func.func @transform_0(%arg0: i32, %arg1: i32) -> (i32, i32) {
    %c0_i32 = arith.constant 0 : i32
    %c0_i32_0 = arith.constant 0 : i32
    return %arg0, %c0_i32 : i32, i32
  }
  func.func @transform_1(%arg0: i32, %arg1: i32) -> (i32, i32) {
    %c0_i32 = arith.constant 0 : i32
    %c0_i32_0 = arith.constant 0 : i32
    return %c0_i32, %arg1 : i32, i32
  }
  func.func @transform_2(%arg0: i32, %arg1: i32) -> (i32, i32) {
    %c0_i32 = arith.constant 0 : i32
    %c0_i32_0 = arith.constant 0 : i32
    return %c0_i32, %arg1 : i32, i32
  }
  func.func @transform_3(%arg0: i32, %arg1: i32) -> (i32, i32) {
    %c0_i32 = arith.constant 0 : i32
    return %arg0, %arg1 : i32, i32
  }
}

module attributes {stable_mosaic.version = 11 : i64} {
  func.func @_mm_kernel_nored(%arg0: i32, %arg1: i32, %arg2: memref<256x256xbf16, #tpu.memory_space<vmem>>, %arg3: memref<256x128xbf16, #tpu.memory_space<vmem>>, %arg4: memref<1x128xf32, #tpu.memory_space<vmem>>, %arg5: memref<256x128xf32, #tpu.memory_space<vmem>>) attributes {dimension_semantics = [#tpu.dimension_semantics<parallel>, #tpu.dimension_semantics<parallel>], iteration_bounds = array<i64: 4, 1>, scalar_prefetch = 0 : i64, scratch_operands = 0 : i64, tpu.core_type = #tpu.core_type<tc>, window_params = [{transform_indices = @transform_0, window_bounds = array<i64: 256, 256>}, {transform_indices = @transform_1, window_bounds = array<i64: 256, 128>}, {transform_indices = @transform_2, window_bounds = array<i64: 1, 128>}, {transform_indices = @transform_3, window_bounds = array<i64: 256, 128>}]} {
    %c0 = arith.constant 0 : index
    %c0_0 = arith.constant 0 : index
    %0 = vector.load %arg2[%c0, %c0_0] : memref<256x256xbf16, #tpu.memory_space<vmem>>, vector<256x256xbf16>
    %c0_1 = arith.constant 0 : index
    %c0_2 = arith.constant 0 : index
    %1 = vector.load %arg3[%c0_1, %c0_2] : memref<256x128xbf16, #tpu.memory_space<vmem>>, vector<256x128xbf16>
    %cst = arith.constant dense<0.000000e+00> : vector<256x128xf32>
    %2 = tpu.matmul %0, %1, %cst {dimension_numbers = #tpu.dot_dimension_numbers<[1], [0], [0], [1], [0, 0, 1, 1], [], []>} : vector<256x256xbf16>, vector<256x128xbf16>, vector<256x128xf32> -> vector<256x128xf32>
    %c0_3 = arith.constant 0 : index
    %c0_4 = arith.constant 0 : index
    %3 = vector.load %arg4[%c0_3, %c0_4] : memref<1x128xf32, #tpu.memory_space<vmem>>, vector<1x128xf32>
    %4 = vector.broadcast %3 : vector<1x128xf32> to vector<256x128xf32>
    %5 = arith.addf %2, %4 : vector<256x128xf32>
    %cst_5 = arith.constant 0.000000e+00 : f32
    %6 = vector.broadcast %cst_5 : f32 to vector<256x128xf32>
    %7 = arith.cmpf oge, %5, %6 : vector<256x128xf32>
    %cst_6 = arith.constant 2.000000e-01 : f32
    %8 = vector.broadcast %cst_6 : f32 to vector<256x128xf32>
    %9 = arith.mulf %8, %5 : vector<256x128xf32>
    %10 = arith.select %7, %5, %9 : vector<256x128xi1>, vector<256x128xf32>
    %c0_7 = arith.constant 0 : index
    %c0_8 = arith.constant 0 : index
    %11 = vector.load %arg5[%c0_7, %c0_8] : memref<256x128xf32, #tpu.memory_space<vmem>>, vector<256x128xf32>
    tpu.vector_store %arg5[%c0_7, %c0_8], %10 {strides = array<i32>} : memref<256x128xf32, #tpu.memory_space<vmem>>, vector<256x128xf32>,
    return
  }
  func.func @transform_0(%arg0: i32, %arg1: i32) -> (i32, i32) {
    %c0_i32 = arith.constant 0 : i32
    %c0_i32_0 = arith.constant 0 : i32
    return %arg0, %c0_i32 : i32, i32
  }
  func.func @transform_1(%arg0: i32, %arg1: i32) -> (i32, i32) {
    %c0_i32 = arith.constant 0 : i32
    %c0_i32_0 = arith.constant 0 : i32
    return %c0_i32, %arg1 : i32, i32
  }
  func.func @transform_2(%arg0: i32, %arg1: i32) -> (i32, i32) {
    %c0_i32 = arith.constant 0 : i32
    %c0_i32_0 = arith.constant 0 : i32
    return %c0_i32, %arg1 : i32, i32
  }
  func.func @transform_3(%arg0: i32, %arg1: i32) -> (i32, i32) {
    %c0_i32 = arith.constant 0 : i32
    return %arg0, %arg1 : i32, i32
  }
}

module attributes {stable_mosaic.version = 11 : i64} {
  func.func @_mm_kernel_nored(%arg0: i32, %arg1: i32, %arg2: memref<256x128xbf16, #tpu.memory_space<vmem>>, %arg3: memref<128x128xbf16, #tpu.memory_space<vmem>>, %arg4: memref<1x128xf32, #tpu.memory_space<vmem>>, %arg5: memref<256x128xf32, #tpu.memory_space<vmem>>) attributes {dimension_semantics = [#tpu.dimension_semantics<parallel>, #tpu.dimension_semantics<parallel>], iteration_bounds = array<i64: 8, 1>, scalar_prefetch = 0 : i64, scratch_operands = 0 : i64, tpu.core_type = #tpu.core_type<tc>, window_params = [{transform_indices = @transform_0, window_bounds = array<i64: 256, 128>}, {transform_indices = @transform_1, window_bounds = array<i64: 128, 128>}, {transform_indices = @transform_2, window_bounds = array<i64: 1, 128>}, {transform_indices = @transform_3, window_bounds = array<i64: 256, 128>}]} {
    %c0 = arith.constant 0 : index
    %c0_0 = arith.constant 0 : index
    %0 = vector.load %arg2[%c0, %c0_0] : memref<256x128xbf16, #tpu.memory_space<vmem>>, vector<256x128xbf16>
    %c0_1 = arith.constant 0 : index
    %c0_2 = arith.constant 0 : index
    %1 = vector.load %arg3[%c0_1, %c0_2] : memref<128x128xbf16, #tpu.memory_space<vmem>>, vector<128x128xbf16>
    %cst = arith.constant dense<0.000000e+00> : vector<256x128xf32>
    %2 = tpu.matmul %0, %1, %cst {dimension_numbers = #tpu.dot_dimension_numbers<[1], [0], [0], [1], [0, 0, 1, 1], [], []>} : vector<256x128xbf16>, vector<128x128xbf16>, vector<256x128xf32> -> vector<256x128xf32>
    %c0_3 = arith.constant 0 : index
    %c0_4 = arith.constant 0 : index
    %3 = vector.load %arg4[%c0_3, %c0_4] : memref<1x128xf32, #tpu.memory_space<vmem>>, vector<1x128xf32>
    %4 = vector.broadcast %3 : vector<1x128xf32> to vector<256x128xf32>
    %5 = arith.addf %2, %4 : vector<256x128xf32>
    %cst_5 = arith.constant 0.000000e+00 : f32
    %6 = vector.broadcast %cst_5 : f32 to vector<256x128xf32>
    %7 = arith.subf %6, %5 : vector<256x128xf32>
    %8 = math.exp %7 : vector<256x128xf32>
    %cst_6 = arith.constant 1.000000e+00 : f32
    %9 = vector.broadcast %cst_6 : f32 to vector<256x128xf32>
    %10 = arith.addf %9, %8 : vector<256x128xf32>
    %cst_7 = arith.constant 1.000000e+00 : f32
    %11 = vector.broadcast %cst_7 : f32 to vector<256x128xf32>
    %12 = arith.divf %11, %10 : vector<256x128xf32>
    %c0_8 = arith.constant 0 : index
    %c0_9 = arith.constant 0 : index
    %13 = vector.load %arg5[%c0_8, %c0_9] : memref<256x128xf32, #tpu.memory_space<vmem>>, vector<256x128xf32>
    tpu.vector_store %arg5[%c0_8, %c0_9], %12 {strides = array<i32>} : memref<256x128xf32, #tpu.memory_space<vmem>>, vector<256x128xf32>,
    return
  }
  func.func @transform_0(%arg0: i32, %arg1: i32) -> (i32, i32) {
    %c0_i32 = arith.constant 0 : i32
    %c0_i32_0 = arith.constant 0 : i32
    return %arg0, %c0_i32 : i32, i32
  }
  func.func @transform_1(%arg0: i32, %arg1: i32) -> (i32, i32) {
    %c0_i32 = arith.constant 0 : i32
    %c0_i32_0 = arith.constant 0 : i32
    return %c0_i32, %arg1 : i32, i32
  }
  func.func @transform_2(%arg0: i32, %arg1: i32) -> (i32, i32) {
    %c0_i32 = arith.constant 0 : i32
    %c0_i32_0 = arith.constant 0 : i32
    return %c0_i32, %arg1 : i32, i32
  }
  func.func @transform_3(%arg0: i32, %arg1: i32) -> (i32, i32) {
    %c0_i32 = arith.constant 0 : i32
    return %arg0, %arg1 : i32, i32
  }
}

</mosaic_0001>

<llo_original>
// kernel: forward.5
$region0: #{forward.5}
  #allocation0 [shape = 'u32[]', space=smem, size = 0x4, offset = 0x4, fixed_abs, tag = 'smem constant byte address 0x4 - core index']
  #allocation1 [shape = 'u32[144,128]{1,0:T(1,128)}', space=vmem, size = 0x12000, scoped, tag = 'internal scratch']
  %s0 = inlined_call_operand.vmem [shape: bf16[16,128], index: 0, kind: input, shape index: {}]
  %s1 = inlined_call_operand.hbm [shape: bf16[128,2048], index: 1, kind: input, shape index: {}]
  %s2 = inlined_call_operand.hbm [shape: f32[1,2048], index: 2, kind: input, shape index: {}]
  %s3 = inlined_call_operand.vmem [shape: f32[16,2048], index: 3, kind: output, shape index: {}]
  %s4 = sld [smem:[#allocation0]]
  $region72: #{forward.5} parent=0
    _
  %s6 = ssub.s32 1, %s4
  %s7 = scalar_select 0, %s6, %s4
  $region1: #{forward.5} parent=0
    #allocation2 [shape = 'u8[262144]{0}', space=vmem, size = 0x40000, scoped, tag = 'input window, operand 1']
    #allocation3 [shape = 's32[2]{0}', space=sflag, size = 0x8, scoped, tag = 'scoped memory for forward.5']
    #allocation4 [shape = 'u8[4096]{0}', space=vmem, size = 0x1000, scoped, tag = 'input window, operand 2']
    #allocation5 [shape = 's32[2]{0}', space=sflag, size = 0x8, scoped, tag = 'scoped memory for forward.5']
    #allocation6 [shape = 'u8[65536]{0}', space=vmem, size = 0x10000, scoped, tag = 'output window, operand 0']
    %8 = vsyncpa [#allocation3], 0
    %s9 = scalar_lea.sflag [#allocation3], 1
    %10 = vsyncpa %s9, 0
    %11 = vsyncpa [#allocation5], 0
    %s12 = scalar_lea.sflag [#allocation5], 1
    %13 = vsyncpa %s12, 0
    loop: start=0, step=1, limit=6
    $region2: #{forward.5} parent=1 // loop_pre_header
      _
    $region3: #{forward.5} parent=1 // loop_header
      %s15 = sphi 0, %s19
      %p16 = scmp.ge.s32.totalorder %s15, 6
      %s22 = sphi 0, %s34
      %s23 = sphi 0, %s30
      %s24 = sphi 0, %s22
      %s25 = sphi 0, %s23
      %s26 = sphi 0, %s24
      %s27 = sphi 0, %s25
      %s37 = sphi 0, %s39
      %s40 = sphi 0, %s37
      %s41 = sphi 0, %s40
      %s57 = sphi 0, %s41
      %s63 = sphi 0, %s65
      %s66 = sphi 0, %s63
      %s67 = sphi 0, %s66
      %s83 = sphi 0, %s67
      %s89 = sphi 0, %s91
      %s92 = sphi 0, %s89
      %s93 = sphi 0, %s92
      %s109 = sphi 0, %s93
      %s117 = sphi 0, %s119
      %s120 = sphi 0, %s117
      %s121 = sphi 0, %s120
      %s137 = sphi 0, %s121
    $region4: #{forward.5} parent=1 // loop_header_branch
      %18 = sbr.rel (%p16) target = $region8
    $region5: #{forward.5} parent=1 // loop_body
      %s20 = ssub.s32 %s15, 1
      %s21 = ssub.s32 %s15, 2
      %s28 = sadd.s32 1, %s23
      %p29 = scmp.ge.s32.totalorder %s28, 4
      %s30 = scalar_select %p29, 0, %s28
      %s31 = sadd.s32 1, %s22
      %s32 = scalar_select %p29, %s31, %s22
      %p33 = scmp.ge.s32.totalorder %s32, 1
      %s34 = scalar_select %p33, 0, %s32
      %s35 = ssub.s32 %s22, %s34
      %p36 = scmp.eq.s32.totalorder %s35, 0
      %s38 = sadd.s32 %s37, 1
      %s39 = scalar_select %p36, %s37, %s38
      %p42 = pneg %p36
      %p43 = scmp.eq.s32.totalorder %s15, 3
      %p44 = por %p42, %p43
      %p45 = scmp.ne.s32.totalorder %s37, %s40
      %p46 = scmp.eq.s32.totalorder %s15, 0
      %p47 = por %p45, %p46
      %p48 = scmp.ne.s32.totalorder %s37, %s40
      %p49 = scmp.eq.s32.totalorder %s20, 3
      %p50 = por %p48, %p49
      %p51 = scmp.ne.s32.totalorder %s40, %s41
      %p52 = scmp.eq.s32.totalorder %s20, 0
      %p53 = por %p51, %p52
      %p54 = scmp.ne.s32.totalorder %s40, %s41
      %p55 = scmp.eq.s32.totalorder %s21, 3
      %p56 = por %p54, %p55
      %p58 = scmp.ne.s32.totalorder %s41, %s57
      %p59 = scmp.eq.s32.totalorder %s21, 0
      %p60 = por %p58, %p59
      %s61 = ssub.s32 %s23, %s30
      %p62 = scmp.eq.s32.totalorder %s61, 0
      %s64 = sadd.s32 %s63, 1
      %s65 = scalar_select %p62, %s63, %s64
      %p68 = pneg %p62
      %p69 = scmp.eq.s32.totalorder %s15, 3
      %p70 = por %p68, %p69
      %p71 = scmp.ne.s32.totalorder %s63, %s66
      %p72 = scmp.eq.s32.totalorder %s15, 0
      %p73 = por %p71, %p72
      %p74 = scmp.ne.s32.totalorder %s63, %s66
      %p75 = scmp.eq.s32.totalorder %s20, 3
      %p76 = por %p74, %p75
      %p77 = scmp.ne.s32.totalorder %s66, %s67
      %p78 = scmp.eq.s32.totalorder %s20, 0
      %p79 = por %p77, %p78
      %p80 = scmp.ne.s32.totalorder %s66, %s67
      %p81 = scmp.eq.s32.totalorder %s21, 3
      %p82 = por %p80, %p81
      %p84 = scmp.ne.s32.totalorder %s67, %s83
      %p85 = scmp.eq.s32.totalorder %s21, 0
      %p86 = por %p84, %p85
      %s87 = ssub.s32 %s23, %s30
      %p88 = scmp.eq.s32.totalorder %s87, 0
      %s90 = sadd.s32 %s89, 1
      %s91 = scalar_select %p88, %s89, %s90
      %p94 = pneg %p88
      %p95 = scmp.eq.s32.totalorder %s15, 3
      %p96 = por %p94, %p95
      %p97 = scmp.ne.s32.totalorder %s89, %s92
      %p98 = scmp.eq.s32.totalorder %s15, 0
      %p99 = por %p97, %p98
      %p100 = scmp.ne.s32.totalorder %s89, %s92
      %p101 = scmp.eq.s32.totalorder %s20, 3
      %p102 = por %p100, %p101
      %p103 = scmp.ne.s32.totalorder %s92, %s93
      %p104 = scmp.eq.s32.totalorder %s20, 0
      %p105 = por %p103, %p104
      %p106 = scmp.ne.s32.totalorder %s92, %s93
      %p107 = scmp.eq.s32.totalorder %s21, 3
      %p108 = por %p106, %p107
      %p110 = scmp.ne.s32.totalorder %s93, %s109
      %p111 = scmp.eq.s32.totalorder %s21, 0
      %p112 = por %p110, %p111
      %s113 = ssub.s32 %s22, %s34
      %s114 = ssub.s32 %s23, %s30
      %s115 = sor.u32 %s113, %s114
      %p116 = scmp.eq.s32.totalorder %s115, 0
      %s118 = sadd.s32 %s117, 1
      %s119 = scalar_select %p116, %s117, %s118
      %p122 = pneg %p116
      %p123 = scmp.eq.s32.totalorder %s15, 3
      %p124 = por %p122, %p123
      %p125 = scmp.ne.s32.totalorder %s117, %s120
      %p126 = scmp.eq.s32.totalorder %s15, 0
      %p127 = por %p125, %p126
      %p128 = scmp.ne.s32.totalorder %s117, %s120
      %p129 = scmp.eq.s32.totalorder %s20, 3
      %p130 = por %p128, %p129
      %p131 = scmp.ne.s32.totalorder %s120, %s121
      %p132 = scmp.eq.s32.totalorder %s20, 0
      %p133 = por %p131, %p132
      %p134 = scmp.ne.s32.totalorder %s120, %s121
      %p135 = scmp.eq.s32.totalorder %s21, 3
      %p136 = por %p134, %p135
      %p138 = scmp.ne.s32.totalorder %s121, %s137
      %p139 = scmp.eq.s32.totalorder %s21, 0
      %p140 = por %p138, %p139
      %p141 = scmp.le.s32.totalorder 1, %s15
      %p142 = scmp.lt.s32.totalorder %s15, 5
      %p143 = pnand %p141, %p142
      %p144 = pneg %p143
      // Predicated region
      $region9: #{forward.5} parent=5 // pred_check
        _
      $region10: #{forward.5} parent=5 // pred_check_branch
        %146 = sbr.rel (%p143) target = $region12
      $region11: #{forward.5} parent=5 // pred_region
        %s147 = ssub.s32 %s15, 1
        // Predicated region
        $region13: #{forward.5} parent=11 // pred_check
          %p148 = pneg %p53
        $region14: #{forward.5} parent=11 // pred_check_branch
          %150 = sbr.rel (%p148) target = $region16
        $region15: #{forward.5} parent=11 // pred_region
          %s151 = smul.u32 2, %s24
          %p152 = scmp.lt.s32.totalorder %s151, 1
          %s153 = scalar_select %p152, %s151, 1
          %s154 = smul.addr %s153, 4
          %s155 = scalar_lea.vmem %s0, %s154
          %s156 = smul.u32 2, %s24
        $region16: #{forward.5} parent=11 // pred_fallthru
          _
      $region12: #{forward.5} parent=5 // pred_fallthru
        _
      %p157 = scmp.lt.s32.totalorder %s15, 4
      // Predicated region
      $region17: #{forward.5} parent=5 // pred_check
        %p158 = pneg %p157
      $region18: #{forward.5} parent=5 // pred_check_branch
        %160 = sbr.rel (%p158) target = $region20
      $region19: #{forward.5} parent=5 // pred_region
        // Predicated region
        $region21: #{forward.5} parent=19 // pred_check
          %p161 = pneg %p73
        $region22: #{forward.5} parent=19 // pred_check_branch
          %163 = sbr.rel (%p161) target = $region24
        $region23: #{forward.5} parent=19 // pred_region
          %s164 = sand.u32 %s63, 1
          %s165 = scalar_lea.sflag [#allocation3], %s164
          %s166 = sand.u32 %s63, 1
          %s167 = smul.addr %s166, 256
          %s168 = scalar_lea.vmem [#allocation2], %s167
          %s169 = smul.u32 4, %s23
          %s171 = ssub.s32 4096, 4096
          %172 = vsyncadd %s165, %s171
          %s173 = smul.addr %s169, 64
          %s174 = scalar_lea.hbm %s1, %s173
          %s175 = sshll.u32 %s168, 4
          %s176 = int_to_ptr.vmem [resolvable:$true] %s175
          %181 = dma.hbm_to_vmem [thread:$0]  %s174, 4096, %s176, %s165, 1024, 256, 16
        $region24: #{forward.5} parent=19 // pred_fallthru
          _
        // Predicated region
        $region25: #{forward.5} parent=19 // pred_check
          %p182 = pneg %p99
        $region26: #{forward.5} parent=19 // pred_check_branch
          %184 = sbr.rel (%p182) target = $region28
        $region27: #{forward.5} parent=19 // pred_region
          %s185 = sand.u32 %s89, 1
          %s186 = scalar_lea.sflag [#allocation5], %s185
          %s187 = sand.u32 %s89, 1
          %s188 = smul.addr %s187, 4
          %s189 = scalar_lea.vmem [#allocation4], %s188
          %s190 = smul.u32 4, %s23
          %s192 = ssub.s32 64, 64
          %193 = vsyncadd %s186, %s192
          %s194 = smul.addr %s190, 16
          %s195 = scalar_lea.hbm %s2, %s194
          %s197 = sshll.u32 %s189, 4
          %s198 = int_to_ptr.vmem [resolvable:$true] %s197
          %200 = dma.hbm_to_vmem [thread:$0]  %s195, 64, %s198, %s186
        $region28: #{forward.5} parent=19 // pred_fallthru
          _
      $region20: #{forward.5} parent=5 // pred_fallthru
        _
      %p201 = scmp.le.s32.totalorder 1, %s15
      %p202 = scmp.lt.s32.totalorder %s15, 5
      %p203 = pnand %p201, %p202
      %p204 = pneg %p203
      // Predicated region
      $region29: #{forward.5} parent=5 // pred_check
        _
      $region30: #{forward.5} parent=5 // pred_check_branch
        %206 = sbr.rel (%p203) target = $region32
      $region31: #{forward.5} parent=5 // pred_region
        %s207 = ssub.s32 %s15, 1
        %s208 = sand.u32 %s66, 1
        %s209 = scalar_lea.sflag [#allocation3], %s208
        %s210 = sand.u32 %s66, 1
        %s211 = smul.addr %s210, 256
        %s212 = scalar_lea.vmem [#allocation2], %s211
        // Predicated region
        $region33: #{forward.5} parent=31 // pred_check
          %p213 = pneg %p79
        $region34: #{forward.5} parent=31 // pred_check_branch
          %215 = sbr.rel (%p213) target = $region36
        $region35: #{forward.5} parent=31 // pred_region
          %216 = dma.done %s209, 4096
        $region36: #{forward.5} parent=31 // pred_fallthru
          _
        %s217 = sand.u32 %s92, 1
        %s218 = scalar_lea.sflag [#allocation5], %s217
        %s219 = sand.u32 %s92, 1
        %s220 = smul.addr %s219, 4
        %s221 = scalar_lea.vmem [#allocation4], %s220
        // Predicated region
        $region37: #{forward.5} parent=31 // pred_check
          %p222 = pneg %p105
        $region38: #{forward.5} parent=31 // pred_check_branch
          %224 = sbr.rel (%p222) target = $region40
        $region39: #{forward.5} parent=31 // pred_region
          %225 = dma.done %s218, 64
        $region40: #{forward.5} parent=31 // pred_fallthru
          _
        %s226 = smul.u32 2, %s24
        %p227 = scmp.lt.s32.totalorder %s226, 1
        %s228 = scalar_select %p227, %s226, 1
        %s229 = smul.addr %s228, 4
        %s230 = scalar_lea.vmem %s0, %s229
        %p231 = pneg %p53
        %p232 = pneg %p50
        %s233 = sand.u32 %s66, 1
        %s234 = scalar_lea.sflag [#allocation3], %s233
        %s235 = sand.u32 %s66, 1
        %s236 = smul.addr %s235, 256
        %s237 = scalar_lea.vmem [#allocation2], %s236
        %p238 = pneg %p79
        %p239 = pneg %p76
        %s240 = sand.u32 %s92, 1
        %s241 = scalar_lea.sflag [#allocation5], %s240
        %s242 = sand.u32 %s92, 1
        %s243 = smul.addr %s242, 4
        %s244 = scalar_lea.vmem [#allocation4], %s243
        %p245 = pneg %p105
        %p246 = pneg %p102
        %p247 = pneg %p133
        %p248 = pneg %p130
        %s249 = sand.u32 %s120, 1
        %s250 = sand.u32 %s120, 1
        %s251 = smul.addr %s250, 64
        %s252 = scalar_lea.vmem [#allocation6], %s251
        %s253 = smul.u32 2, %s24
        %p254 = scmp.lt.s32.totalorder %s253, 1
        %s255 = scalar_select %p254, %s253, 1
        %s256 = smul.addr %s255, 4
        %s257 = scalar_lea.vmem %s0, %s256
        %s258 = smul.u32 2, %s24
        %s259 = smul.u32 4, %s25
        %s260 = smul.u32 4, %s25
        %s261 = smul.u32 2, %s24
        %s262 = smul.u32 4, %s25
        %v264 = vld [vmem:[%s257] sm:$0xf]
        %v265 = vld [vmem:[%s257 + $0x4] sm:$0xf]
        %v266 = vld [vmem:[%s212] sm:$0xff]
        %v267 = vld [vmem:[%s212 + $0x8] sm:$0xff]
        %v268 = vld [vmem:[%s212 + $0x10] sm:$0xff]
        %v269 = vld [vmem:[%s212 + $0x18] sm:$0xff]
        %v270 = vld [vmem:[%s212 + $0x20] sm:$0xff]
        %v271 = vld [vmem:[%s212 + $0x28] sm:$0xff]
        %v272 = vld [vmem:[%s212 + $0x30] sm:$0xff]
        %v273 = vld [vmem:[%s212 + $0x38] sm:$0xff]
        %v274 = vld [vmem:[%s212 + $0x40] sm:$0xff]
        %v275 = vld [vmem:[%s212 + $0x48] sm:$0xff]
        %v276 = vld [vmem:[%s212 + $0x50] sm:$0xff]
        %v277 = vld [vmem:[%s212 + $0x58] sm:$0xff]
        %v278 = vld [vmem:[%s212 + $0x60] sm:$0xff]
        %v279 = vld [vmem:[%s212 + $0x68] sm:$0xff]
        %v280 = vld [vmem:[%s212 + $0x70] sm:$0xff]
        %v281 = vld [vmem:[%s212 + $0x78] sm:$0xff]
        %v282 = vld [vmem:[%s212 + $0x80] sm:$0xff]
        %v283 = vld [vmem:[%s212 + $0x88] sm:$0xff]
        %v284 = vld [vmem:[%s212 + $0x90] sm:$0xff]
        %v285 = vld [vmem:[%s212 + $0x98] sm:$0xff]
        %v286 = vld [vmem:[%s212 + $0xa0] sm:$0xff]
        %v287 = vld [vmem:[%s212 + $0xa8] sm:$0xff]
        %v288 = vld [vmem:[%s212 + $0xb0] sm:$0xff]
        %v289 = vld [vmem:[%s212 + $0xb8] sm:$0xff]
        %v290 = vld [vmem:[%s212 + $0xc0] sm:$0xff]
        %v291 = vld [vmem:[%s212 + $0xc8] sm:$0xff]
        %v292 = vld [vmem:[%s212 + $0xd0] sm:$0xff]
        %v293 = vld [vmem:[%s212 + $0xd8] sm:$0xff]
        %v294 = vld [vmem:[%s212 + $0xe0] sm:$0xff]
        %v295 = vld [vmem:[%s212 + $0xe8] sm:$0xff]
        %v296 = vld [vmem:[%s212 + $0xf0] sm:$0xff]
        %v297 = vld [vmem:[%s212 + $0xf8] sm:$0xff]
        %v298 = vld [vmem:[%s221] sm:$0xf]
        %v300 = vlaneseq
        %v301 = vshrl.u32 %v300, 7
        %v302 = vsub.s32 0, %v301
        %v303 = vrot.slane %v298, %v302
        %v304 = vlaneseq
        %v305 = vshrl.u32 %v304, 7
        %v306 = vsub.s32 1, %v305
        %v307 = vrot.slane %v298, %v306
        %v308 = vlaneseq
        %v309 = vshrl.u32 %v308, 7
        %v310 = vsub.s32 2, %v309
        %v311 = vrot.slane %v298, %v310
        %v312 = vlaneseq
        %v313 = vshrl.u32 %v312, 7
        %v314 = vsub.s32 3, %v313
        %v315 = vrot.slane %v298, %v314
        %v322 = vunpack.c.l.b16 %v264
        %v323 = vunpack.c.l.b16 %v265
        %v324 = vpack.c.b16 %v323, %v322
        %v358 = vunpack.c.l.b16 %v266
        %v359 = vunpack.c.h.b16 %v266
        %v360 = vunpack.c.l.b16 %v267
        %v361 = vunpack.c.h.b16 %v267
        %v362 = vunpack.c.l.b16 %v268
        %v363 = vunpack.c.h.b16 %v268
        %v364 = vunpack.c.l.b16 %v269
        %v365 = vunpack.c.h.b16 %v269
        %v366 = vunpack.c.l.b16 %v270
        %v367 = vunpack.c.h.b16 %v270
        %v368 = vunpack.c.l.b16 %v271
        %v369 = vunpack.c.h.b16 %v271
        %v370 = vunpack.c.l.b16 %v272
        %v371 = vunpack.c.h.b16 %v272
        %v372 = vunpack.c.l.b16 %v273
        %v373 = vunpack.c.h.b16 %v273
        %v374 = vunpack.c.l.b16 %v274
        %v375 = vunpack.c.h.b16 %v274
        %v376 = vunpack.c.l.b16 %v275
        %v377 = vunpack.c.h.b16 %v275
        %v378 = vunpack.c.l.b16 %v276
        %v379 = vunpack.c.h.b16 %v276
        %v380 = vunpack.c.l.b16 %v277
        %v381 = vunpack.c.h.b16 %v277
        %v382 = vunpack.c.l.b16 %v278
        %v383 = vunpack.c.h.b16 %v278
        %v384 = vunpack.c.l.b16 %v279
        %v385 = vunpack.c.h.b16 %v279
        %v386 = vunpack.c.l.b16 %v280
        %v387 = vunpack.c.h.b16 %v280
        %v388 = vunpack.c.l.b16 %v281
        %v389 = vunpack.c.h.b16 %v281
        %v390 = vunpack.c.l.b16 %v282
        %v391 = vunpack.c.h.b16 %v282
        %v392 = vunpack.c.l.b16 %v283
        %v393 = vunpack.c.h.b16 %v283
        %v394 = vunpack.c.l.b16 %v284
        %v395 = vunpack.c.h.b16 %v284
        %v396 = vunpack.c.l.b16 %v285
        %v397 = vunpack.c.h.b16 %v285
        %v398 = vunpack.c.l.b16 %v286
        %v399 = vunpack.c.h.b16 %v286
        %v400 = vunpack.c.l.b16 %v287
        %v401 = vunpack.c.h.b16 %v287
        %v402 = vunpack.c.l.b16 %v288
        %v403 = vunpack.c.h.b16 %v288
        %v404 = vunpack.c.l.b16 %v289
        %v405 = vunpack.c.h.b16 %v289
        %v406 = vunpack.c.l.b16 %v290
        %v407 = vunpack.c.h.b16 %v290
        %v408 = vunpack.c.l.b16 %v291
        %v409 = vunpack.c.h.b16 %v291
        %v410 = vunpack.c.l.b16 %v292
        %v411 = vunpack.c.h.b16 %v292
        %v412 = vunpack.c.l.b16 %v293
        %v413 = vunpack.c.h.b16 %v293
        %v414 = vunpack.c.l.b16 %v294
        %v415 = vunpack.c.h.b16 %v294
        %v416 = vunpack.c.l.b16 %v295
        %v417 = vunpack.c.h.b16 %v295
        %v418 = vunpack.c.l.b16 %v296
        %v419 = vunpack.c.h.b16 %v296
        %v420 = vunpack.c.l.b16 %v297
        %v421 = vunpack.c.h.b16 %v297
        %v422 = vpack.c.b16 %v362, %v358
        %v423 = vpack.c.b16 %v363, %v359
        %v424 = vpack.c.b16 %v364, %v360
        %v425 = vpack.c.b16 %v365, %v361
        %v426 = vpack.c.b16 %v370, %v366
        %v427 = vpack.c.b16 %v371, %v367
        %v428 = vpack.c.b16 %v372, %v368
        %v429 = vpack.c.b16 %v373, %v369
        %v430 = vpack.c.b16 %v378, %v374
        %v431 = vpack.c.b16 %v379, %v375
        %v432 = vpack.c.b16 %v380, %v376
        %v433 = vpack.c.b16 %v381, %v377
        %v434 = vpack.c.b16 %v386, %v382
        %v435 = vpack.c.b16 %v387, %v383
        %v436 = vpack.c.b16 %v388, %v384
        %v437 = vpack.c.b16 %v389, %v385
        %v438 = vpack.c.b16 %v394, %v390
        %v439 = vpack.c.b16 %v395, %v391
        %v440 = vpack.c.b16 %v396, %v392
        %v441 = vpack.c.b16 %v397, %v393
        %v442 = vpack.c.b16 %v402, %v398
        %v443 = vpack.c.b16 %v403, %v399
        %v444 = vpack.c.b16 %v404, %v400
        %v445 = vpack.c.b16 %v405, %v401
        %v446 = vpack.c.b16 %v410, %v406
        %v447 = vpack.c.b16 %v411, %v407
        %v448 = vpack.c.b16 %v412, %v408
        %v449 = vpack.c.b16 %v413, %v409
        %v450 = vpack.c.b16 %v418, %v414
        %v451 = vpack.c.b16 %v419, %v415
        %v452 = vpack.c.b16 %v420, %v416
        %v453 = vpack.c.b16 %v421, %v417
        %486 = vmatprep.subr.bf16.mxu0 %v423
        %487 = vmatpush1.bf16.msra.mxu0 %v422
        %488 = vmatprep.subr.bf16.mxu0 %v427
        %489 = vmatpush1.bf16.msra.mxu0 %v426
        %490 = vmatprep.subr.bf16.mxu0 %v431
        %491 = vmatpush1.bf16.msra.mxu0 %v430
        %492 = vmatprep.subr.bf16.mxu0 %v435
        %493 = vmatpush1.bf16.msra.mxu0 %v434
        %494 = vmatprep.subr.bf16.mxu0 %v439
        %495 = vmatpush1.bf16.msra.mxu0 %v438
        %496 = vmatprep.subr.bf16.mxu0 %v443
        %497 = vmatpush1.bf16.msra.mxu0 %v442
        %498 = vmatprep.subr.bf16.mxu0 %v447
        %499 = vmatpush1.bf16.msra.mxu0 %v446
        %500 = vmatprep.subr.bf16.mxu0 %v451
        %501 = vmatpush1.bf16.msra.mxu0 %v450
        %502 = vmatprep.subr.bf16.mxu0 0
        %503 = vmatpush1.bf16.msra.mxu0 0
        %504 = vmatprep.subr.bf16.mxu0 0
        %505 = vmatpush1.bf16.msra.mxu0 0
        %506 = vmatprep.subr.bf16.mxu0 0
        %507 = vmatpush1.bf16.msra.mxu0 0
        %508 = vmatprep.subr.bf16.mxu0 0
        %509 = vmatpush1.bf16.msra.mxu0 0
        %510 = vmatprep.subr.bf16.mxu0 0
        %511 = vmatpush1.bf16.msra.mxu0 0
        %512 = vmatprep.subr.bf16.mxu0 0
        %513 = vmatpush1.bf16.msra.mxu0 0
        %514 = vmatprep.subr.bf16.mxu0 0
        %515 = vmatpush1.bf16.msra.mxu0 0
        %516 = vmatprep.subr.bf16.mxu0 0
        %517 = vmatpush1.bf16.msra.mxu0 0
        %518 = vmatprep.mubr.bf16.mxu0 0
        %519 = vmatmul.mubr.bf16.gmra.mrb[0].mxu0 %v324
        %v520 = vpop.f32.mrb[0].mxu0
        %v521 = vadd.f32 %v303, %v520
        %v522 = vpop.f32.mrb[0].mxu0
        %v523 = vadd.f32 %v307, %v522
        %v524 = vpop.f32.mrb[0].mxu0
        %v525 = vadd.f32 %v303, %v524
        %v526 = vpop.f32.mrb[0].mxu0
        %v527 = vadd.f32 %v307, %v526
        %528 = vdwg.mxu0
        %529 = vmatprep.subr.bf16.mxu0 %v425
        %530 = vmatpush1.bf16.msra.mxu0 %v424
        %531 = vmatprep.subr.bf16.mxu0 %v429
        %532 = vmatpush1.bf16.msra.mxu0 %v428
        %533 = vmatprep.subr.bf16.mxu0 %v433
        %534 = vmatpush1.bf16.msra.mxu0 %v432
        %535 = vmatprep.subr.bf16.mxu0 %v437
        %536 = vmatpush1.bf16.msra.mxu0 %v436
        %537 = vmatprep.subr.bf16.mxu0 %v441
        %538 = vmatpush1.bf16.msra.mxu0 %v440
        %539 = vmatprep.subr.bf16.mxu0 %v445
        %540 = vmatpush1.bf16.msra.mxu0 %v444
        %541 = vmatprep.subr.bf16.mxu0 %v449
        %542 = vmatpush1.bf16.msra.mxu0 %v448
        %543 = vmatprep.subr.bf16.mxu0 %v453
        %544 = vmatpush1.bf16.msra.mxu0 %v452
        %545 = vmatprep.subr.bf16.mxu0 0
        %546 = vmatpush1.bf16.msra.mxu0 0
        %547 = vmatprep.subr.bf16.mxu0 0
        %548 = vmatpush1.bf16.msra.mxu0 0
        %549 = vmatprep.subr.bf16.mxu0 0
        %550 = vmatpush1.bf16.msra.mxu0 0
        %551 = vmatprep.subr.bf16.mxu0 0
        %552 = vmatpush1.bf16.msra.mxu0 0
        %553 = vmatprep.subr.bf16.mxu0 0
        %554 = vmatpush1.bf16.msra.mxu0 0
        %555 = vmatprep.subr.bf16.mxu0 0
        %556 = vmatpush1.bf16.msra.mxu0 0
        %557 = vmatprep.subr.bf16.mxu0 0
        %558 = vmatpush1.bf16.msra.mxu0 0
        %559 = vmatprep.subr.bf16.mxu0 0
        %560 = vmatpush1.bf16.msra.mxu0 0
        %561 = vmatprep.mubr.bf16.mxu0 0
        %562 = vmatmul.mubr.bf16.gmra.mrb[0].mxu0 %v324
        %v563 = vpop.f32.mrb[0].mxu0
        %v564 = vadd.f32 %v311, %v563
        %v565 = vpop.f32.mrb[0].mxu0
        %v566 = vadd.f32 %v315, %v565
        %v567 = vpop.f32.mrb[0].mxu0
        %v568 = vadd.f32 %v311, %v567
        %v569 = vpop.f32.mrb[0].mxu0
        %v570 = vadd.f32 %v315, %v569
        %571 = vdwg.mxu0
        %vm572 = vcmp.ge.f32.partialorder %v521, 0.0
        %vm573 = vcmp.ge.f32.partialorder %v523, 0.0
        %vm574 = vcmp.ge.f32.partialorder %v564, 0.0
        %vm575 = vcmp.ge.f32.partialorder %v566, 0.0
        %vm576 = vcmp.ge.f32.partialorder %v525, 0.0
        %vm577 = vcmp.ge.f32.partialorder %v527, 0.0
        %vm578 = vcmp.ge.f32.partialorder %v568, 0.0
        %vm579 = vcmp.ge.f32.partialorder %v570, 0.0
        %v580 = vmul.f32 %v521, 0.2
        %v581 = vmul.f32 %v523, 0.2
        %v582 = vmul.f32 %v564, 0.2
        %v583 = vmul.f32 %v566, 0.2
        %v584 = vmul.f32 %v525, 0.2
        %v585 = vmul.f32 %v527, 0.2
        %v586 = vmul.f32 %v568, 0.2
        %v587 = vmul.f32 %v570, 0.2
        %v588 = vsel %vm572, %v521, %v580
        %v589 = vsel %vm573, %v523, %v581
        %v590 = vsel %vm574, %v564, %v582
        %v591 = vsel %vm575, %v566, %v583
        %v592 = vsel %vm576, %v525, %v584
        %v593 = vsel %vm577, %v527, %v585
        %v594 = vsel %vm578, %v568, %v586
        %v595 = vsel %vm579, %v570, %v587
        %596 = vst [vmem:[%s252] sm:$0xff] %v588
        %597 = vst [vmem:[%s252 + $0x8] sm:$0xff] %v589
        %598 = vst [vmem:[%s252 + $0x10] sm:$0xff] %v590
        %599 = vst [vmem:[%s252 + $0x18] sm:$0xff] %v591
        %600 = vst [vmem:[%s252 + $0x20] sm:$0xff] %v592
        %601 = vst [vmem:[%s252 + $0x28] sm:$0xff] %v593
        %602 = vst [vmem:[%s252 + $0x30] sm:$0xff] %v594
        %603 = vst [vmem:[%s252 + $0x38] sm:$0xff] %v595
        %s604 = sand.u32 %s120, 1
        %s605 = sand.u32 %s120, 1
        %s606 = smul.addr %s605, 64
        %s607 = scalar_lea.vmem [#allocation6], %s606
        // Predicated region
        $region41: #{forward.5} parent=31 // pred_check
          %p608 = pneg %p130
        $region42: #{forward.5} parent=31 // pred_check_branch
          %610 = sbr.rel (%p608) target = $region44
        $region43: #{forward.5} parent=31 // pred_region
          %s611 = smul.u32 2, %s24
          %s612 = smul.u32 4, %s25
          %s613 = smul.addr %s611, 16
          %s614 = sadd.s32 %s612, %s613
          %s615 = smul.addr %s614, 8
          %s616 = scalar_lea.vmem %s3, %s615
          // Predicated region
          $region45: #{forward.5} parent=43 // pred_check
            _
          $region46: #{forward.5} parent=43 // pred_check_branch
            %618 = sbr.rel (0) target = $region48
          $region47: #{forward.5} parent=43 // pred_region
            // Predicated region
            $region49: #{forward.5} parent=47 // pred_check
              _
            $region50: #{forward.5} parent=47 // pred_check_branch
              %620 = sbr.rel (0) target = $region52
            $region51: #{forward.5} parent=47 // pred_region
              loop: start=0, step=1, limit=1
              $region53: #{forward.5} parent=51 // loop_pre_header
                _
              $region54: #{forward.5} parent=51 // loop_header
                %s622 = sphi 0, %s626
                %p623 = scmp.ge.s32.totalorder %s622, 1
                %s627 = sphi %s607, %s607
                %s628 = sphi %s616, %s616
              $region55: #{forward.5} parent=51 // loop_header_branch
                %625 = sbr.rel (%p623) target = $region59
              $region56: #{forward.5} parent=51 // loop_body
                %v629 = vld [vmem:[%s627] sm:$0xff]
                %630 = vst [vmem:[%s628] sm:$0xff] %v629
                %v631 = vld [vmem:[%s627 + $0x8] sm:$0xff]
                %632 = vst [vmem:[%s628 + $0x8] sm:$0xff] %v631
                %v633 = vld [vmem:[%s627 + $0x10] sm:$0xff]
                %634 = vst [vmem:[%s628 + $0x10] sm:$0xff] %v633
                %v635 = vld [vmem:[%s627 + $0x18] sm:$0xff]
                %636 = vst [vmem:[%s628 + $0x18] sm:$0xff] %v635
                %v637 = vld [vmem:[%s627 + $0x20] sm:$0xff]
                %638 = vst [vmem:[%s628 + $0x80] sm:$0xff] %v637
                %v639 = vld [vmem:[%s627 + $0x28] sm:$0xff]
                %640 = vst [vmem:[%s628 + $0x88] sm:$0xff] %v639
                %v641 = vld [vmem:[%s627 + $0x30] sm:$0xff]
                %642 = vst [vmem:[%s628 + $0x90] sm:$0xff] %v641
                %v643 = vld [vmem:[%s627 + $0x38] sm:$0xff]
                %644 = vst [vmem:[%s628 + $0x98] sm:$0xff] %v643
              $region57: #{forward.5} parent=51 // loop_footer
                %s626 = sadd.s32 1, %s622
              $region58: #{forward.5} parent=51 // loop_footer_branch
                %621 = sbr.rel target = $region54
              $region59: #{forward.5} parent=51 // loop_exit
                _
            $region52: #{forward.5} parent=47 // pred_fallthru
              _
            // Predicated region
            $region60: #{forward.5} parent=47 // pred_check
              _
            $region61: #{forward.5} parent=47 // pred_check_branch
              %646 = sbr.rel target = $region63
            $region62: #{forward.5} parent=47 // pred_region
              _
            $region63: #{forward.5} parent=47 // pred_fallthru
              _
          $region48: #{forward.5} parent=43 // pred_fallthru
            _
          %647 = vnop
        $region44: #{forward.5} parent=31 // pred_fallthru
          _
      $region32: #{forward.5} parent=5 // pred_fallthru
        _
      %p648 = scmp.le.s32.totalorder 2, %s15
      // Predicated region
      $region64: #{forward.5} parent=5 // pred_check
        %p649 = pneg %p648
      $region65: #{forward.5} parent=5 // pred_check_branch
        %651 = sbr.rel (%p649) target = $region67
      $region66: #{forward.5} parent=5 // pred_region
        %s652 = ssub.s32 %s15, 2
        // Predicated region
        $region68: #{forward.5} parent=66 // pred_check
          %p653 = pneg %p136
        $region69: #{forward.5} parent=66 // pred_check_branch
          %655 = sbr.rel (%p653) target = $region71
        $region70: #{forward.5} parent=66 // pred_region
          %s656 = sand.u32 %s121, 1
          %s657 = sand.u32 %s121, 1
          %s658 = smul.addr %s657, 64
          %s659 = scalar_lea.vmem [#allocation6], %s658
        $region71: #{forward.5} parent=66 // pred_fallthru
          _
      $region67: #{forward.5} parent=5 // pred_fallthru
        _
    $region6: #{forward.5} parent=1 // loop_footer
      %s19 = sadd.s32 1, %s15
    $region7: #{forward.5} parent=1 // loop_footer_branch
      %14 = sbr.rel target = $region3
    $region8: #{forward.5} parent=1 // loop_exit
      _
    %660 = vsyncpa [#allocation3], 1
    %s661 = scalar_lea.sflag [#allocation3], 1
    %662 = vsyncpa %s661, 1
    %663 = vsyncpa [#allocation5], 1
    %s664 = scalar_lea.sflag [#allocation5], 1
    %665 = vsyncpa %s664, 1

// kernel: forward.6
$region0: #{forward.6}
  #allocation0 [shape = 'u32[]', space=smem, size = 0x4, offset = 0x4, fixed_abs, tag = 'smem constant byte address 0x4 - core index']
  #allocation1 [shape = 'u32[144,128]{1,0:T(1,128)}', space=vmem, size = 0x12000, scoped, tag = 'internal scratch']
  %s0 = inlined_call_operand.vmem [shape: bf16[128,2048], index: 0, kind: input, shape index: {}]
  %s1 = inlined_call_operand.vmem [shape: bf16[2048,128], index: 1, kind: input, shape index: {}]
  %s2 = inlined_call_operand.hbm [shape: f32[1,128], index: 2, kind: input, shape index: {}]
  %s3 = inlined_call_operand.vmem [shape: f32[128,128], index: 3, kind: output, shape index: {}]
  %s4 = sld [smem:[#allocation0]]
  $region49: #{forward.6} parent=0
    _
  %s6 = ssub.s32 1, %s4
  %s7 = scalar_select 0, %s6, %s4
  $region1: #{forward.6} parent=0
    #allocation2 [shape = 'u8[512]{0}', space=vmem, size = 0x400, scoped, tag = 'input window, operand 2, single buffered']
    #allocation3 [shape = 's32[2]{0}', space=sflag, size = 0x8, scoped, tag = 'scoped memory for forward.6']
    %8 = vsyncpa [#allocation3], 0
    loop: start=0, step=1, limit=4
    $region2: #{forward.6} parent=1 // loop_pre_header
      _
    $region3: #{forward.6} parent=1 // loop_header
      %s10 = sphi 0, %s14
      %p11 = scmp.ge.s32.totalorder %s10, 4
      %s17 = sphi 0, %s29
      %s18 = sphi 0, %s25
      %s19 = sphi 0, %s17
      %s20 = sphi 0, %s18
      %s21 = sphi 0, %s19
      %s22 = sphi 0, %s20
      %s32 = sphi 0, %s34
      %s35 = sphi 0, %s32
      %s36 = sphi 0, %s35
      %s52 = sphi 0, %s36
      %s58 = sphi 0, %s60
      %s61 = sphi 0, %s58
      %s62 = sphi 0, %s61
      %s78 = sphi 0, %s62
      %s84 = sphi 0, %s86
      %s87 = sphi 0, %s84
      %s88 = sphi 0, %s87
      %s104 = sphi 0, %s88
      %s112 = sphi 0, %s114
      %s115 = sphi 0, %s112
      %s116 = sphi 0, %s115
      %s132 = sphi 0, %s116
    $region4: #{forward.6} parent=1 // loop_header_branch
      %13 = sbr.rel (%p11) target = $region8
    $region5: #{forward.6} parent=1 // loop_body
      %s15 = ssub.s32 %s10, 1
      %s16 = ssub.s32 %s10, 2
      %s23 = sadd.s32 1, %s18
      %p24 = scmp.ge.s32.totalorder %s23, 1
      %s25 = scalar_select %p24, 0, %s23
      %s26 = sadd.s32 1, %s17
      %s27 = scalar_select %p24, %s26, %s17
      %p28 = scmp.ge.s32.totalorder %s27, 2
      %s29 = scalar_select %p28, 0, %s27
      %s30 = ssub.s32 %s17, %s29
      %p31 = scmp.eq.s32.totalorder %s30, 0
      %s33 = sadd.s32 %s32, 1
      %s34 = scalar_select %p31, %s32, %s33
      %p37 = pneg %p31
      %p38 = scmp.eq.s32.totalorder %s10, 1
      %p39 = por %p37, %p38
      %p40 = scmp.ne.s32.totalorder %s32, %s35
      %p41 = scmp.eq.s32.totalorder %s10, 0
      %p42 = por %p40, %p41
      %p43 = scmp.ne.s32.totalorder %s32, %s35
      %p44 = scmp.eq.s32.totalorder %s15, 1
      %p45 = por %p43, %p44
      %p46 = scmp.ne.s32.totalorder %s35, %s36
      %p47 = scmp.eq.s32.totalorder %s15, 0
      %p48 = por %p46, %p47
      %p49 = scmp.ne.s32.totalorder %s35, %s36
      %p50 = scmp.eq.s32.totalorder %s16, 1
      %p51 = por %p49, %p50
      %p53 = scmp.ne.s32.totalorder %s36, %s52
      %p54 = scmp.eq.s32.totalorder %s16, 0
      %p55 = por %p53, %p54
      %s56 = ssub.s32 %s18, %s25
      %p57 = scmp.eq.s32.totalorder %s56, 0
      %s59 = sadd.s32 %s58, 1
      %s60 = scalar_select %p57, %s58, %s59
      %p63 = pneg %p57
      %p64 = scmp.eq.s32.totalorder %s10, 1
      %p65 = por %p63, %p64
      %p66 = scmp.ne.s32.totalorder %s58, %s61
      %p67 = scmp.eq.s32.totalorder %s10, 0
      %p68 = por %p66, %p67
      %p69 = scmp.ne.s32.totalorder %s58, %s61
      %p70 = scmp.eq.s32.totalorder %s15, 1
      %p71 = por %p69, %p70
      %p72 = scmp.ne.s32.totalorder %s61, %s62
      %p73 = scmp.eq.s32.totalorder %s15, 0
      %p74 = por %p72, %p73
      %p75 = scmp.ne.s32.totalorder %s61, %s62
      %p76 = scmp.eq.s32.totalorder %s16, 1
      %p77 = por %p75, %p76
      %p79 = scmp.ne.s32.totalorder %s62, %s78
      %p80 = scmp.eq.s32.totalorder %s16, 0
      %p81 = por %p79, %p80
      %s82 = ssub.s32 %s18, %s25
      %p83 = scmp.eq.s32.totalorder %s82, 0
      %s85 = sadd.s32 %s84, 1
      %s86 = scalar_select %p83, %s84, %s85
      %p89 = pneg %p83
      %p90 = scmp.eq.s32.totalorder %s10, 1
      %p91 = por %p89, %p90
      %p92 = scmp.ne.s32.totalorder %s84, %s87
      %p93 = scmp.eq.s32.totalorder %s10, 0
      %p94 = por %p92, %p93
      %p95 = scmp.ne.s32.totalorder %s84, %s87
      %p96 = scmp.eq.s32.totalorder %s15, 1
      %p97 = por %p95, %p96
      %p98 = scmp.ne.s32.totalorder %s87, %s88
      %p99 = scmp.eq.s32.totalorder %s15, 0
      %p100 = por %p98, %p99
      %p101 = scmp.ne.s32.totalorder %s87, %s88
      %p102 = scmp.eq.s32.totalorder %s16, 1
      %p103 = por %p101, %p102
      %p105 = scmp.ne.s32.totalorder %s88, %s104
      %p106 = scmp.eq.s32.totalorder %s16, 0
      %p107 = por %p105, %p106
      %s108 = ssub.s32 %s17, %s29
      %s109 = ssub.s32 %s18, %s25
      %s110 = sor.u32 %s108, %s109
      %p111 = scmp.eq.s32.totalorder %s110, 0
      %s113 = sadd.s32 %s112, 1
      %s114 = scalar_select %p111, %s112, %s113
      %p117 = pneg %p111
      %p118 = scmp.eq.s32.totalorder %s10, 1
      %p119 = por %p117, %p118
      %p120 = scmp.ne.s32.totalorder %s112, %s115
      %p121 = scmp.eq.s32.totalorder %s10, 0
      %p122 = por %p120, %p121
      %p123 = scmp.ne.s32.totalorder %s112, %s115
      %p124 = scmp.eq.s32.totalorder %s15, 1
      %p125 = por %p123, %p124
      %p126 = scmp.ne.s32.totalorder %s115, %s116
      %p127 = scmp.eq.s32.totalorder %s15, 0
      %p128 = por %p126, %p127
      %p129 = scmp.ne.s32.totalorder %s115, %s116
      %p130 = scmp.eq.s32.totalorder %s16, 1
      %p131 = por %p129, %p130
      %p133 = scmp.ne.s32.totalorder %s116, %s132
      %p134 = scmp.eq.s32.totalorder %s16, 0
      %p135 = por %p133, %p134
      %p136 = scmp.le.s32.totalorder 1, %s10
      %p137 = scmp.lt.s32.totalorder %s10, 3
      %p138 = pnand %p136, %p137
      %p139 = pneg %p138
      // Predicated region
      $region9: #{forward.6} parent=5 // pred_check
        _
      $region10: #{forward.6} parent=5 // pred_check_branch
        %141 = sbr.rel (%p138) target = $region12
      $region11: #{forward.6} parent=5 // pred_region
        %s142 = ssub.s32 %s10, 1
        // Predicated region
        $region13: #{forward.6} parent=11 // pred_check
          %p143 = pneg %p74
        $region14: #{forward.6} parent=11 // pred_check_branch
          %145 = sbr.rel (%p143) target = $region16
        $region15: #{forward.6} parent=11 // pred_region
          %p146 = scmp.lt.s32.totalorder %s20, 0
          %s147 = scalar_select %p146, %s20, 0
          %s148 = smul.addr %s147, 4
          %s149 = scalar_lea.vmem %s1, %s148
        $region16: #{forward.6} parent=11 // pred_fallthru
          _
        // Predicated region
        $region17: #{forward.6} parent=11 // pred_check
          %p150 = pneg %p100
        $region18: #{forward.6} parent=11 // pred_check_branch
          %152 = sbr.rel (%p150) target = $region20
        $region19: #{forward.6} parent=11 // pred_region
          %s154 = ssub.s32 16, 16
          %155 = vsyncadd [#allocation3], %s154
          %s156 = smul.addr %s20, 16
          %s157 = scalar_lea.hbm %s2, %s156
          %s159 = sshll.u32 [#allocation2], 4
          %s160 = int_to_ptr.vmem [resolvable:$true] %s159
          %162 = dma.hbm_to_vmem [thread:$0]  %s157, 16, %s160, [#allocation3]
        $region20: #{forward.6} parent=11 // pred_fallthru
          _
      $region12: #{forward.6} parent=5 // pred_fallthru
        _
      %p163 = scmp.lt.s32.totalorder %s10, 2
      // Predicated region
      $region21: #{forward.6} parent=5 // pred_check
        %p164 = pneg %p163
      $region22: #{forward.6} parent=5 // pred_check_branch
        %166 = sbr.rel (%p164) target = $region24
      $region23: #{forward.6} parent=5 // pred_region
        // Predicated region
        $region25: #{forward.6} parent=23 // pred_check
          %p167 = pneg %p42
        $region26: #{forward.6} parent=23 // pred_check_branch
          %169 = sbr.rel (%p167) target = $region28
        $region27: #{forward.6} parent=23 // pred_region
          %s170 = smul.u32 8, %s17
          %p171 = scmp.lt.s32.totalorder %s170, 15
          %s172 = scalar_select %p171, %s170, 15
          %s173 = smul.addr %s172, 16
          %s174 = smul.addr %s173, 4
          %s175 = scalar_lea.vmem %s0, %s174
          %s176 = smul.u32 8, %s17
        $region28: #{forward.6} parent=23 // pred_fallthru
          _
      $region24: #{forward.6} parent=5 // pred_fallthru
        _
      %p177 = scmp.le.s32.totalorder 1, %s10
      %p178 = scmp.lt.s32.totalorder %s10, 3
      %p179 = pnand %p177, %p178
      %p180 = pneg %p179
      // Predicated region
      $region29: #{forward.6} parent=5 // pred_check
        _
      $region30: #{forward.6} parent=5 // pred_check_branch
        %182 = sbr.rel (%p179) target = $region32
      $region31: #{forward.6} parent=5 // pred_region
        %s183 = ssub.s32 %s10, 1
        // Predicated region
        $region33: #{forward.6} parent=31 // pred_check
          %p184 = pneg %p100
        $region34: #{forward.6} parent=31 // pred_check_branch
          %186 = sbr.rel (%p184) target = $region36
        $region35: #{forward.6} parent=31 // pred_region
          %187 = dma.done [#allocation3], 16
        $region36: #{forward.6} parent=31 // pred_fallthru
          _
        %s188 = smul.u32 8, %s19
        %p189 = scmp.lt.s32.totalorder %s188, 15
        %s190 = scalar_select %p189, %s188, 15
        %s191 = smul.addr %s190, 16
        %s192 = smul.addr %s191, 4
        %s193 = scalar_lea.vmem %s0, %s192
        %p194 = pneg %p48
        %p195 = pneg %p45
        %p196 = scmp.lt.s32.totalorder %s20, 0
        %s197 = scalar_select %p196, %s20, 0
        %s198 = smul.addr %s197, 4
        %s199 = scalar_lea.vmem %s1, %s198
        %p200 = pneg %p74
        %p201 = pneg %p71
        %p202 = pneg %p100
        %p203 = pneg %p97
        %p204 = pneg %p128
        %p205 = pneg %p125
        %s206 = smul.u32 8, %s19
        %p207 = scmp.lt.s32.totalorder %s206, 15
        %s208 = scalar_select %p207, %s206, 15
        %p209 = scmp.lt.s32.totalorder %s20, 0
        %s210 = scalar_select %p209, %s20, 0
        %s211 = sadd.s32 %s210, %s208
        %s212 = smul.addr %s211, 8
        %s213 = scalar_lea.vmem %s3, %s212
        %s214 = smul.u32 8, %s19
        %p215 = scmp.lt.s32.totalorder %s214, 15
        %s216 = scalar_select %p215, %s214, 15
        %s217 = smul.addr %s216, 16
        %s218 = smul.addr %s217, 4
        %s219 = scalar_lea.vmem %s0, %s218
        %s220 = smul.u32 8, %s19
        %p221 = scmp.lt.s32.totalorder %s20, 0
        %s222 = scalar_select %p221, %s20, 0
        %s223 = smul.addr %s222, 4
        %s224 = scalar_lea.vmem %s1, %s223
        %s225 = smul.u32 8, %s19
        %p226 = scmp.lt.s32.totalorder %s225, 15
        %s227 = scalar_select %p226, %s225, 15
        %p228 = scmp.lt.s32.totalorder %s20, 0
        %s229 = scalar_select %p228, %s20, 0
        %s230 = sadd.s32 %s229, %s227
        %s231 = smul.addr %s230, 8
        %s232 = scalar_lea.vmem %s3, %s231
        %s233 = smul.u32 8, %s19
        %v235 = vld [vmem:[%s219] sm:$0xff]
        %v236 = vld [vmem:[%s219 + $0x8] sm:$0xff]
        %v237 = vld [vmem:[%s219 + $0x10] sm:$0xff]
        %v238 = vld [vmem:[%s219 + $0x18] sm:$0xff]
        %v239 = vld [vmem:[%s219 + $0x20] sm:$0xff]
        %v240 = vld [vmem:[%s219 + $0x28] sm:$0xff]
        %v241 = vld [vmem:[%s219 + $0x30] sm:$0xff]
        %v242 = vld [vmem:[%s219 + $0x38] sm:$0xff]
        %v243 = vld [vmem:[%s219 + $0x40] sm:$0xff]
        %v244 = vld [vmem:[%s219 + $0x48] sm:$0xff]
        %v245 = vld [vmem:[%s219 + $0x50] sm:$0xff]
        %v246 = vld [vmem:[%s219 + $0x58] sm:$0xff]
        %v247 = vld [vmem:[%s219 + $0x60] sm:$0xff]
        %v248 = vld [vmem:[%s219 + $0x68] sm:$0xff]
        %v249 = vld [vmem:[%s219 + $0x70] sm:$0xff]
        %v250 = vld [vmem:[%s219 + $0x78] sm:$0xff]
        %v251 = vld [vmem:[%s219 + $0x80] sm:$0xff]
        %v252 = vld [vmem:[%s219 + $0x88] sm:$0xff]
        %v253 = vld [vmem:[%s219 + $0x90] sm:$0xff]
        %v254 = vld [vmem:[%s219 + $0x98] sm:$0xff]
        %v255 = vld [vmem:[%s219 + $0xa0] sm:$0xff]
        %v256 = vld [vmem:[%s219 + $0xa8] sm:$0xff]
        %v257 = vld [vmem:[%s219 + $0xb0] sm:$0xff]
        %v258 = vld [vmem:[%s219 + $0xb8] sm:$0xff]
        %v259 = vld [vmem:[%s219 + $0xc0] sm:$0xff]
        %v260 = vld [vmem:[%s219 + $0xc8] sm:$0xff]
        %v261 = vld [vmem:[%s219 + $0xd0] sm:$0xff]
        %v262 = vld [vmem:[%s219 + $0xd8] sm:$0xff]
        %v263 = vld [vmem:[%s219 + $0xe0] sm:$0xff]
        %v264 = vld [vmem:[%s219 + $0xe8] sm:$0xff]
        %v265 = vld [vmem:[%s219 + $0xf0] sm:$0xff]
        %v266 = vld [vmem:[%s219 + $0xf8] sm:$0xff]
        %v267 = vld [vmem:[%s219 + $0x100] sm:$0xff]
        %v268 = vld [vmem:[%s219 + $0x108] sm:$0xff]
        %v269 = vld [vmem:[%s219 + $0x110] sm:$0xff]
        %v270 = vld [vmem:[%s219 + $0x118] sm:$0xff]
        %v271 = vld [vmem:[%s219 + $0x120] sm:$0xff]
        %v272 = vld [vmem:[%s219 + $0x128] sm:$0xff]
        %v273 = vld [vmem:[%s219 + $0x130] sm:$0xff]
        %v274 = vld [vmem:[%s219 + $0x138] sm:$0xff]
        %v275 = vld [vmem:[%s219 + $0x140] sm:$0xff]
        %v276 = vld [vmem:[%s219 + $0x148] sm:$0xff]
        %v277 = vld [vmem:[%s219 + $0x150] sm:$0xff]
        %v278 = vld [vmem:[%s219 + $0x158] sm:$0xff]
        %v279 = vld [vmem:[%s219 + $0x160] sm:$0xff]
        %v280 = vld [vmem:[%s219 + $0x168] sm:$0xff]
        %v281 = vld [vmem:[%s219 + $0x170] sm:$0xff]
        %v282 = vld [vmem:[%s219 + $0x178] sm:$0xff]
        %v283 = vld [vmem:[%s219 + $0x180] sm:$0xff]
        %v284 = vld [vmem:[%s219 + $0x188] sm:$0xff]
        %v285 = vld [vmem:[%s219 + $0x190] sm:$0xff]
        %v286 = vld [vmem:[%s219 + $0x198] sm:$0xff]
        %v287 = vld [vmem:[%s219 + $0x1a0] sm:$0xff]
        %v288 = vld [vmem:[%s219 + $0x1a8] sm:$0xff]
        %v289 = vld [vmem:[%s219 + $0x1b0] sm:$0xff]
        %v290 = vld [vmem:[%s219 + $0x1b8] sm:$0xff]
        %v291 = vld [vmem:[%s219 + $0x1c0] sm:$0xff]
        %v292 = vld [vmem:[%s219 + $0x1c8] sm:$0xff]
        %v293 = vld [vmem:[%s219 + $0x1d0] sm:$0xff]
        %v294 = vld [vmem:[%s219 + $0x1d8] sm:$0xff]
        %v295 = vld [vmem:[%s219 + $0x1e0] sm:$0xff]
        %v296 = vld [vmem:[%s219 + $0x1e8] sm:$0xff]
        %v297 = vld [vmem:[%s219 + $0x1f0] sm:$0xff]
        %v298 = vld [vmem:[%s219 + $0x1f8] sm:$0xff]
        %v299 = vld [vmem:[%s224] sm:$0xf]
        %v300 = vld [vmem:[%s224 + $0x4] sm:$0xf]
        %v301 = vld [vmem:[%s224 + $0x8] sm:$0xf]
        %v302 = vld [vmem:[%s224 + $0xc] sm:$0xf]
        %v303 = vld [vmem:[%s224 + $0x10] sm:$0xf]
        %v304 = vld [vmem:[%s224 + $0x14] sm:$0xf]
        %v305 = vld [vmem:[%s224 + $0x18] sm:$0xf]
        %v306 = vld [vmem:[%s224 + $0x1c] sm:$0xf]
        %v307 = vld [vmem:[%s224 + $0x20] sm:$0xf]
        %v308 = vld [vmem:[%s224 + $0x24] sm:$0xf]
        %v309 = vld [vmem:[%s224 + $0x28] sm:$0xf]
        %v310 = vld [vmem:[%s224 + $0x2c] sm:$0xf]
        %v311 = vld [vmem:[%s224 + $0x30] sm:$0xf]
        %v312 = vld [vmem:[%s224 + $0x34] sm:$0xf]
        %v313 = vld [vmem:[%s224 + $0x38] sm:$0xf]
        %v314 = vld [vmem:[%s224 + $0x3c] sm:$0xf]
        %v315 = vld [vmem:[%s224 + $0x40] sm:$0xf]
        %v316 = vld [vmem:[%s224 + $0x44] sm:$0xf]
        %v317 = vld [vmem:[%s224 + $0x48] sm:$0xf]
        %v318 = vld [vmem:[%s224 + $0x4c] sm:$0xf]
        %v319 = vld [vmem:[%s224 + $0x50] sm:$0xf]
        %v320 = vld [vmem:[%s224 + $0x54] sm:$0xf]
        %v321 = vld [vmem:[%s224 + $0x58] sm:$0xf]
        %v322 = vld [vmem:[%s224 + $0x5c] sm:$0xf]
        %v323 = vld [vmem:[%s224 + $0x60] sm:$0xf]
        %v324 = vld [vmem:[%s224 + $0x64] sm:$0xf]
        %v325 = vld [vmem:[%s224 + $0x68] sm:$0xf]
        %v326 = vld [vmem:[%s224 + $0x6c] sm:$0xf]
        %v327 = vld [vmem:[%s224 + $0x70] sm:$0xf]
        %v328 = vld [vmem:[%s224 + $0x74] sm:$0xf]
        %v329 = vld [vmem:[%s224 + $0x78] sm:$0xf]
        %v330 = vld [vmem:[%s224 + $0x7c] sm:$0xf]
        %v331 = vld [vmem:[%s224 + $0x80] sm:$0xf]
        %v332 = vld [vmem:[%s224 + $0x84] sm:$0xf]
        %v333 = vld [vmem:[%s224 + $0x88] sm:$0xf]
        %v334 = vld [vmem:[%s224 + $0x8c] sm:$0xf]
        %v335 = vld [vmem:[%s224 + $0x90] sm:$0xf]
        %v336 = vld [vmem:[%s224 + $0x94] sm:$0xf]
        %v337 = vld [vmem:[%s224 + $0x98] sm:$0xf]
        %v338 = vld [vmem:[%s224 + $0x9c] sm:$0xf]
        %v339 = vld [vmem:[%s224 + $0xa0] sm:$0xf]
        %v340 = vld [vmem:[%s224 + $0xa4] sm:$0xf]
        %v341 = vld [vmem:[%s224 + $0xa8] sm:$0xf]
        %v342 = vld [vmem:[%s224 + $0xac] sm:$0xf]
        %v343 = vld [vmem:[%s224 + $0xb0] sm:$0xf]
        %v344 = vld [vmem:[%s224 + $0xb4] sm:$0xf]
        %v345 = vld [vmem:[%s224 + $0xb8] sm:$0xf]
        %v346 = vld [vmem:[%s224 + $0xbc] sm:$0xf]
        %v347 = vld [vmem:[%s224 + $0xc0] sm:$0xf]
        %v348 = vld [vmem:[%s224 + $0xc4] sm:$0xf]
        %v349 = vld [vmem:[%s224 + $0xc8] sm:$0xf]
        %v350 = vld [vmem:[%s224 + $0xcc] sm:$0xf]
        %v351 = vld [vmem:[%s224 + $0xd0] sm:$0xf]
        %v352 = vld [vmem:[%s224 + $0xd4] sm:$0xf]
        %v353 = vld [vmem:[%s224 + $0xd8] sm:$0xf]
        %v354 = vld [vmem:[%s224 + $0xdc] sm:$0xf]
        %v355 = vld [vmem:[%s224 + $0xe0] sm:$0xf]
        %v356 = vld [vmem:[%s224 + $0xe4] sm:$0xf]
        %v357 = vld [vmem:[%s224 + $0xe8] sm:$0xf]
        %v358 = vld [vmem:[%s224 + $0xec] sm:$0xf]
        %v359 = vld [vmem:[%s224 + $0xf0] sm:$0xf]
        %v360 = vld [vmem:[%s224 + $0xf4] sm:$0xf]
        %v361 = vld [vmem:[%s224 + $0xf8] sm:$0xf]
        %v362 = vld [vmem:[%s224 + $0xfc] sm:$0xf]
        %v363 = vld [vmem:[%s224 + $0x100] sm:$0xf]
        %v364 = vld [vmem:[%s224 + $0x104] sm:$0xf]
        %v365 = vld [vmem:[%s224 + $0x108] sm:$0xf]
        %v366 = vld [vmem:[%s224 + $0x10c] sm:$0xf]
        %v367 = vld [vmem:[%s224 + $0x110] sm:$0xf]
        %v368 = vld [vmem:[%s224 + $0x114] sm:$0xf]
        %v369 = vld [vmem:[%s224 + $0x118] sm:$0xf]
        %v370 = vld [vmem:[%s224 + $0x11c] sm:$0xf]
        %v371 = vld [vmem:[%s224 + $0x120] sm:$0xf]
        %v372 = vld [vmem:[%s224 + $0x124] sm:$0xf]
        %v373 = vld [vmem:[%s224 + $0x128] sm:$0xf]
        %v374 = vld [vmem:[%s224 + $0x12c] sm:$0xf]
        %v375 = vld [vmem:[%s224 + $0x130] sm:$0xf]
        %v376 = vld [vmem:[%s224 + $0x134] sm:$0xf]
        %v377 = vld [vmem:[%s224 + $0x138] sm:$0xf]
        %v378 = vld [vmem:[%s224 + $0x13c] sm:$0xf]
        %v379 = vld [vmem:[%s224 + $0x140] sm:$0xf]
        %v380 = vld [vmem:[%s224 + $0x144] sm:$0xf]
        %v381 = vld [vmem:[%s224 + $0x148] sm:$0xf]
        %v382 = vld [vmem:[%s224 + $0x14c] sm:$0xf]
        %v383 = vld [vmem:[%s224 + $0x150] sm:$0xf]
        %v384 = vld [vmem:[%s224 + $0x154] sm:$0xf]
        %v385 = vld [vmem:[%s224 + $0x158] sm:$0xf]
        %v386 = vld [vmem:[%s224 + $0x15c] sm:$0xf]
        %v387 = vld [vmem:[%s224 + $0x160] sm:$0xf]
        %v388 = vld [vmem:[%s224 + $0x164] sm:$0xf]
        %v389 = vld [vmem:[%s224 + $0x168] sm:$0xf]
        %v390 = vld [vmem:[%s224 + $0x16c] sm:$0xf]
        %v391 = vld [vmem:[%s224 + $0x170] sm:$0xf]
        %v392 = vld [vmem:[%s224 + $0x174] sm:$0xf]
        %v393 = vld [vmem:[%s224 + $0x178] sm:$0xf]
        %v394 = vld [vmem:[%s224 + $0x17c] sm:$0xf]
        %v395 = vld [vmem:[%s224 + $0x180] sm:$0xf]
        %v396 = vld [vmem:[%s224 + $0x184] sm:$0xf]
        %v397 = vld [vmem:[%s224 + $0x188] sm:$0xf]
        %v398 = vld [vmem:[%s224 + $0x18c] sm:$0xf]
        %v399 = vld [vmem:[%s224 + $0x190] sm:$0xf]
        %v400 = vld [vmem:[%s224 + $0x194] sm:$0xf]
        %v401 = vld [vmem:[%s224 + $0x198] sm:$0xf]
        %v402 = vld [vmem:[%s224 + $0x19c] sm:$0xf]
        %v403 = vld [vmem:[%s224 + $0x1a0] sm:$0xf]
        %v404 = vld [vmem:[%s224 + $0x1a4] sm:$0xf]
        %v405 = vld [vmem:[%s224 + $0x1a8] sm:$0xf]
        %v406 = vld [vmem:[%s224 + $0x1ac] sm:$0xf]
        %v407 = vld [vmem:[%s224 + $0x1b0] sm:$0xf]
        %v408 = vld [vmem:[%s224 + $0x1b4] sm:$0xf]
        %v409 = vld [vmem:[%s224 + $0x1b8] sm:$0xf]
        %v410 = vld [vmem:[%s224 + $0x1bc] sm:$0xf]
        %v411 = vld [vmem:[%s224 + $0x1c0] sm:$0xf]
        %v412 = vld [vmem:[%s224 + $0x1c4] sm:$0xf]
        %v413 = vld [vmem:[%s224 + $0x1c8] sm:$0xf]
        %v414 = vld [vmem:[%s224 + $0x1cc] sm:$0xf]
        %v415 = vld [vmem:[%s224 + $0x1d0] sm:$0xf]
        %v416 = vld [vmem:[%s224 + $0x1d4] sm:$0xf]
        %v417 = vld [vmem:[%s224 + $0x1d8] sm:$0xf]
        %v418 = vld [vmem:[%s224 + $0x1dc] sm:$0xf]
        %v419 = vld [vmem:[%s224 + $0x1e0] sm:$0xf]
        %v420 = vld [vmem:[%s224 + $0x1e4] sm:$0xf]
        %v421 = vld [vmem:[%s224 + $0x1e8] sm:$0xf]
        %v422 = vld [vmem:[%s224 + $0x1ec] sm:$0xf]
        %v423 = vld [vmem:[%s224 + $0x1f0] sm:$0xf]
        %v424 = vld [vmem:[%s224 + $0x1f4] sm:$0xf]
        %v425 = vld [vmem:[%s224 + $0x1f8] sm:$0xf]
        %v426 = vld [vmem:[%s224 + $0x1fc] sm:$0xf]
        %v427 = vld [vmem:[%s224 + $0x200] sm:$0xf]
        %v428 = vld [vmem:[%s224 + $0x204] sm:$0xf]
        %v429 = vld [vmem:[%s224 + $0x208] sm:$0xf]
        %v430 = vld [vmem:[%s224 + $0x20c] sm:$0xf]
        %v431 = vld [vmem:[%s224 + $0x210] sm:$0xf]
        %v432 = vld [vmem:[%s224 + $0x214] sm:$0xf]
        %v433 = vld [vmem:[%s224 + $0x218] sm:$0xf]
        %v434 = vld [vmem:[%s224 + $0x21c] sm:$0xf]
        %v435 = vld [vmem:[%s224 + $0x220] sm:$0xf]
        %v436 = vld [vmem:[%s224 + $0x224] sm:$0xf]
        %v437 = vld [vmem:[%s224 + $0x228] sm:$0xf]
        %v438 = vld [vmem:[%s224 + $0x22c] sm:$0xf]
        %v439 = vld [vmem:[%s224 + $0x230] sm:$0xf]
        %v440 = vld [vmem:[%s224 + $0x234] sm:$0xf]
        %v441 = vld [vmem:[%s224 + $0x238] sm:$0xf]
        %v442 = vld [vmem:[%s224 + $0x23c] sm:$0xf]
        %v443 = vld [vmem:[%s224 + $0x240] sm:$0xf]
        %v444 = vld [vmem:[%s224 + $0x244] sm:$0xf]
        %v445 = vld [vmem:[%s224 + $0x248] sm:$0xf]
        %v446 = vld [vmem:[%s224 + $0x24c] sm:$0xf]
        %v447 = vld [vmem:[%s224 + $0x250] sm:$0xf]
        %v448 = vld [vmem:[%s224 + $0x254] sm:$0xf]
        %v449 = vld [vmem:[%s224 + $0x258] sm:$0xf]
        %v450 = vld [vmem:[%s224 + $0x25c] sm:$0xf]
        %v451 = vld [vmem:[%s224 + $0x260] sm:$0xf]
        %v452 = vld [vmem:[%s224 + $0x264] sm:$0xf]
        %v453 = vld [vmem:[%s224 + $0x268] sm:$0xf]
        %v454 = vld [vmem:[%s224 + $0x26c] sm:$0xf]
        %v455 = vld [vmem:[%s224 + $0x270] sm:$0xf]
        %v456 = vld [vmem:[%s224 + $0x274] sm:$0xf]
        %v457 = vld [vmem:[%s224 + $0x278] sm:$0xf]
        %v458 = vld [vmem:[%s224 + $0x27c] sm:$0xf]
        %v459 = vld [vmem:[%s224 + $0x280] sm:$0xf]
        %v460 = vld [vmem:[%s224 + $0x284] sm:$0xf]
        %v461 = vld [vmem:[%s224 + $0x288] sm:$0xf]
        %v462 = vld [vmem:[%s224 + $0x28c] sm:$0xf]
        %v463 = vld [vmem:[%s224 + $0x290] sm:$0xf]
        %v464 = vld [vmem:[%s224 + $0x294] sm:$0xf]
        %v465 = vld [vmem:[%s224 + $0x298] sm:$0xf]
        %v466 = vld [vmem:[%s224 + $0x29c] sm:$0xf]
        %v467 = vld [vmem:[%s224 + $0x2a0] sm:$0xf]
        %v468 = vld [vmem:[%s224 + $0x2a4] sm:$0xf]
        %v469 = vld [vmem:[%s224 + $0x2a8] sm:$0xf]
        %v470 = vld [vmem:[%s224 + $0x2ac] sm:$0xf]
        %v471 = vld [vmem:[%s224 + $0x2b0] sm:$0xf]
        %v472 = vld [vmem:[%s224 + $0x2b4] sm:$0xf]
        %v473 = vld [vmem:[%s224 + $0x2b8] sm:$0xf]
        %v474 = vld [vmem:[%s224 + $0x2bc] sm:$0xf]
        %v475 = vld [vmem:[%s224 + $0x2c0] sm:$0xf]
        %v476 = vld [vmem:[%s224 + $0x2c4] sm:$0xf]
        %v477 = vld [vmem:[%s224 + $0x2c8] sm:$0xf]
        %v478 = vld [vmem:[%s224 + $0x2cc] sm:$0xf]
        %v479 = vld [vmem:[%s224 + $0x2d0] sm:$0xf]
        %v480 = vld [vmem:[%s224 + $0x2d4] sm:$0xf]
        %v481 = vld [vmem:[%s224 + $0x2d8] sm:$0xf]
        %v482 = vld [vmem:[%s224 + $0x2dc] sm:$0xf]
        %v483 = vld [vmem:[%s224 + $0x2e0] sm:$0xf]
        %v484 = vld [vmem:[%s224 + $0x2e4] sm:$0xf]
        %v485 = vld [vmem:[%s224 + $0x2e8] sm:$0xf]
        %v486 = vld [vmem:[%s224 + $0x2ec] sm:$0xf]
        %v487 = vld [vmem:[%s224 + $0x2f0] sm:$0xf]
        %v488 = vld [vmem:[%s224 + $0x2f4] sm:$0xf]
        %v489 = vld [vmem:[%s224 + $0x2f8] sm:$0xf]
        %v490 = vld [vmem:[%s224 + $0x2fc] sm:$0xf]
        %v491 = vld [vmem:[%s224 + $0x300] sm:$0xf]
        %v492 = vld [vmem:[%s224 + $0x304] sm:$0xf]
        %v493 = vld [vmem:[%s224 + $0x308] sm:$0xf]
        %v494 = vld [vmem:[%s224 + $0x30c] sm:$0xf]
        %v495 = vld [vmem:[%s224 + $0x310] sm:$0xf]
        %v496 = vld [vmem:[%s224 + $0x314] sm:$0xf]
        %v497 = vld [vmem:[%s224 + $0x318] sm:$0xf]
        %v498 = vld [vmem:[%s224 + $0x31c] sm:$0xf]
        %v499 = vld [vmem:[%s224 + $0x320] sm:$0xf]
        %v500 = vld [vmem:[%s224 + $0x324] sm:$0xf]
        %v501 = vld [vmem:[%s224 + $0x328] sm:$0xf]
        %v502 = vld [vmem:[%s224 + $0x32c] sm:$0xf]
        %v503 = vld [vmem:[%s224 + $0x330] sm:$0xf]
        %v504 = vld [vmem:[%s224 + $0x334] sm:$0xf]
        %v505 = vld [vmem:[%s224 + $0x338] sm:$0xf]
        %v506 = vld [vmem:[%s224 + $0x33c] sm:$0xf]
        %v507 = vld [vmem:[%s224 + $0x340] sm:$0xf]
        %v508 = vld [vmem:[%s224 + $0x344] sm:$0xf]
        %v509 = vld [vmem:[%s224 + $0x348] sm:$0xf]
        %v510 = vld [vmem:[%s224 + $0x34c] sm:$0xf]
        %v511 = vld [vmem:[%s224 + $0x350] sm:$0xf]
        %v512 = vld [vmem:[%s224 + $0x354] sm:$0xf]
        %v513 = vld [vmem:[%s224 + $0x358] sm:$0xf]
        %v514 = vld [vmem:[%s224 + $0x35c] sm:$0xf]
        %v515 = vld [vmem:[%s224 + $0x360] sm:$0xf]
        %v516 = vld [vmem:[%s224 + $0x364] sm:$0xf]
        %v517 = vld [vmem:[%s224 + $0x368] sm:$0xf]
        %v518 = vld [vmem:[%s224 + $0x36c] sm:$0xf]
        %v519 = vld [vmem:[%s224 + $0x370] sm:$0xf]
        %v520 = vld [vmem:[%s224 + $0x374] sm:$0xf]
        %v521 = vld [vmem:[%s224 + $0x378] sm:$0xf]
        %v522 = vld [vmem:[%s224 + $0x37c] sm:$0xf]
        %v523 = vld [vmem:[%s224 + $0x380] sm:$0xf]
        %v524 = vld [vmem:[%s224 + $0x384] sm:$0xf]
        %v525 = vld [vmem:[%s224 + $0x388] sm:$0xf]
        %v526 = vld [vmem:[%s224 + $0x38c] sm:$0xf]
        %v527 = vld [vmem:[%s224 + $0x390] sm:$0xf]
        %v528 = vld [vmem:[%s224 + $0x394] sm:$0xf]
        %v529 = vld [vmem:[%s224 + $0x398] sm:$0xf]
        %v530 = vld [vmem:[%s224 + $0x39c] sm:$0xf]
        %v531 = vld [vmem:[%s224 + $0x3a0] sm:$0xf]
        %v532 = vld [vmem:[%s224 + $0x3a4] sm:$0xf]
        %v533 = vld [vmem:[%s224 + $0x3a8] sm:$0xf]
        %v534 = vld [vmem:[%s224 + $0x3ac] sm:$0xf]
        %v535 = vld [vmem:[%s224 + $0x3b0] sm:$0xf]
        %v536 = vld [vmem:[%s224 + $0x3b4] sm:$0xf]
        %v537 = vld [vmem:[%s224 + $0x3b8] sm:$0xf]
        %v538 = vld [vmem:[%s224 + $0x3bc] sm:$0xf]
        %v539 = vld [vmem:[%s224 + $0x3c0] sm:$0xf]
        %v540 = vld [vmem:[%s224 + $0x3c4] sm:$0xf]
        %v541 = vld [vmem:[%s224 + $0x3c8] sm:$0xf]
        %v542 = vld [vmem:[%s224 + $0x3cc] sm:$0xf]
        %v543 = vld [vmem:[%s224 + $0x3d0] sm:$0xf]
        %v544 = vld [vmem:[%s224 + $0x3d4] sm:$0xf]
        %v545 = vld [vmem:[%s224 + $0x3d8] sm:$0xf]
        %v546 = vld [vmem:[%s224 + $0x3dc] sm:$0xf]
        %v547 = vld [vmem:[%s224 + $0x3e0] sm:$0xf]
        %v548 = vld [vmem:[%s224 + $0x3e4] sm:$0xf]
        %v549 = vld [vmem:[%s224 + $0x3e8] sm:$0xf]
        %v550 = vld [vmem:[%s224 + $0x3ec] sm:$0xf]
        %v551 = vld [vmem:[%s224 + $0x3f0] sm:$0xf]
        %v552 = vld [vmem:[%s224 + $0x3f4] sm:$0xf]
        %v553 = vld [vmem:[%s224 + $0x3f8] sm:$0xf]
        %v554 = vld [vmem:[%s224 + $0x3fc] sm:$0xf]
        %v555 = vld [vmem:[#allocation2] sm:$0x1]
        %v557 = vlaneseq
        %v558 = vshrl.u32 %v557, 7
        %v559 = vsub.s32 0, %v558
        %v560 = vrot.slane %v555, %v559
        %v626 = vunpack.c.l.b16 %v235
        %v627 = vunpack.c.h.b16 %v235
        %v628 = vunpack.c.l.b16 %v236
        %v629 = vunpack.c.h.b16 %v236
        %v630 = vunpack.c.l.b16 %v237
        %v631 = vunpack.c.h.b16 %v237
        %v632 = vunpack.c.l.b16 %v238
        %v633 = vunpack.c.h.b16 %v238
        %v634 = vunpack.c.l.b16 %v239
        %v635 = vunpack.c.h.b16 %v239
        %v636 = vunpack.c.l.b16 %v240
        %v637 = vunpack.c.h.b16 %v240
        %v638 = vunpack.c.l.b16 %v241
        %v639 = vunpack.c.h.b16 %v241
        %v640 = vunpack.c.l.b16 %v242
        %v641 = vunpack.c.h.b16 %v242
        %v642 = vunpack.c.l.b16 %v243
        %v643 = vunpack.c.h.b16 %v243
        %v644 = vunpack.c.l.b16 %v244
        %v645 = vunpack.c.h.b16 %v244
        %v646 = vunpack.c.l.b16 %v245
        %v647 = vunpack.c.h.b16 %v245
        %v648 = vunpack.c.l.b16 %v246
        %v649 = vunpack.c.h.b16 %v246
        %v650 = vunpack.c.l.b16 %v247
        %v651 = vunpack.c.h.b16 %v247
        %v652 = vunpack.c.l.b16 %v248
        %v653 = vunpack.c.h.b16 %v248
        %v654 = vunpack.c.l.b16 %v249
        %v655 = vunpack.c.h.b16 %v249
        %v656 = vunpack.c.l.b16 %v250
        %v657 = vunpack.c.h.b16 %v250
        %v658 = vunpack.c.l.b16 %v251
        %v659 = vunpack.c.h.b16 %v251
        %v660 = vunpack.c.l.b16 %v252
        %v661 = vunpack.c.h.b16 %v252
        %v662 = vunpack.c.l.b16 %v253
        %v663 = vunpack.c.h.b16 %v253
        %v664 = vunpack.c.l.b16 %v254
        %v665 = vunpack.c.h.b16 %v254
        %v666 = vunpack.c.l.b16 %v255
        %v667 = vunpack.c.h.b16 %v255
        %v668 = vunpack.c.l.b16 %v256
        %v669 = vunpack.c.h.b16 %v256
        %v670 = vunpack.c.l.b16 %v257
        %v671 = vunpack.c.h.b16 %v257
        %v672 = vunpack.c.l.b16 %v258
        %v673 = vunpack.c.h.b16 %v258
        %v674 = vunpack.c.l.b16 %v259
        %v675 = vunpack.c.h.b16 %v259
        %v676 = vunpack.c.l.b16 %v260
        %v677 = vunpack.c.h.b16 %v260
        %v678 = vunpack.c.l.b16 %v261
        %v679 = vunpack.c.h.b16 %v261
        %v680 = vunpack.c.l.b16 %v262
        %v681 = vunpack.c.h.b16 %v262
        %v682 = vunpack.c.l.b16 %v263
        %v683 = vunpack.c.h.b16 %v263
        %v684 = vunpack.c.l.b16 %v264
        %v685 = vunpack.c.h.b16 %v264
        %v686 = vunpack.c.l.b16 %v265
        %v687 = vunpack.c.h.b16 %v265
        %v688 = vunpack.c.l.b16 %v266
        %v689 = vunpack.c.h.b16 %v266
        %v690 = vunpack.c.l.b16 %v267
        %v691 = vunpack.c.h.b16 %v267
        %v692 = vunpack.c.l.b16 %v268
        %v693 = vunpack.c.h.b16 %v268
        %v694 = vunpack.c.l.b16 %v269
        %v695 = vunpack.c.h.b16 %v269
        %v696 = vunpack.c.l.b16 %v270
        %v697 = vunpack.c.h.b16 %v270
        %v698 = vunpack.c.l.b16 %v271
        %v699 = vunpack.c.h.b16 %v271
        %v700 = vunpack.c.l.b16 %v272
        %v701 = vunpack.c.h.b16 %v272
        %v702 = vunpack.c.l.b16 %v273
        %v703 = vunpack.c.h.b16 %v273
        %v704 = vunpack.c.l.b16 %v274
        %v705 = vunpack.c.h.b16 %v274
        %v706 = vunpack.c.l.b16 %v275
        %v707 = vunpack.c.h.b16 %v275
        %v708 = vunpack.c.l.b16 %v276
        %v709 = vunpack.c.h.b16 %v276
        %v710 = vunpack.c.l.b16 %v277
        %v711 = vunpack.c.h.b16 %v277
        %v712 = vunpack.c.l.b16 %v278
        %v713 = vunpack.c.h.b16 %v278
        %v714 = vunpack.c.l.b16 %v279
        %v715 = vunpack.c.h.b16 %v279
        %v716 = vunpack.c.l.b16 %v280
        %v717 = vunpack.c.h.b16 %v280
        %v718 = vunpack.c.l.b16 %v281
        %v719 = vunpack.c.h.b16 %v281
        %v720 = vunpack.c.l.b16 %v282
        %v721 = vunpack.c.h.b16 %v282
        %v722 = vunpack.c.l.b16 %v283
        %v723 = vunpack.c.h.b16 %v283
        %v724 = vunpack.c.l.b16 %v284
        %v725 = vunpack.c.h.b16 %v284
        %v726 = vunpack.c.l.b16 %v285
        %v727 = vunpack.c.h.b16 %v285
        %v728 = vunpack.c.l.b16 %v286
        %v729 = vunpack.c.h.b16 %v286
        %v730 = vunpack.c.l.b16 %v287
        %v731 = vunpack.c.h.b16 %v287
        %v732 = vunpack.c.l.b16 %v288
        %v733 = vunpack.c.h.b16 %v288
        %v734 = vunpack.c.l.b16 %v289
        %v735 = vunpack.c.h.b16 %v289
        %v736 = vunpack.c.l.b16 %v290
        %v737 = vunpack.c.h.b16 %v290
        %v738 = vunpack.c.l.b16 %v291
        %v739 = vunpack.c.h.b16 %v291
        %v740 = vunpack.c.l.b16 %v292
        %v741 = vunpack.c.h.b16 %v292
        %v742 = vunpack.c.l.b16 %v293
        %v743 = vunpack.c.h.b16 %v293
        %v744 = vunpack.c.l.b16 %v294
        %v745 = vunpack.c.h.b16 %v294
        %v746 = vunpack.c.l.b16 %v295
        %v747 = vunpack.c.h.b16 %v295
        %v748 = vunpack.c.l.b16 %v296
        %v749 = vunpack.c.h.b16 %v296
        %v750 = vunpack.c.l.b16 %v297
        %v751 = vunpack.c.h.b16 %v297
        %v752 = vunpack.c.l.b16 %v298
        %v753 = vunpack.c.h.b16 %v298
        %v754 = vpack.c.b16 %v642, %v626
        %v755 = vpack.c.b16 %v643, %v627
        %v756 = vpack.c.b16 %v644, %v628
        %v757 = vpack.c.b16 %v645, %v629
        %v758 = vpack.c.b16 %v646, %v630
        %v759 = vpack.c.b16 %v647, %v631
        %v760 = vpack.c.b16 %v648, %v632
        %v761 = vpack.c.b16 %v649, %v633
        %v762 = vpack.c.b16 %v650, %v634
        %v763 = vpack.c.b16 %v651, %v635
        %v764 = vpack.c.b16 %v652, %v636
        %v765 = vpack.c.b16 %v653, %v637
        %v766 = vpack.c.b16 %v654, %v638
        %v767 = vpack.c.b16 %v655, %v639
        %v768 = vpack.c.b16 %v656, %v640
        %v769 = vpack.c.b16 %v657, %v641
        %v770 = vpack.c.b16 %v674, %v658
        %v771 = vpack.c.b16 %v675, %v659
        %v772 = vpack.c.b16 %v676, %v660
        %v773 = vpack.c.b16 %v677, %v661
        %v774 = vpack.c.b16 %v678, %v662
        %v775 = vpack.c.b16 %v679, %v663
        %v776 = vpack.c.b16 %v680, %v664
        %v777 = vpack.c.b16 %v681, %v665
        %v778 = vpack.c.b16 %v682, %v666
        %v779 = vpack.c.b16 %v683, %v667
        %v780 = vpack.c.b16 %v684, %v668
        %v781 = vpack.c.b16 %v685, %v669
        %v782 = vpack.c.b16 %v686, %v670
        %v783 = vpack.c.b16 %v687, %v671
        %v784 = vpack.c.b16 %v688, %v672
        %v785 = vpack.c.b16 %v689, %v673
        %v786 = vpack.c.b16 %v706, %v690
        %v787 = vpack.c.b16 %v707, %v691
        %v788 = vpack.c.b16 %v708, %v692
        %v789 = vpack.c.b16 %v709, %v693
        %v790 = vpack.c.b16 %v710, %v694
        %v791 = vpack.c.b16 %v711, %v695
        %v792 = vpack.c.b16 %v712, %v696
        %v793 = vpack.c.b16 %v713, %v697
        %v794 = vpack.c.b16 %v714, %v698
        %v795 = vpack.c.b16 %v715, %v699
        %v796 = vpack.c.b16 %v716, %v700
        %v797 = vpack.c.b16 %v717, %v701
        %v798 = vpack.c.b16 %v718, %v702
        %v799 = vpack.c.b16 %v719, %v703
        %v800 = vpack.c.b16 %v720, %v704
        %v801 = vpack.c.b16 %v721, %v705
        %v802 = vpack.c.b16 %v738, %v722
        %v803 = vpack.c.b16 %v739, %v723
        %v804 = vpack.c.b16 %v740, %v724
        %v805 = vpack.c.b16 %v741, %v725
        %v806 = vpack.c.b16 %v742, %v726
        %v807 = vpack.c.b16 %v743, %v727
        %v808 = vpack.c.b16 %v744, %v728
        %v809 = vpack.c.b16 %v745, %v729
        %v810 = vpack.c.b16 %v746, %v730
        %v811 = vpack.c.b16 %v747, %v731
        %v812 = vpack.c.b16 %v748, %v732
        %v813 = vpack.c.b16 %v749, %v733
        %v814 = vpack.c.b16 %v750, %v734
        %v815 = vpack.c.b16 %v751, %v735
        %v816 = vpack.c.b16 %v752, %v736
        %v817 = vpack.c.b16 %v753, %v737
        %v1138 = vunpack.c.l.b16 %v299
        %v1139 = vunpack.c.l.b16 %v300
        %v1140 = vunpack.c.l.b16 %v301
        %v1141 = vunpack.c.l.b16 %v302
        %v1142 = vunpack.c.l.b16 %v303
        %v1143 = vunpack.c.l.b16 %v304
        %v1144 = vunpack.c.l.b16 %v305
        %v1145 = vunpack.c.l.b16 %v306
        %v1146 = vunpack.c.l.b16 %v307
        %v1147 = vunpack.c.l.b16 %v308
        %v1148 = vunpack.c.l.b16 %v309
        %v1149 = vunpack.c.l.b16 %v310
        %v1150 = vunpack.c.l.b16 %v311
        %v1151 = vunpack.c.l.b16 %v312
        %v1152 = vunpack.c.l.b16 %v313
        %v1153 = vunpack.c.l.b16 %v314
        %v1154 = vunpack.c.l.b16 %v315
        %v1155 = vunpack.c.l.b16 %v316
        %v1156 = vunpack.c.l.b16 %v317
        %v1157 = vunpack.c.l.b16 %v318
        %v1158 = vunpack.c.l.b16 %v319
        %v1159 = vunpack.c.l.b16 %v320
        %v1160 = vunpack.c.l.b16 %v321
        %v1161 = vunpack.c.l.b16 %v322
        %v1162 = vunpack.c.l.b16 %v323
        %v1163 = vunpack.c.l.b16 %v324
        %v1164 = vunpack.c.l.b16 %v325
        %v1165 = vunpack.c.l.b16 %v326
        %v1166 = vunpack.c.l.b16 %v327
        %v1167 = vunpack.c.l.b16 %v328
        %v1168 = vunpack.c.l.b16 %v329
        %v1169 = vunpack.c.l.b16 %v330
        %v1170 = vunpack.c.l.b16 %v331
        %v1171 = vunpack.c.l.b16 %v332
        %v1172 = vunpack.c.l.b16 %v333
        %v1173 = vunpack.c.l.b16 %v334
        %v1174 = vunpack.c.l.b16 %v335
        %v1175 = vunpack.c.l.b16 %v336
        %v1176 = vunpack.c.l.b16 %v337
        %v1177 = vunpack.c.l.b16 %v338
        %v1178 = vunpack.c.l.b16 %v339
        %v1179 = vunpack.c.l.b16 %v340
        %v1180 = vunpack.c.l.b16 %v341
        %v1181 = vunpack.c.l.b16 %v342
        %v1182 = vunpack.c.l.b16 %v343
        %v1183 = vunpack.c.l.b16 %v344
        %v1184 = vunpack.c.l.b16 %v345
        %v1185 = vunpack.c.l.b16 %v346
        %v1186 = vunpack.c.l.b16 %v347
        %v1187 = vunpack.c.l.b16 %v348
        %v1188 = vunpack.c.l.b16 %v349
        %v1189 = vunpack.c.l.b16 %v350
        %v1190 = vunpack.c.l.b16 %v351
        %v1191 = vunpack.c.l.b16 %v352
        %v1192 = vunpack.c.l.b16 %v353
        %v1193 = vunpack.c.l.b16 %v354
        %v1194 = vunpack.c.l.b16 %v355
        %v1195 = vunpack.c.l.b16 %v356
        %v1196 = vunpack.c.l.b16 %v357
        %v1197 = vunpack.c.l.b16 %v358
        %v1198 = vunpack.c.l.b16 %v359
        %v1199 = vunpack.c.l.b16 %v360
        %v1200 = vunpack.c.l.b16 %v361
        %v1201 = vunpack.c.l.b16 %v362
        %v1202 = vunpack.c.l.b16 %v363
        %v1203 = vunpack.c.l.b16 %v364
        %v1204 = vunpack.c.l.b16 %v365
        %v1205 = vunpack.c.l.b16 %v366
        %v1206 = vunpack.c.l.b16 %v367
        %v1207 = vunpack.c.l.b16 %v368
        %v1208 = vunpack.c.l.b16 %v369
        %v1209 = vunpack.c.l.b16 %v370
        %v1210 = vunpack.c.l.b16 %v371
        %v1211 = vunpack.c.l.b16 %v372
        %v1212 = vunpack.c.l.b16 %v373
        %v1213 = vunpack.c.l.b16 %v374
        %v1214 = vunpack.c.l.b16 %v375
        %v1215 = vunpack.c.l.b16 %v376
        %v1216 = vunpack.c.l.b16 %v377
        %v1217 = vunpack.c.l.b16 %v378
        %v1218 = vunpack.c.l.b16 %v379
        %v1219 = vunpack.c.l.b16 %v380
        %v1220 = vunpack.c.l.b16 %v381
        %v1221 = vunpack.c.l.b16 %v382
        %v1222 = vunpack.c.l.b16 %v383
        %v1223 = vunpack.c.l.b16 %v384
        %v1224 = vunpack.c.l.b16 %v385
        %v1225 = vunpack.c.l.b16 %v386
        %v1226 = vunpack.c.l.b16 %v387
        %v1227 = vunpack.c.l.b16 %v388
        %v1228 = vunpack.c.l.b16 %v389
        %v1229 = vunpack.c.l.b16 %v390
        %v1230 = vunpack.c.l.b16 %v391
        %v1231 = vunpack.c.l.b16 %v392
        %v1232 = vunpack.c.l.b16 %v393
        %v1233 = vunpack.c.l.b16 %v394
        %v1234 = vunpack.c.l.b16 %v395
        %v1235 = vunpack.c.l.b16 %v396
        %v1236 = vunpack.c.l.b16 %v397
        %v1237 = vunpack.c.l.b16 %v398
        %v1238 = vunpack.c.l.b16 %v399
        %v1239 = vunpack.c.l.b16 %v400
        %v1240 = vunpack.c.l.b16 %v401
        %v1241 = vunpack.c.l.b16 %v402
        %v1242 = vunpack.c.l.b16 %v403
        %v1243 = vunpack.c.l.b16 %v404
        %v1244 = vunpack.c.l.b16 %v405
        %v1245 = vunpack.c.l.b16 %v406
        %v1246 = vunpack.c.l.b16 %v407
        %v1247 = vunpack.c.l.b16 %v408
        %v1248 = vunpack.c.l.b16 %v409
        %v1249 = vunpack.c.l.b16 %v410
        %v1250 = vunpack.c.l.b16 %v411
        %v1251 = vunpack.c.l.b16 %v412
        %v1252 = vunpack.c.l.b16 %v413
        %v1253 = vunpack.c.l.b16 %v414
        %v1254 = vunpack.c.l.b16 %v415
        %v1255 = vunpack.c.l.b16 %v416
        %v1256 = vunpack.c.l.b16 %v417
        %v1257 = vunpack.c.l.b16 %v418
        %v1258 = vunpack.c.l.b16 %v419
        %v1259 = vunpack.c.l.b16 %v420
        %v1260 = vunpack.c.l.b16 %v421
        %v1261 = vunpack.c.l.b16 %v422
        %v1262 = vunpack.c.l.b16 %v423
        %v1263 = vunpack.c.l.b16 %v424
        %v1264 = vunpack.c.l.b16 %v425
        %v1265 = vunpack.c.l.b16 %v426
        %v1266 = vunpack.c.l.b16 %v427
        %v1267 = vunpack.c.l.b16 %v428
        %v1268 = vunpack.c.l.b16 %v429
        %v1269 = vunpack.c.l.b16 %v430
        %v1270 = vunpack.c.l.b16 %v431
        %v1271 = vunpack.c.l.b16 %v432
        %v1272 = vunpack.c.l.b16 %v433
        %v1273 = vunpack.c.l.b16 %v434
        %v1274 = vunpack.c.l.b16 %v435
        %v1275 = vunpack.c.l.b16 %v436
        %v1276 = vunpack.c.l.b16 %v437
        %v1277 = vunpack.c.l.b16 %v438
        %v1278 = vunpack.c.l.b16 %v439
        %v1279 = vunpack.c.l.b16 %v440
        %v1280 = vunpack.c.l.b16 %v441
        %v1281 = vunpack.c.l.b16 %v442
        %v1282 = vunpack.c.l.b16 %v443
        %v1283 = vunpack.c.l.b16 %v444
        %v1284 = vunpack.c.l.b16 %v445
        %v1285 = vunpack.c.l.b16 %v446
        %v1286 = vunpack.c.l.b16 %v447
        %v1287 = vunpack.c.l.b16 %v448
        %v1288 = vunpack.c.l.b16 %v449
        %v1289 = vunpack.c.l.b16 %v450
        %v1290 = vunpack.c.l.b16 %v451
        %v1291 = vunpack.c.l.b16 %v452
        %v1292 = vunpack.c.l.b16 %v453
        %v1293 = vunpack.c.l.b16 %v454
        %v1294 = vunpack.c.l.b16 %v455
        %v1295 = vunpack.c.l.b16 %v456
        %v1296 = vunpack.c.l.b16 %v457
        %v1297 = vunpack.c.l.b16 %v458
        %v1298 = vunpack.c.l.b16 %v459
        %v1299 = vunpack.c.l.b16 %v460
        %v1300 = vunpack.c.l.b16 %v461
        %v1301 = vunpack.c.l.b16 %v462
        %v1302 = vunpack.c.l.b16 %v463
        %v1303 = vunpack.c.l.b16 %v464
        %v1304 = vunpack.c.l.b16 %v465
        %v1305 = vunpack.c.l.b16 %v466
        %v1306 = vunpack.c.l.b16 %v467
        %v1307 = vunpack.c.l.b16 %v468
        %v1308 = vunpack.c.l.b16 %v469
        %v1309 = vunpack.c.l.b16 %v470
        %v1310 = vunpack.c.l.b16 %v471
        %v1311 = vunpack.c.l.b16 %v472
        %v1312 = vunpack.c.l.b16 %v473
        %v1313 = vunpack.c.l.b16 %v474
        %v1314 = vunpack.c.l.b16 %v475
        %v1315 = vunpack.c.l.b16 %v476
        %v1316 = vunpack.c.l.b16 %v477
        %v1317 = vunpack.c.l.b16 %v478
        %v1318 = vunpack.c.l.b16 %v479
        %v1319 = vunpack.c.l.b16 %v480
        %v1320 = vunpack.c.l.b16 %v481
        %v1321 = vunpack.c.l.b16 %v482
        %v1322 = vunpack.c.l.b16 %v483
        %v1323 = vunpack.c.l.b16 %v484
        %v1324 = vunpack.c.l.b16 %v485
        %v1325 = vunpack.c.l.b16 %v486
        %v1326 = vunpack.c.l.b16 %v487
        %v1327 = vunpack.c.l.b16 %v488
        %v1328 = vunpack.c.l.b16 %v489
        %v1329 = vunpack.c.l.b16 %v490
        %v1330 = vunpack.c.l.b16 %v491
        %v1331 = vunpack.c.l.b16 %v492
        %v1332 = vunpack.c.l.b16 %v493
        %v1333 = vunpack.c.l.b16 %v494
        %v1334 = vunpack.c.l.b16 %v495
        %v1335 = vunpack.c.l.b16 %v496
        %v1336 = vunpack.c.l.b16 %v497
        %v1337 = vunpack.c.l.b16 %v498
        %v1338 = vunpack.c.l.b16 %v499
        %v1339 = vunpack.c.l.b16 %v500
        %v1340 = vunpack.c.l.b16 %v501
        %v1341 = vunpack.c.l.b16 %v502
        %v1342 = vunpack.c.l.b16 %v503
        %v1343 = vunpack.c.l.b16 %v504
        %v1344 = vunpack.c.l.b16 %v505
        %v1345 = vunpack.c.l.b16 %v506
        %v1346 = vunpack.c.l.b16 %v507
        %v1347 = vunpack.c.l.b16 %v508
        %v1348 = vunpack.c.l.b16 %v509
        %v1349 = vunpack.c.l.b16 %v510
        %v1350 = vunpack.c.l.b16 %v511
        %v1351 = vunpack.c.l.b16 %v512
        %v1352 = vunpack.c.l.b16 %v513
        %v1353 = vunpack.c.l.b16 %v514
        %v1354 = vunpack.c.l.b16 %v515
        %v1355 = vunpack.c.l.b16 %v516
        %v1356 = vunpack.c.l.b16 %v517
        %v1357 = vunpack.c.l.b16 %v518
        %v1358 = vunpack.c.l.b16 %v519
        %v1359 = vunpack.c.l.b16 %v520
        %v1360 = vunpack.c.l.b16 %v521
        %v1361 = vunpack.c.l.b16 %v522
        %v1362 = vunpack.c.l.b16 %v523
        %v1363 = vunpack.c.l.b16 %v524
        %v1364 = vunpack.c.l.b16 %v525
        %v1365 = vunpack.c.l.b16 %v526
        %v1366 = vunpack.c.l.b16 %v527
        %v1367 = vunpack.c.l.b16 %v528
        %v1368 = vunpack.c.l.b16 %v529
        %v1369 = vunpack.c.l.b16 %v530
        %v1370 = vunpack.c.l.b16 %v531
        %v1371 = vunpack.c.l.b16 %v532
        %v1372 = vunpack.c.l.b16 %v533
        %v1373 = vunpack.c.l.b16 %v534
        %v1374 = vunpack.c.l.b16 %v535
        %v1375 = vunpack.c.l.b16 %v536
        %v1376 = vunpack.c.l.b16 %v537
        %v1377 = vunpack.c.l.b16 %v538
        %v1378 = vunpack.c.l.b16 %v539
        %v1379 = vunpack.c.l.b16 %v540
        %v1380 = vunpack.c.l.b16 %v541
        %v1381 = vunpack.c.l.b16 %v542
        %v1382 = vunpack.c.l.b16 %v543
        %v1383 = vunpack.c.l.b16 %v544
        %v1384 = vunpack.c.l.b16 %v545
        %v1385 = vunpack.c.l.b16 %v546
        %v1386 = vunpack.c.l.b16 %v547
        %v1387 = vunpack.c.l.b16 %v548
        %v1388 = vunpack.c.l.b16 %v549
        %v1389 = vunpack.c.l.b16 %v550
        %v1390 = vunpack.c.l.b16 %v551
        %v1391 = vunpack.c.l.b16 %v552
        %v1392 = vunpack.c.l.b16 %v553
        %v1393 = vunpack.c.l.b16 %v554
        %v1394 = vpack.c.b16 %v1139, %v1138
        %v1395 = vpack.c.b16 %v1141, %v1140
        %v1396 = vpack.c.b16 %v1143, %v1142
        %v1397 = vpack.c.b16 %v1145, %v1144
        %v1398 = vpack.c.b16 %v1147, %v1146
        %v1399 = vpack.c.b16 %v1149, %v1148
        %v1400 = vpack.c.b16 %v1151, %v1150
        %v1401 = vpack.c.b16 %v1153, %v1152
        %v1402 = vpack.c.b16 %v1155, %v1154
        %v1403 = vpack.c.b16 %v1157, %v1156
        %v1404 = vpack.c.b16 %v1159, %v1158
        %v1405 = vpack.c.b16 %v1161, %v1160
        %v1406 = vpack.c.b16 %v1163, %v1162
        %v1407 = vpack.c.b16 %v1165, %v1164
        %v1408 = vpack.c.b16 %v1167, %v1166
        %v1409 = vpack.c.b16 %v1169, %v1168
        %v1410 = vpack.c.b16 %v1171, %v1170
        %v1411 = vpack.c.b16 %v1173, %v1172
        %v1412 = vpack.c.b16 %v1175, %v1174
        %v1413 = vpack.c.b16 %v1177, %v1176
        %v1414 = vpack.c.b16 %v1179, %v1178
        %v1415 = vpack.c.b16 %v1181, %v1180
        %v1416 = vpack.c.b16 %v1183, %v1182
        %v1417 = vpack.c.b16 %v1185, %v1184
        %v1418 = vpack.c.b16 %v1187, %v1186
        %v1419 = vpack.c.b16 %v1189, %v1188
        %v1420 = vpack.c.b16 %v1191, %v1190
        %v1421 = vpack.c.b16 %v1193, %v1192
        %v1422 = vpack.c.b16 %v1195, %v1194
        %v1423 = vpack.c.b16 %v1197, %v1196
        %v1424 = vpack.c.b16 %v1199, %v1198
        %v1425 = vpack.c.b16 %v1201, %v1200
        %v1426 = vpack.c.b16 %v1203, %v1202
        %v1427 = vpack.c.b16 %v1205, %v1204
        %v1428 = vpack.c.b16 %v1207, %v1206
        %v1429 = vpack.c.b16 %v1209, %v1208
        %v1430 = vpack.c.b16 %v1211, %v1210
        %v1431 = vpack.c.b16 %v1213, %v1212
        %v1432 = vpack.c.b16 %v1215, %v1214
        %v1433 = vpack.c.b16 %v1217, %v1216
        %v1434 = vpack.c.b16 %v1219, %v1218
        %v1435 = vpack.c.b16 %v1221, %v1220
        %v1436 = vpack.c.b16 %v1223, %v1222
        %v1437 = vpack.c.b16 %v1225, %v1224
        %v1438 = vpack.c.b16 %v1227, %v1226
        %v1439 = vpack.c.b16 %v1229, %v1228
        %v1440 = vpack.c.b16 %v1231, %v1230
        %v1441 = vpack.c.b16 %v1233, %v1232
        %v1442 = vpack.c.b16 %v1235, %v1234
        %v1443 = vpack.c.b16 %v1237, %v1236
        %v1444 = vpack.c.b16 %v1239, %v1238
        %v1445 = vpack.c.b16 %v1241, %v1240
        %v1446 = vpack.c.b16 %v1243, %v1242
        %v1447 = vpack.c.b16 %v1245, %v1244
        %v1448 = vpack.c.b16 %v1247, %v1246
        %v1449 = vpack.c.b16 %v1249, %v1248
        %v1450 = vpack.c.b16 %v1251, %v1250
        %v1451 = vpack.c.b16 %v1253, %v1252
        %v1452 = vpack.c.b16 %v1255, %v1254
        %v1453 = vpack.c.b16 %v1257, %v1256
        %v1454 = vpack.c.b16 %v1259, %v1258
        %v1455 = vpack.c.b16 %v1261, %v1260
        %v1456 = vpack.c.b16 %v1263, %v1262
        %v1457 = vpack.c.b16 %v1265, %v1264
        %v1458 = vpack.c.b16 %v1267, %v1266
        %v1459 = vpack.c.b16 %v1269, %v1268
        %v1460 = vpack.c.b16 %v1271, %v1270
        %v1461 = vpack.c.b16 %v1273, %v1272
        %v1462 = vpack.c.b16 %v1275, %v1274
        %v1463 = vpack.c.b16 %v1277, %v1276
        %v1464 = vpack.c.b16 %v1279, %v1278
        %v1465 = vpack.c.b16 %v1281, %v1280
        %v1466 = vpack.c.b16 %v1283, %v1282
        %v1467 = vpack.c.b16 %v1285, %v1284
        %v1468 = vpack.c.b16 %v1287, %v1286
        %v1469 = vpack.c.b16 %v1289, %v1288
        %v1470 = vpack.c.b16 %v1291, %v1290
        %v1471 = vpack.c.b16 %v1293, %v1292
        %v1472 = vpack.c.b16 %v1295, %v1294
        %v1473 = vpack.c.b16 %v1297, %v1296
        %v1474 = vpack.c.b16 %v1299, %v1298
        %v1475 = vpack.c.b16 %v1301, %v1300
        %v1476 = vpack.c.b16 %v1303, %v1302
        %v1477 = vpack.c.b16 %v1305, %v1304
        %v1478 = vpack.c.b16 %v1307, %v1306
        %v1479 = vpack.c.b16 %v1309, %v1308
        %v1480 = vpack.c.b16 %v1311, %v1310
        %v1481 = vpack.c.b16 %v1313, %v1312
        %v1482 = vpack.c.b16 %v1315, %v1314
        %v1483 = vpack.c.b16 %v1317, %v1316
        %v1484 = vpack.c.b16 %v1319, %v1318
        %v1485 = vpack.c.b16 %v1321, %v1320
        %v1486 = vpack.c.b16 %v1323, %v1322
        %v1487 = vpack.c.b16 %v1325, %v1324
        %v1488 = vpack.c.b16 %v1327, %v1326
        %v1489 = vpack.c.b16 %v1329, %v1328
        %v1490 = vpack.c.b16 %v1331, %v1330
        %v1491 = vpack.c.b16 %v1333, %v1332
        %v1492 = vpack.c.b16 %v1335, %v1334
        %v1493 = vpack.c.b16 %v1337, %v1336
        %v1494 = vpack.c.b16 %v1339, %v1338
        %v1495 = vpack.c.b16 %v1341, %v1340
        %v1496 = vpack.c.b16 %v1343, %v1342
        %v1497 = vpack.c.b16 %v1345, %v1344
        %v1498 = vpack.c.b16 %v1347, %v1346
        %v1499 = vpack.c.b16 %v1349, %v1348
        %v1500 = vpack.c.b16 %v1351, %v1350
        %v1501 = vpack.c.b16 %v1353, %v1352
        %v1502 = vpack.c.b16 %v1355, %v1354
        %v1503 = vpack.c.b16 %v1357, %v1356
        %v1504 = vpack.c.b16 %v1359, %v1358
        %v1505 = vpack.c.b16 %v1361, %v1360
        %v1506 = vpack.c.b16 %v1363, %v1362
        %v1507 = vpack.c.b16 %v1365, %v1364
        %v1508 = vpack.c.b16 %v1367, %v1366
        %v1509 = vpack.c.b16 %v1369, %v1368
        %v1510 = vpack.c.b16 %v1371, %v1370
        %v1511 = vpack.c.b16 %v1373, %v1372
        %v1512 = vpack.c.b16 %v1375, %v1374
        %v1513 = vpack.c.b16 %v1377, %v1376
        %v1514 = vpack.c.b16 %v1379, %v1378
        %v1515 = vpack.c.b16 %v1381, %v1380
        %v1516 = vpack.c.b16 %v1383, %v1382
        %v1517 = vpack.c.b16 %v1385, %v1384
        %v1518 = vpack.c.b16 %v1387, %v1386
        %v1519 = vpack.c.b16 %v1389, %v1388
        %v1520 = vpack.c.b16 %v1391, %v1390
        %v1521 = vpack.c.b16 %v1393, %v1392
        %1650 = vmatprep.subr.bf16.mxu0 0
        %1651 = vmatpush1.bf16.msra.mxu0 %v1394
        %1652 = vmatprep.subr.bf16.mxu0 0
        %1653 = vmatpush1.bf16.msra.mxu0 %v1395
        %1654 = vmatprep.subr.bf16.mxu0 0
        %1655 = vmatpush1.bf16.msra.mxu0 %v1396
        %1656 = vmatprep.subr.bf16.mxu0 0
        %1657 = vmatpush1.bf16.msra.mxu0 %v1397
        %1658 = vmatprep.subr.bf16.mxu0 0
        %1659 = vmatpush1.bf16.msra.mxu0 %v1398
        %1660 = vmatprep.subr.bf16.mxu0 0
        %1661 = vmatpush1.bf16.msra.mxu0 %v1399
        %1662 = vmatprep.subr.bf16.mxu0 0
        %1663 = vmatpush1.bf16.msra.mxu0 %v1400
        %1664 = vmatprep.subr.bf16.mxu0 0
        %1665 = vmatpush1.bf16.msra.mxu0 %v1401
        %1666 = vmatprep.subr.bf16.mxu0 0
        %1667 = vmatpush1.bf16.msra.mxu0 %v1402
        %1668 = vmatprep.subr.bf16.mxu0 0
        %1669 = vmatpush1.bf16.msra.mxu0 %v1403
        %1670 = vmatprep.subr.bf16.mxu0 0
        %1671 = vmatpush1.bf16.msra.mxu0 %v1404
        %1672 = vmatprep.subr.bf16.mxu0 0
        %1673 = vmatpush1.bf16.msra.mxu0 %v1405
        %1674 = vmatprep.subr.bf16.mxu0 0
        %1675 = vmatpush1.bf16.msra.mxu0 %v1406
        %1676 = vmatprep.subr.bf16.mxu0 0
        %1677 = vmatpush1.bf16.msra.mxu0 %v1407
        %1678 = vmatprep.subr.bf16.mxu0 0
        %1679 = vmatpush1.bf16.msra.mxu0 %v1408
        %1680 = vmatprep.subr.bf16.mxu0 0
        %1681 = vmatpush1.bf16.msra.mxu0 %v1409
        %1682 = vmatprep.mubr.bf16.mxu0 %v755
        %1683 = vmatmul.mubr.bf16.gmra.mrb[0].mxu0 %v754
        %v1684 = vpop.f32.mrb[0].mxu0
        %v1685 = vadd.f32 %v560, %v1684
        %v1686 = vpop.f32.mrb[0].mxu0
        %v1687 = vpop.f32.mrb[0].mxu0
        %v1688 = vadd.f32 %v560, %v1687
        %v1689 = vpop.f32.mrb[0].mxu0
        %1690 = vmatprep.mubr.bf16.mxu0 %v771
        %1691 = vmatmul.mubr.bf16.gmra.mrb[0].mxu0 %v770
        %v1692 = vpop.f32.mrb[0].mxu0
        %v1693 = vadd.f32 %v560, %v1692
        %v1694 = vpop.f32.mrb[0].mxu0
        %v1695 = vpop.f32.mrb[0].mxu0
        %v1696 = vadd.f32 %v560, %v1695
        %v1697 = vpop.f32.mrb[0].mxu0
        %1698 = vmatprep.mubr.bf16.mxu0 %v787
        %1699 = vmatmul.mubr.bf16.gmra.mrb[0].mxu0 %v786
        %v1700 = vpop.f32.mrb[0].mxu0
        %v1701 = vadd.f32 %v560, %v1700
        %v1702 = vpop.f32.mrb[0].mxu0
        %v1703 = vpop.f32.mrb[0].mxu0
        %v1704 = vadd.f32 %v560, %v1703
        %v1705 = vpop.f32.mrb[0].mxu0
        %1706 = vmatprep.mubr.bf16.mxu0 %v803
        %1707 = vmatmul.mubr.bf16.gmra.mrb[0].mxu0 %v802
        %v1708 = vpop.f32.mrb[0].mxu0
        %v1709 = vadd.f32 %v560, %v1708
        %v1710 = vpop.f32.mrb[0].mxu0
        %v1711 = vpop.f32.mrb[0].mxu0
        %v1712 = vadd.f32 %v560, %v1711
        %v1713 = vpop.f32.mrb[0].mxu0
        %1714 = vdwg.mxu0
        %1715 = vmatprep.subr.bf16.mxu0 0
        %1716 = vmatpush1.bf16.msra.mxu0 %v1410
        %1717 = vmatprep.subr.bf16.mxu0 0
        %1718 = vmatpush1.bf16.msra.mxu0 %v1411
        %1719 = vmatprep.subr.bf16.mxu0 0
        %1720 = vmatpush1.bf16.msra.mxu0 %v1412
        %1721 = vmatprep.subr.bf16.mxu0 0
        %1722 = vmatpush1.bf16.msra.mxu0 %v1413
        %1723 = vmatprep.subr.bf16.mxu0 0
        %1724 = vmatpush1.bf16.msra.mxu0 %v1414
        %1725 = vmatprep.subr.bf16.mxu0 0
        %1726 = vmatpush1.bf16.msra.mxu0 %v1415
        %1727 = vmatprep.subr.bf16.mxu0 0
        %1728 = vmatpush1.bf16.msra.mxu0 %v1416
        %1729 = vmatprep.subr.bf16.mxu0 0
        %1730 = vmatpush1.bf16.msra.mxu0 %v1417
        %1731 = vmatprep.subr.bf16.mxu0 0
        %1732 = vmatpush1.bf16.msra.mxu0 %v1418
        %1733 = vmatprep.subr.bf16.mxu0 0
        %1734 = vmatpush1.bf16.msra.mxu0 %v1419
        %1735 = vmatprep.subr.bf16.mxu0 0
        %1736 = vmatpush1.bf16.msra.mxu0 %v1420
        %1737 = vmatprep.subr.bf16.mxu0 0
        %1738 = vmatpush1.bf16.msra.mxu0 %v1421
        %1739 = vmatprep.subr.bf16.mxu0 0
        %1740 = vmatpush1.bf16.msra.mxu0 %v1422
        %1741 = vmatprep.subr.bf16.mxu0 0
        %1742 = vmatpush1.bf16.msra.mxu0 %v1423
        %1743 = vmatprep.subr.bf16.mxu0 0
        %1744 = vmatpush1.bf16.msra.mxu0 %v1424
        %1745 = vmatprep.subr.bf16.mxu0 0
        %1746 = vmatpush1.bf16.msra.mxu0 %v1425
        %1747 = vmatprep.mubr.bf16.mxu0 %v757
        %1748 = vmatmul.mubr.bf16.gmra.mrb[0].mxu0 %v756
        %v1749 = vpop.f32.mrb[0].mxu0
        %v1750 = vadd.f32 %v1685, %v1749
        %v1751 = vpop.f32.mrb[0].mxu0
        %v1752 = vpop.f32.mrb[0].mxu0
        %v1753 = vadd.f32 %v1688, %v1752
        %v1754 = vpop.f32.mrb[0].mxu0
        %1755 = vmatprep.mubr.bf16.mxu0 %v773
        %1756 = vmatmul.mubr.bf16.gmra.mrb[0].mxu0 %v772
        %v1757 = vpop.f32.mrb[0].mxu0
        %v1758 = vadd.f32 %v1693, %v1757
        %v1759 = vpop.f32.mrb[0].mxu0
        %v1760 = vpop.f32.mrb[0].mxu0
        %v1761 = vadd.f32 %v1696, %v1760
        %v1762 = vpop.f32.mrb[0].mxu0
        %1763 = vmatprep.mubr.bf16.mxu0 %v789
        %1764 = vmatmul.mubr.bf16.gmra.mrb[0].mxu0 %v788
        %v1765 = vpop.f32.mrb[0].mxu0
        %v1766 = vadd.f32 %v1701, %v1765
        %v1767 = vpop.f32.mrb[0].mxu0
        %v1768 = vpop.f32.mrb[0].mxu0
        %v1769 = vadd.f32 %v1704, %v1768
        %v1770 = vpop.f32.mrb[0].mxu0
        %1771 = vmatprep.mubr.bf16.mxu0 %v805
        %1772 = vmatmul.mubr.bf16.gmra.mrb[0].mxu0 %v804
        %v1773 = vpop.f32.mrb[0].mxu0
        %v1774 = vadd.f32 %v1709, %v1773
        %v1775 = vpop.f32.mrb[0].mxu0
        %v1776 = vpop.f32.mrb[0].mxu0
        %v1777 = vadd.f32 %v1712, %v1776
        %v1778 = vpop.f32.mrb[0].mxu0
        %1779 = vdwg.mxu0
        %1780 = vmatprep.subr.bf16.mxu0 0
        %1781 = vmatpush1.bf16.msra.mxu0 %v1426
        %1782 = vmatprep.subr.bf16.mxu0 0
        %1783 = vmatpush1.bf16.msra.mxu0 %v1427
        %1784 = vmatprep.subr.bf16.mxu0 0
        %1785 = vmatpush1.bf16.msra.mxu0 %v1428
        %1786 = vmatprep.subr.bf16.mxu0 0
        %1787 = vmatpush1.bf16.msra.mxu0 %v1429
        %1788 = vmatprep.subr.bf16.mxu0 0
        %1789 = vmatpush1.bf16.msra.mxu0 %v1430
        %1790 = vmatprep.subr.bf16.mxu0 0
        %1791 = vmatpush1.bf16.msra.mxu0 %v1431
        %1792 = vmatprep.subr.bf16.mxu0 0
        %1793 = vmatpush1.bf16.msra.mxu0 %v1432
        %1794 = vmatprep.subr.bf16.mxu0 0
        %1795 = vmatpush1.bf16.msra.mxu0 %v1433
        %1796 = vmatprep.subr.bf16.mxu0 0
        %1797 = vmatpush1.bf16.msra.mxu0 %v1434
        %1798 = vmatprep.subr.bf16.mxu0 0
        %1799 = vmatpush1.bf16.msra.mxu0 %v1435
        %1800 = vmatprep.subr.bf16.mxu0 0
        %1801 = vmatpush1.bf16.msra.mxu0 %v1436
        %1802 = vmatprep.subr.bf16.mxu0 0
        %1803 = vmatpush1.bf16.msra.mxu0 %v1437
        %1804 = vmatprep.subr.bf16.mxu0 0
        %1805 = vmatpush1.bf16.msra.mxu0 %v1438
        %1806 = vmatprep.subr.bf16.mxu0 0
        %1807 = vmatpush1.bf16.msra.mxu0 %v1439
        %1808 = vmatprep.subr.bf16.mxu0 0
        %1809 = vmatpush1.bf16.msra.mxu0 %v1440
        %1810 = vmatprep.subr.bf16.mxu0 0
        %1811 = vmatpush1.bf16.msra.mxu0 %v1441
        %1812 = vmatprep.mubr.bf16.mxu0 %v759
        %1813 = vmatmul.mubr.bf16.gmra.mrb[0].mxu0 %v758
        %v1814 = vpop.f32.mrb[0].mxu0
        %v1815 = vadd.f32 %v1750, %v1814
        %v1816 = vpop.f32.mrb[0].mxu0
        %v1817 = vpop.f32.mrb[0].mxu0
        %v1818 = vadd.f32 %v1753, %v1817
        %v1819 = vpop.f32.mrb[0].mxu0
        %1820 = vmatprep.mubr.bf16.mxu0 %v775
        %1821 = vmatmul.mubr.bf16.gmra.mrb[0].mxu0 %v774
        %v1822 = vpop.f32.mrb[0].mxu0
        %v1823 = vadd.f32 %v1758, %v1822
        %v1824 = vpop.f32.mrb[0].mxu0
        %v1825 = vpop.f32.mrb[0].mxu0
        %v1826 = vadd.f32 %v1761, %v1825
        %v1827 = vpop.f32.mrb[0].mxu0
        %1828 = vmatprep.mubr.bf16.mxu0 %v791
        %1829 = vmatmul.mubr.bf16.gmra.mrb[0].mxu0 %v790
        %v1830 = vpop.f32.mrb[0].mxu0
        %v1831 = vadd.f32 %v1766, %v1830
        %v1832 = vpop.f32.mrb[0].mxu0
        %v1833 = vpop.f32.mrb[0].mxu0
        %v1834 = vadd.f32 %v1769, %v1833
        %v1835 = vpop.f32.mrb[0].mxu0
        %1836 = vmatprep.mubr.bf16.mxu0 %v807
        %1837 = vmatmul.mubr.bf16.gmra.mrb[0].mxu0 %v806
        %v1838 = vpop.f32.mrb[0].mxu0
        %v1839 = vadd.f32 %v1774, %v1838
        %v1840 = vpop.f32.mrb[0].mxu0
        %v1841 = vpop.f32.mrb[0].mxu0
        %v1842 = vadd.f32 %v1777, %v1841
        %v1843 = vpop.f32.mrb[0].mxu0
        %1844 = vdwg.mxu0
        %1845 = vmatprep.subr.bf16.mxu0 0
        %1846 = vmatpush1.bf16.msra.mxu0 %v1442
        %1847 = vmatprep.subr.bf16.mxu0 0
        %1848 = vmatpush1.bf16.msra.mxu0 %v1443
        %1849 = vmatprep.subr.bf16.mxu0 0
        %1850 = vmatpush1.bf16.msra.mxu0 %v1444
        %1851 = vmatprep.subr.bf16.mxu0 0
        %1852 = vmatpush1.bf16.msra.mxu0 %v1445
        %1853 = vmatprep.subr.bf16.mxu0 0
        %1854 = vmatpush1.bf16.msra.mxu0 %v1446
        %1855 = vmatprep.subr.bf16.mxu0 0
        %1856 = vmatpush1.bf16.msra.mxu0 %v1447
        %1857 = vmatprep.subr.bf16.mxu0 0
        %1858 = vmatpush1.bf16.msra.mxu0 %v1448
        %1859 = vmatprep.subr.bf16.mxu0 0
        %1860 = vmatpush1.bf16.msra.mxu0 %v1449
        %1861 = vmatprep.subr.bf16.mxu0 0
        %1862 = vmatpush1.bf16.msra.mxu0 %v1450
        %1863 = vmatprep.subr.bf16.mxu0 0
        %1864 = vmatpush1.bf16.msra.mxu0 %v1451
        %1865 = vmatprep.subr.bf16.mxu0 0
        %1866 = vmatpush1.bf16.msra.mxu0 %v1452
        %1867 = vmatprep.subr.bf16.mxu0 0
        %1868 = vmatpush1.bf16.msra.mxu0 %v1453
        %1869 = vmatprep.subr.bf16.mxu0 0
        %1870 = vmatpush1.bf16.msra.mxu0 %v1454
        %1871 = vmatprep.subr.bf16.mxu0 0
        %1872 = vmatpush1.bf16.msra.mxu0 %v1455
        %1873 = vmatprep.subr.bf16.mxu0 0
        %1874 = vmatpush1.bf16.msra.mxu0 %v1456
        %1875 = vmatprep.subr.bf16.mxu0 0
        %1876 = vmatpush1.bf16.msra.mxu0 %v1457
        %1877 = vmatprep.mubr.bf16.mxu0 %v761
        %1878 = vmatmul.mubr.bf16.gmra.mrb[0].mxu0 %v760
        %v1879 = vpop.f32.mrb[0].mxu0
        %v1880 = vadd.f32 %v1815, %v1879
        %v1881 = vpop.f32.mrb[0].mxu0
        %v1882 = vpop.f32.mrb[0].mxu0
        %v1883 = vadd.f32 %v1818, %v1882
        %v1884 = vpop.f32.mrb[0].mxu0
        %1885 = vmatprep.mubr.bf16.mxu0 %v777
        %1886 = vmatmul.mubr.bf16.gmra.mrb[0].mxu0 %v776
        %v1887 = vpop.f32.mrb[0].mxu0
        %v1888 = vadd.f32 %v1823, %v1887
        %v1889 = vpop.f32.mrb[0].mxu0
        %v1890 = vpop.f32.mrb[0].mxu0
        %v1891 = vadd.f32 %v1826, %v1890
        %v1892 = vpop.f32.mrb[0].mxu0
        %1893 = vmatprep.mubr.bf16.mxu0 %v793
        %1894 = vmatmul.mubr.bf16.gmra.mrb[0].mxu0 %v792
        %v1895 = vpop.f32.mrb[0].mxu0
        %v1896 = vadd.f32 %v1831, %v1895
        %v1897 = vpop.f32.mrb[0].mxu0
        %v1898 = vpop.f32.mrb[0].mxu0
        %v1899 = vadd.f32 %v1834, %v1898
        %v1900 = vpop.f32.mrb[0].mxu0
        %1901 = vmatprep.mubr.bf16.mxu0 %v809
        %1902 = vmatmul.mubr.bf16.gmra.mrb[0].mxu0 %v808
        %v1903 = vpop.f32.mrb[0].mxu0
        %v1904 = vadd.f32 %v1839, %v1903
        %v1905 = vpop.f32.mrb[0].mxu0
        %v1906 = vpop.f32.mrb[0].mxu0
        %v1907 = vadd.f32 %v1842, %v1906
        %v1908 = vpop.f32.mrb[0].mxu0
        %1909 = vdwg.mxu0
        %1910 = vmatprep.subr.bf16.mxu0 0
        %1911 = vmatpush1.bf16.msra.mxu0 %v1458
        %1912 = vmatprep.subr.bf16.mxu0 0
        %1913 = vmatpush1.bf16.msra.mxu0 %v1459
        %1914 = vmatprep.subr.bf16.mxu0 0
        %1915 = vmatpush1.bf16.msra.mxu0 %v1460
        %1916 = vmatprep.subr.bf16.mxu0 0
        %1917 = vmatpush1.bf16.msra.mxu0 %v1461
        %1918 = vmatprep.subr.bf16.mxu0 0
        %1919 = vmatpush1.bf16.msra.mxu0 %v1462
        %1920 = vmatprep.subr.bf16.mxu0 0
        %1921 = vmatpush1.bf16.msra.mxu0 %v1463
        %1922 = vmatprep.subr.bf16.mxu0 0
        %1923 = vmatpush1.bf16.msra.mxu0 %v1464
        %1924 = vmatprep.subr.bf16.mxu0 0
        %1925 = vmatpush1.bf16.msra.mxu0 %v1465
        %1926 = vmatprep.subr.bf16.mxu0 0
        %1927 = vmatpush1.bf16.msra.mxu0 %v1466
        %1928 = vmatprep.subr.bf16.mxu0 0
        %1929 = vmatpush1.bf16.msra.mxu0 %v1467
        %1930 = vmatprep.subr.bf16.mxu0 0
        %1931 = vmatpush1.bf16.msra.mxu0 %v1468
        %1932 = vmatprep.subr.bf16.mxu0 0
        %1933 = vmatpush1.bf16.msra.mxu0 %v1469
        %1934 = vmatprep.subr.bf16.mxu0 0
        %1935 = vmatpush1.bf16.msra.mxu0 %v1470
        %1936 = vmatprep.subr.bf16.mxu0 0
        %1937 = vmatpush1.bf16.msra.mxu0 %v1471
        %1938 = vmatprep.subr.bf16.mxu0 0
        %1939 = vmatpush1.bf16.msra.mxu0 %v1472
        %1940 = vmatprep.subr.bf16.mxu0 0
        %1941 = vmatpush1.bf16.msra.mxu0 %v1473
        %1942 = vmatprep.mubr.bf16.mxu0 %v763
        %1943 = vmatmul.mubr.bf16.gmra.mrb[0].mxu0 %v762
        %v1944 = vpop.f32.mrb[0].mxu0
        %v1945 = vadd.f32 %v1880, %v1944
        %v1946 = vpop.f32.mrb[0].mxu0
        %v1947 = vpop.f32.mrb[0].mxu0
        %v1948 = vadd.f32 %v1883, %v1947
        %v1949 = vpop.f32.mrb[0].mxu0
        %1950 = vmatprep.mubr.bf16.mxu0 %v779
        %1951 = vmatmul.mubr.bf16.gmra.mrb[0].mxu0 %v778
        %v1952 = vpop.f32.mrb[0].mxu0
        %v1953 = vadd.f32 %v1888, %v1952
        %v1954 = vpop.f32.mrb[0].mxu0
        %v1955 = vpop.f32.mrb[0].mxu0
        %v1956 = vadd.f32 %v1891, %v1955
        %v1957 = vpop.f32.mrb[0].mxu0
        %1958 = vmatprep.mubr.bf16.mxu0 %v795
        %1959 = vmatmul.mubr.bf16.gmra.mrb[0].mxu0 %v794
        %v1960 = vpop.f32.mrb[0].mxu0
        %v1961 = vadd.f32 %v1896, %v1960
        %v1962 = vpop.f32.mrb[0].mxu0
        %v1963 = vpop.f32.mrb[0].mxu0
        %v1964 = vadd.f32 %v1899, %v1963
        %v1965 = vpop.f32.mrb[0].mxu0
        %1966 = vmatprep.mubr.bf16.mxu0 %v811
        %1967 = vmatmul.mubr.bf16.gmra.mrb[0].mxu0 %v810
        %v1968 = vpop.f32.mrb[0].mxu0
        %v1969 = vadd.f32 %v1904, %v1968
        %v1970 = vpop.f32.mrb[0].mxu0
        %v1971 = vpop.f32.mrb[0].mxu0
        %v1972 = vadd.f32 %v1907, %v1971
        %v1973 = vpop.f32.mrb[0].mxu0
        %1974 = vdwg.mxu0
        %1975 = vmatprep.subr.bf16.mxu0 0
        %1976 = vmatpush1.bf16.msra.mxu0 %v1474
        %1977 = vmatprep.subr.bf16.mxu0 0
        %1978 = vmatpush1.bf16.msra.mxu0 %v1475
        %1979 = vmatprep.subr.bf16.mxu0 0
        %1980 = vmatpush1.bf16.msra.mxu0 %v1476
        %1981 = vmatprep.subr.bf16.mxu0 0
        %1982 = vmatpush1.bf16.msra.mxu0 %v1477
        %1983 = vmatprep.subr.bf16.mxu0 0
        %1984 = vmatpush1.bf16.msra.mxu0 %v1478
        %1985 = vmatprep.subr.bf16.mxu0 0
        %1986 = vmatpush1.bf16.msra.mxu0 %v1479
        %1987 = vmatprep.subr.bf16.mxu0 0
        %1988 = vmatpush1.bf16.msra.mxu0 %v1480
        %1989 = vmatprep.subr.bf16.mxu0 0
        %1990 = vmatpush1.bf16.msra.mxu0 %v1481
        %1991 = vmatprep.subr.bf16.mxu0 0
        %1992 = vmatpush1.bf16.msra.mxu0 %v1482
        %1993 = vmatprep.subr.bf16.mxu0 0
        %1994 = vmatpush1.bf16.msra.mxu0 %v1483
        %1995 = vmatprep.subr.bf16.mxu0 0
        %1996 = vmatpush1.bf16.msra.mxu0 %v1484
        %1997 = vmatprep.subr.bf16.mxu0 0
        %1998 = vmatpush1.bf16.msra.mxu0 %v1485
        %1999 = vmatprep.subr.bf16.mxu0 0
        %2000 = vmatpush1.bf16.msra.mxu0 %v1486
        %2001 = vmatprep.subr.bf16.mxu0 0
        %2002 = vmatpush1.bf16.msra.mxu0 %v1487
        %2003 = vmatprep.subr.bf16.mxu0 0
        %2004 = vmatpush1.bf16.msra.mxu0 %v1488
        %2005 = vmatprep.subr.bf16.mxu0 0
        %2006 = vmatpush1.bf16.msra.mxu0 %v1489
        %2007 = vmatprep.mubr.bf16.mxu0 %v765
        %2008 = vmatmul.mubr.bf16.gmra.mrb[0].mxu0 %v764
        %v2009 = vpop.f32.mrb[0].mxu0
        %v2010 = vadd.f32 %v1945, %v2009
        %v2011 = vpop.f32.mrb[0].mxu0
        %v2012 = vpop.f32.mrb[0].mxu0
        %v2013 = vadd.f32 %v1948, %v2012
        %v2014 = vpop.f32.mrb[0].mxu0
        %2015 = vmatprep.mubr.bf16.mxu0 %v781
        %2016 = vmatmul.mubr.bf16.gmra.mrb[0].mxu0 %v780
        %v2017 = vpop.f32.mrb[0].mxu0
        %v2018 = vadd.f32 %v1953, %v2017
        %v2019 = vpop.f32.mrb[0].mxu0
        %v2020 = vpop.f32.mrb[0].mxu0
        %v2021 = vadd.f32 %v1956, %v2020
        %v2022 = vpop.f32.mrb[0].mxu0
        %2023 = vmatprep.mubr.bf16.mxu0 %v797
        %2024 = vmatmul.mubr.bf16.gmra.mrb[0].mxu0 %v796
        %v2025 = vpop.f32.mrb[0].mxu0
        %v2026 = vadd.f32 %v1961, %v2025
        %v2027 = vpop.f32.mrb[0].mxu0
        %v2028 = vpop.f32.mrb[0].mxu0
        %v2029 = vadd.f32 %v1964, %v2028
        %v2030 = vpop.f32.mrb[0].mxu0
        %2031 = vmatprep.mubr.bf16.mxu0 %v813
        %2032 = vmatmul.mubr.bf16.gmra.mrb[0].mxu0 %v812
        %v2033 = vpop.f32.mrb[0].mxu0
        %v2034 = vadd.f32 %v1969, %v2033
        %v2035 = vpop.f32.mrb[0].mxu0
        %v2036 = vpop.f32.mrb[0].mxu0
        %v2037 = vadd.f32 %v1972, %v2036
        %v2038 = vpop.f32.mrb[0].mxu0
        %2039 = vdwg.mxu0
        %2040 = vmatprep.subr.bf16.mxu0 0
        %2041 = vmatpush1.bf16.msra.mxu0 %v1490
        %2042 = vmatprep.subr.bf16.mxu0 0
        %2043 = vmatpush1.bf16.msra.mxu0 %v1491
        %2044 = vmatprep.subr.bf16.mxu0 0
        %2045 = vmatpush1.bf16.msra.mxu0 %v1492
        %2046 = vmatprep.subr.bf16.mxu0 0
        %2047 = vmatpush1.bf16.msra.mxu0 %v1493
        %2048 = vmatprep.subr.bf16.mxu0 0
        %2049 = vmatpush1.bf16.msra.mxu0 %v1494
        %2050 = vmatprep.subr.bf16.mxu0 0
        %2051 = vmatpush1.bf16.msra.mxu0 %v1495
        %2052 = vmatprep.subr.bf16.mxu0 0
        %2053 = vmatpush1.bf16.msra.mxu0 %v1496
        %2054 = vmatprep.subr.bf16.mxu0 0
        %2055 = vmatpush1.bf16.msra.mxu0 %v1497
        %2056 = vmatprep.subr.bf16.mxu0 0
        %2057 = vmatpush1.bf16.msra.mxu0 %v1498
        %2058 = vmatprep.subr.bf16.mxu0 0
        %2059 = vmatpush1.bf16.msra.mxu0 %v1499
        %2060 = vmatprep.subr.bf16.mxu0 0
        %2061 = vmatpush1.bf16.msra.mxu0 %v1500
        %2062 = vmatprep.subr.bf16.mxu0 0
        %2063 = vmatpush1.bf16.msra.mxu0 %v1501
        %2064 = vmatprep.subr.bf16.mxu0 0
        %2065 = vmatpush1.bf16.msra.mxu0 %v1502
        %2066 = vmatprep.subr.bf16.mxu0 0
        %2067 = vmatpush1.bf16.msra.mxu0 %v1503
        %2068 = vmatprep.subr.bf16.mxu0 0
        %2069 = vmatpush1.bf16.msra.mxu0 %v1504
        %2070 = vmatprep.subr.bf16.mxu0 0
        %2071 = vmatpush1.bf16.msra.mxu0 %v1505
        %2072 = vmatprep.mubr.bf16.mxu0 %v767
        %2073 = vmatmul.mubr.bf16.gmra.mrb[0].mxu0 %v766
        %v2074 = vpop.f32.mrb[0].mxu0
        %v2075 = vadd.f32 %v2010, %v2074
        %v2076 = vpop.f32.mrb[0].mxu0
        %v2077 = vpop.f32.mrb[0].mxu0
        %v2078 = vadd.f32 %v2013, %v2077
        %v2079 = vpop.f32.mrb[0].mxu0
        %2080 = vmatprep.mubr.bf16.mxu0 %v783
        %2081 = vmatmul.mubr.bf16.gmra.mrb[0].mxu0 %v782
        %v2082 = vpop.f32.mrb[0].mxu0
        %v2083 = vadd.f32 %v2018, %v2082
        %v2084 = vpop.f32.mrb[0].mxu0
        %v2085 = vpop.f32.mrb[0].mxu0
        %v2086 = vadd.f32 %v2021, %v2085
        %v2087 = vpop.f32.mrb[0].mxu0
        %2088 = vmatprep.mubr.bf16.mxu0 %v799
        %2089 = vmatmul.mubr.bf16.gmra.mrb[0].mxu0 %v798
        %v2090 = vpop.f32.mrb[0].mxu0
        %v2091 = vadd.f32 %v2026, %v2090
        %v2092 = vpop.f32.mrb[0].mxu0
        %v2093 = vpop.f32.mrb[0].mxu0
        %v2094 = vadd.f32 %v2029, %v2093
        %v2095 = vpop.f32.mrb[0].mxu0
        %2096 = vmatprep.mubr.bf16.mxu0 %v815
        %2097 = vmatmul.mubr.bf16.gmra.mrb[0].mxu0 %v814
        %v2098 = vpop.f32.mrb[0].mxu0
        %v2099 = vadd.f32 %v2034, %v2098
        %v2100 = vpop.f32.mrb[0].mxu0
        %v2101 = vpop.f32.mrb[0].mxu0
        %v2102 = vadd.f32 %v2037, %v2101
        %v2103 = vpop.f32.mrb[0].mxu0
        %2104 = vdwg.mxu0
        %2105 = vmatprep.subr.bf16.mxu0 0
        %2106 = vmatpush1.bf16.msra.mxu0 %v1506
        %2107 = vmatprep.subr.bf16.mxu0 0
        %2108 = vmatpush1.bf16.msra.mxu0 %v1507
        %2109 = vmatprep.subr.bf16.mxu0 0
        %2110 = vmatpush1.bf16.msra.mxu0 %v1508
        %2111 = vmatprep.subr.bf16.mxu0 0
        %2112 = vmatpush1.bf16.msra.mxu0 %v1509
        %2113 = vmatprep.subr.bf16.mxu0 0
        %2114 = vmatpush1.bf16.msra.mxu0 %v1510
        %2115 = vmatprep.subr.bf16.mxu0 0
        %2116 = vmatpush1.bf16.msra.mxu0 %v1511
        %2117 = vmatprep.subr.bf16.mxu0 0
        %2118 = vmatpush1.bf16.msra.mxu0 %v1512
        %2119 = vmatprep.subr.bf16.mxu0 0
        %2120 = vmatpush1.bf16.msra.mxu0 %v1513
        %2121 = vmatprep.subr.bf16.mxu0 0
        %2122 = vmatpush1.bf16.msra.mxu0 %v1514
        %2123 = vmatprep.subr.bf16.mxu0 0
        %2124 = vmatpush1.bf16.msra.mxu0 %v1515
        %2125 = vmatprep.subr.bf16.mxu0 0
        %2126 = vmatpush1.bf16.msra.mxu0 %v1516
        %2127 = vmatprep.subr.bf16.mxu0 0
        %2128 = vmatpush1.bf16.msra.mxu0 %v1517
        %2129 = vmatprep.subr.bf16.mxu0 0
        %2130 = vmatpush1.bf16.msra.mxu0 %v1518
        %2131 = vmatprep.subr.bf16.mxu0 0
        %2132 = vmatpush1.bf16.msra.mxu0 %v1519
        %2133 = vmatprep.subr.bf16.mxu0 0
        %2134 = vmatpush1.bf16.msra.mxu0 %v1520
        %2135 = vmatprep.subr.bf16.mxu0 0
        %2136 = vmatpush1.bf16.msra.mxu0 %v1521
        %2137 = vmatprep.mubr.bf16.mxu0 %v769
        %2138 = vmatmul.mubr.bf16.gmra.mrb[0].mxu0 %v768
        %v2139 = vpop.f32.mrb[0].mxu0
        %v2140 = vadd.f32 %v2075, %v2139
        %v2141 = vpop.f32.mrb[0].mxu0
        %v2142 = vpop.f32.mrb[0].mxu0
        %v2143 = vadd.f32 %v2078, %v2142
        %v2144 = vpop.f32.mrb[0].mxu0
        %2145 = vmatprep.mubr.bf16.mxu0 %v785
        %2146 = vmatmul.mubr.bf16.gmra.mrb[0].mxu0 %v784
        %v2147 = vpop.f32.mrb[0].mxu0
        %v2148 = vadd.f32 %v2083, %v2147
        %v2149 = vpop.f32.mrb[0].mxu0
        %v2150 = vpop.f32.mrb[0].mxu0
        %v2151 = vadd.f32 %v2086, %v2150
        %v2152 = vpop.f32.mrb[0].mxu0
        %2153 = vmatprep.mubr.bf16.mxu0 %v801
        %2154 = vmatmul.mubr.bf16.gmra.mrb[0].mxu0 %v800
        %v2155 = vpop.f32.mrb[0].mxu0
        %v2156 = vadd.f32 %v2091, %v2155
        %v2157 = vpop.f32.mrb[0].mxu0
        %v2158 = vpop.f32.mrb[0].mxu0
        %v2159 = vadd.f32 %v2094, %v2158
        %v2160 = vpop.f32.mrb[0].mxu0
        %2161 = vmatprep.mubr.bf16.mxu0 %v817
        %2162 = vmatmul.mubr.bf16.gmra.mrb[0].mxu0 %v816
        %v2163 = vpop.f32.mrb[0].mxu0
        %v2164 = vadd.f32 %v2099, %v2163
        %v2165 = vpop.f32.mrb[0].mxu0
        %v2166 = vpop.f32.mrb[0].mxu0
        %v2167 = vadd.f32 %v2102, %v2166
        %v2168 = vpop.f32.mrb[0].mxu0
        %2169 = vdwg.mxu0
        %vm2170 = vcmp.ge.f32.partialorder %v2140, 0.0
        %vm2171 = vcmp.ge.f32.partialorder %v2143, 0.0
        %vm2172 = vcmp.ge.f32.partialorder %v2148, 0.0
        %vm2173 = vcmp.ge.f32.partialorder %v2151, 0.0
        %vm2174 = vcmp.ge.f32.partialorder %v2156, 0.0
        %vm2175 = vcmp.ge.f32.partialorder %v2159, 0.0
        %vm2176 = vcmp.ge.f32.partialorder %v2164, 0.0
        %vm2177 = vcmp.ge.f32.partialorder %v2167, 0.0
        %v2178 = vmul.f32 %v2140, 0.2
        %v2179 = vmul.f32 %v2143, 0.2
        %v2180 = vmul.f32 %v2148, 0.2
        %v2181 = vmul.f32 %v2151, 0.2
        %v2182 = vmul.f32 %v2156, 0.2
        %v2183 = vmul.f32 %v2159, 0.2
        %v2184 = vmul.f32 %v2164, 0.2
        %v2185 = vmul.f32 %v2167, 0.2
        %v2186 = vsel %vm2170, %v2140, %v2178
        %v2187 = vsel %vm2171, %v2143, %v2179
        %v2188 = vsel %vm2172, %v2148, %v2180
        %v2189 = vsel %vm2173, %v2151, %v2181
        %v2190 = vsel %vm2174, %v2156, %v2182
        %v2191 = vsel %vm2175, %v2159, %v2183
        %v2192 = vsel %vm2176, %v2164, %v2184
        %v2193 = vsel %vm2177, %v2167, %v2185
        %2194 = vst [vmem:[%s232] sm:$0xff] %v2186
        %2195 = vst [vmem:[%s232 + $0x8] sm:$0xff] %v2187
        %2196 = vst [vmem:[%s232 + $0x10] sm:$0xff] %v2188
        %2197 = vst [vmem:[%s232 + $0x18] sm:$0xff] %v2189
        %2198 = vst [vmem:[%s232 + $0x20] sm:$0xff] %v2190
        %2199 = vst [vmem:[%s232 + $0x28] sm:$0xff] %v2191
        %2200 = vst [vmem:[%s232 + $0x30] sm:$0xff] %v2192
        %2201 = vst [vmem:[%s232 + $0x38] sm:$0xff] %v2193
        %s2202 = smul.u32 8, %s19
        %p2203 = scmp.lt.s32.totalorder %s2202, 15
        %s2204 = scalar_select %p2203, %s2202, 15
        %p2205 = scmp.lt.s32.totalorder %s20, 0
        %s2206 = scalar_select %p2205, %s20, 0
        %s2207 = sadd.s32 %s2206, %s2204
        %s2208 = smul.addr %s2207, 8
        %s2209 = scalar_lea.vmem %s3, %s2208
        // Predicated region
        $region37: #{forward.6} parent=31 // pred_check
          %p2210 = pneg %p125
        $region38: #{forward.6} parent=31 // pred_check_branch
          %2212 = sbr.rel (%p2210) target = $region40
        $region39: #{forward.6} parent=31 // pred_region
          %s2213 = smul.u32 8, %s19
        $region40: #{forward.6} parent=31 // pred_fallthru
          _
      $region32: #{forward.6} parent=5 // pred_fallthru
        _
      %p2214 = scmp.le.s32.totalorder 2, %s10
      // Predicated region
      $region41: #{forward.6} parent=5 // pred_check
        %p2215 = pneg %p2214
      $region42: #{forward.6} parent=5 // pred_check_branch
        %2217 = sbr.rel (%p2215) target = $region44
      $region43: #{forward.6} parent=5 // pred_region
        %s2218 = ssub.s32 %s10, 2
        // Predicated region
        $region45: #{forward.6} parent=43 // pred_check
          %p2219 = pneg %p131
        $region46: #{forward.6} parent=43 // pred_check_branch
          %2221 = sbr.rel (%p2219) target = $region48
        $region47: #{forward.6} parent=43 // pred_region
          %s2222 = smul.u32 8, %s21
          %p2223 = scmp.lt.s32.totalorder %s2222, 15
          %s2224 = scalar_select %p2223, %s2222, 15
          %p2225 = scmp.lt.s32.totalorder %s22, 0
          %s2226 = scalar_select %p2225, %s22, 0
          %s2227 = sadd.s32 %s2226, %s2224
          %s2228 = smul.addr %s2227, 8
          %s2229 = scalar_lea.vmem %s3, %s2228
        $region48: #{forward.6} parent=43 // pred_fallthru
          _
      $region44: #{forward.6} parent=5 // pred_fallthru
        _
    $region6: #{forward.6} parent=1 // loop_footer
      %s14 = sadd.s32 1, %s10
    $region7: #{forward.6} parent=1 // loop_footer_branch
      %9 = sbr.rel target = $region3
    $region8: #{forward.6} parent=1 // loop_exit
      _
    %2230 = vsyncpa [#allocation3], 1
    %s2231 = scalar_lea.sflag [#allocation3], 1
    %2232 = vsyncpa %s2231, 1

// kernel: forward.8
$region0: #{forward.8}
  #allocation0 [shape = 'u32[]', space=smem, size = 0x4, offset = 0x4, fixed_abs, tag = 'smem constant byte address 0x4 - core index']
  #allocation1 [shape = 'u32[144,128]{1,0:T(1,128)}', space=vmem, size = 0x12000, scoped, tag = 'internal scratch']
  %s0 = inlined_call_operand.vmem [shape: bf16[1024,256], index: 0, kind: input, shape index: {}]
  %s1 = inlined_call_operand.vmem [shape: bf16[256,128], index: 1, kind: input, shape index: {}]
  %s2 = inlined_call_operand.vmem [shape: f32[1,128], index: 2, kind: input, shape index: {}]
  %s3 = inlined_call_operand.vmem [shape: f32[1024,128], index: 3, kind: output, shape index: {}]
  %s4 = sld [smem:[#allocation0]]
  $region45: #{forward.8} parent=0
    _
  %s6 = ssub.s32 1, %s4
  %s7 = scalar_select 0, %s6, %s4
  loop: start=0, step=1, limit=6
  $region2: #{forward.8} parent=0 // loop_pre_header
    _
  $region3: #{forward.8} parent=0 // loop_header
    %s9 = sphi 0, %s13
    %p10 = scmp.ge.s32.totalorder %s9, 6
    %s16 = sphi 0, %s28
    %s17 = sphi 0, %s24
    %s18 = sphi 0, %s16
    %s19 = sphi 0, %s17
    %s20 = sphi 0, %s18
    %s21 = sphi 0, %s19
    %s31 = sphi 0, %s33
    %s34 = sphi 0, %s31
    %s35 = sphi 0, %s34
    %s51 = sphi 0, %s35
    %s57 = sphi 0, %s59
    %s60 = sphi 0, %s57
    %s61 = sphi 0, %s60
    %s77 = sphi 0, %s61
    %s83 = sphi 0, %s85
    %s86 = sphi 0, %s83
    %s87 = sphi 0, %s86
    %s103 = sphi 0, %s87
    %s111 = sphi 0, %s113
    %s114 = sphi 0, %s111
    %s115 = sphi 0, %s114
    %s131 = sphi 0, %s115
  $region4: #{forward.8} parent=0 // loop_header_branch
    %12 = sbr.rel (%p10) target = $region8
  $region5: #{forward.8} parent=0 // loop_body
    %s14 = ssub.s32 %s9, 1
    %s15 = ssub.s32 %s9, 2
    %s22 = sadd.s32 1, %s17
    %p23 = scmp.ge.s32.totalorder %s22, 1
    %s24 = scalar_select %p23, 0, %s22
    %s25 = sadd.s32 1, %s16
    %s26 = scalar_select %p23, %s25, %s16
    %p27 = scmp.ge.s32.totalorder %s26, 4
    %s28 = scalar_select %p27, 0, %s26
    %s29 = ssub.s32 %s16, %s28
    %p30 = scmp.eq.s32.totalorder %s29, 0
    %s32 = sadd.s32 %s31, 1
    %s33 = scalar_select %p30, %s31, %s32
    %p36 = pneg %p30
    %p37 = scmp.eq.s32.totalorder %s9, 3
    %p38 = por %p36, %p37
    %p39 = scmp.ne.s32.totalorder %s31, %s34
    %p40 = scmp.eq.s32.totalorder %s9, 0
    %p41 = por %p39, %p40
    %p42 = scmp.ne.s32.totalorder %s31, %s34
    %p43 = scmp.eq.s32.totalorder %s14, 3
    %p44 = por %p42, %p43
    %p45 = scmp.ne.s32.totalorder %s34, %s35
    %p46 = scmp.eq.s32.totalorder %s14, 0
    %p47 = por %p45, %p46
    %p48 = scmp.ne.s32.totalorder %s34, %s35
    %p49 = scmp.eq.s32.totalorder %s15, 3
    %p50 = por %p48, %p49
    %p52 = scmp.ne.s32.totalorder %s35, %s51
    %p53 = scmp.eq.s32.totalorder %s15, 0
    %p54 = por %p52, %p53
    %s55 = ssub.s32 %s17, %s24
    %p56 = scmp.eq.s32.totalorder %s55, 0
    %s58 = sadd.s32 %s57, 1
    %s59 = scalar_select %p56, %s57, %s58
    %p62 = pneg %p56
    %p63 = scmp.eq.s32.totalorder %s9, 3
    %p64 = por %p62, %p63
    %p65 = scmp.ne.s32.totalorder %s57, %s60
    %p66 = scmp.eq.s32.totalorder %s9, 0
    %p67 = por %p65, %p66
    %p68 = scmp.ne.s32.totalorder %s57, %s60
    %p69 = scmp.eq.s32.totalorder %s14, 3
    %p70 = por %p68, %p69
    %p71 = scmp.ne.s32.totalorder %s60, %s61
    %p72 = scmp.eq.s32.totalorder %s14, 0
    %p73 = por %p71, %p72
    %p74 = scmp.ne.s32.totalorder %s60, %s61
    %p75 = scmp.eq.s32.totalorder %s15, 3
    %p76 = por %p74, %p75
    %p78 = scmp.ne.s32.totalorder %s61, %s77
    %p79 = scmp.eq.s32.totalorder %s15, 0
    %p80 = por %p78, %p79
    %s81 = ssub.s32 %s17, %s24
    %p82 = scmp.eq.s32.totalorder %s81, 0
    %s84 = sadd.s32 %s83, 1
    %s85 = scalar_select %p82, %s83, %s84
    %p88 = pneg %p82
    %p89 = scmp.eq.s32.totalorder %s9, 3
    %p90 = por %p88, %p89
    %p91 = scmp.ne.s32.totalorder %s83, %s86
    %p92 = scmp.eq.s32.totalorder %s9, 0
    %p93 = por %p91, %p92
    %p94 = scmp.ne.s32.totalorder %s83, %s86
    %p95 = scmp.eq.s32.totalorder %s14, 3
    %p96 = por %p94, %p95
    %p97 = scmp.ne.s32.totalorder %s86, %s87
    %p98 = scmp.eq.s32.totalorder %s14, 0
    %p99 = por %p97, %p98
    %p100 = scmp.ne.s32.totalorder %s86, %s87
    %p101 = scmp.eq.s32.totalorder %s15, 3
    %p102 = por %p100, %p101
    %p104 = scmp.ne.s32.totalorder %s87, %s103
    %p105 = scmp.eq.s32.totalorder %s15, 0
    %p106 = por %p104, %p105
    %s107 = ssub.s32 %s16, %s28
    %s108 = ssub.s32 %s17, %s24
    %s109 = sor.u32 %s107, %s108
    %p110 = scmp.eq.s32.totalorder %s109, 0
    %s112 = sadd.s32 %s111, 1
    %s113 = scalar_select %p110, %s111, %s112
    %p116 = pneg %p110
    %p117 = scmp.eq.s32.totalorder %s9, 3
    %p118 = por %p116, %p117
    %p119 = scmp.ne.s32.totalorder %s111, %s114
    %p120 = scmp.eq.s32.totalorder %s9, 0
    %p121 = por %p119, %p120
    %p122 = scmp.ne.s32.totalorder %s111, %s114
    %p123 = scmp.eq.s32.totalorder %s14, 3
    %p124 = por %p122, %p123
    %p125 = scmp.ne.s32.totalorder %s114, %s115
    %p126 = scmp.eq.s32.totalorder %s14, 0
    %p127 = por %p125, %p126
    %p128 = scmp.ne.s32.totalorder %s114, %s115
    %p129 = scmp.eq.s32.totalorder %s15, 3
    %p130 = por %p128, %p129
    %p132 = scmp.ne.s32.totalorder %s115, %s131
    %p133 = scmp.eq.s32.totalorder %s15, 0
    %p134 = por %p132, %p133
    %p135 = scmp.le.s32.totalorder 1, %s9
    %p136 = scmp.lt.s32.totalorder %s9, 5
    %p137 = pnand %p135, %p136
    %p138 = pneg %p137
    // Predicated region
    $region9: #{forward.8} parent=5 // pred_check
      _
    $region10: #{forward.8} parent=5 // pred_check_branch
      %140 = sbr.rel (%p137) target = $region12
    $region11: #{forward.8} parent=5 // pred_region
      %s141 = ssub.s32 %s9, 1
      // Predicated region
      $region13: #{forward.8} parent=11 // pred_check
        %p142 = pneg %p73
      $region14: #{forward.8} parent=11 // pred_check_branch
        %144 = sbr.rel (%p142) target = $region16
      $region15: #{forward.8} parent=11 // pred_region
        %p145 = scmp.lt.s32.totalorder %s19, 0
        %s146 = scalar_select %p145, %s19, 0
        %s147 = smul.addr %s146, 4
        %s148 = scalar_lea.vmem %s1, %s147
      $region16: #{forward.8} parent=11 // pred_fallthru
        _
      // Predicated region
      $region17: #{forward.8} parent=11 // pred_check
        %p149 = pneg %p99
      $region18: #{forward.8} parent=11 // pred_check_branch
        %151 = sbr.rel (%p149) target = $region20
      $region19: #{forward.8} parent=11 // pred_region
        %p152 = scmp.lt.s32.totalorder %s19, 0
        %s153 = scalar_select %p152, %s19, 0
        %s154 = scalar_lea.vmem %s2, %s153
      $region20: #{forward.8} parent=11 // pred_fallthru
        _
    $region12: #{forward.8} parent=5 // pred_fallthru
      _
    %p155 = scmp.lt.s32.totalorder %s9, 4
    // Predicated region
    $region21: #{forward.8} parent=5 // pred_check
      %p156 = pneg %p155
    $region22: #{forward.8} parent=5 // pred_check_branch
      %158 = sbr.rel (%p156) target = $region24
    $region23: #{forward.8} parent=5 // pred_region
      // Predicated region
      $region25: #{forward.8} parent=23 // pred_check
        %p159 = pneg %p41
      $region26: #{forward.8} parent=23 // pred_check_branch
        %161 = sbr.rel (%p159) target = $region28
      $region27: #{forward.8} parent=23 // pred_region
        %s162 = smul.u32 32, %s16
        %p163 = scmp.lt.s32.totalorder %s162, 127
        %s164 = scalar_select %p163, %s162, 127
        %s165 = smul.addr %s164, 2
        %s166 = smul.addr %s165, 4
        %s167 = scalar_lea.vmem %s0, %s166
        %s168 = smul.u32 32, %s16
      $region28: #{forward.8} parent=23 // pred_fallthru
        _
    $region24: #{forward.8} parent=5 // pred_fallthru
      _
    %p169 = scmp.le.s32.totalorder 1, %s9
    %p170 = scmp.lt.s32.totalorder %s9, 5
    %p171 = pnand %p169, %p170
    %p172 = pneg %p171
    // Predicated region
    $region29: #{forward.8} parent=5 // pred_check
      _
    $region30: #{forward.8} parent=5 // pred_check_branch
      %174 = sbr.rel (%p171) target = $region32
    $region31: #{forward.8} parent=5 // pred_region
      %s175 = ssub.s32 %s9, 1
      %s176 = smul.u32 32, %s18
      %p177 = scmp.lt.s32.totalorder %s176, 127
      %s178 = scalar_select %p177, %s176, 127
      %s179 = smul.addr %s178, 2
      %s180 = smul.addr %s179, 4
      %s181 = scalar_lea.vmem %s0, %s180
      %p182 = pneg %p47
      %p183 = pneg %p44
      %p184 = scmp.lt.s32.totalorder %s19, 0
      %s185 = scalar_select %p184, %s19, 0
      %s186 = smul.addr %s185, 4
      %s187 = scalar_lea.vmem %s1, %s186
      %p188 = pneg %p73
      %p189 = pneg %p70
      %p190 = scmp.lt.s32.totalorder %s19, 0
      %s191 = scalar_select %p190, %s19, 0
      %s192 = scalar_lea.vmem %s2, %s191
      %p193 = pneg %p99
      %p194 = pneg %p96
      %p195 = pneg %p127
      %p196 = pneg %p124
      %s197 = smul.u32 32, %s18
      %p198 = scmp.lt.s32.totalorder %s197, 127
      %s199 = scalar_select %p198, %s197, 127
      %p200 = scmp.lt.s32.totalorder %s19, 0
      %s201 = scalar_select %p200, %s19, 0
      %s202 = sadd.s32 %s201, %s199
      %s203 = smul.addr %s202, 8
      %s204 = scalar_lea.vmem %s3, %s203
      %s205 = smul.u32 32, %s18
      %p206 = scmp.lt.s32.totalorder %s205, 127
      %s207 = scalar_select %p206, %s205, 127
      %s208 = smul.addr %s207, 2
      %s209 = smul.addr %s208, 4
      %s210 = scalar_lea.vmem %s0, %s209
      %s211 = smul.u32 32, %s18
      %p212 = scmp.lt.s32.totalorder %s19, 0
      %s213 = scalar_select %p212, %s19, 0
      %s214 = smul.addr %s213, 4
      %s215 = scalar_lea.vmem %s1, %s214
      %p216 = scmp.lt.s32.totalorder %s19, 0
      %s217 = scalar_select %p216, %s19, 0
      %s218 = scalar_lea.vmem %s2, %s217
      %s219 = smul.u32 32, %s18
      %p220 = scmp.lt.s32.totalorder %s219, 127
      %s221 = scalar_select %p220, %s219, 127
      %p222 = scmp.lt.s32.totalorder %s19, 0
      %s223 = scalar_select %p222, %s19, 0
      %s224 = sadd.s32 %s223, %s221
      %s225 = smul.addr %s224, 8
      %s226 = scalar_lea.vmem %s3, %s225
      %s227 = smul.u32 32, %s18
      %v229 = vld [vmem:[%s210] sm:$0xff]
      %v230 = vld [vmem:[%s210 + $0x8] sm:$0xff]
      %v231 = vld [vmem:[%s210 + $0x10] sm:$0xff]
      %v232 = vld [vmem:[%s210 + $0x18] sm:$0xff]
      %v233 = vld [vmem:[%s210 + $0x20] sm:$0xff]
      %v234 = vld [vmem:[%s210 + $0x28] sm:$0xff]
      %v235 = vld [vmem:[%s210 + $0x30] sm:$0xff]
      %v236 = vld [vmem:[%s210 + $0x38] sm:$0xff]
      %v237 = vld [vmem:[%s210 + $0x40] sm:$0xff]
      %v238 = vld [vmem:[%s210 + $0x48] sm:$0xff]
      %v239 = vld [vmem:[%s210 + $0x50] sm:$0xff]
      %v240 = vld [vmem:[%s210 + $0x58] sm:$0xff]
      %v241 = vld [vmem:[%s210 + $0x60] sm:$0xff]
      %v242 = vld [vmem:[%s210 + $0x68] sm:$0xff]
      %v243 = vld [vmem:[%s210 + $0x70] sm:$0xff]
      %v244 = vld [vmem:[%s210 + $0x78] sm:$0xff]
      %v245 = vld [vmem:[%s210 + $0x80] sm:$0xff]
      %v246 = vld [vmem:[%s210 + $0x88] sm:$0xff]
      %v247 = vld [vmem:[%s210 + $0x90] sm:$0xff]
      %v248 = vld [vmem:[%s210 + $0x98] sm:$0xff]
      %v249 = vld [vmem:[%s210 + $0xa0] sm:$0xff]
      %v250 = vld [vmem:[%s210 + $0xa8] sm:$0xff]
      %v251 = vld [vmem:[%s210 + $0xb0] sm:$0xff]
      %v252 = vld [vmem:[%s210 + $0xb8] sm:$0xff]
      %v253 = vld [vmem:[%s210 + $0xc0] sm:$0xff]
      %v254 = vld [vmem:[%s210 + $0xc8] sm:$0xff]
      %v255 = vld [vmem:[%s210 + $0xd0] sm:$0xff]
      %v256 = vld [vmem:[%s210 + $0xd8] sm:$0xff]
      %v257 = vld [vmem:[%s210 + $0xe0] sm:$0xff]
      %v258 = vld [vmem:[%s210 + $0xe8] sm:$0xff]
      %v259 = vld [vmem:[%s210 + $0xf0] sm:$0xff]
      %v260 = vld [vmem:[%s210 + $0xf8] sm:$0xff]
      %v261 = vld [vmem:[%s215] sm:$0xf]
      %v262 = vld [vmem:[%s215 + $0x4] sm:$0xf]
      %v263 = vld [vmem:[%s215 + $0x8] sm:$0xf]
      %v264 = vld [vmem:[%s215 + $0xc] sm:$0xf]
      %v265 = vld [vmem:[%s215 + $0x10] sm:$0xf]
      %v266 = vld [vmem:[%s215 + $0x14] sm:$0xf]
      %v267 = vld [vmem:[%s215 + $0x18] sm:$0xf]
      %v268 = vld [vmem:[%s215 + $0x1c] sm:$0xf]
      %v269 = vld [vmem:[%s215 + $0x20] sm:$0xf]
      %v270 = vld [vmem:[%s215 + $0x24] sm:$0xf]
      %v271 = vld [vmem:[%s215 + $0x28] sm:$0xf]
      %v272 = vld [vmem:[%s215 + $0x2c] sm:$0xf]
      %v273 = vld [vmem:[%s215 + $0x30] sm:$0xf]
      %v274 = vld [vmem:[%s215 + $0x34] sm:$0xf]
      %v275 = vld [vmem:[%s215 + $0x38] sm:$0xf]
      %v276 = vld [vmem:[%s215 + $0x3c] sm:$0xf]
      %v277 = vld [vmem:[%s215 + $0x40] sm:$0xf]
      %v278 = vld [vmem:[%s215 + $0x44] sm:$0xf]
      %v279 = vld [vmem:[%s215 + $0x48] sm:$0xf]
      %v280 = vld [vmem:[%s215 + $0x4c] sm:$0xf]
      %v281 = vld [vmem:[%s215 + $0x50] sm:$0xf]
      %v282 = vld [vmem:[%s215 + $0x54] sm:$0xf]
      %v283 = vld [vmem:[%s215 + $0x58] sm:$0xf]
      %v284 = vld [vmem:[%s215 + $0x5c] sm:$0xf]
      %v285 = vld [vmem:[%s215 + $0x60] sm:$0xf]
      %v286 = vld [vmem:[%s215 + $0x64] sm:$0xf]
      %v287 = vld [vmem:[%s215 + $0x68] sm:$0xf]
      %v288 = vld [vmem:[%s215 + $0x6c] sm:$0xf]
      %v289 = vld [vmem:[%s215 + $0x70] sm:$0xf]
      %v290 = vld [vmem:[%s215 + $0x74] sm:$0xf]
      %v291 = vld [vmem:[%s215 + $0x78] sm:$0xf]
      %v292 = vld [vmem:[%s215 + $0x7c] sm:$0xf]
      %v293 = vld [vmem:[%s218] sm:$0x1]
      %v295 = vlaneseq
      %v296 = vshrl.u32 %v295, 7
      %v297 = vsub.s32 0, %v296
      %v298 = vrot.slane %v293, %v297
      %v332 = vunpack.c.l.b16 %v229
      %v333 = vunpack.c.h.b16 %v229
      %v334 = vunpack.c.l.b16 %v230
      %v335 = vunpack.c.h.b16 %v230
      %v336 = vunpack.c.l.b16 %v231
      %v337 = vunpack.c.h.b16 %v231
      %v338 = vunpack.c.l.b16 %v232
      %v339 = vunpack.c.h.b16 %v232
      %v340 = vunpack.c.l.b16 %v233
      %v341 = vunpack.c.h.b16 %v233
      %v342 = vunpack.c.l.b16 %v234
      %v343 = vunpack.c.h.b16 %v234
      %v344 = vunpack.c.l.b16 %v235
      %v345 = vunpack.c.h.b16 %v235
      %v346 = vunpack.c.l.b16 %v236
      %v347 = vunpack.c.h.b16 %v236
      %v348 = vunpack.c.l.b16 %v237
      %v349 = vunpack.c.h.b16 %v237
      %v350 = vunpack.c.l.b16 %v238
      %v351 = vunpack.c.h.b16 %v238
      %v352 = vunpack.c.l.b16 %v239
      %v353 = vunpack.c.h.b16 %v239
      %v354 = vunpack.c.l.b16 %v240
      %v355 = vunpack.c.h.b16 %v240
      %v356 = vunpack.c.l.b16 %v241
      %v357 = vunpack.c.h.b16 %v241
      %v358 = vunpack.c.l.b16 %v242
      %v359 = vunpack.c.h.b16 %v242
      %v360 = vunpack.c.l.b16 %v243
      %v361 = vunpack.c.h.b16 %v243
      %v362 = vunpack.c.l.b16 %v244
      %v363 = vunpack.c.h.b16 %v244
      %v364 = vunpack.c.l.b16 %v245
      %v365 = vunpack.c.h.b16 %v245
      %v366 = vunpack.c.l.b16 %v246
      %v367 = vunpack.c.h.b16 %v246
      %v368 = vunpack.c.l.b16 %v247
      %v369 = vunpack.c.h.b16 %v247
      %v370 = vunpack.c.l.b16 %v248
      %v371 = vunpack.c.h.b16 %v248
      %v372 = vunpack.c.l.b16 %v249
      %v373 = vunpack.c.h.b16 %v249
      %v374 = vunpack.c.l.b16 %v250
      %v375 = vunpack.c.h.b16 %v250
      %v376 = vunpack.c.l.b16 %v251
      %v377 = vunpack.c.h.b16 %v251
      %v378 = vunpack.c.l.b16 %v252
      %v379 = vunpack.c.h.b16 %v252
      %v380 = vunpack.c.l.b16 %v253
      %v381 = vunpack.c.h.b16 %v253
      %v382 = vunpack.c.l.b16 %v254
      %v383 = vunpack.c.h.b16 %v254
      %v384 = vunpack.c.l.b16 %v255
      %v385 = vunpack.c.h.b16 %v255
      %v386 = vunpack.c.l.b16 %v256
      %v387 = vunpack.c.h.b16 %v256
      %v388 = vunpack.c.l.b16 %v257
      %v389 = vunpack.c.h.b16 %v257
      %v390 = vunpack.c.l.b16 %v258
      %v391 = vunpack.c.h.b16 %v258
      %v392 = vunpack.c.l.b16 %v259
      %v393 = vunpack.c.h.b16 %v259
      %v394 = vunpack.c.l.b16 %v260
      %v395 = vunpack.c.h.b16 %v260
      %v396 = vpack.c.b16 %v334, %v332
      %v397 = vpack.c.b16 %v335, %v333
      %v398 = vpack.c.b16 %v338, %v336
      %v399 = vpack.c.b16 %v339, %v337
      %v400 = vpack.c.b16 %v342, %v340
      %v401 = vpack.c.b16 %v343, %v341
      %v402 = vpack.c.b16 %v346, %v344
      %v403 = vpack.c.b16 %v347, %v345
      %v404 = vpack.c.b16 %v350, %v348
      %v405 = vpack.c.b16 %v351, %v349
      %v406 = vpack.c.b16 %v354, %v352
      %v407 = vpack.c.b16 %v355, %v353
      %v408 = vpack.c.b16 %v358, %v356
      %v409 = vpack.c.b16 %v359, %v357
      %v410 = vpack.c.b16 %v362, %v360
      %v411 = vpack.c.b16 %v363, %v361
      %v412 = vpack.c.b16 %v366, %v364
      %v413 = vpack.c.b16 %v367, %v365
      %v414 = vpack.c.b16 %v370, %v368
      %v415 = vpack.c.b16 %v371, %v369
      %v416 = vpack.c.b16 %v374, %v372
      %v417 = vpack.c.b16 %v375, %v373
      %v418 = vpack.c.b16 %v378, %v376
      %v419 = vpack.c.b16 %v379, %v377
      %v420 = vpack.c.b16 %v382, %v380
      %v421 = vpack.c.b16 %v383, %v381
      %v422 = vpack.c.b16 %v386, %v384
      %v423 = vpack.c.b16 %v387, %v385
      %v424 = vpack.c.b16 %v390, %v388
      %v425 = vpack.c.b16 %v391, %v389
      %v426 = vpack.c.b16 %v394, %v392
      %v427 = vpack.c.b16 %v395, %v393
      %v492 = vunpack.c.l.b16 %v261
      %v493 = vunpack.c.l.b16 %v262
      %v494 = vunpack.c.l.b16 %v263
      %v495 = vunpack.c.l.b16 %v264
      %v496 = vunpack.c.l.b16 %v265
      %v497 = vunpack.c.l.b16 %v266
      %v498 = vunpack.c.l.b16 %v267
      %v499 = vunpack.c.l.b16 %v268
      %v500 = vunpack.c.l.b16 %v269
      %v501 = vunpack.c.l.b16 %v270
      %v502 = vunpack.c.l.b16 %v271
      %v503 = vunpack.c.l.b16 %v272
      %v504 = vunpack.c.l.b16 %v273
      %v505 = vunpack.c.l.b16 %v274
      %v506 = vunpack.c.l.b16 %v275
      %v507 = vunpack.c.l.b16 %v276
      %v508 = vunpack.c.l.b16 %v277
      %v509 = vunpack.c.l.b16 %v278
      %v510 = vunpack.c.l.b16 %v279
      %v511 = vunpack.c.l.b16 %v280
      %v512 = vunpack.c.l.b16 %v281
      %v513 = vunpack.c.l.b16 %v282
      %v514 = vunpack.c.l.b16 %v283
      %v515 = vunpack.c.l.b16 %v284
      %v516 = vunpack.c.l.b16 %v285
      %v517 = vunpack.c.l.b16 %v286
      %v518 = vunpack.c.l.b16 %v287
      %v519 = vunpack.c.l.b16 %v288
      %v520 = vunpack.c.l.b16 %v289
      %v521 = vunpack.c.l.b16 %v290
      %v522 = vunpack.c.l.b16 %v291
      %v523 = vunpack.c.l.b16 %v292
      %v524 = vpack.c.b16 %v493, %v492
      %v525 = vpack.c.b16 %v495, %v494
      %v526 = vpack.c.b16 %v497, %v496
      %v527 = vpack.c.b16 %v499, %v498
      %v528 = vpack.c.b16 %v501, %v500
      %v529 = vpack.c.b16 %v503, %v502
      %v530 = vpack.c.b16 %v505, %v504
      %v531 = vpack.c.b16 %v507, %v506
      %v532 = vpack.c.b16 %v509, %v508
      %v533 = vpack.c.b16 %v511, %v510
      %v534 = vpack.c.b16 %v513, %v512
      %v535 = vpack.c.b16 %v515, %v514
      %v536 = vpack.c.b16 %v517, %v516
      %v537 = vpack.c.b16 %v519, %v518
      %v538 = vpack.c.b16 %v521, %v520
      %v539 = vpack.c.b16 %v523, %v522
      %556 = vmatprep.subr.bf16.mxu0 0
      %557 = vmatpush1.bf16.msra.mxu0 %v524
      %558 = vmatprep.subr.bf16.mxu0 0
      %559 = vmatpush1.bf16.msra.mxu0 %v525
      %560 = vmatprep.subr.bf16.mxu0 0
      %561 = vmatpush1.bf16.msra.mxu0 %v526
      %562 = vmatprep.subr.bf16.mxu0 0
      %563 = vmatpush1.bf16.msra.mxu0 %v527
      %564 = vmatprep.subr.bf16.mxu0 0
      %565 = vmatpush1.bf16.msra.mxu0 %v528
      %566 = vmatprep.subr.bf16.mxu0 0
      %567 = vmatpush1.bf16.msra.mxu0 %v529
      %568 = vmatprep.subr.bf16.mxu0 0
      %569 = vmatpush1.bf16.msra.mxu0 %v530
      %570 = vmatprep.subr.bf16.mxu0 0
      %571 = vmatpush1.bf16.msra.mxu0 %v531
      %572 = vmatprep.subr.bf16.mxu0 0
      %573 = vmatpush1.bf16.msra.mxu0 %v532
      %574 = vmatprep.subr.bf16.mxu0 0
      %575 = vmatpush1.bf16.msra.mxu0 %v533
      %576 = vmatprep.subr.bf16.mxu0 0
      %577 = vmatpush1.bf16.msra.mxu0 %v534
      %578 = vmatprep.subr.bf16.mxu0 0
      %579 = vmatpush1.bf16.msra.mxu0 %v535
      %580 = vmatprep.subr.bf16.mxu0 0
      %581 = vmatpush1.bf16.msra.mxu0 %v536
      %582 = vmatprep.subr.bf16.mxu0 0
      %583 = vmatpush1.bf16.msra.mxu0 %v537
      %584 = vmatprep.subr.bf16.mxu0 0
      %585 = vmatpush1.bf16.msra.mxu0 %v538
      %586 = vmatprep.subr.bf16.mxu0 0
      %587 = vmatpush1.bf16.msra.mxu0 %v539
      %588 = vmatprep.mubr.bf16.mxu0 %v397
      %589 = vmatmul.mubr.bf16.gmra.mrb[0].mxu0 %v396
      %v590 = vpop.f32.mrb[0].mxu0
      %v591 = vadd.f32 %v298, %v590
      %v592 = vpop.f32.mrb[0].mxu0
      %v593 = vpop.f32.mrb[0].mxu0
      %v594 = vadd.f32 %v298, %v593
      %v595 = vpop.f32.mrb[0].mxu0
      %596 = vmatprep.mubr.bf16.mxu0 %v399
      %597 = vmatmul.mubr.bf16.gmra.mrb[0].mxu0 %v398
      %v598 = vpop.f32.mrb[0].mxu0
      %v599 = vadd.f32 %v298, %v598
      %v600 = vpop.f32.mrb[0].mxu0
      %v601 = vpop.f32.mrb[0].mxu0
      %v602 = vadd.f32 %v298, %v601
      %v603 = vpop.f32.mrb[0].mxu0
      %604 = vmatprep.mubr.bf16.mxu0 %v401
      %605 = vmatmul.mubr.bf16.gmra.mrb[0].mxu0 %v400
      %v606 = vpop.f32.mrb[0].mxu0
      %v607 = vadd.f32 %v298, %v606
      %v608 = vpop.f32.mrb[0].mxu0
      %v609 = vpop.f32.mrb[0].mxu0
      %v610 = vadd.f32 %v298, %v609
      %v611 = vpop.f32.mrb[0].mxu0
      %612 = vmatprep.mubr.bf16.mxu0 %v403
      %613 = vmatmul.mubr.bf16.gmra.mrb[0].mxu0 %v402
      %v614 = vpop.f32.mrb[0].mxu0
      %v615 = vadd.f32 %v298, %v614
      %v616 = vpop.f32.mrb[0].mxu0
      %v617 = vpop.f32.mrb[0].mxu0
      %v618 = vadd.f32 %v298, %v617
      %v619 = vpop.f32.mrb[0].mxu0
      %620 = vmatprep.mubr.bf16.mxu0 %v405
      %621 = vmatmul.mubr.bf16.gmra.mrb[0].mxu0 %v404
      %v622 = vpop.f32.mrb[0].mxu0
      %v623 = vadd.f32 %v298, %v622
      %v624 = vpop.f32.mrb[0].mxu0
      %v625 = vpop.f32.mrb[0].mxu0
      %v626 = vadd.f32 %v298, %v625
      %v627 = vpop.f32.mrb[0].mxu0
      %628 = vmatprep.mubr.bf16.mxu0 %v407
      %629 = vmatmul.mubr.bf16.gmra.mrb[0].mxu0 %v406
      %v630 = vpop.f32.mrb[0].mxu0
      %v631 = vadd.f32 %v298, %v630
      %v632 = vpop.f32.mrb[0].mxu0
      %v633 = vpop.f32.mrb[0].mxu0
      %v634 = vadd.f32 %v298, %v633
      %v635 = vpop.f32.mrb[0].mxu0
      %636 = vmatprep.mubr.bf16.mxu0 %v409
      %637 = vmatmul.mubr.bf16.gmra.mrb[0].mxu0 %v408
      %v638 = vpop.f32.mrb[0].mxu0
      %v639 = vadd.f32 %v298, %v638
      %v640 = vpop.f32.mrb[0].mxu0
      %v641 = vpop.f32.mrb[0].mxu0
      %v642 = vadd.f32 %v298, %v641
      %v643 = vpop.f32.mrb[0].mxu0
      %644 = vmatprep.mubr.bf16.mxu0 %v411
      %645 = vmatmul.mubr.bf16.gmra.mrb[0].mxu0 %v410
      %v646 = vpop.f32.mrb[0].mxu0
      %v647 = vadd.f32 %v298, %v646
      %v648 = vpop.f32.mrb[0].mxu0
      %v649 = vpop.f32.mrb[0].mxu0
      %v650 = vadd.f32 %v298, %v649
      %v651 = vpop.f32.mrb[0].mxu0
      %652 = vmatprep.mubr.bf16.mxu0 %v413
      %653 = vmatmul.mubr.bf16.gmra.mrb[0].mxu0 %v412
      %v654 = vpop.f32.mrb[0].mxu0
      %v655 = vadd.f32 %v298, %v654
      %v656 = vpop.f32.mrb[0].mxu0
      %v657 = vpop.f32.mrb[0].mxu0
      %v658 = vadd.f32 %v298, %v657
      %v659 = vpop.f32.mrb[0].mxu0
      %660 = vmatprep.mubr.bf16.mxu0 %v415
      %661 = vmatmul.mubr.bf16.gmra.mrb[0].mxu0 %v414
      %v662 = vpop.f32.mrb[0].mxu0
      %v663 = vadd.f32 %v298, %v662
      %v664 = vpop.f32.mrb[0].mxu0
      %v665 = vpop.f32.mrb[0].mxu0
      %v666 = vadd.f32 %v298, %v665
      %v667 = vpop.f32.mrb[0].mxu0
      %668 = vmatprep.mubr.bf16.mxu0 %v417
      %669 = vmatmul.mubr.bf16.gmra.mrb[0].mxu0 %v416
      %v670 = vpop.f32.mrb[0].mxu0
      %v671 = vadd.f32 %v298, %v670
      %v672 = vpop.f32.mrb[0].mxu0
      %v673 = vpop.f32.mrb[0].mxu0
      %v674 = vadd.f32 %v298, %v673
      %v675 = vpop.f32.mrb[0].mxu0
      %676 = vmatprep.mubr.bf16.mxu0 %v419
      %677 = vmatmul.mubr.bf16.gmra.mrb[0].mxu0 %v418
      %v678 = vpop.f32.mrb[0].mxu0
      %v679 = vadd.f32 %v298, %v678
      %v680 = vpop.f32.mrb[0].mxu0
      %v681 = vpop.f32.mrb[0].mxu0
      %v682 = vadd.f32 %v298, %v681
      %v683 = vpop.f32.mrb[0].mxu0
      %684 = vmatprep.mubr.bf16.mxu0 %v421
      %685 = vmatmul.mubr.bf16.gmra.mrb[0].mxu0 %v420
      %v686 = vpop.f32.mrb[0].mxu0
      %v687 = vadd.f32 %v298, %v686
      %v688 = vpop.f32.mrb[0].mxu0
      %v689 = vpop.f32.mrb[0].mxu0
      %v690 = vadd.f32 %v298, %v689
      %v691 = vpop.f32.mrb[0].mxu0
      %692 = vmatprep.mubr.bf16.mxu0 %v423
      %693 = vmatmul.mubr.bf16.gmra.mrb[0].mxu0 %v422
      %v694 = vpop.f32.mrb[0].mxu0
      %v695 = vadd.f32 %v298, %v694
      %v696 = vpop.f32.mrb[0].mxu0
      %v697 = vpop.f32.mrb[0].mxu0
      %v698 = vadd.f32 %v298, %v697
      %v699 = vpop.f32.mrb[0].mxu0
      %700 = vmatprep.mubr.bf16.mxu0 %v425
      %701 = vmatmul.mubr.bf16.gmra.mrb[0].mxu0 %v424
      %v702 = vpop.f32.mrb[0].mxu0
      %v703 = vadd.f32 %v298, %v702
      %v704 = vpop.f32.mrb[0].mxu0
      %v705 = vpop.f32.mrb[0].mxu0
      %v706 = vadd.f32 %v298, %v705
      %v707 = vpop.f32.mrb[0].mxu0
      %708 = vmatprep.mubr.bf16.mxu0 %v427
      %709 = vmatmul.mubr.bf16.gmra.mrb[0].mxu0 %v426
      %v710 = vpop.f32.mrb[0].mxu0
      %v711 = vadd.f32 %v298, %v710
      %v712 = vpop.f32.mrb[0].mxu0
      %v713 = vpop.f32.mrb[0].mxu0
      %v714 = vadd.f32 %v298, %v713
      %v715 = vpop.f32.mrb[0].mxu0
      %716 = vdwg.mxu0
      %vm717 = vcmp.ge.f32.partialorder %v591, 0.0
      %vm718 = vcmp.ge.f32.partialorder %v594, 0.0
      %vm719 = vcmp.ge.f32.partialorder %v599, 0.0
      %vm720 = vcmp.ge.f32.partialorder %v602, 0.0
      %vm721 = vcmp.ge.f32.partialorder %v607, 0.0
      %vm722 = vcmp.ge.f32.partialorder %v610, 0.0
      %vm723 = vcmp.ge.f32.partialorder %v615, 0.0
      %vm724 = vcmp.ge.f32.partialorder %v618, 0.0
      %vm725 = vcmp.ge.f32.partialorder %v623, 0.0
      %vm726 = vcmp.ge.f32.partialorder %v626, 0.0
      %vm727 = vcmp.ge.f32.partialorder %v631, 0.0
      %vm728 = vcmp.ge.f32.partialorder %v634, 0.0
      %vm729 = vcmp.ge.f32.partialorder %v639, 0.0
      %vm730 = vcmp.ge.f32.partialorder %v642, 0.0
      %vm731 = vcmp.ge.f32.partialorder %v647, 0.0
      %vm732 = vcmp.ge.f32.partialorder %v650, 0.0
      %vm733 = vcmp.ge.f32.partialorder %v655, 0.0
      %vm734 = vcmp.ge.f32.partialorder %v658, 0.0
      %vm735 = vcmp.ge.f32.partialorder %v663, 0.0
      %vm736 = vcmp.ge.f32.partialorder %v666, 0.0
      %vm737 = vcmp.ge.f32.partialorder %v671, 0.0
      %vm738 = vcmp.ge.f32.partialorder %v674, 0.0
      %vm739 = vcmp.ge.f32.partialorder %v679, 0.0
      %vm740 = vcmp.ge.f32.partialorder %v682, 0.0
      %vm741 = vcmp.ge.f32.partialorder %v687, 0.0
      %vm742 = vcmp.ge.f32.partialorder %v690, 0.0
      %vm743 = vcmp.ge.f32.partialorder %v695, 0.0
      %vm744 = vcmp.ge.f32.partialorder %v698, 0.0
      %vm745 = vcmp.ge.f32.partialorder %v703, 0.0
      %vm746 = vcmp.ge.f32.partialorder %v706, 0.0
      %vm747 = vcmp.ge.f32.partialorder %v711, 0.0
      %vm748 = vcmp.ge.f32.partialorder %v714, 0.0
      %v749 = vmul.f32 %v591, 0.2
      %v750 = vmul.f32 %v594, 0.2
      %v751 = vmul.f32 %v599, 0.2
      %v752 = vmul.f32 %v602, 0.2
      %v753 = vmul.f32 %v607, 0.2
      %v754 = vmul.f32 %v610, 0.2
      %v755 = vmul.f32 %v615, 0.2
      %v756 = vmul.f32 %v618, 0.2
      %v757 = vmul.f32 %v623, 0.2
      %v758 = vmul.f32 %v626, 0.2
      %v759 = vmul.f32 %v631, 0.2
      %v760 = vmul.f32 %v634, 0.2
      %v761 = vmul.f32 %v639, 0.2
      %v762 = vmul.f32 %v642, 0.2
      %v763 = vmul.f32 %v647, 0.2
      %v764 = vmul.f32 %v650, 0.2
      %v765 = vmul.f32 %v655, 0.2
      %v766 = vmul.f32 %v658, 0.2
      %v767 = vmul.f32 %v663, 0.2
      %v768 = vmul.f32 %v666, 0.2
      %v769 = vmul.f32 %v671, 0.2
      %v770 = vmul.f32 %v674, 0.2
      %v771 = vmul.f32 %v679, 0.2
      %v772 = vmul.f32 %v682, 0.2
      %v773 = vmul.f32 %v687, 0.2
      %v774 = vmul.f32 %v690, 0.2
      %v775 = vmul.f32 %v695, 0.2
      %v776 = vmul.f32 %v698, 0.2
      %v777 = vmul.f32 %v703, 0.2
      %v778 = vmul.f32 %v706, 0.2
      %v779 = vmul.f32 %v711, 0.2
      %v780 = vmul.f32 %v714, 0.2
      %v781 = vsel %vm717, %v591, %v749
      %v782 = vsel %vm718, %v594, %v750
      %v783 = vsel %vm719, %v599, %v751
      %v784 = vsel %vm720, %v602, %v752
      %v785 = vsel %vm721, %v607, %v753
      %v786 = vsel %vm722, %v610, %v754
      %v787 = vsel %vm723, %v615, %v755
      %v788 = vsel %vm724, %v618, %v756
      %v789 = vsel %vm725, %v623, %v757
      %v790 = vsel %vm726, %v626, %v758
      %v791 = vsel %vm727, %v631, %v759
      %v792 = vsel %vm728, %v634, %v760
      %v793 = vsel %vm729, %v639, %v761
      %v794 = vsel %vm730, %v642, %v762
      %v795 = vsel %vm731, %v647, %v763
      %v796 = vsel %vm732, %v650, %v764
      %v797 = vsel %vm733, %v655, %v765
      %v798 = vsel %vm734, %v658, %v766
      %v799 = vsel %vm735, %v663, %v767
      %v800 = vsel %vm736, %v666, %v768
      %v801 = vsel %vm737, %v671, %v769
      %v802 = vsel %vm738, %v674, %v770
      %v803 = vsel %vm739, %v679, %v771
      %v804 = vsel %vm740, %v682, %v772
      %v805 = vsel %vm741, %v687, %v773
      %v806 = vsel %vm742, %v690, %v774
      %v807 = vsel %vm743, %v695, %v775
      %v808 = vsel %vm744, %v698, %v776
      %v809 = vsel %vm745, %v703, %v777
      %v810 = vsel %vm746, %v706, %v778
      %v811 = vsel %vm747, %v711, %v779
      %v812 = vsel %vm748, %v714, %v780
      %813 = vst [vmem:[%s226] sm:$0xff] %v781
      %814 = vst [vmem:[%s226 + $0x8] sm:$0xff] %v782
      %815 = vst [vmem:[%s226 + $0x10] sm:$0xff] %v783
      %816 = vst [vmem:[%s226 + $0x18] sm:$0xff] %v784
      %817 = vst [vmem:[%s226 + $0x20] sm:$0xff] %v785
      %818 = vst [vmem:[%s226 + $0x28] sm:$0xff] %v786
      %819 = vst [vmem:[%s226 + $0x30] sm:$0xff] %v787
      %820 = vst [vmem:[%s226 + $0x38] sm:$0xff] %v788
      %821 = vst [vmem:[%s226 + $0x40] sm:$0xff] %v789
      %822 = vst [vmem:[%s226 + $0x48] sm:$0xff] %v790
      %823 = vst [vmem:[%s226 + $0x50] sm:$0xff] %v791
      %824 = vst [vmem:[%s226 + $0x58] sm:$0xff] %v792
      %825 = vst [vmem:[%s226 + $0x60] sm:$0xff] %v793
      %826 = vst [vmem:[%s226 + $0x68] sm:$0xff] %v794
      %827 = vst [vmem:[%s226 + $0x70] sm:$0xff] %v795
      %828 = vst [vmem:[%s226 + $0x78] sm:$0xff] %v796
      %829 = vst [vmem:[%s226 + $0x80] sm:$0xff] %v797
      %830 = vst [vmem:[%s226 + $0x88] sm:$0xff] %v798
      %831 = vst [vmem:[%s226 + $0x90] sm:$0xff] %v799
      %832 = vst [vmem:[%s226 + $0x98] sm:$0xff] %v800
      %833 = vst [vmem:[%s226 + $0xa0] sm:$0xff] %v801
      %834 = vst [vmem:[%s226 + $0xa8] sm:$0xff] %v802
      %835 = vst [vmem:[%s226 + $0xb0] sm:$0xff] %v803
      %836 = vst [vmem:[%s226 + $0xb8] sm:$0xff] %v804
      %837 = vst [vmem:[%s226 + $0xc0] sm:$0xff] %v805
      %838 = vst [vmem:[%s226 + $0xc8] sm:$0xff] %v806
      %839 = vst [vmem:[%s226 + $0xd0] sm:$0xff] %v807
      %840 = vst [vmem:[%s226 + $0xd8] sm:$0xff] %v808
      %841 = vst [vmem:[%s226 + $0xe0] sm:$0xff] %v809
      %842 = vst [vmem:[%s226 + $0xe8] sm:$0xff] %v810
      %843 = vst [vmem:[%s226 + $0xf0] sm:$0xff] %v811
      %844 = vst [vmem:[%s226 + $0xf8] sm:$0xff] %v812
      %s845 = smul.u32 32, %s18
      %p846 = scmp.lt.s32.totalorder %s845, 127
      %s847 = scalar_select %p846, %s845, 127
      %p848 = scmp.lt.s32.totalorder %s19, 0
      %s849 = scalar_select %p848, %s19, 0
      %s850 = sadd.s32 %s849, %s847
      %s851 = smul.addr %s850, 8
      %s852 = scalar_lea.vmem %s3, %s851
      // Predicated region
      $region33: #{forward.8} parent=31 // pred_check
        %p853 = pneg %p124
      $region34: #{forward.8} parent=31 // pred_check_branch
        %855 = sbr.rel (%p853) target = $region36
      $region35: #{forward.8} parent=31 // pred_region
        %s856 = smul.u32 32, %s18
      $region36: #{forward.8} parent=31 // pred_fallthru
        _
    $region32: #{forward.8} parent=5 // pred_fallthru
      _
    %p857 = scmp.le.s32.totalorder 2, %s9
    // Predicated region
    $region37: #{forward.8} parent=5 // pred_check
      %p858 = pneg %p857
    $region38: #{forward.8} parent=5 // pred_check_branch
      %860 = sbr.rel (%p858) target = $region40
    $region39: #{forward.8} parent=5 // pred_region
      %s861 = ssub.s32 %s9, 2
      // Predicated region
      $region41: #{forward.8} parent=39 // pred_check
        %p862 = pneg %p130
      $region42: #{forward.8} parent=39 // pred_check_branch
        %864 = sbr.rel (%p862) target = $region44
      $region43: #{forward.8} parent=39 // pred_region
        %s865 = smul.u32 32, %s20
        %p866 = scmp.lt.s32.totalorder %s865, 127
        %s867 = scalar_select %p866, %s865, 127
        %p868 = scmp.lt.s32.totalorder %s21, 0
        %s869 = scalar_select %p868, %s21, 0
        %s870 = sadd.s32 %s869, %s867
        %s871 = smul.addr %s870, 8
        %s872 = scalar_lea.vmem %s3, %s871
      $region44: #{forward.8} parent=39 // pred_fallthru
        _
    $region40: #{forward.8} parent=5 // pred_fallthru
      _
  $region6: #{forward.8} parent=0 // loop_footer
    %s13 = sadd.s32 1, %s9
  $region7: #{forward.8} parent=0 // loop_footer_branch
    %8 = sbr.rel target = $region3
  $region8: #{forward.8} parent=0 // loop_exit
    _

// kernel: forward.7
$region0: #{forward.7}
  #allocation0 [shape = 'u32[]', space=smem, size = 0x4, offset = 0x4, fixed_abs, tag = 'smem constant byte address 0x4 - core index']
  #allocation1 [shape = 'u32[144,128]{1,0:T(1,128)}', space=vmem, size = 0x12000, scoped, tag = 'internal scratch']
  %s0 = inlined_call_operand.vmem [shape: bf16[512,2048], index: 0, kind: input, shape index: {}]
  %s1 = inlined_call_operand.vmem [shape: bf16[2048,128], index: 1, kind: input, shape index: {}]
  %s2 = inlined_call_operand.vmem [shape: f32[1,128], index: 2, kind: input, shape index: {}]
  %s3 = inlined_call_operand.vmem [shape: f32[512,128], index: 3, kind: output, shape index: {}]
  %s4 = sld [smem:[#allocation0]]
  $region45: #{forward.7} parent=0
    _
  %s6 = ssub.s32 1, %s4
  %s7 = scalar_select 0, %s6, %s4
  loop: start=0, step=1, limit=4
  $region2: #{forward.7} parent=0 // loop_pre_header
    _
  $region3: #{forward.7} parent=0 // loop_header
    %s9 = sphi 0, %s13
    %p10 = scmp.ge.s32.totalorder %s9, 4
    %s16 = sphi 0, %s28
    %s17 = sphi 0, %s24
    %s18 = sphi 0, %s16
    %s19 = sphi 0, %s17
    %s20 = sphi 0, %s18
    %s21 = sphi 0, %s19
    %s31 = sphi 0, %s33
    %s34 = sphi 0, %s31
    %s35 = sphi 0, %s34
    %s51 = sphi 0, %s35
    %s57 = sphi 0, %s59
    %s60 = sphi 0, %s57
    %s61 = sphi 0, %s60
    %s77 = sphi 0, %s61
    %s83 = sphi 0, %s85
    %s86 = sphi 0, %s83
    %s87 = sphi 0, %s86
    %s103 = sphi 0, %s87
    %s111 = sphi 0, %s113
    %s114 = sphi 0, %s111
    %s115 = sphi 0, %s114
    %s131 = sphi 0, %s115
  $region4: #{forward.7} parent=0 // loop_header_branch
    %12 = sbr.rel (%p10) target = $region8
  $region5: #{forward.7} parent=0 // loop_body
    %s14 = ssub.s32 %s9, 1
    %s15 = ssub.s32 %s9, 2
    %s22 = sadd.s32 1, %s17
    %p23 = scmp.ge.s32.totalorder %s22, 1
    %s24 = scalar_select %p23, 0, %s22
    %s25 = sadd.s32 1, %s16
    %s26 = scalar_select %p23, %s25, %s16
    %p27 = scmp.ge.s32.totalorder %s26, 2
    %s28 = scalar_select %p27, 0, %s26
    %s29 = ssub.s32 %s16, %s28
    %p30 = scmp.eq.s32.totalorder %s29, 0
    %s32 = sadd.s32 %s31, 1
    %s33 = scalar_select %p30, %s31, %s32
    %p36 = pneg %p30
    %p37 = scmp.eq.s32.totalorder %s9, 1
    %p38 = por %p36, %p37
    %p39 = scmp.ne.s32.totalorder %s31, %s34
    %p40 = scmp.eq.s32.totalorder %s9, 0
    %p41 = por %p39, %p40
    %p42 = scmp.ne.s32.totalorder %s31, %s34
    %p43 = scmp.eq.s32.totalorder %s14, 1
    %p44 = por %p42, %p43
    %p45 = scmp.ne.s32.totalorder %s34, %s35
    %p46 = scmp.eq.s32.totalorder %s14, 0
    %p47 = por %p45, %p46
    %p48 = scmp.ne.s32.totalorder %s34, %s35
    %p49 = scmp.eq.s32.totalorder %s15, 1
    %p50 = por %p48, %p49
    %p52 = scmp.ne.s32.totalorder %s35, %s51
    %p53 = scmp.eq.s32.totalorder %s15, 0
    %p54 = por %p52, %p53
    %s55 = ssub.s32 %s17, %s24
    %p56 = scmp.eq.s32.totalorder %s55, 0
    %s58 = sadd.s32 %s57, 1
    %s59 = scalar_select %p56, %s57, %s58
    %p62 = pneg %p56
    %p63 = scmp.eq.s32.totalorder %s9, 1
    %p64 = por %p62, %p63
    %p65 = scmp.ne.s32.totalorder %s57, %s60
    %p66 = scmp.eq.s32.totalorder %s9, 0
    %p67 = por %p65, %p66
    %p68 = scmp.ne.s32.totalorder %s57, %s60
    %p69 = scmp.eq.s32.totalorder %s14, 1
    %p70 = por %p68, %p69
    %p71 = scmp.ne.s32.totalorder %s60, %s61
    %p72 = scmp.eq.s32.totalorder %s14, 0
    %p73 = por %p71, %p72
    %p74 = scmp.ne.s32.totalorder %s60, %s61
    %p75 = scmp.eq.s32.totalorder %s15, 1
    %p76 = por %p74, %p75
    %p78 = scmp.ne.s32.totalorder %s61, %s77
    %p79 = scmp.eq.s32.totalorder %s15, 0
    %p80 = por %p78, %p79
    %s81 = ssub.s32 %s17, %s24
    %p82 = scmp.eq.s32.totalorder %s81, 0
    %s84 = sadd.s32 %s83, 1
    %s85 = scalar_select %p82, %s83, %s84
    %p88 = pneg %p82
    %p89 = scmp.eq.s32.totalorder %s9, 1
    %p90 = por %p88, %p89
    %p91 = scmp.ne.s32.totalorder %s83, %s86
    %p92 = scmp.eq.s32.totalorder %s9, 0
    %p93 = por %p91, %p92
    %p94 = scmp.ne.s32.totalorder %s83, %s86
    %p95 = scmp.eq.s32.totalorder %s14, 1
    %p96 = por %p94, %p95
    %p97 = scmp.ne.s32.totalorder %s86, %s87
    %p98 = scmp.eq.s32.totalorder %s14, 0
    %p99 = por %p97, %p98
    %p100 = scmp.ne.s32.totalorder %s86, %s87
    %p101 = scmp.eq.s32.totalorder %s15, 1
    %p102 = por %p100, %p101
    %p104 = scmp.ne.s32.totalorder %s87, %s103
    %p105 = scmp.eq.s32.totalorder %s15, 0
    %p106 = por %p104, %p105
    %s107 = ssub.s32 %s16, %s28
    %s108 = ssub.s32 %s17, %s24
    %s109 = sor.u32 %s107, %s108
    %p110 = scmp.eq.s32.totalorder %s109, 0
    %s112 = sadd.s32 %s111, 1
    %s113 = scalar_select %p110, %s111, %s112
    %p116 = pneg %p110
    %p117 = scmp.eq.s32.totalorder %s9, 1
    %p118 = por %p116, %p117
    %p119 = scmp.ne.s32.totalorder %s111, %s114
    %p120 = scmp.eq.s32.totalorder %s9, 0
    %p121 = por %p119, %p120
    %p122 = scmp.ne.s32.totalorder %s111, %s114
    %p123 = scmp.eq.s32.totalorder %s14, 1
    %p124 = por %p122, %p123
    %p125 = scmp.ne.s32.totalorder %s114, %s115
    %p126 = scmp.eq.s32.totalorder %s14, 0
    %p127 = por %p125, %p126
    %p128 = scmp.ne.s32.totalorder %s114, %s115
    %p129 = scmp.eq.s32.totalorder %s15, 1
    %p130 = por %p128, %p129
    %p132 = scmp.ne.s32.totalorder %s115, %s131
    %p133 = scmp.eq.s32.totalorder %s15, 0
    %p134 = por %p132, %p133
    %p135 = scmp.le.s32.totalorder 1, %s9
    %p136 = scmp.lt.s32.totalorder %s9, 3
    %p137 = pnand %p135, %p136
    %p138 = pneg %p137
    // Predicated region
    $region9: #{forward.7} parent=5 // pred_check
      _
    $region10: #{forward.7} parent=5 // pred_check_branch
      %140 = sbr.rel (%p137) target = $region12
    $region11: #{forward.7} parent=5 // pred_region
      %s141 = ssub.s32 %s9, 1
      // Predicated region
      $region13: #{forward.7} parent=11 // pred_check
        %p142 = pneg %p73
      $region14: #{forward.7} parent=11 // pred_check_branch
        %144 = sbr.rel (%p142) target = $region16
      $region15: #{forward.7} parent=11 // pred_region
        %p145 = scmp.lt.s32.totalorder %s19, 0
        %s146 = scalar_select %p145, %s19, 0
        %s147 = smul.addr %s146, 4
        %s148 = scalar_lea.vmem %s1, %s147
      $region16: #{forward.7} parent=11 // pred_fallthru
        _
      // Predicated region
      $region17: #{forward.7} parent=11 // pred_check
        %p149 = pneg %p99
      $region18: #{forward.7} parent=11 // pred_check_branch
        %151 = sbr.rel (%p149) target = $region20
      $region19: #{forward.7} parent=11 // pred_region
        %p152 = scmp.lt.s32.totalorder %s19, 0
        %s153 = scalar_select %p152, %s19, 0
        %s154 = scalar_lea.vmem %s2, %s153
      $region20: #{forward.7} parent=11 // pred_fallthru
        _
    $region12: #{forward.7} parent=5 // pred_fallthru
      _
    %p155 = scmp.lt.s32.totalorder %s9, 2
    // Predicated region
    $region21: #{forward.7} parent=5 // pred_check
      %p156 = pneg %p155
    $region22: #{forward.7} parent=5 // pred_check_branch
      %158 = sbr.rel (%p156) target = $region24
    $region23: #{forward.7} parent=5 // pred_region
      // Predicated region
      $region25: #{forward.7} parent=23 // pred_check
        %p159 = pneg %p41
      $region26: #{forward.7} parent=23 // pred_check_branch
        %161 = sbr.rel (%p159) target = $region28
      $region27: #{forward.7} parent=23 // pred_region
        %s162 = smul.u32 32, %s16
        %p163 = scmp.lt.s32.totalorder %s162, 63
        %s164 = scalar_select %p163, %s162, 63
        %s165 = smul.addr %s164, 16
        %s166 = smul.addr %s165, 4
        %s167 = scalar_lea.vmem %s0, %s166
        %s168 = smul.u32 32, %s16
      $region28: #{forward.7} parent=23 // pred_fallthru
        _
    $region24: #{forward.7} parent=5 // pred_fallthru
      _
    %p169 = scmp.le.s32.totalorder 1, %s9
    %p170 = scmp.lt.s32.totalorder %s9, 3
    %p171 = pnand %p169, %p170
    %p172 = pneg %p171
    // Predicated region
    $region29: #{forward.7} parent=5 // pred_check
      _
    $region30: #{forward.7} parent=5 // pred_check_branch
      %174 = sbr.rel (%p171) target = $region32
    $region31: #{forward.7} parent=5 // pred_region
      %s175 = ssub.s32 %s9, 1
      %s176 = smul.u32 32, %s18
      %p177 = scmp.lt.s32.totalorder %s176, 63
      %s178 = scalar_select %p177, %s176, 63
      %s179 = smul.addr %s178, 16
      %s180 = smul.addr %s179, 4
      %s181 = scalar_lea.vmem %s0, %s180
      %p182 = pneg %p47
      %p183 = pneg %p44
      %p184 = scmp.lt.s32.totalorder %s19, 0
      %s185 = scalar_select %p184, %s19, 0
      %s186 = smul.addr %s185, 4
      %s187 = scalar_lea.vmem %s1, %s186
      %p188 = pneg %p73
      %p189 = pneg %p70
      %p190 = scmp.lt.s32.totalorder %s19, 0
      %s191 = scalar_select %p190, %s19, 0
      %s192 = scalar_lea.vmem %s2, %s191
      %p193 = pneg %p99
      %p194 = pneg %p96
      %p195 = pneg %p127
      %p196 = pneg %p124
      %s197 = smul.u32 32, %s18
      %p198 = scmp.lt.s32.totalorder %s197, 63
      %s199 = scalar_select %p198, %s197, 63
      %p200 = scmp.lt.s32.totalorder %s19, 0
      %s201 = scalar_select %p200, %s19, 0
      %s202 = sadd.s32 %s201, %s199
      %s203 = smul.addr %s202, 8
      %s204 = scalar_lea.vmem %s3, %s203
      %s205 = smul.u32 32, %s18
      %p206 = scmp.lt.s32.totalorder %s205, 63
      %s207 = scalar_select %p206, %s205, 63
      %s208 = smul.addr %s207, 16
      %s209 = smul.addr %s208, 4
      %s210 = scalar_lea.vmem %s0, %s209
      %s211 = smul.u32 32, %s18
      %p212 = scmp.lt.s32.totalorder %s19, 0
      %s213 = scalar_select %p212, %s19, 0
      %s214 = smul.addr %s213, 4
      %s215 = scalar_lea.vmem %s1, %s214
      %p216 = scmp.lt.s32.totalorder %s19, 0
      %s217 = scalar_select %p216, %s19, 0
      %s218 = scalar_lea.vmem %s2, %s217
      %s219 = smul.u32 32, %s18
      %p220 = scmp.lt.s32.totalorder %s219, 63
      %s221 = scalar_select %p220, %s219, 63
      %p222 = scmp.lt.s32.totalorder %s19, 0
      %s223 = scalar_select %p222, %s19, 0
      %s224 = sadd.s32 %s223, %s221
      %s225 = smul.addr %s224, 8
      %s226 = scalar_lea.vmem %s3, %s225
      %s227 = smul.u32 32, %s18
      %v229 = vld [vmem:[%s210] sm:$0xff]
      %v230 = vld [vmem:[%s210 + $0x8] sm:$0xff]
      %v231 = vld [vmem:[%s210 + $0x10] sm:$0xff]
      %v232 = vld [vmem:[%s210 + $0x18] sm:$0xff]
      %v233 = vld [vmem:[%s210 + $0x20] sm:$0xff]
      %v234 = vld [vmem:[%s210 + $0x28] sm:$0xff]
      %v235 = vld [vmem:[%s210 + $0x30] sm:$0xff]
      %v236 = vld [vmem:[%s210 + $0x38] sm:$0xff]
      %v237 = vld [vmem:[%s210 + $0x40] sm:$0xff]
      %v238 = vld [vmem:[%s210 + $0x48] sm:$0xff]
      %v239 = vld [vmem:[%s210 + $0x50] sm:$0xff]
      %v240 = vld [vmem:[%s210 + $0x58] sm:$0xff]
      %v241 = vld [vmem:[%s210 + $0x60] sm:$0xff]
      %v242 = vld [vmem:[%s210 + $0x68] sm:$0xff]
      %v243 = vld [vmem:[%s210 + $0x70] sm:$0xff]
      %v244 = vld [vmem:[%s210 + $0x78] sm:$0xff]
      %v245 = vld [vmem:[%s210 + $0x80] sm:$0xff]
      %v246 = vld [vmem:[%s210 + $0x88] sm:$0xff]
      %v247 = vld [vmem:[%s210 + $0x90] sm:$0xff]
      %v248 = vld [vmem:[%s210 + $0x98] sm:$0xff]
      %v249 = vld [vmem:[%s210 + $0xa0] sm:$0xff]
      %v250 = vld [vmem:[%s210 + $0xa8] sm:$0xff]
      %v251 = vld [vmem:[%s210 + $0xb0] sm:$0xff]
      %v252 = vld [vmem:[%s210 + $0xb8] sm:$0xff]
      %v253 = vld [vmem:[%s210 + $0xc0] sm:$0xff]
      %v254 = vld [vmem:[%s210 + $0xc8] sm:$0xff]
      %v255 = vld [vmem:[%s210 + $0xd0] sm:$0xff]
      %v256 = vld [vmem:[%s210 + $0xd8] sm:$0xff]
      %v257 = vld [vmem:[%s210 + $0xe0] sm:$0xff]
      %v258 = vld [vmem:[%s210 + $0xe8] sm:$0xff]
      %v259 = vld [vmem:[%s210 + $0xf0] sm:$0xff]
      %v260 = vld [vmem:[%s210 + $0xf8] sm:$0xff]
      %v261 = vld [vmem:[%s210 + $0x100] sm:$0xff]
      %v262 = vld [vmem:[%s210 + $0x108] sm:$0xff]
      %v263 = vld [vmem:[%s210 + $0x110] sm:$0xff]
      %v264 = vld [vmem:[%s210 + $0x118] sm:$0xff]
      %v265 = vld [vmem:[%s210 + $0x120] sm:$0xff]
      %v266 = vld [vmem:[%s210 + $0x128] sm:$0xff]
      %v267 = vld [vmem:[%s210 + $0x130] sm:$0xff]
      %v268 = vld [vmem:[%s210 + $0x138] sm:$0xff]
      %v269 = vld [vmem:[%s210 + $0x140] sm:$0xff]
      %v270 = vld [vmem:[%s210 + $0x148] sm:$0xff]
      %v271 = vld [vmem:[%s210 + $0x150] sm:$0xff]
      %v272 = vld [vmem:[%s210 + $0x158] sm:$0xff]
      %v273 = vld [vmem:[%s210 + $0x160] sm:$0xff]
      %v274 = vld [vmem:[%s210 + $0x168] sm:$0xff]
      %v275 = vld [vmem:[%s210 + $0x170] sm:$0xff]
      %v276 = vld [vmem:[%s210 + $0x178] sm:$0xff]
      %v277 = vld [vmem:[%s210 + $0x180] sm:$0xff]
      %v278 = vld [vmem:[%s210 + $0x188] sm:$0xff]
      %v279 = vld [vmem:[%s210 + $0x190] sm:$0xff]
      %v280 = vld [vmem:[%s210 + $0x198] sm:$0xff]
      %v281 = vld [vmem:[%s210 + $0x1a0] sm:$0xff]
      %v282 = vld [vmem:[%s210 + $0x1a8] sm:$0xff]
      %v283 = vld [vmem:[%s210 + $0x1b0] sm:$0xff]
      %v284 = vld [vmem:[%s210 + $0x1b8] sm:$0xff]
      %v285 = vld [vmem:[%s210 + $0x1c0] sm:$0xff]
      %v286 = vld [vmem:[%s210 + $0x1c8] sm:$0xff]
      %v287 = vld [vmem:[%s210 + $0x1d0] sm:$0xff]
      %v288 = vld [vmem:[%s210 + $0x1d8] sm:$0xff]
      %v289 = vld [vmem:[%s210 + $0x1e0] sm:$0xff]
      %v290 = vld [vmem:[%s210 + $0x1e8] sm:$0xff]
      %v291 = vld [vmem:[%s210 + $0x1f0] sm:$0xff]
      %v292 = vld [vmem:[%s210 + $0x1f8] sm:$0xff]
      %v293 = vld [vmem:[%s210 + $0x200] sm:$0xff]
      %v294 = vld [vmem:[%s210 + $0x208] sm:$0xff]
      %v295 = vld [vmem:[%s210 + $0x210] sm:$0xff]
      %v296 = vld [vmem:[%s210 + $0x218] sm:$0xff]
      %v297 = vld [vmem:[%s210 + $0x220] sm:$0xff]
      %v298 = vld [vmem:[%s210 + $0x228] sm:$0xff]
      %v299 = vld [vmem:[%s210 + $0x230] sm:$0xff]
      %v300 = vld [vmem:[%s210 + $0x238] sm:$0xff]
      %v301 = vld [vmem:[%s210 + $0x240] sm:$0xff]
      %v302 = vld [vmem:[%s210 + $0x248] sm:$0xff]
      %v303 = vld [vmem:[%s210 + $0x250] sm:$0xff]
      %v304 = vld [vmem:[%s210 + $0x258] sm:$0xff]
      %v305 = vld [vmem:[%s210 + $0x260] sm:$0xff]
      %v306 = vld [vmem:[%s210 + $0x268] sm:$0xff]
      %v307 = vld [vmem:[%s210 + $0x270] sm:$0xff]
      %v308 = vld [vmem:[%s210 + $0x278] sm:$0xff]
      %v309 = vld [vmem:[%s210 + $0x280] sm:$0xff]
      %v310 = vld [vmem:[%s210 + $0x288] sm:$0xff]
      %v311 = vld [vmem:[%s210 + $0x290] sm:$0xff]
      %v312 = vld [vmem:[%s210 + $0x298] sm:$0xff]
      %v313 = vld [vmem:[%s210 + $0x2a0] sm:$0xff]
      %v314 = vld [vmem:[%s210 + $0x2a8] sm:$0xff]
      %v315 = vld [vmem:[%s210 + $0x2b0] sm:$0xff]
      %v316 = vld [vmem:[%s210 + $0x2b8] sm:$0xff]
      %v317 = vld [vmem:[%s210 + $0x2c0] sm:$0xff]
      %v318 = vld [vmem:[%s210 + $0x2c8] sm:$0xff]
      %v319 = vld [vmem:[%s210 + $0x2d0] sm:$0xff]
      %v320 = vld [vmem:[%s210 + $0x2d8] sm:$0xff]
      %v321 = vld [vmem:[%s210 + $0x2e0] sm:$0xff]
      %v322 = vld [vmem:[%s210 + $0x2e8] sm:$0xff]
      %v323 = vld [vmem:[%s210 + $0x2f0] sm:$0xff]
      %v324 = vld [vmem:[%s210 + $0x2f8] sm:$0xff]
      %v325 = vld [vmem:[%s210 + $0x300] sm:$0xff]
      %v326 = vld [vmem:[%s210 + $0x308] sm:$0xff]
      %v327 = vld [vmem:[%s210 + $0x310] sm:$0xff]
      %v328 = vld [vmem:[%s210 + $0x318] sm:$0xff]
      %v329 = vld [vmem:[%s210 + $0x320] sm:$0xff]
      %v330 = vld [vmem:[%s210 + $0x328] sm:$0xff]
      %v331 = vld [vmem:[%s210 + $0x330] sm:$0xff]
      %v332 = vld [vmem:[%s210 + $0x338] sm:$0xff]
      %v333 = vld [vmem:[%s210 + $0x340] sm:$0xff]
      %v334 = vld [vmem:[%s210 + $0x348] sm:$0xff]
      %v335 = vld [vmem:[%s210 + $0x350] sm:$0xff]
      %v336 = vld [vmem:[%s210 + $0x358] sm:$0xff]
      %v337 = vld [vmem:[%s210 + $0x360] sm:$0xff]
      %v338 = vld [vmem:[%s210 + $0x368] sm:$0xff]
      %v339 = vld [vmem:[%s210 + $0x370] sm:$0xff]
      %v340 = vld [vmem:[%s210 + $0x378] sm:$0xff]
      %v341 = vld [vmem:[%s210 + $0x380] sm:$0xff]
      %v342 = vld [vmem:[%s210 + $0x388] sm:$0xff]
      %v343 = vld [vmem:[%s210 + $0x390] sm:$0xff]
      %v344 = vld [vmem:[%s210 + $0x398] sm:$0xff]
      %v345 = vld [vmem:[%s210 + $0x3a0] sm:$0xff]
      %v346 = vld [vmem:[%s210 + $0x3a8] sm:$0xff]
      %v347 = vld [vmem:[%s210 + $0x3b0] sm:$0xff]
      %v348 = vld [vmem:[%s210 + $0x3b8] sm:$0xff]
      %v349 = vld [vmem:[%s210 + $0x3c0] sm:$0xff]
      %v350 = vld [vmem:[%s210 + $0x3c8] sm:$0xff]
      %v351 = vld [vmem:[%s210 + $0x3d0] sm:$0xff]
      %v352 = vld [vmem:[%s210 + $0x3d8] sm:$0xff]
      %v353 = vld [vmem:[%s210 + $0x3e0] sm:$0xff]
      %v354 = vld [vmem:[%s210 + $0x3e8] sm:$0xff]
      %v355 = vld [vmem:[%s210 + $0x3f0] sm:$0xff]
      %v356 = vld [vmem:[%s210 + $0x3f8] sm:$0xff]
      %v357 = vld [vmem:[%s210 + $0x400] sm:$0xff]
      %v358 = vld [vmem:[%s210 + $0x408] sm:$0xff]
      %v359 = vld [vmem:[%s210 + $0x410] sm:$0xff]
      %v360 = vld [vmem:[%s210 + $0x418] sm:$0xff]
      %v361 = vld [vmem:[%s210 + $0x420] sm:$0xff]
      %v362 = vld [vmem:[%s210 + $0x428] sm:$0xff]
      %v363 = vld [vmem:[%s210 + $0x430] sm:$0xff]
      %v364 = vld [vmem:[%s210 + $0x438] sm:$0xff]
      %v365 = vld [vmem:[%s210 + $0x440] sm:$0xff]
      %v366 = vld [vmem:[%s210 + $0x448] sm:$0xff]
      %v367 = vld [vmem:[%s210 + $0x450] sm:$0xff]
      %v368 = vld [vmem:[%s210 + $0x458] sm:$0xff]
      %v369 = vld [vmem:[%s210 + $0x460] sm:$0xff]
      %v370 = vld [vmem:[%s210 + $0x468] sm:$0xff]
      %v371 = vld [vmem:[%s210 + $0x470] sm:$0xff]
      %v372 = vld [vmem:[%s210 + $0x478] sm:$0xff]
      %v373 = vld [vmem:[%s210 + $0x480] sm:$0xff]
      %v374 = vld [vmem:[%s210 + $0x488] sm:$0xff]
      %v375 = vld [vmem:[%s210 + $0x490] sm:$0xff]
      %v376 = vld [vmem:[%s210 + $0x498] sm:$0xff]
      %v377 = vld [vmem:[%s210 + $0x4a0] sm:$0xff]
      %v378 = vld [vmem:[%s210 + $0x4a8] sm:$0xff]
      %v379 = vld [vmem:[%s210 + $0x4b0] sm:$0xff]
      %v380 = vld [vmem:[%s210 + $0x4b8] sm:$0xff]
      %v381 = vld [vmem:[%s210 + $0x4c0] sm:$0xff]
      %v382 = vld [vmem:[%s210 + $0x4c8] sm:$0xff]
      %v383 = vld [vmem:[%s210 + $0x4d0] sm:$0xff]
      %v384 = vld [vmem:[%s210 + $0x4d8] sm:$0xff]
      %v385 = vld [vmem:[%s210 + $0x4e0] sm:$0xff]
      %v386 = vld [vmem:[%s210 + $0x4e8] sm:$0xff]
      %v387 = vld [vmem:[%s210 + $0x4f0] sm:$0xff]
      %v388 = vld [vmem:[%s210 + $0x4f8] sm:$0xff]
      %v389 = vld [vmem:[%s210 + $0x500] sm:$0xff]
      %v390 = vld [vmem:[%s210 + $0x508] sm:$0xff]
      %v391 = vld [vmem:[%s210 + $0x510] sm:$0xff]
      %v392 = vld [vmem:[%s210 + $0x518] sm:$0xff]
      %v393 = vld [vmem:[%s210 + $0x520] sm:$0xff]
      %v394 = vld [vmem:[%s210 + $0x528] sm:$0xff]
      %v395 = vld [vmem:[%s210 + $0x530] sm:$0xff]
      %v396 = vld [vmem:[%s210 + $0x538] sm:$0xff]
      %v397 = vld [vmem:[%s210 + $0x540] sm:$0xff]
      %v398 = vld [vmem:[%s210 + $0x548] sm:$0xff]
      %v399 = vld [vmem:[%s210 + $0x550] sm:$0xff]
      %v400 = vld [vmem:[%s210 + $0x558] sm:$0xff]
      %v401 = vld [vmem:[%s210 + $0x560] sm:$0xff]
      %v402 = vld [vmem:[%s210 + $0x568] sm:$0xff]
      %v403 = vld [vmem:[%s210 + $0x570] sm:$0xff]
      %v404 = vld [vmem:[%s210 + $0x578] sm:$0xff]
      %v405 = vld [vmem:[%s210 + $0x580] sm:$0xff]
      %v406 = vld [vmem:[%s210 + $0x588] sm:$0xff]
      %v407 = vld [vmem:[%s210 + $0x590] sm:$0xff]
      %v408 = vld [vmem:[%s210 + $0x598] sm:$0xff]
      %v409 = vld [vmem:[%s210 + $0x5a0] sm:$0xff]
      %v410 = vld [vmem:[%s210 + $0x5a8] sm:$0xff]
      %v411 = vld [vmem:[%s210 + $0x5b0] sm:$0xff]
      %v412 = vld [vmem:[%s210 + $0x5b8] sm:$0xff]
      %v413 = vld [vmem:[%s210 + $0x5c0] sm:$0xff]
      %v414 = vld [vmem:[%s210 + $0x5c8] sm:$0xff]
      %v415 = vld [vmem:[%s210 + $0x5d0] sm:$0xff]
      %v416 = vld [vmem:[%s210 + $0x5d8] sm:$0xff]
      %v417 = vld [vmem:[%s210 + $0x5e0] sm:$0xff]
      %v418 = vld [vmem:[%s210 + $0x5e8] sm:$0xff]
      %v419 = vld [vmem:[%s210 + $0x5f0] sm:$0xff]
      %v420 = vld [vmem:[%s210 + $0x5f8] sm:$0xff]
      %v421 = vld [vmem:[%s210 + $0x600] sm:$0xff]
      %v422 = vld [vmem:[%s210 + $0x608] sm:$0xff]
      %v423 = vld [vmem:[%s210 + $0x610] sm:$0xff]
      %v424 = vld [vmem:[%s210 + $0x618] sm:$0xff]
      %v425 = vld [vmem:[%s210 + $0x620] sm:$0xff]
      %v426 = vld [vmem:[%s210 + $0x628] sm:$0xff]
      %v427 = vld [vmem:[%s210 + $0x630] sm:$0xff]
      %v428 = vld [vmem:[%s210 + $0x638] sm:$0xff]
      %v429 = vld [vmem:[%s210 + $0x640] sm:$0xff]
      %v430 = vld [vmem:[%s210 + $0x648] sm:$0xff]
      %v431 = vld [vmem:[%s210 + $0x650] sm:$0xff]
      %v432 = vld [vmem:[%s210 + $0x658] sm:$0xff]
      %v433 = vld [vmem:[%s210 + $0x660] sm:$0xff]
      %v434 = vld [vmem:[%s210 + $0x668] sm:$0xff]
      %v435 = vld [vmem:[%s210 + $0x670] sm:$0xff]
      %v436 = vld [vmem:[%s210 + $0x678] sm:$0xff]
      %v437 = vld [vmem:[%s210 + $0x680] sm:$0xff]
      %v438 = vld [vmem:[%s210 + $0x688] sm:$0xff]
      %v439 = vld [vmem:[%s210 + $0x690] sm:$0xff]
      %v440 = vld [vmem:[%s210 + $0x698] sm:$0xff]
      %v441 = vld [vmem:[%s210 + $0x6a0] sm:$0xff]
      %v442 = vld [vmem:[%s210 + $0x6a8] sm:$0xff]
      %v443 = vld [vmem:[%s210 + $0x6b0] sm:$0xff]
      %v444 = vld [vmem:[%s210 + $0x6b8] sm:$0xff]
      %v445 = vld [vmem:[%s210 + $0x6c0] sm:$0xff]
      %v446 = vld [vmem:[%s210 + $0x6c8] sm:$0xff]
      %v447 = vld [vmem:[%s210 + $0x6d0] sm:$0xff]
      %v448 = vld [vmem:[%s210 + $0x6d8] sm:$0xff]
      %v449 = vld [vmem:[%s210 + $0x6e0] sm:$0xff]
      %v450 = vld [vmem:[%s210 + $0x6e8] sm:$0xff]
      %v451 = vld [vmem:[%s210 + $0x6f0] sm:$0xff]
      %v452 = vld [vmem:[%s210 + $0x6f8] sm:$0xff]
      %v453 = vld [vmem:[%s210 + $0x700] sm:$0xff]
      %v454 = vld [vmem:[%s210 + $0x708] sm:$0xff]
      %v455 = vld [vmem:[%s210 + $0x710] sm:$0xff]
      %v456 = vld [vmem:[%s210 + $0x718] sm:$0xff]
      %v457 = vld [vmem:[%s210 + $0x720] sm:$0xff]
      %v458 = vld [vmem:[%s210 + $0x728] sm:$0xff]
      %v459 = vld [vmem:[%s210 + $0x730] sm:$0xff]
      %v460 = vld [vmem:[%s210 + $0x738] sm:$0xff]
      %v461 = vld [vmem:[%s210 + $0x740] sm:$0xff]
      %v462 = vld [vmem:[%s210 + $0x748] sm:$0xff]
      %v463 = vld [vmem:[%s210 + $0x750] sm:$0xff]
      %v464 = vld [vmem:[%s210 + $0x758] sm:$0xff]
      %v465 = vld [vmem:[%s210 + $0x760] sm:$0xff]
      %v466 = vld [vmem:[%s210 + $0x768] sm:$0xff]
      %v467 = vld [vmem:[%s210 + $0x770] sm:$0xff]
      %v468 = vld [vmem:[%s210 + $0x778] sm:$0xff]
      %v469 = vld [vmem:[%s210 + $0x780] sm:$0xff]
      %v470 = vld [vmem:[%s210 + $0x788] sm:$0xff]
      %v471 = vld [vmem:[%s210 + $0x790] sm:$0xff]
      %v472 = vld [vmem:[%s210 + $0x798] sm:$0xff]
      %v473 = vld [vmem:[%s210 + $0x7a0] sm:$0xff]
      %v474 = vld [vmem:[%s210 + $0x7a8] sm:$0xff]
      %v475 = vld [vmem:[%s210 + $0x7b0] sm:$0xff]
      %v476 = vld [vmem:[%s210 + $0x7b8] sm:$0xff]
      %v477 = vld [vmem:[%s210 + $0x7c0] sm:$0xff]
      %v478 = vld [vmem:[%s210 + $0x7c8] sm:$0xff]
      %v479 = vld [vmem:[%s210 + $0x7d0] sm:$0xff]
      %v480 = vld [vmem:[%s210 + $0x7d8] sm:$0xff]
      %v481 = vld [vmem:[%s210 + $0x7e0] sm:$0xff]
      %v482 = vld [vmem:[%s210 + $0x7e8] sm:$0xff]
      %v483 = vld [vmem:[%s210 + $0x7f0] sm:$0xff]
      %v484 = vld [vmem:[%s210 + $0x7f8] sm:$0xff]
      %v485 = vld [vmem:[%s215] sm:$0xf]
      %v486 = vld [vmem:[%s215 + $0x4] sm:$0xf]
      %v487 = vld [vmem:[%s215 + $0x8] sm:$0xf]
      %v488 = vld [vmem:[%s215 + $0xc] sm:$0xf]
      %v489 = vld [vmem:[%s215 + $0x10] sm:$0xf]
      %v490 = vld [vmem:[%s215 + $0x14] sm:$0xf]
      %v491 = vld [vmem:[%s215 + $0x18] sm:$0xf]
      %v492 = vld [vmem:[%s215 + $0x1c] sm:$0xf]
      %v493 = vld [vmem:[%s215 + $0x20] sm:$0xf]
      %v494 = vld [vmem:[%s215 + $0x24] sm:$0xf]
      %v495 = vld [vmem:[%s215 + $0x28] sm:$0xf]
      %v496 = vld [vmem:[%s215 + $0x2c] sm:$0xf]
      %v497 = vld [vmem:[%s215 + $0x30] sm:$0xf]
      %v498 = vld [vmem:[%s215 + $0x34] sm:$0xf]
      %v499 = vld [vmem:[%s215 + $0x38] sm:$0xf]
      %v500 = vld [vmem:[%s215 + $0x3c] sm:$0xf]
      %v501 = vld [vmem:[%s215 + $0x40] sm:$0xf]
      %v502 = vld [vmem:[%s215 + $0x44] sm:$0xf]
      %v503 = vld [vmem:[%s215 + $0x48] sm:$0xf]
      %v504 = vld [vmem:[%s215 + $0x4c] sm:$0xf]
      %v505 = vld [vmem:[%s215 + $0x50] sm:$0xf]
      %v506 = vld [vmem:[%s215 + $0x54] sm:$0xf]
      %v507 = vld [vmem:[%s215 + $0x58] sm:$0xf]
      %v508 = vld [vmem:[%s215 + $0x5c] sm:$0xf]
      %v509 = vld [vmem:[%s215 + $0x60] sm:$0xf]
      %v510 = vld [vmem:[%s215 + $0x64] sm:$0xf]
      %v511 = vld [vmem:[%s215 + $0x68] sm:$0xf]
      %v512 = vld [vmem:[%s215 + $0x6c] sm:$0xf]
      %v513 = vld [vmem:[%s215 + $0x70] sm:$0xf]
      %v514 = vld [vmem:[%s215 + $0x74] sm:$0xf]
      %v515 = vld [vmem:[%s215 + $0x78] sm:$0xf]
      %v516 = vld [vmem:[%s215 + $0x7c] sm:$0xf]
      %v517 = vld [vmem:[%s215 + $0x80] sm:$0xf]
      %v518 = vld [vmem:[%s215 + $0x84] sm:$0xf]
      %v519 = vld [vmem:[%s215 + $0x88] sm:$0xf]
      %v520 = vld [vmem:[%s215 + $0x8c] sm:$0xf]
      %v521 = vld [vmem:[%s215 + $0x90] sm:$0xf]
      %v522 = vld [vmem:[%s215 + $0x94] sm:$0xf]
      %v523 = vld [vmem:[%s215 + $0x98] sm:$0xf]
      %v524 = vld [vmem:[%s215 + $0x9c] sm:$0xf]
      %v525 = vld [vmem:[%s215 + $0xa0] sm:$0xf]
      %v526 = vld [vmem:[%s215 + $0xa4] sm:$0xf]
      %v527 = vld [vmem:[%s215 + $0xa8] sm:$0xf]
      %v528 = vld [vmem:[%s215 + $0xac] sm:$0xf]
      %v529 = vld [vmem:[%s215 + $0xb0] sm:$0xf]
      %v530 = vld [vmem:[%s215 + $0xb4] sm:$0xf]
      %v531 = vld [vmem:[%s215 + $0xb8] sm:$0xf]
      %v532 = vld [vmem:[%s215 + $0xbc] sm:$0xf]
      %v533 = vld [vmem:[%s215 + $0xc0] sm:$0xf]
      %v534 = vld [vmem:[%s215 + $0xc4] sm:$0xf]
      %v535 = vld [vmem:[%s215 + $0xc8] sm:$0xf]
      %v536 = vld [vmem:[%s215 + $0xcc] sm:$0xf]
      %v537 = vld [vmem:[%s215 + $0xd0] sm:$0xf]
      %v538 = vld [vmem:[%s215 + $0xd4] sm:$0xf]
      %v539 = vld [vmem:[%s215 + $0xd8] sm:$0xf]
      %v540 = vld [vmem:[%s215 + $0xdc] sm:$0xf]
      %v541 = vld [vmem:[%s215 + $0xe0] sm:$0xf]
      %v542 = vld [vmem:[%s215 + $0xe4] sm:$0xf]
      %v543 = vld [vmem:[%s215 + $0xe8] sm:$0xf]
      %v544 = vld [vmem:[%s215 + $0xec] sm:$0xf]
      %v545 = vld [vmem:[%s215 + $0xf0] sm:$0xf]
      %v546 = vld [vmem:[%s215 + $0xf4] sm:$0xf]
      %v547 = vld [vmem:[%s215 + $0xf8] sm:$0xf]
      %v548 = vld [vmem:[%s215 + $0xfc] sm:$0xf]
      %v549 = vld [vmem:[%s215 + $0x100] sm:$0xf]
      %v550 = vld [vmem:[%s215 + $0x104] sm:$0xf]
      %v551 = vld [vmem:[%s215 + $0x108] sm:$0xf]
      %v552 = vld [vmem:[%s215 + $0x10c] sm:$0xf]
      %v553 = vld [vmem:[%s215 + $0x110] sm:$0xf]
      %v554 = vld [vmem:[%s215 + $0x114] sm:$0xf]
      %v555 = vld [vmem:[%s215 + $0x118] sm:$0xf]
      %v556 = vld [vmem:[%s215 + $0x11c] sm:$0xf]
      %v557 = vld [vmem:[%s215 + $0x120] sm:$0xf]
      %v558 = vld [vmem:[%s215 + $0x124] sm:$0xf]
      %v559 = vld [vmem:[%s215 + $0x128] sm:$0xf]
      %v560 = vld [vmem:[%s215 + $0x12c] sm:$0xf]
      %v561 = vld [vmem:[%s215 + $0x130] sm:$0xf]
      %v562 = vld [vmem:[%s215 + $0x134] sm:$0xf]
      %v563 = vld [vmem:[%s215 + $0x138] sm:$0xf]
      %v564 = vld [vmem:[%s215 + $0x13c] sm:$0xf]
      %v565 = vld [vmem:[%s215 + $0x140] sm:$0xf]
      %v566 = vld [vmem:[%s215 + $0x144] sm:$0xf]
      %v567 = vld [vmem:[%s215 + $0x148] sm:$0xf]
      %v568 = vld [vmem:[%s215 + $0x14c] sm:$0xf]
      %v569 = vld [vmem:[%s215 + $0x150] sm:$0xf]
      %v570 = vld [vmem:[%s215 + $0x154] sm:$0xf]
      %v571 = vld [vmem:[%s215 + $0x158] sm:$0xf]
      %v572 = vld [vmem:[%s215 + $0x15c] sm:$0xf]
      %v573 = vld [vmem:[%s215 + $0x160] sm:$0xf]
      %v574 = vld [vmem:[%s215 + $0x164] sm:$0xf]
      %v575 = vld [vmem:[%s215 + $0x168] sm:$0xf]
      %v576 = vld [vmem:[%s215 + $0x16c] sm:$0xf]
      %v577 = vld [vmem:[%s215 + $0x170] sm:$0xf]
      %v578 = vld [vmem:[%s215 + $0x174] sm:$0xf]
      %v579 = vld [vmem:[%s215 + $0x178] sm:$0xf]
      %v580 = vld [vmem:[%s215 + $0x17c] sm:$0xf]
      %v581 = vld [vmem:[%s215 + $0x180] sm:$0xf]
      %v582 = vld [vmem:[%s215 + $0x184] sm:$0xf]
      %v583 = vld [vmem:[%s215 + $0x188] sm:$0xf]
      %v584 = vld [vmem:[%s215 + $0x18c] sm:$0xf]
      %v585 = vld [vmem:[%s215 + $0x190] sm:$0xf]
      %v586 = vld [vmem:[%s215 + $0x194] sm:$0xf]
      %v587 = vld [vmem:[%s215 + $0x198] sm:$0xf]
      %v588 = vld [vmem:[%s215 + $0x19c] sm:$0xf]
      %v589 = vld [vmem:[%s215 + $0x1a0] sm:$0xf]
      %v590 = vld [vmem:[%s215 + $0x1a4] sm:$0xf]
      %v591 = vld [vmem:[%s215 + $0x1a8] sm:$0xf]
      %v592 = vld [vmem:[%s215 + $0x1ac] sm:$0xf]
      %v593 = vld [vmem:[%s215 + $0x1b0] sm:$0xf]
      %v594 = vld [vmem:[%s215 + $0x1b4] sm:$0xf]
      %v595 = vld [vmem:[%s215 + $0x1b8] sm:$0xf]
      %v596 = vld [vmem:[%s215 + $0x1bc] sm:$0xf]
      %v597 = vld [vmem:[%s215 + $0x1c0] sm:$0xf]
      %v598 = vld [vmem:[%s215 + $0x1c4] sm:$0xf]
      %v599 = vld [vmem:[%s215 + $0x1c8] sm:$0xf]
      %v600 = vld [vmem:[%s215 + $0x1cc] sm:$0xf]
      %v601 = vld [vmem:[%s215 + $0x1d0] sm:$0xf]
      %v602 = vld [vmem:[%s215 + $0x1d4] sm:$0xf]
      %v603 = vld [vmem:[%s215 + $0x1d8] sm:$0xf]
      %v604 = vld [vmem:[%s215 + $0x1dc] sm:$0xf]
      %v605 = vld [vmem:[%s215 + $0x1e0] sm:$0xf]
      %v606 = vld [vmem:[%s215 + $0x1e4] sm:$0xf]
      %v607 = vld [vmem:[%s215 + $0x1e8] sm:$0xf]
      %v608 = vld [vmem:[%s215 + $0x1ec] sm:$0xf]
      %v609 = vld [vmem:[%s215 + $0x1f0] sm:$0xf]
      %v610 = vld [vmem:[%s215 + $0x1f4] sm:$0xf]
      %v611 = vld [vmem:[%s215 + $0x1f8] sm:$0xf]
      %v612 = vld [vmem:[%s215 + $0x1fc] sm:$0xf]
      %v613 = vld [vmem:[%s215 + $0x200] sm:$0xf]
      %v614 = vld [vmem:[%s215 + $0x204] sm:$0xf]
      %v615 = vld [vmem:[%s215 + $0x208] sm:$0xf]
      %v616 = vld [vmem:[%s215 + $0x20c] sm:$0xf]
      %v617 = vld [vmem:[%s215 + $0x210] sm:$0xf]
      %v618 = vld [vmem:[%s215 + $0x214] sm:$0xf]
      %v619 = vld [vmem:[%s215 + $0x218] sm:$0xf]
      %v620 = vld [vmem:[%s215 + $0x21c] sm:$0xf]
      %v621 = vld [vmem:[%s215 + $0x220] sm:$0xf]
      %v622 = vld [vmem:[%s215 + $0x224] sm:$0xf]
      %v623 = vld [vmem:[%s215 + $0x228] sm:$0xf]
      %v624 = vld [vmem:[%s215 + $0x22c] sm:$0xf]
      %v625 = vld [vmem:[%s215 + $0x230] sm:$0xf]
      %v626 = vld [vmem:[%s215 + $0x234] sm:$0xf]
      %v627 = vld [vmem:[%s215 + $0x238] sm:$0xf]
      %v628 = vld [vmem:[%s215 + $0x23c] sm:$0xf]
      %v629 = vld [vmem:[%s215 + $0x240] sm:$0xf]
      %v630 = vld [vmem:[%s215 + $0x244] sm:$0xf]
      %v631 = vld [vmem:[%s215 + $0x248] sm:$0xf]
      %v632 = vld [vmem:[%s215 + $0x24c] sm:$0xf]
      %v633 = vld [vmem:[%s215 + $0x250] sm:$0xf]
      %v634 = vld [vmem:[%s215 + $0x254] sm:$0xf]
      %v635 = vld [vmem:[%s215 + $0x258] sm:$0xf]
      %v636 = vld [vmem:[%s215 + $0x25c] sm:$0xf]
      %v637 = vld [vmem:[%s215 + $0x260] sm:$0xf]
      %v638 = vld [vmem:[%s215 + $0x264] sm:$0xf]
      %v639 = vld [vmem:[%s215 + $0x268] sm:$0xf]
      %v640 = vld [vmem:[%s215 + $0x26c] sm:$0xf]
      %v641 = vld [vmem:[%s215 + $0x270] sm:$0xf]
      %v642 = vld [vmem:[%s215 + $0x274] sm:$0xf]
      %v643 = vld [vmem:[%s215 + $0x278] sm:$0xf]
      %v644 = vld [vmem:[%s215 + $0x27c] sm:$0xf]
      %v645 = vld [vmem:[%s215 + $0x280] sm:$0xf]
      %v646 = vld [vmem:[%s215 + $0x284] sm:$0xf]
      %v647 = vld [vmem:[%s215 + $0x288] sm:$0xf]
      %v648 = vld [vmem:[%s215 + $0x28c] sm:$0xf]
      %v649 = vld [vmem:[%s215 + $0x290] sm:$0xf]
      %v650 = vld [vmem:[%s215 + $0x294] sm:$0xf]
      %v651 = vld [vmem:[%s215 + $0x298] sm:$0xf]
      %v652 = vld [vmem:[%s215 + $0x29c] sm:$0xf]
      %v653 = vld [vmem:[%s215 + $0x2a0] sm:$0xf]
      %v654 = vld [vmem:[%s215 + $0x2a4] sm:$0xf]
      %v655 = vld [vmem:[%s215 + $0x2a8] sm:$0xf]
      %v656 = vld [vmem:[%s215 + $0x2ac] sm:$0xf]
      %v657 = vld [vmem:[%s215 + $0x2b0] sm:$0xf]
      %v658 = vld [vmem:[%s215 + $0x2b4] sm:$0xf]
      %v659 = vld [vmem:[%s215 + $0x2b8] sm:$0xf]
      %v660 = vld [vmem:[%s215 + $0x2bc] sm:$0xf]
      %v661 = vld [vmem:[%s215 + $0x2c0] sm:$0xf]
      %v662 = vld [vmem:[%s215 + $0x2c4] sm:$0xf]
      %v663 = vld [vmem:[%s215 + $0x2c8] sm:$0xf]
      %v664 = vld [vmem:[%s215 + $0x2cc] sm:$0xf]
      %v665 = vld [vmem:[%s215 + $0x2d0] sm:$0xf]
      %v666 = vld [vmem:[%s215 + $0x2d4] sm:$0xf]
      %v667 = vld [vmem:[%s215 + $0x2d8] sm:$0xf]
      %v668 = vld [vmem:[%s215 + $0x2dc] sm:$0xf]
      %v669 = vld [vmem:[%s215 + $0x2e0] sm:$0xf]
      %v670 = vld [vmem:[%s215 + $0x2e4] sm:$0xf]
      %v671 = vld [vmem:[%s215 + $0x2e8] sm:$0xf]
      %v672 = vld [vmem:[%s215 + $0x2ec] sm:$0xf]
      %v673 = vld [vmem:[%s215 + $0x2f0] sm:$0xf]
      %v674 = vld [vmem:[%s215 + $0x2f4] sm:$0xf]
      %v675 = vld [vmem:[%s215 + $0x2f8] sm:$0xf]
      %v676 = vld [vmem:[%s215 + $0x2fc] sm:$0xf]
      %v677 = vld [vmem:[%s215 + $0x300] sm:$0xf]
      %v678 = vld [vmem:[%s215 + $0x304] sm:$0xf]
      %v679 = vld [vmem:[%s215 + $0x308] sm:$0xf]
      %v680 = vld [vmem:[%s215 + $0x30c] sm:$0xf]
      %v681 = vld [vmem:[%s215 + $0x310] sm:$0xf]
      %v682 = vld [vmem:[%s215 + $0x314] sm:$0xf]
      %v683 = vld [vmem:[%s215 + $0x318] sm:$0xf]
      %v684 = vld [vmem:[%s215 + $0x31c] sm:$0xf]
      %v685 = vld [vmem:[%s215 + $0x320] sm:$0xf]
      %v686 = vld [vmem:[%s215 + $0x324] sm:$0xf]
      %v687 = vld [vmem:[%s215 + $0x328] sm:$0xf]
      %v688 = vld [vmem:[%s215 + $0x32c] sm:$0xf]
      %v689 = vld [vmem:[%s215 + $0x330] sm:$0xf]
      %v690 = vld [vmem:[%s215 + $0x334] sm:$0xf]
      %v691 = vld [vmem:[%s215 + $0x338] sm:$0xf]
      %v692 = vld [vmem:[%s215 + $0x33c] sm:$0xf]
      %v693 = vld [vmem:[%s215 + $0x340] sm:$0xf]
      %v694 = vld [vmem:[%s215 + $0x344] sm:$0xf]
      %v695 = vld [vmem:[%s215 + $0x348] sm:$0xf]
      %v696 = vld [vmem:[%s215 + $0x34c] sm:$0xf]
      %v697 = vld [vmem:[%s215 + $0x350] sm:$0xf]
      %v698 = vld [vmem:[%s215 + $0x354] sm:$0xf]
      %v699 = vld [vmem:[%s215 + $0x358] sm:$0xf]
      %v700 = vld [vmem:[%s215 + $0x35c] sm:$0xf]
      %v701 = vld [vmem:[%s215 + $0x360] sm:$0xf]
      %v702 = vld [vmem:[%s215 + $0x364] sm:$0xf]
      %v703 = vld [vmem:[%s215 + $0x368] sm:$0xf]
      %v704 = vld [vmem:[%s215 + $0x36c] sm:$0xf]
      %v705 = vld [vmem:[%s215 + $0x370] sm:$0xf]
      %v706 = vld [vmem:[%s215 + $0x374] sm:$0xf]
      %v707 = vld [vmem:[%s215 + $0x378] sm:$0xf]
      %v708 = vld [vmem:[%s215 + $0x37c] sm:$0xf]
      %v709 = vld [vmem:[%s215 + $0x380] sm:$0xf]
      %v710 = vld [vmem:[%s215 + $0x384] sm:$0xf]
      %v711 = vld [vmem:[%s215 + $0x388] sm:$0xf]
      %v712 = vld [vmem:[%s215 + $0x38c] sm:$0xf]
      %v713 = vld [vmem:[%s215 + $0x390] sm:$0xf]
      %v714 = vld [vmem:[%s215 + $0x394] sm:$0xf]
      %v715 = vld [vmem:[%s215 + $0x398] sm:$0xf]
      %v716 = vld [vmem:[%s215 + $0x39c] sm:$0xf]
      %v717 = vld [vmem:[%s215 + $0x3a0] sm:$0xf]
      %v718 = vld [vmem:[%s215 + $0x3a4] sm:$0xf]
      %v719 = vld [vmem:[%s215 + $0x3a8] sm:$0xf]
      %v720 = vld [vmem:[%s215 + $0x3ac] sm:$0xf]
      %v721 = vld [vmem:[%s215 + $0x3b0] sm:$0xf]
      %v722 = vld [vmem:[%s215 + $0x3b4] sm:$0xf]
      %v723 = vld [vmem:[%s215 + $0x3b8] sm:$0xf]
      %v724 = vld [vmem:[%s215 + $0x3bc] sm:$0xf]
      %v725 = vld [vmem:[%s215 + $0x3c0] sm:$0xf]
      %v726 = vld [vmem:[%s215 + $0x3c4] sm:$0xf]
      %v727 = vld [vmem:[%s215 + $0x3c8] sm:$0xf]
      %v728 = vld [vmem:[%s215 + $0x3cc] sm:$0xf]
      %v729 = vld [vmem:[%s215 + $0x3d0] sm:$0xf]
      %v730 = vld [vmem:[%s215 + $0x3d4] sm:$0xf]
      %v731 = vld [vmem:[%s215 + $0x3d8] sm:$0xf]
      %v732 = vld [vmem:[%s215 + $0x3dc] sm:$0xf]
      %v733 = vld [vmem:[%s215 + $0x3e0] sm:$0xf]
      %v734 = vld [vmem:[%s215 + $0x3e4] sm:$0xf]
      %v735 = vld [vmem:[%s215 + $0x3e8] sm:$0xf]
      %v736 = vld [vmem:[%s215 + $0x3ec] sm:$0xf]
      %v737 = vld [vmem:[%s215 + $0x3f0] sm:$0xf]
      %v738 = vld [vmem:[%s215 + $0x3f4] sm:$0xf]
      %v739 = vld [vmem:[%s215 + $0x3f8] sm:$0xf]
      %v740 = vld [vmem:[%s215 + $0x3fc] sm:$0xf]
      %v741 = vld [vmem:[%s218] sm:$0x1]
      %v743 = vlaneseq
      %v744 = vshrl.u32 %v743, 7
      %v745 = vsub.s32 0, %v744
      %v746 = vrot.slane %v741, %v745
      %v1004 = vunpack.c.l.b16 %v229
      %v1005 = vunpack.c.h.b16 %v229
      %v1006 = vunpack.c.l.b16 %v230
      %v1007 = vunpack.c.h.b16 %v230
      %v1008 = vunpack.c.l.b16 %v231
      %v1009 = vunpack.c.h.b16 %v231
      %v1010 = vunpack.c.l.b16 %v232
      %v1011 = vunpack.c.h.b16 %v232
      %v1012 = vunpack.c.l.b16 %v233
      %v1013 = vunpack.c.h.b16 %v233
      %v1014 = vunpack.c.l.b16 %v234
      %v1015 = vunpack.c.h.b16 %v234
      %v1016 = vunpack.c.l.b16 %v235
      %v1017 = vunpack.c.h.b16 %v235
      %v1018 = vunpack.c.l.b16 %v236
      %v1019 = vunpack.c.h.b16 %v236
      %v1020 = vunpack.c.l.b16 %v237
      %v1021 = vunpack.c.h.b16 %v237
      %v1022 = vunpack.c.l.b16 %v238
      %v1023 = vunpack.c.h.b16 %v238
      %v1024 = vunpack.c.l.b16 %v239
      %v1025 = vunpack.c.h.b16 %v239
      %v1026 = vunpack.c.l.b16 %v240
      %v1027 = vunpack.c.h.b16 %v240
      %v1028 = vunpack.c.l.b16 %v241
      %v1029 = vunpack.c.h.b16 %v241
      %v1030 = vunpack.c.l.b16 %v242
      %v1031 = vunpack.c.h.b16 %v242
      %v1032 = vunpack.c.l.b16 %v243
      %v1033 = vunpack.c.h.b16 %v243
      %v1034 = vunpack.c.l.b16 %v244
      %v1035 = vunpack.c.h.b16 %v244
      %v1036 = vunpack.c.l.b16 %v245
      %v1037 = vunpack.c.h.b16 %v245
      %v1038 = vunpack.c.l.b16 %v246
      %v1039 = vunpack.c.h.b16 %v246
      %v1040 = vunpack.c.l.b16 %v247
      %v1041 = vunpack.c.h.b16 %v247
      %v1042 = vunpack.c.l.b16 %v248
      %v1043 = vunpack.c.h.b16 %v248
      %v1044 = vunpack.c.l.b16 %v249
      %v1045 = vunpack.c.h.b16 %v249
      %v1046 = vunpack.c.l.b16 %v250
      %v1047 = vunpack.c.h.b16 %v250
      %v1048 = vunpack.c.l.b16 %v251
      %v1049 = vunpack.c.h.b16 %v251
      %v1050 = vunpack.c.l.b16 %v252
      %v1051 = vunpack.c.h.b16 %v252
      %v1052 = vunpack.c.l.b16 %v253
      %v1053 = vunpack.c.h.b16 %v253
      %v1054 = vunpack.c.l.b16 %v254
      %v1055 = vunpack.c.h.b16 %v254
      %v1056 = vunpack.c.l.b16 %v255
      %v1057 = vunpack.c.h.b16 %v255
      %v1058 = vunpack.c.l.b16 %v256
      %v1059 = vunpack.c.h.b16 %v256
      %v1060 = vunpack.c.l.b16 %v257
      %v1061 = vunpack.c.h.b16 %v257
      %v1062 = vunpack.c.l.b16 %v258
      %v1063 = vunpack.c.h.b16 %v258
      %v1064 = vunpack.c.l.b16 %v259
      %v1065 = vunpack.c.h.b16 %v259
      %v1066 = vunpack.c.l.b16 %v260
      %v1067 = vunpack.c.h.b16 %v260
      %v1068 = vunpack.c.l.b16 %v261
      %v1069 = vunpack.c.h.b16 %v261
      %v1070 = vunpack.c.l.b16 %v262
      %v1071 = vunpack.c.h.b16 %v262
      %v1072 = vunpack.c.l.b16 %v263
      %v1073 = vunpack.c.h.b16 %v263
      %v1074 = vunpack.c.l.b16 %v264
      %v1075 = vunpack.c.h.b16 %v264
      %v1076 = vunpack.c.l.b16 %v265
      %v1077 = vunpack.c.h.b16 %v265
      %v1078 = vunpack.c.l.b16 %v266
      %v1079 = vunpack.c.h.b16 %v266
      %v1080 = vunpack.c.l.b16 %v267
      %v1081 = vunpack.c.h.b16 %v267
      %v1082 = vunpack.c.l.b16 %v268
      %v1083 = vunpack.c.h.b16 %v268
      %v1084 = vunpack.c.l.b16 %v269
      %v1085 = vunpack.c.h.b16 %v269
      %v1086 = vunpack.c.l.b16 %v270
      %v1087 = vunpack.c.h.b16 %v270
      %v1088 = vunpack.c.l.b16 %v271
      %v1089 = vunpack.c.h.b16 %v271
      %v1090 = vunpack.c.l.b16 %v272
      %v1091 = vunpack.c.h.b16 %v272
      %v1092 = vunpack.c.l.b16 %v273
      %v1093 = vunpack.c.h.b16 %v273
      %v1094 = vunpack.c.l.b16 %v274
      %v1095 = vunpack.c.h.b16 %v274
      %v1096 = vunpack.c.l.b16 %v275
      %v1097 = vunpack.c.h.b16 %v275
      %v1098 = vunpack.c.l.b16 %v276
      %v1099 = vunpack.c.h.b16 %v276
      %v1100 = vunpack.c.l.b16 %v277
      %v1101 = vunpack.c.h.b16 %v277
      %v1102 = vunpack.c.l.b16 %v278
      %v1103 = vunpack.c.h.b16 %v278
      %v1104 = vunpack.c.l.b16 %v279
      %v1105 = vunpack.c.h.b16 %v279
      %v1106 = vunpack.c.l.b16 %v280
      %v1107 = vunpack.c.h.b16 %v280
      %v1108 = vunpack.c.l.b16 %v281
      %v1109 = vunpack.c.h.b16 %v281
      %v1110 = vunpack.c.l.b16 %v282
      %v1111 = vunpack.c.h.b16 %v282
      %v1112 = vunpack.c.l.b16 %v283
      %v1113 = vunpack.c.h.b16 %v283
      %v1114 = vunpack.c.l.b16 %v284
      %v1115 = vunpack.c.h.b16 %v284
      %v1116 = vunpack.c.l.b16 %v285
      %v1117 = vunpack.c.h.b16 %v285
      %v1118 = vunpack.c.l.b16 %v286
      %v1119 = vunpack.c.h.b16 %v286
      %v1120 = vunpack.c.l.b16 %v287
      %v1121 = vunpack.c.h.b16 %v287
      %v1122 = vunpack.c.l.b16 %v288
      %v1123 = vunpack.c.h.b16 %v288
      %v1124 = vunpack.c.l.b16 %v289
      %v1125 = vunpack.c.h.b16 %v289
      %v1126 = vunpack.c.l.b16 %v290
      %v1127 = vunpack.c.h.b16 %v290
      %v1128 = vunpack.c.l.b16 %v291
      %v1129 = vunpack.c.h.b16 %v291
      %v1130 = vunpack.c.l.b16 %v292
      %v1131 = vunpack.c.h.b16 %v292
      %v1132 = vunpack.c.l.b16 %v293
      %v1133 = vunpack.c.h.b16 %v293
      %v1134 = vunpack.c.l.b16 %v294
      %v1135 = vunpack.c.h.b16 %v294
      %v1136 = vunpack.c.l.b16 %v295
      %v1137 = vunpack.c.h.b16 %v295
      %v1138 = vunpack.c.l.b16 %v296
      %v1139 = vunpack.c.h.b16 %v296
      %v1140 = vunpack.c.l.b16 %v297
      %v1141 = vunpack.c.h.b16 %v297
      %v1142 = vunpack.c.l.b16 %v298
      %v1143 = vunpack.c.h.b16 %v298
      %v1144 = vunpack.c.l.b16 %v299
      %v1145 = vunpack.c.h.b16 %v299
      %v1146 = vunpack.c.l.b16 %v300
      %v1147 = vunpack.c.h.b16 %v300
      %v1148 = vunpack.c.l.b16 %v301
      %v1149 = vunpack.c.h.b16 %v301
      %v1150 = vunpack.c.l.b16 %v302
      %v1151 = vunpack.c.h.b16 %v302
      %v1152 = vunpack.c.l.b16 %v303
      %v1153 = vunpack.c.h.b16 %v303
      %v1154 = vunpack.c.l.b16 %v304
      %v1155 = vunpack.c.h.b16 %v304
      %v1156 = vunpack.c.l.b16 %v305
      %v1157 = vunpack.c.h.b16 %v305
      %v1158 = vunpack.c.l.b16 %v306
      %v1159 = vunpack.c.h.b16 %v306
      %v1160 = vunpack.c.l.b16 %v307
      %v1161 = vunpack.c.h.b16 %v307
      %v1162 = vunpack.c.l.b16 %v308
      %v1163 = vunpack.c.h.b16 %v308
      %v1164 = vunpack.c.l.b16 %v309
      %v1165 = vunpack.c.h.b16 %v309
      %v1166 = vunpack.c.l.b16 %v310
      %v1167 = vunpack.c.h.b16 %v310
      %v1168 = vunpack.c.l.b16 %v311
      %v1169 = vunpack.c.h.b16 %v311
      %v1170 = vunpack.c.l.b16 %v312
      %v1171 = vunpack.c.h.b16 %v312
      %v1172 = vunpack.c.l.b16 %v313
      %v1173 = vunpack.c.h.b16 %v313
      %v1174 = vunpack.c.l.b16 %v314
      %v1175 = vunpack.c.h.b16 %v314
      %v1176 = vunpack.c.l.b16 %v315
      %v1177 = vunpack.c.h.b16 %v315
      %v1178 = vunpack.c.l.b16 %v316
      %v1179 = vunpack.c.h.b16 %v316
      %v1180 = vunpack.c.l.b16 %v317
      %v1181 = vunpack.c.h.b16 %v317
      %v1182 = vunpack.c.l.b16 %v318
      %v1183 = vunpack.c.h.b16 %v318
      %v1184 = vunpack.c.l.b16 %v319
      %v1185 = vunpack.c.h.b16 %v319
      %v1186 = vunpack.c.l.b16 %v320
      %v1187 = vunpack.c.h.b16 %v320
      %v1188 = vunpack.c.l.b16 %v321
      %v1189 = vunpack.c.h.b16 %v321
      %v1190 = vunpack.c.l.b16 %v322
      %v1191 = vunpack.c.h.b16 %v322
      %v1192 = vunpack.c.l.b16 %v323
      %v1193 = vunpack.c.h.b16 %v323
      %v1194 = vunpack.c.l.b16 %v324
      %v1195 = vunpack.c.h.b16 %v324
      %v1196 = vunpack.c.l.b16 %v325
      %v1197 = vunpack.c.h.b16 %v325
      %v1198 = vunpack.c.l.b16 %v326
      %v1199 = vunpack.c.h.b16 %v326
      %v1200 = vunpack.c.l.b16 %v327
      %v1201 = vunpack.c.h.b16 %v327
      %v1202 = vunpack.c.l.b16 %v328
      %v1203 = vunpack.c.h.b16 %v328
      %v1204 = vunpack.c.l.b16 %v329
      %v1205 = vunpack.c.h.b16 %v329
      %v1206 = vunpack.c.l.b16 %v330
      %v1207 = vunpack.c.h.b16 %v330
      %v1208 = vunpack.c.l.b16 %v331
      %v1209 = vunpack.c.h.b16 %v331
      %v1210 = vunpack.c.l.b16 %v332
      %v1211 = vunpack.c.h.b16 %v332
      %v1212 = vunpack.c.l.b16 %v333
      %v1213 = vunpack.c.h.b16 %v333
      %v1214 = vunpack.c.l.b16 %v334
      %v1215 = vunpack.c.h.b16 %v334
      %v1216 = vunpack.c.l.b16 %v335
      %v1217 = vunpack.c.h.b16 %v335
      %v1218 = vunpack.c.l.b16 %v336
      %v1219 = vunpack.c.h.b16 %v336
      %v1220 = vunpack.c.l.b16 %v337
      %v1221 = vunpack.c.h.b16 %v337
      %v1222 = vunpack.c.l.b16 %v338
      %v1223 = vunpack.c.h.b16 %v338
      %v1224 = vunpack.c.l.b16 %v339
      %v1225 = vunpack.c.h.b16 %v339
      %v1226 = vunpack.c.l.b16 %v340
      %v1227 = vunpack.c.h.b16 %v340
      %v1228 = vunpack.c.l.b16 %v341
      %v1229 = vunpack.c.h.b16 %v341
      %v1230 = vunpack.c.l.b16 %v342
      %v1231 = vunpack.c.h.b16 %v342
      %v1232 = vunpack.c.l.b16 %v343
      %v1233 = vunpack.c.h.b16 %v343
      %v1234 = vunpack.c.l.b16 %v344
      %v1235 = vunpack.c.h.b16 %v344
      %v1236 = vunpack.c.l.b16 %v345
      %v1237 = vunpack.c.h.b16 %v345
      %v1238 = vunpack.c.l.b16 %v346
      %v1239 = vunpack.c.h.b16 %v346
      %v1240 = vunpack.c.l.b16 %v347
      %v1241 = vunpack.c.h.b16 %v347
      %v1242 = vunpack.c.l.b16 %v348
      %v1243 = vunpack.c.h.b16 %v348
      %v1244 = vunpack.c.l.b16 %v349
      %v1245 = vunpack.c.h.b16 %v349
      %v1246 = vunpack.c.l.b16 %v350
      %v1247 = vunpack.c.h.b16 %v350
      %v1248 = vunpack.c.l.b16 %v351
      %v1249 = vunpack.c.h.b16 %v351
      %v1250 = vunpack.c.l.b16 %v352
      %v1251 = vunpack.c.h.b16 %v352
      %v1252 = vunpack.c.l.b16 %v353
      %v1253 = vunpack.c.h.b16 %v353
      %v1254 = vunpack.c.l.b16 %v354
      %v1255 = vunpack.c.h.b16 %v354
      %v1256 = vunpack.c.l.b16 %v355
      %v1257 = vunpack.c.h.b16 %v355
      %v1258 = vunpack.c.l.b16 %v356
      %v1259 = vunpack.c.h.b16 %v356
      %v1260 = vunpack.c.l.b16 %v357
      %v1261 = vunpack.c.h.b16 %v357
      %v1262 = vunpack.c.l.b16 %v358
      %v1263 = vunpack.c.h.b16 %v358
      %v1264 = vunpack.c.l.b16 %v359
      %v1265 = vunpack.c.h.b16 %v359
      %v1266 = vunpack.c.l.b16 %v360
      %v1267 = vunpack.c.h.b16 %v360
      %v1268 = vunpack.c.l.b16 %v361
      %v1269 = vunpack.c.h.b16 %v361
      %v1270 = vunpack.c.l.b16 %v362
      %v1271 = vunpack.c.h.b16 %v362
      %v1272 = vunpack.c.l.b16 %v363
      %v1273 = vunpack.c.h.b16 %v363
      %v1274 = vunpack.c.l.b16 %v364
      %v1275 = vunpack.c.h.b16 %v364
      %v1276 = vunpack.c.l.b16 %v365
      %v1277 = vunpack.c.h.b16 %v365
      %v1278 = vunpack.c.l.b16 %v366
      %v1279 = vunpack.c.h.b16 %v366
      %v1280 = vunpack.c.l.b16 %v367
      %v1281 = vunpack.c.h.b16 %v367
      %v1282 = vunpack.c.l.b16 %v368
      %v1283 = vunpack.c.h.b16 %v368
      %v1284 = vunpack.c.l.b16 %v369
      %v1285 = vunpack.c.h.b16 %v369
      %v1286 = vunpack.c.l.b16 %v370
      %v1287 = vunpack.c.h.b16 %v370
      %v1288 = vunpack.c.l.b16 %v371
      %v1289 = vunpack.c.h.b16 %v371
      %v1290 = vunpack.c.l.b16 %v372
      %v1291 = vunpack.c.h.b16 %v372
      %v1292 = vunpack.c.l.b16 %v373
      %v1293 = vunpack.c.h.b16 %v373
      %v1294 = vunpack.c.l.b16 %v374
      %v1295 = vunpack.c.h.b16 %v374
      %v1296 = vunpack.c.l.b16 %v375
      %v1297 = vunpack.c.h.b16 %v375
      %v1298 = vunpack.c.l.b16 %v376
      %v1299 = vunpack.c.h.b16 %v376
      %v1300 = vunpack.c.l.b16 %v377
      %v1301 = vunpack.c.h.b16 %v377
      %v1302 = vunpack.c.l.b16 %v378
      %v1303 = vunpack.c.h.b16 %v378
      %v1304 = vunpack.c.l.b16 %v379
      %v1305 = vunpack.c.h.b16 %v379
      %v1306 = vunpack.c.l.b16 %v380
      %v1307 = vunpack.c.h.b16 %v380
      %v1308 = vunpack.c.l.b16 %v381
      %v1309 = vunpack.c.h.b16 %v381
      %v1310 = vunpack.c.l.b16 %v382
      %v1311 = vunpack.c.h.b16 %v382
      %v1312 = vunpack.c.l.b16 %v383
      %v1313 = vunpack.c.h.b16 %v383
      %v1314 = vunpack.c.l.b16 %v384
      %v1315 = vunpack.c.h.b16 %v384
      %v1316 = vunpack.c.l.b16 %v385
      %v1317 = vunpack.c.h.b16 %v385
      %v1318 = vunpack.c.l.b16 %v386
      %v1319 = vunpack.c.h.b16 %v386
      %v1320 = vunpack.c.l.b16 %v387
      %v1321 = vunpack.c.h.b16 %v387
      %v1322 = vunpack.c.l.b16 %v388
      %v1323 = vunpack.c.h.b16 %v388
      %v1324 = vunpack.c.l.b16 %v389
      %v1325 = vunpack.c.h.b16 %v389
      %v1326 = vunpack.c.l.b16 %v390
      %v1327 = vunpack.c.h.b16 %v390
      %v1328 = vunpack.c.l.b16 %v391
      %v1329 = vunpack.c.h.b16 %v391
      %v1330 = vunpack.c.l.b16 %v392
      %v1331 = vunpack.c.h.b16 %v392
      %v1332 = vunpack.c.l.b16 %v393
      %v1333 = vunpack.c.h.b16 %v393
      %v1334 = vunpack.c.l.b16 %v394
      %v1335 = vunpack.c.h.b16 %v394
      %v1336 = vunpack.c.l.b16 %v395
      %v1337 = vunpack.c.h.b16 %v395
      %v1338 = vunpack.c.l.b16 %v396
      %v1339 = vunpack.c.h.b16 %v396
      %v1340 = vunpack.c.l.b16 %v397
      %v1341 = vunpack.c.h.b16 %v397
      %v1342 = vunpack.c.l.b16 %v398
      %v1343 = vunpack.c.h.b16 %v398
      %v1344 = vunpack.c.l.b16 %v399
      %v1345 = vunpack.c.h.b16 %v399
      %v1346 = vunpack.c.l.b16 %v400
      %v1347 = vunpack.c.h.b16 %v400
      %v1348 = vunpack.c.l.b16 %v401
      %v1349 = vunpack.c.h.b16 %v401
      %v1350 = vunpack.c.l.b16 %v402
      %v1351 = vunpack.c.h.b16 %v402
      %v1352 = vunpack.c.l.b16 %v403
      %v1353 = vunpack.c.h.b16 %v403
      %v1354 = vunpack.c.l.b16 %v404
      %v1355 = vunpack.c.h.b16 %v404
      %v1356 = vunpack.c.l.b16 %v405
      %v1357 = vunpack.c.h.b16 %v405
      %v1358 = vunpack.c.l.b16 %v406
      %v1359 = vunpack.c.h.b16 %v406
      %v1360 = vunpack.c.l.b16 %v407
      %v1361 = vunpack.c.h.b16 %v407
      %v1362 = vunpack.c.l.b16 %v408
      %v1363 = vunpack.c.h.b16 %v408
      %v1364 = vunpack.c.l.b16 %v409
      %v1365 = vunpack.c.h.b16 %v409
      %v1366 = vunpack.c.l.b16 %v410
      %v1367 = vunpack.c.h.b16 %v410
      %v1368 = vunpack.c.l.b16 %v411
      %v1369 = vunpack.c.h.b16 %v411
      %v1370 = vunpack.c.l.b16 %v412
      %v1371 = vunpack.c.h.b16 %v412
      %v1372 = vunpack.c.l.b16 %v413
      %v1373 = vunpack.c.h.b16 %v413
      %v1374 = vunpack.c.l.b16 %v414
      %v1375 = vunpack.c.h.b16 %v414
      %v1376 = vunpack.c.l.b16 %v415
      %v1377 = vunpack.c.h.b16 %v415
      %v1378 = vunpack.c.l.b16 %v416
      %v1379 = vunpack.c.h.b16 %v416
      %v1380 = vunpack.c.l.b16 %v417
      %v1381 = vunpack.c.h.b16 %v417
      %v1382 = vunpack.c.l.b16 %v418
      %v1383 = vunpack.c.h.b16 %v418
      %v1384 = vunpack.c.l.b16 %v419
      %v1385 = vunpack.c.h.b16 %v419
      %v1386 = vunpack.c.l.b16 %v420
      %v1387 = vunpack.c.h.b16 %v420
      %v1388 = vunpack.c.l.b16 %v421
      %v1389 = vunpack.c.h.b16 %v421
      %v1390 = vunpack.c.l.b16 %v422
      %v1391 = vunpack.c.h.b16 %v422
      %v1392 = vunpack.c.l.b16 %v423
      %v1393 = vunpack.c.h.b16 %v423
      %v1394 = vunpack.c.l.b16 %v424
      %v1395 = vunpack.c.h.b16 %v424
      %v1396 = vunpack.c.l.b16 %v425
      %v1397 = vunpack.c.h.b16 %v425
      %v1398 = vunpack.c.l.b16 %v426
      %v1399 = vunpack.c.h.b16 %v426
      %v1400 = vunpack.c.l.b16 %v427
      %v1401 = vunpack.c.h.b16 %v427
      %v1402 = vunpack.c.l.b16 %v428
      %v1403 = vunpack.c.h.b16 %v428
      %v1404 = vunpack.c.l.b16 %v429
      %v1405 = vunpack.c.h.b16 %v429
      %v1406 = vunpack.c.l.b16 %v430
      %v1407 = vunpack.c.h.b16 %v430
      %v1408 = vunpack.c.l.b16 %v431
      %v1409 = vunpack.c.h.b16 %v431
      %v1410 = vunpack.c.l.b16 %v432
      %v1411 = vunpack.c.h.b16 %v432
      %v1412 = vunpack.c.l.b16 %v433
      %v1413 = vunpack.c.h.b16 %v433
      %v1414 = vunpack.c.l.b16 %v434
      %v1415 = vunpack.c.h.b16 %v434
      %v1416 = vunpack.c.l.b16 %v435
      %v1417 = vunpack.c.h.b16 %v435
      %v1418 = vunpack.c.l.b16 %v436
      %v1419 = vunpack.c.h.b16 %v436
      %v1420 = vunpack.c.l.b16 %v437
      %v1421 = vunpack.c.h.b16 %v437
      %v1422 = vunpack.c.l.b16 %v438
      %v1423 = vunpack.c.h.b16 %v438
      %v1424 = vunpack.c.l.b16 %v439
      %v1425 = vunpack.c.h.b16 %v439
      %v1426 = vunpack.c.l.b16 %v440
      %v1427 = vunpack.c.h.b16 %v440
      %v1428 = vunpack.c.l.b16 %v441
      %v1429 = vunpack.c.h.b16 %v441
      %v1430 = vunpack.c.l.b16 %v442
      %v1431 = vunpack.c.h.b16 %v442
      %v1432 = vunpack.c.l.b16 %v443
      %v1433 = vunpack.c.h.b16 %v443
      %v1434 = vunpack.c.l.b16 %v444
      %v1435 = vunpack.c.h.b16 %v444
      %v1436 = vunpack.c.l.b16 %v445
      %v1437 = vunpack.c.h.b16 %v445
      %v1438 = vunpack.c.l.b16 %v446
      %v1439 = vunpack.c.h.b16 %v446
      %v1440 = vunpack.c.l.b16 %v447
      %v1441 = vunpack.c.h.b16 %v447
      %v1442 = vunpack.c.l.b16 %v448
      %v1443 = vunpack.c.h.b16 %v448
      %v1444 = vunpack.c.l.b16 %v449
      %v1445 = vunpack.c.h.b16 %v449
      %v1446 = vunpack.c.l.b16 %v450
      %v1447 = vunpack.c.h.b16 %v450
      %v1448 = vunpack.c.l.b16 %v451
      %v1449 = vunpack.c.h.b16 %v451
      %v1450 = vunpack.c.l.b16 %v452
      %v1451 = vunpack.c.h.b16 %v452
      %v1452 = vunpack.c.l.b16 %v453
      %v1453 = vunpack.c.h.b16 %v453
      %v1454 = vunpack.c.l.b16 %v454
      %v1455 = vunpack.c.h.b16 %v454
      %v1456 = vunpack.c.l.b16 %v455
      %v1457 = vunpack.c.h.b16 %v455
      %v1458 = vunpack.c.l.b16 %v456
      %v1459 = vunpack.c.h.b16 %v456
      %v1460 = vunpack.c.l.b16 %v457
      %v1461 = vunpack.c.h.b16 %v457
      %v1462 = vunpack.c.l.b16 %v458
      %v1463 = vunpack.c.h.b16 %v458
      %v1464 = vunpack.c.l.b16 %v459
      %v1465 = vunpack.c.h.b16 %v459
      %v1466 = vunpack.c.l.b16 %v460
      %v1467 = vunpack.c.h.b16 %v460
      %v1468 = vunpack.c.l.b16 %v461
      %v1469 = vunpack.c.h.b16 %v461
      %v1470 = vunpack.c.l.b16 %v462
      %v1471 = vunpack.c.h.b16 %v462
      %v1472 = vunpack.c.l.b16 %v463
      %v1473 = vunpack.c.h.b16 %v463
      %v1474 = vunpack.c.l.b16 %v464
      %v1475 = vunpack.c.h.b16 %v464
      %v1476 = vunpack.c.l.b16 %v465
      %v1477 = vunpack.c.h.b16 %v465
      %v1478 = vunpack.c.l.b16 %v466
      %v1479 = vunpack.c.h.b16 %v466
      %v1480 = vunpack.c.l.b16 %v467
      %v1481 = vunpack.c.h.b16 %v467
      %v1482 = vunpack.c.l.b16 %v468
      %v1483 = vunpack.c.h.b16 %v468
      %v1484 = vunpack.c.l.b16 %v469
      %v1485 = vunpack.c.h.b16 %v469
      %v1486 = vunpack.c.l.b16 %v470
      %v1487 = vunpack.c.h.b16 %v470
      %v1488 = vunpack.c.l.b16 %v471
      %v1489 = vunpack.c.h.b16 %v471
      %v1490 = vunpack.c.l.b16 %v472
      %v1491 = vunpack.c.h.b16 %v472
      %v1492 = vunpack.c.l.b16 %v473
      %v1493 = vunpack.c.h.b16 %v473
      %v1494 = vunpack.c.l.b16 %v474
      %v1495 = vunpack.c.h.b16 %v474
      %v1496 = vunpack.c.l.b16 %v475
      %v1497 = vunpack.c.h.b16 %v475
      %v1498 = vunpack.c.l.b16 %v476
      %v1499 = vunpack.c.h.b16 %v476
      %v1500 = vunpack.c.l.b16 %v477
      %v1501 = vunpack.c.h.b16 %v477
      %v1502 = vunpack.c.l.b16 %v478
      %v1503 = vunpack.c.h.b16 %v478
      %v1504 = vunpack.c.l.b16 %v479
      %v1505 = vunpack.c.h.b16 %v479
      %v1506 = vunpack.c.l.b16 %v480
      %v1507 = vunpack.c.h.b16 %v480
      %v1508 = vunpack.c.l.b16 %v481
      %v1509 = vunpack.c.h.b16 %v481
      %v1510 = vunpack.c.l.b16 %v482
      %v1511 = vunpack.c.h.b16 %v482
      %v1512 = vunpack.c.l.b16 %v483
      %v1513 = vunpack.c.h.b16 %v483
      %v1514 = vunpack.c.l.b16 %v484
      %v1515 = vunpack.c.h.b16 %v484
      %v1516 = vpack.c.b16 %v1020, %v1004
      %v1517 = vpack.c.b16 %v1021, %v1005
      %v1518 = vpack.c.b16 %v1022, %v1006
      %v1519 = vpack.c.b16 %v1023, %v1007
      %v1520 = vpack.c.b16 %v1024, %v1008
      %v1521 = vpack.c.b16 %v1025, %v1009
      %v1522 = vpack.c.b16 %v1026, %v1010
      %v1523 = vpack.c.b16 %v1027, %v1011
      %v1524 = vpack.c.b16 %v1028, %v1012
      %v1525 = vpack.c.b16 %v1029, %v1013
      %v1526 = vpack.c.b16 %v1030, %v1014
      %v1527 = vpack.c.b16 %v1031, %v1015
      %v1528 = vpack.c.b16 %v1032, %v1016
      %v1529 = vpack.c.b16 %v1033, %v1017
      %v1530 = vpack.c.b16 %v1034, %v1018
      %v1531 = vpack.c.b16 %v1035, %v1019
      %v1532 = vpack.c.b16 %v1052, %v1036
      %v1533 = vpack.c.b16 %v1053, %v1037
      %v1534 = vpack.c.b16 %v1054, %v1038
      %v1535 = vpack.c.b16 %v1055, %v1039
      %v1536 = vpack.c.b16 %v1056, %v1040
      %v1537 = vpack.c.b16 %v1057, %v1041
      %v1538 = vpack.c.b16 %v1058, %v1042
      %v1539 = vpack.c.b16 %v1059, %v1043
      %v1540 = vpack.c.b16 %v1060, %v1044
      %v1541 = vpack.c.b16 %v1061, %v1045
      %v1542 = vpack.c.b16 %v1062, %v1046
      %v1543 = vpack.c.b16 %v1063, %v1047
      %v1544 = vpack.c.b16 %v1064, %v1048
      %v1545 = vpack.c.b16 %v1065, %v1049
      %v1546 = vpack.c.b16 %v1066, %v1050
      %v1547 = vpack.c.b16 %v1067, %v1051
      %v1548 = vpack.c.b16 %v1084, %v1068
      %v1549 = vpack.c.b16 %v1085, %v1069
      %v1550 = vpack.c.b16 %v1086, %v1070
      %v1551 = vpack.c.b16 %v1087, %v1071
      %v1552 = vpack.c.b16 %v1088, %v1072
      %v1553 = vpack.c.b16 %v1089, %v1073
      %v1554 = vpack.c.b16 %v1090, %v1074
      %v1555 = vpack.c.b16 %v1091, %v1075
      %v1556 = vpack.c.b16 %v1092, %v1076
      %v1557 = vpack.c.b16 %v1093, %v1077
      %v1558 = vpack.c.b16 %v1094, %v1078
      %v1559 = vpack.c.b16 %v1095, %v1079
      %v1560 = vpack.c.b16 %v1096, %v1080
      %v1561 = vpack.c.b16 %v1097, %v1081
      %v1562 = vpack.c.b16 %v1098, %v1082
      %v1563 = vpack.c.b16 %v1099, %v1083
      %v1564 = vpack.c.b16 %v1116, %v1100
      %v1565 = vpack.c.b16 %v1117, %v1101
      %v1566 = vpack.c.b16 %v1118, %v1102
      %v1567 = vpack.c.b16 %v1119, %v1103
      %v1568 = vpack.c.b16 %v1120, %v1104
      %v1569 = vpack.c.b16 %v1121, %v1105
      %v1570 = vpack.c.b16 %v1122, %v1106
      %v1571 = vpack.c.b16 %v1123, %v1107
      %v1572 = vpack.c.b16 %v1124, %v1108
      %v1573 = vpack.c.b16 %v1125, %v1109
      %v1574 = vpack.c.b16 %v1126, %v1110
      %v1575 = vpack.c.b16 %v1127, %v1111
      %v1576 = vpack.c.b16 %v1128, %v1112
      %v1577 = vpack.c.b16 %v1129, %v1113
      %v1578 = vpack.c.b16 %v1130, %v1114
      %v1579 = vpack.c.b16 %v1131, %v1115
      %v1580 = vpack.c.b16 %v1148, %v1132
      %v1581 = vpack.c.b16 %v1149, %v1133
      %v1582 = vpack.c.b16 %v1150, %v1134
      %v1583 = vpack.c.b16 %v1151, %v1135
      %v1584 = vpack.c.b16 %v1152, %v1136
      %v1585 = vpack.c.b16 %v1153, %v1137
      %v1586 = vpack.c.b16 %v1154, %v1138
      %v1587 = vpack.c.b16 %v1155, %v1139
      %v1588 = vpack.c.b16 %v1156, %v1140
      %v1589 = vpack.c.b16 %v1157, %v1141
      %v1590 = vpack.c.b16 %v1158, %v1142
      %v1591 = vpack.c.b16 %v1159, %v1143
      %v1592 = vpack.c.b16 %v1160, %v1144
      %v1593 = vpack.c.b16 %v1161, %v1145
      %v1594 = vpack.c.b16 %v1162, %v1146
      %v1595 = vpack.c.b16 %v1163, %v1147
      %v1596 = vpack.c.b16 %v1180, %v1164
      %v1597 = vpack.c.b16 %v1181, %v1165
      %v1598 = vpack.c.b16 %v1182, %v1166
      %v1599 = vpack.c.b16 %v1183, %v1167
      %v1600 = vpack.c.b16 %v1184, %v1168
      %v1601 = vpack.c.b16 %v1185, %v1169
      %v1602 = vpack.c.b16 %v1186, %v1170
      %v1603 = vpack.c.b16 %v1187, %v1171
      %v1604 = vpack.c.b16 %v1188, %v1172
      %v1605 = vpack.c.b16 %v1189, %v1173
      %v1606 = vpack.c.b16 %v1190, %v1174
      %v1607 = vpack.c.b16 %v1191, %v1175
      %v1608 = vpack.c.b16 %v1192, %v1176
      %v1609 = vpack.c.b16 %v1193, %v1177
      %v1610 = vpack.c.b16 %v1194, %v1178
      %v1611 = vpack.c.b16 %v1195, %v1179
      %v1612 = vpack.c.b16 %v1212, %v1196
      %v1613 = vpack.c.b16 %v1213, %v1197
      %v1614 = vpack.c.b16 %v1214, %v1198
      %v1615 = vpack.c.b16 %v1215, %v1199
      %v1616 = vpack.c.b16 %v1216, %v1200
      %v1617 = vpack.c.b16 %v1217, %v1201
      %v1618 = vpack.c.b16 %v1218, %v1202
      %v1619 = vpack.c.b16 %v1219, %v1203
      %v1620 = vpack.c.b16 %v1220, %v1204
      %v1621 = vpack.c.b16 %v1221, %v1205
      %v1622 = vpack.c.b16 %v1222, %v1206
      %v1623 = vpack.c.b16 %v1223, %v1207
      %v1624 = vpack.c.b16 %v1224, %v1208
      %v1625 = vpack.c.b16 %v1225, %v1209
      %v1626 = vpack.c.b16 %v1226, %v1210
      %v1627 = vpack.c.b16 %v1227, %v1211
      %v1628 = vpack.c.b16 %v1244, %v1228
      %v1629 = vpack.c.b16 %v1245, %v1229
      %v1630 = vpack.c.b16 %v1246, %v1230
      %v1631 = vpack.c.b16 %v1247, %v1231
      %v1632 = vpack.c.b16 %v1248, %v1232
      %v1633 = vpack.c.b16 %v1249, %v1233
      %v1634 = vpack.c.b16 %v1250, %v1234
      %v1635 = vpack.c.b16 %v1251, %v1235
      %v1636 = vpack.c.b16 %v1252, %v1236
      %v1637 = vpack.c.b16 %v1253, %v1237
      %v1638 = vpack.c.b16 %v1254, %v1238
      %v1639 = vpack.c.b16 %v1255, %v1239
      %v1640 = vpack.c.b16 %v1256, %v1240
      %v1641 = vpack.c.b16 %v1257, %v1241
      %v1642 = vpack.c.b16 %v1258, %v1242
      %v1643 = vpack.c.b16 %v1259, %v1243
      %v1644 = vpack.c.b16 %v1276, %v1260
      %v1645 = vpack.c.b16 %v1277, %v1261
      %v1646 = vpack.c.b16 %v1278, %v1262
      %v1647 = vpack.c.b16 %v1279, %v1263
      %v1648 = vpack.c.b16 %v1280, %v1264
      %v1649 = vpack.c.b16 %v1281, %v1265
      %v1650 = vpack.c.b16 %v1282, %v1266
      %v1651 = vpack.c.b16 %v1283, %v1267
      %v1652 = vpack.c.b16 %v1284, %v1268
      %v1653 = vpack.c.b16 %v1285, %v1269
      %v1654 = vpack.c.b16 %v1286, %v1270
      %v1655 = vpack.c.b16 %v1287, %v1271
      %v1656 = vpack.c.b16 %v1288, %v1272
      %v1657 = vpack.c.b16 %v1289, %v1273
      %v1658 = vpack.c.b16 %v1290, %v1274
      %v1659 = vpack.c.b16 %v1291, %v1275
      %v1660 = vpack.c.b16 %v1308, %v1292
      %v1661 = vpack.c.b16 %v1309, %v1293
      %v1662 = vpack.c.b16 %v1310, %v1294
      %v1663 = vpack.c.b16 %v1311, %v1295
      %v1664 = vpack.c.b16 %v1312, %v1296
      %v1665 = vpack.c.b16 %v1313, %v1297
      %v1666 = vpack.c.b16 %v1314, %v1298
      %v1667 = vpack.c.b16 %v1315, %v1299
      %v1668 = vpack.c.b16 %v1316, %v1300
      %v1669 = vpack.c.b16 %v1317, %v1301
      %v1670 = vpack.c.b16 %v1318, %v1302
      %v1671 = vpack.c.b16 %v1319, %v1303
      %v1672 = vpack.c.b16 %v1320, %v1304
      %v1673 = vpack.c.b16 %v1321, %v1305
      %v1674 = vpack.c.b16 %v1322, %v1306
      %v1675 = vpack.c.b16 %v1323, %v1307
      %v1676 = vpack.c.b16 %v1340, %v1324
      %v1677 = vpack.c.b16 %v1341, %v1325
      %v1678 = vpack.c.b16 %v1342, %v1326
      %v1679 = vpack.c.b16 %v1343, %v1327
      %v1680 = vpack.c.b16 %v1344, %v1328
      %v1681 = vpack.c.b16 %v1345, %v1329
      %v1682 = vpack.c.b16 %v1346, %v1330
      %v1683 = vpack.c.b16 %v1347, %v1331
      %v1684 = vpack.c.b16 %v1348, %v1332
      %v1685 = vpack.c.b16 %v1349, %v1333
      %v1686 = vpack.c.b16 %v1350, %v1334
      %v1687 = vpack.c.b16 %v1351, %v1335
      %v1688 = vpack.c.b16 %v1352, %v1336
      %v1689 = vpack.c.b16 %v1353, %v1337
      %v1690 = vpack.c.b16 %v1354, %v1338
      %v1691 = vpack.c.b16 %v1355, %v1339
      %v1692 = vpack.c.b16 %v1372, %v1356
      %v1693 = vpack.c.b16 %v1373, %v1357
      %v1694 = vpack.c.b16 %v1374, %v1358
      %v1695 = vpack.c.b16 %v1375, %v1359
      %v1696 = vpack.c.b16 %v1376, %v1360
      %v1697 = vpack.c.b16 %v1377, %v1361
      %v1698 = vpack.c.b16 %v1378, %v1362
      %v1699 = vpack.c.b16 %v1379, %v1363
      %v1700 = vpack.c.b16 %v1380, %v1364
      %v1701 = vpack.c.b16 %v1381, %v1365
      %v1702 = vpack.c.b16 %v1382, %v1366
      %v1703 = vpack.c.b16 %v1383, %v1367
      %v1704 = vpack.c.b16 %v1384, %v1368
      %v1705 = vpack.c.b16 %v1385, %v1369
      %v1706 = vpack.c.b16 %v1386, %v1370
      %v1707 = vpack.c.b16 %v1387, %v1371
      %v1708 = vpack.c.b16 %v1404, %v1388
      %v1709 = vpack.c.b16 %v1405, %v1389
      %v1710 = vpack.c.b16 %v1406, %v1390
      %v1711 = vpack.c.b16 %v1407, %v1391
      %v1712 = vpack.c.b16 %v1408, %v1392
      %v1713 = vpack.c.b16 %v1409, %v1393
      %v1714 = vpack.c.b16 %v1410, %v1394
      %v1715 = vpack.c.b16 %v1411, %v1395
      %v1716 = vpack.c.b16 %v1412, %v1396
      %v1717 = vpack.c.b16 %v1413, %v1397
      %v1718 = vpack.c.b16 %v1414, %v1398
      %v1719 = vpack.c.b16 %v1415, %v1399
      %v1720 = vpack.c.b16 %v1416, %v1400
      %v1721 = vpack.c.b16 %v1417, %v1401
      %v1722 = vpack.c.b16 %v1418, %v1402
      %v1723 = vpack.c.b16 %v1419, %v1403
      %v1724 = vpack.c.b16 %v1436, %v1420
      %v1725 = vpack.c.b16 %v1437, %v1421
      %v1726 = vpack.c.b16 %v1438, %v1422
      %v1727 = vpack.c.b16 %v1439, %v1423
      %v1728 = vpack.c.b16 %v1440, %v1424
      %v1729 = vpack.c.b16 %v1441, %v1425
      %v1730 = vpack.c.b16 %v1442, %v1426
      %v1731 = vpack.c.b16 %v1443, %v1427
      %v1732 = vpack.c.b16 %v1444, %v1428
      %v1733 = vpack.c.b16 %v1445, %v1429
      %v1734 = vpack.c.b16 %v1446, %v1430
      %v1735 = vpack.c.b16 %v1447, %v1431
      %v1736 = vpack.c.b16 %v1448, %v1432
      %v1737 = vpack.c.b16 %v1449, %v1433
      %v1738 = vpack.c.b16 %v1450, %v1434
      %v1739 = vpack.c.b16 %v1451, %v1435
      %v1740 = vpack.c.b16 %v1468, %v1452
      %v1741 = vpack.c.b16 %v1469, %v1453
      %v1742 = vpack.c.b16 %v1470, %v1454
      %v1743 = vpack.c.b16 %v1471, %v1455
      %v1744 = vpack.c.b16 %v1472, %v1456
      %v1745 = vpack.c.b16 %v1473, %v1457
      %v1746 = vpack.c.b16 %v1474, %v1458
      %v1747 = vpack.c.b16 %v1475, %v1459
      %v1748 = vpack.c.b16 %v1476, %v1460
      %v1749 = vpack.c.b16 %v1477, %v1461
      %v1750 = vpack.c.b16 %v1478, %v1462
      %v1751 = vpack.c.b16 %v1479, %v1463
      %v1752 = vpack.c.b16 %v1480, %v1464
      %v1753 = vpack.c.b16 %v1481, %v1465
      %v1754 = vpack.c.b16 %v1482, %v1466
      %v1755 = vpack.c.b16 %v1483, %v1467
      %v1756 = vpack.c.b16 %v1500, %v1484
      %v1757 = vpack.c.b16 %v1501, %v1485
      %v1758 = vpack.c.b16 %v1502, %v1486
      %v1759 = vpack.c.b16 %v1503, %v1487
      %v1760 = vpack.c.b16 %v1504, %v1488
      %v1761 = vpack.c.b16 %v1505, %v1489
      %v1762 = vpack.c.b16 %v1506, %v1490
      %v1763 = vpack.c.b16 %v1507, %v1491
      %v1764 = vpack.c.b16 %v1508, %v1492
      %v1765 = vpack.c.b16 %v1509, %v1493
      %v1766 = vpack.c.b16 %v1510, %v1494
      %v1767 = vpack.c.b16 %v1511, %v1495
      %v1768 = vpack.c.b16 %v1512, %v1496
      %v1769 = vpack.c.b16 %v1513, %v1497
      %v1770 = vpack.c.b16 %v1514, %v1498
      %v1771 = vpack.c.b16 %v1515, %v1499
      %v2284 = vunpack.c.l.b16 %v485
      %v2285 = vunpack.c.l.b16 %v486
      %v2286 = vunpack.c.l.b16 %v487
      %v2287 = vunpack.c.l.b16 %v488
      %v2288 = vunpack.c.l.b16 %v489
      %v2289 = vunpack.c.l.b16 %v490
      %v2290 = vunpack.c.l.b16 %v491
      %v2291 = vunpack.c.l.b16 %v492
      %v2292 = vunpack.c.l.b16 %v493
      %v2293 = vunpack.c.l.b16 %v494
      %v2294 = vunpack.c.l.b16 %v495
      %v2295 = vunpack.c.l.b16 %v496
      %v2296 = vunpack.c.l.b16 %v497
      %v2297 = vunpack.c.l.b16 %v498
      %v2298 = vunpack.c.l.b16 %v499
      %v2299 = vunpack.c.l.b16 %v500
      %v2300 = vunpack.c.l.b16 %v501
      %v2301 = vunpack.c.l.b16 %v502
      %v2302 = vunpack.c.l.b16 %v503
      %v2303 = vunpack.c.l.b16 %v504
      %v2304 = vunpack.c.l.b16 %v505
      %v2305 = vunpack.c.l.b16 %v506
      %v2306 = vunpack.c.l.b16 %v507
      %v2307 = vunpack.c.l.b16 %v508
      %v2308 = vunpack.c.l.b16 %v509
      %v2309 = vunpack.c.l.b16 %v510
      %v2310 = vunpack.c.l.b16 %v511
      %v2311 = vunpack.c.l.b16 %v512
      %v2312 = vunpack.c.l.b16 %v513
      %v2313 = vunpack.c.l.b16 %v514
      %v2314 = vunpack.c.l.b16 %v515
      %v2315 = vunpack.c.l.b16 %v516
      %v2316 = vunpack.c.l.b16 %v517
      %v2317 = vunpack.c.l.b16 %v518
      %v2318 = vunpack.c.l.b16 %v519
      %v2319 = vunpack.c.l.b16 %v520
      %v2320 = vunpack.c.l.b16 %v521
      %v2321 = vunpack.c.l.b16 %v522
      %v2322 = vunpack.c.l.b16 %v523
      %v2323 = vunpack.c.l.b16 %v524
      %v2324 = vunpack.c.l.b16 %v525
      %v2325 = vunpack.c.l.b16 %v526
      %v2326 = vunpack.c.l.b16 %v527
      %v2327 = vunpack.c.l.b16 %v528
      %v2328 = vunpack.c.l.b16 %v529
      %v2329 = vunpack.c.l.b16 %v530
      %v2330 = vunpack.c.l.b16 %v531
      %v2331 = vunpack.c.l.b16 %v532
      %v2332 = vunpack.c.l.b16 %v533
      %v2333 = vunpack.c.l.b16 %v534
      %v2334 = vunpack.c.l.b16 %v535
      %v2335 = vunpack.c.l.b16 %v536
      %v2336 = vunpack.c.l.b16 %v537
      %v2337 = vunpack.c.l.b16 %v538
      %v2338 = vunpack.c.l.b16 %v539
      %v2339 = vunpack.c.l.b16 %v540
      %v2340 = vunpack.c.l.b16 %v541
      %v2341 = vunpack.c.l.b16 %v542
      %v2342 = vunpack.c.l.b16 %v543
      %v2343 = vunpack.c.l.b16 %v544
      %v2344 = vunpack.c.l.b16 %v545
      %v2345 = vunpack.c.l.b16 %v546
      %v2346 = vunpack.c.l.b16 %v547
      %v2347 = vunpack.c.l.b16 %v548
      %v2348 = vunpack.c.l.b16 %v549
      %v2349 = vunpack.c.l.b16 %v550
      %v2350 = vunpack.c.l.b16 %v551
      %v2351 = vunpack.c.l.b16 %v552
      %v2352 = vunpack.c.l.b16 %v553
      %v2353 = vunpack.c.l.b16 %v554
      %v2354 = vunpack.c.l.b16 %v555
      %v2355 = vunpack.c.l.b16 %v556
      %v2356 = vunpack.c.l.b16 %v557
      %v2357 = vunpack.c.l.b16 %v558
      %v2358 = vunpack.c.l.b16 %v559
      %v2359 = vunpack.c.l.b16 %v560
      %v2360 = vunpack.c.l.b16 %v561
      %v2361 = vunpack.c.l.b16 %v562
      %v2362 = vunpack.c.l.b16 %v563
      %v2363 = vunpack.c.l.b16 %v564
      %v2364 = vunpack.c.l.b16 %v565
      %v2365 = vunpack.c.l.b16 %v566
      %v2366 = vunpack.c.l.b16 %v567
      %v2367 = vunpack.c.l.b16 %v568
      %v2368 = vunpack.c.l.b16 %v569
      %v2369 = vunpack.c.l.b16 %v570
      %v2370 = vunpack.c.l.b16 %v571
      %v2371 = vunpack.c.l.b16 %v572
      %v2372 = vunpack.c.l.b16 %v573
      %v2373 = vunpack.c.l.b16 %v574
      %v2374 = vunpack.c.l.b16 %v575
      %v2375 = vunpack.c.l.b16 %v576
      %v2376 = vunpack.c.l.b16 %v577
      %v2377 = vunpack.c.l.b16 %v578
      %v2378 = vunpack.c.l.b16 %v579
      %v2379 = vunpack.c.l.b16 %v580
      %v2380 = vunpack.c.l.b16 %v581
      %v2381 = vunpack.c.l.b16 %v582
      %v2382 = vunpack.c.l.b16 %v583
      %v2383 = vunpack.c.l.b16 %v584
      %v2384 = vunpack.c.l.b16 %v585
      %v2385 = vunpack.c.l.b16 %v586
      %v2386 = vunpack.c.l.b16 %v587
      %v2387 = vunpack.c.l.b16 %v588
      %v2388 = vunpack.c.l.b16 %v589
      %v2389 = vunpack.c.l.b16 %v590
      %v2390 = vunpack.c.l.b16 %v591
      %v2391 = vunpack.c.l.b16 %v592
      %v2392 = vunpack.c.l.b16 %v593
      %v2393 = vunpack.c.l.b16 %v594
      %v2394 = vunpack.c.l.b16 %v595
      %v2395 = vunpack.c.l.b16 %v596
      %v2396 = vunpack.c.l.b16 %v597
      %v2397 = vunpack.c.l.b16 %v598
      %v2398 = vunpack.c.l.b16 %v599
      %v2399 = vunpack.c.l.b16 %v600
      %v2400 = vunpack.c.l.b16 %v601
      %v2401 = vunpack.c.l.b16 %v602
      %v2402 = vunpack.c.l.b16 %v603
      %v2403 = vunpack.c.l.b16 %v604
      %v2404 = vunpack.c.l.b16 %v605
      %v2405 = vunpack.c.l.b16 %v606
      %v2406 = vunpack.c.l.b16 %v607
      %v2407 = vunpack.c.l.b16 %v608
      %v2408 = vunpack.c.l.b16 %v609
      %v2409 = vunpack.c.l.b16 %v610
      %v2410 = vunpack.c.l.b16 %v611
      %v2411 = vunpack.c.l.b16 %v612
      %v2412 = vunpack.c.l.b16 %v613
      %v2413 = vunpack.c.l.b16 %v614
      %v2414 = vunpack.c.l.b16 %v615
      %v2415 = vunpack.c.l.b16 %v616
      %v2416 = vunpack.c.l.b16 %v617
      %v2417 = vunpack.c.l.b16 %v618
      %v2418 = vunpack.c.l.b16 %v619
      %v2419 = vunpack.c.l.b16 %v620
      %v2420 = vunpack.c.l.b16 %v621
      %v2421 = vunpack.c.l.b16 %v622
      %v2422 = vunpack.c.l.b16 %v623
      %v2423 = vunpack.c.l.b16 %v624
      %v2424 = vunpack.c.l.b16 %v625
      %v2425 = vunpack.c.l.b16 %v626
      %v2426 = vunpack.c.l.b16 %v627
      %v2427 = vunpack.c.l.b16 %v628
      %v2428 = vunpack.c.l.b16 %v629
      %v2429 = vunpack.c.l.b16 %v630
      %v2430 = vunpack.c.l.b16 %v631
      %v2431 = vunpack.c.l.b16 %v632
      %v2432 = vunpack.c.l.b16 %v633
      %v2433 = vunpack.c.l.b16 %v634
      %v2434 = vunpack.c.l.b16 %v635
      %v2435 = vunpack.c.l.b16 %v636
      %v2436 = vunpack.c.l.b16 %v637
      %v2437 = vunpack.c.l.b16 %v638
      %v2438 = vunpack.c.l.b16 %v639
      %v2439 = vunpack.c.l.b16 %v640
      %v2440 = vunpack.c.l.b16 %v641
      %v2441 = vunpack.c.l.b16 %v642
      %v2442 = vunpack.c.l.b16 %v643
      %v2443 = vunpack.c.l.b16 %v644
      %v2444 = vunpack.c.l.b16 %v645
      %v2445 = vunpack.c.l.b16 %v646
      %v2446 = vunpack.c.l.b16 %v647
      %v2447 = vunpack.c.l.b16 %v648
      %v2448 = vunpack.c.l.b16 %v649
      %v2449 = vunpack.c.l.b16 %v650
      %v2450 = vunpack.c.l.b16 %v651
      %v2451 = vunpack.c.l.b16 %v652
      %v2452 = vunpack.c.l.b16 %v653
      %v2453 = vunpack.c.l.b16 %v654
      %v2454 = vunpack.c.l.b16 %v655
      %v2455 = vunpack.c.l.b16 %v656
      %v2456 = vunpack.c.l.b16 %v657
      %v2457 = vunpack.c.l.b16 %v658
      %v2458 = vunpack.c.l.b16 %v659
      %v2459 = vunpack.c.l.b16 %v660
      %v2460 = vunpack.c.l.b16 %v661
      %v2461 = vunpack.c.l.b16 %v662
      %v2462 = vunpack.c.l.b16 %v663
      %v2463 = vunpack.c.l.b16 %v664
      %v2464 = vunpack.c.l.b16 %v665
      %v2465 = vunpack.c.l.b16 %v666
      %v2466 = vunpack.c.l.b16 %v667
      %v2467 = vunpack.c.l.b16 %v668
      %v2468 = vunpack.c.l.b16 %v669
      %v2469 = vunpack.c.l.b16 %v670
      %v2470 = vunpack.c.l.b16 %v671
      %v2471 = vunpack.c.l.b16 %v672
      %v2472 = vunpack.c.l.b16 %v673
      %v2473 = vunpack.c.l.b16 %v674
      %v2474 = vunpack.c.l.b16 %v675
      %v2475 = vunpack.c.l.b16 %v676
      %v2476 = vunpack.c.l.b16 %v677
      %v2477 = vunpack.c.l.b16 %v678
      %v2478 = vunpack.c.l.b16 %v679
      %v2479 = vunpack.c.l.b16 %v680
      %v2480 = vunpack.c.l.b16 %v681
      %v2481 = vunpack.c.l.b16 %v682
      %v2482 = vunpack.c.l.b16 %v683
      %v2483 = vunpack.c.l.b16 %v684
      %v2484 = vunpack.c.l.b16 %v685
      %v2485 = vunpack.c.l.b16 %v686
      %v2486 = vunpack.c.l.b16 %v687
      %v2487 = vunpack.c.l.b16 %v688
      %v2488 = vunpack.c.l.b16 %v689
      %v2489 = vunpack.c.l.b16 %v690
      %v2490 = vunpack.c.l.b16 %v691
      %v2491 = vunpack.c.l.b16 %v692
      %v2492 = vunpack.c.l.b16 %v693
      %v2493 = vunpack.c.l.b16 %v694
      %v2494 = vunpack.c.l.b16 %v695
      %v2495 = vunpack.c.l.b16 %v696
      %v2496 = vunpack.c.l.b16 %v697
      %v2497 = vunpack.c.l.b16 %v698
      %v2498 = vunpack.c.l.b16 %v699
      %v2499 = vunpack.c.l.b16 %v700
      %v2500 = vunpack.c.l.b16 %v701
      %v2501 = vunpack.c.l.b16 %v702
      %v2502 = vunpack.c.l.b16 %v703
      %v2503 = vunpack.c.l.b16 %v704
      %v2504 = vunpack.c.l.b16 %v705
      %v2505 = vunpack.c.l.b16 %v706
      %v2506 = vunpack.c.l.b16 %v707
      %v2507 = vunpack.c.l.b16 %v708
      %v2508 = vunpack.c.l.b16 %v709
      %v2509 = vunpack.c.l.b16 %v710
      %v2510 = vunpack.c.l.b16 %v711
      %v2511 = vunpack.c.l.b16 %v712
      %v2512 = vunpack.c.l.b16 %v713
      %v2513 = vunpack.c.l.b16 %v714
      %v2514 = vunpack.c.l.b16 %v715
      %v2515 = vunpack.c.l.b16 %v716
      %v2516 = vunpack.c.l.b16 %v717
      %v2517 = vunpack.c.l.b16 %v718
      %v2518 = vunpack.c.l.b16 %v719
      %v2519 = vunpack.c.l.b16 %v720
      %v2520 = vunpack.c.l.b16 %v721
      %v2521 = vunpack.c.l.b16 %v722
      %v2522 = vunpack.c.l.b16 %v723
      %v2523 = vunpack.c.l.b16 %v724
      %v2524 = vunpack.c.l.b16 %v725
      %v2525 = vunpack.c.l.b16 %v726
      %v2526 = vunpack.c.l.b16 %v727
      %v2527 = vunpack.c.l.b16 %v728
      %v2528 = vunpack.c.l.b16 %v729
      %v2529 = vunpack.c.l.b16 %v730
      %v2530 = vunpack.c.l.b16 %v731
      %v2531 = vunpack.c.l.b16 %v732
      %v2532 = vunpack.c.l.b16 %v733
      %v2533 = vunpack.c.l.b16 %v734
      %v2534 = vunpack.c.l.b16 %v735
      %v2535 = vunpack.c.l.b16 %v736
      %v2536 = vunpack.c.l.b16 %v737
      %v2537 = vunpack.c.l.b16 %v738
      %v2538 = vunpack.c.l.b16 %v739
      %v2539 = vunpack.c.l.b16 %v740
      %v2540 = vpack.c.b16 %v2285, %v2284
      %v2541 = vpack.c.b16 %v2287, %v2286
      %v2542 = vpack.c.b16 %v2289, %v2288
      %v2543 = vpack.c.b16 %v2291, %v2290
      %v2544 = vpack.c.b16 %v2293, %v2292
      %v2545 = vpack.c.b16 %v2295, %v2294
      %v2546 = vpack.c.b16 %v2297, %v2296
      %v2547 = vpack.c.b16 %v2299, %v2298
      %v2548 = vpack.c.b16 %v2301, %v2300
      %v2549 = vpack.c.b16 %v2303, %v2302
      %v2550 = vpack.c.b16 %v2305, %v2304
      %v2551 = vpack.c.b16 %v2307, %v2306
      %v2552 = vpack.c.b16 %v2309, %v2308
      %v2553 = vpack.c.b16 %v2311, %v2310
      %v2554 = vpack.c.b16 %v2313, %v2312
      %v2555 = vpack.c.b16 %v2315, %v2314
      %v2556 = vpack.c.b16 %v2317, %v2316
      %v2557 = vpack.c.b16 %v2319, %v2318
      %v2558 = vpack.c.b16 %v2321, %v2320
      %v2559 = vpack.c.b16 %v2323, %v2322
      %v2560 = vpack.c.b16 %v2325, %v2324
      %v2561 = vpack.c.b16 %v2327, %v2326
      %v2562 = vpack.c.b16 %v2329, %v2328
      %v2563 = vpack.c.b16 %v2331, %v2330
      %v2564 = vpack.c.b16 %v2333, %v2332
      %v2565 = vpack.c.b16 %v2335, %v2334
      %v2566 = vpack.c.b16 %v2337, %v2336
      %v2567 = vpack.c.b16 %v2339, %v2338
      %v2568 = vpack.c.b16 %v2341, %v2340
      %v2569 = vpack.c.b16 %v2343, %v2342
      %v2570 = vpack.c.b16 %v2345, %v2344
      %v2571 = vpack.c.b16 %v2347, %v2346
      %v2572 = vpack.c.b16 %v2349, %v2348
      %v2573 = vpack.c.b16 %v2351, %v2350
      %v2574 = vpack.c.b16 %v2353, %v2352
      %v2575 = vpack.c.b16 %v2355, %v2354
      %v2576 = vpack.c.b16 %v2357, %v2356
      %v2577 = vpack.c.b16 %v2359, %v2358
      %v2578 = vpack.c.b16 %v2361, %v2360
      %v2579 = vpack.c.b16 %v2363, %v2362
      %v2580 = vpack.c.b16 %v2365, %v2364
      %v2581 = vpack.c.b16 %v2367, %v2366
      %v2582 = vpack.c.b16 %v2369, %v2368
      %v2583 = vpack.c.b16 %v2371, %v2370
      %v2584 = vpack.c.b16 %v2373, %v2372
      %v2585 = vpack.c.b16 %v2375, %v2374
      %v2586 = vpack.c.b16 %v2377, %v2376
      %v2587 = vpack.c.b16 %v2379, %v2378
      %v2588 = vpack.c.b16 %v2381, %v2380
      %v2589 = vpack.c.b16 %v2383, %v2382
      %v2590 = vpack.c.b16 %v2385, %v2384
      %v2591 = vpack.c.b16 %v2387, %v2386
      %v2592 = vpack.c.b16 %v2389, %v2388
      %v2593 = vpack.c.b16 %v2391, %v2390
      %v2594 = vpack.c.b16 %v2393, %v2392
      %v2595 = vpack.c.b16 %v2395, %v2394
      %v2596 = vpack.c.b16 %v2397, %v2396
      %v2597 = vpack.c.b16 %v2399, %v2398
      %v2598 = vpack.c.b16 %v2401, %v2400
      %v2599 = vpack.c.b16 %v2403, %v2402
      %v2600 = vpack.c.b16 %v2405, %v2404
      %v2601 = vpack.c.b16 %v2407, %v2406
      %v2602 = vpack.c.b16 %v2409, %v2408
      %v2603 = vpack.c.b16 %v2411, %v2410
      %v2604 = vpack.c.b16 %v2413, %v2412
      %v2605 = vpack.c.b16 %v2415, %v2414
      %v2606 = vpack.c.b16 %v2417, %v2416
      %v2607 = vpack.c.b16 %v2419, %v2418
      %v2608 = vpack.c.b16 %v2421, %v2420
      %v2609 = vpack.c.b16 %v2423, %v2422
      %v2610 = vpack.c.b16 %v2425, %v2424
      %v2611 = vpack.c.b16 %v2427, %v2426
      %v2612 = vpack.c.b16 %v2429, %v2428
      %v2613 = vpack.c.b16 %v2431, %v2430
      %v2614 = vpack.c.b16 %v2433, %v2432
      %v2615 = vpack.c.b16 %v2435, %v2434
      %v2616 = vpack.c.b16 %v2437, %v2436
      %v2617 = vpack.c.b16 %v2439, %v2438
      %v2618 = vpack.c.b16 %v2441, %v2440
      %v2619 = vpack.c.b16 %v2443, %v2442
      %v2620 = vpack.c.b16 %v2445, %v2444
      %v2621 = vpack.c.b16 %v2447, %v2446
      %v2622 = vpack.c.b16 %v2449, %v2448
      %v2623 = vpack.c.b16 %v2451, %v2450
      %v2624 = vpack.c.b16 %v2453, %v2452
      %v2625 = vpack.c.b16 %v2455, %v2454
      %v2626 = vpack.c.b16 %v2457, %v2456
      %v2627 = vpack.c.b16 %v2459, %v2458
      %v2628 = vpack.c.b16 %v2461, %v2460
      %v2629 = vpack.c.b16 %v2463, %v2462
      %v2630 = vpack.c.b16 %v2465, %v2464
      %v2631 = vpack.c.b16 %v2467, %v2466
      %v2632 = vpack.c.b16 %v2469, %v2468
      %v2633 = vpack.c.b16 %v2471, %v2470
      %v2634 = vpack.c.b16 %v2473, %v2472
      %v2635 = vpack.c.b16 %v2475, %v2474
      %v2636 = vpack.c.b16 %v2477, %v2476
      %v2637 = vpack.c.b16 %v2479, %v2478
      %v2638 = vpack.c.b16 %v2481, %v2480
      %v2639 = vpack.c.b16 %v2483, %v2482
      %v2640 = vpack.c.b16 %v2485, %v2484
      %v2641 = vpack.c.b16 %v2487, %v2486
      %v2642 = vpack.c.b16 %v2489, %v2488
      %v2643 = vpack.c.b16 %v2491, %v2490
      %v2644 = vpack.c.b16 %v2493, %v2492
      %v2645 = vpack.c.b16 %v2495, %v2494
      %v2646 = vpack.c.b16 %v2497, %v2496
      %v2647 = vpack.c.b16 %v2499, %v2498
      %v2648 = vpack.c.b16 %v2501, %v2500
      %v2649 = vpack.c.b16 %v2503, %v2502
      %v2650 = vpack.c.b16 %v2505, %v2504
      %v2651 = vpack.c.b16 %v2507, %v2506
      %v2652 = vpack.c.b16 %v2509, %v2508
      %v2653 = vpack.c.b16 %v2511, %v2510
      %v2654 = vpack.c.b16 %v2513, %v2512
      %v2655 = vpack.c.b16 %v2515, %v2514
      %v2656 = vpack.c.b16 %v2517, %v2516
      %v2657 = vpack.c.b16 %v2519, %v2518
      %v2658 = vpack.c.b16 %v2521, %v2520
      %v2659 = vpack.c.b16 %v2523, %v2522
      %v2660 = vpack.c.b16 %v2525, %v2524
      %v2661 = vpack.c.b16 %v2527, %v2526
      %v2662 = vpack.c.b16 %v2529, %v2528
      %v2663 = vpack.c.b16 %v2531, %v2530
      %v2664 = vpack.c.b16 %v2533, %v2532
      %v2665 = vpack.c.b16 %v2535, %v2534
      %v2666 = vpack.c.b16 %v2537, %v2536
      %v2667 = vpack.c.b16 %v2539, %v2538
      %2796 = vmatprep.subr.bf16.mxu0 0
      %2797 = vmatpush1.bf16.msra.mxu0 %v2540
      %2798 = vmatprep.subr.bf16.mxu0 0
      %2799 = vmatpush1.bf16.msra.mxu0 %v2541
      %2800 = vmatprep.subr.bf16.mxu0 0
      %2801 = vmatpush1.bf16.msra.mxu0 %v2542
      %2802 = vmatprep.subr.bf16.mxu0 0
      %2803 = vmatpush1.bf16.msra.mxu0 %v2543
      %2804 = vmatprep.subr.bf16.mxu0 0
      %2805 = vmatpush1.bf16.msra.mxu0 %v2544
      %2806 = vmatprep.subr.bf16.mxu0 0
      %2807 = vmatpush1.bf16.msra.mxu0 %v2545
      %2808 = vmatprep.subr.bf16.mxu0 0
      %2809 = vmatpush1.bf16.msra.mxu0 %v2546
      %2810 = vmatprep.subr.bf16.mxu0 0
      %2811 = vmatpush1.bf16.msra.mxu0 %v2547
      %2812 = vmatprep.subr.bf16.mxu0 0
      %2813 = vmatpush1.bf16.msra.mxu0 %v2548
      %2814 = vmatprep.subr.bf16.mxu0 0
      %2815 = vmatpush1.bf16.msra.mxu0 %v2549
      %2816 = vmatprep.subr.bf16.mxu0 0
      %2817 = vmatpush1.bf16.msra.mxu0 %v2550
      %2818 = vmatprep.subr.bf16.mxu0 0
      %2819 = vmatpush1.bf16.msra.mxu0 %v2551
      %2820 = vmatprep.subr.bf16.mxu0 0
      %2821 = vmatpush1.bf16.msra.mxu0 %v2552
      %2822 = vmatprep.subr.bf16.mxu0 0
      %2823 = vmatpush1.bf16.msra.mxu0 %v2553
      %2824 = vmatprep.subr.bf16.mxu0 0
      %2825 = vmatpush1.bf16.msra.mxu0 %v2554
      %2826 = vmatprep.subr.bf16.mxu0 0
      %2827 = vmatpush1.bf16.msra.mxu0 %v2555
      %2828 = vmatprep.mubr.bf16.mxu0 %v1517
      %2829 = vmatmul.mubr.bf16.gmra.mrb[0].mxu0 %v1516
      %v2830 = vpop.f32.mrb[0].mxu0
      %v2831 = vadd.f32 %v746, %v2830
      %v2832 = vpop.f32.mrb[0].mxu0
      %v2833 = vpop.f32.mrb[0].mxu0
      %v2834 = vadd.f32 %v746, %v2833
      %v2835 = vpop.f32.mrb[0].mxu0
      %2836 = vmatprep.mubr.bf16.mxu0 %v1533
      %2837 = vmatmul.mubr.bf16.gmra.mrb[0].mxu0 %v1532
      %v2838 = vpop.f32.mrb[0].mxu0
      %v2839 = vadd.f32 %v746, %v2838
      %v2840 = vpop.f32.mrb[0].mxu0
      %v2841 = vpop.f32.mrb[0].mxu0
      %v2842 = vadd.f32 %v746, %v2841
      %v2843 = vpop.f32.mrb[0].mxu0
      %2844 = vmatprep.mubr.bf16.mxu0 %v1549
      %2845 = vmatmul.mubr.bf16.gmra.mrb[0].mxu0 %v1548
      %v2846 = vpop.f32.mrb[0].mxu0
      %v2847 = vadd.f32 %v746, %v2846
      %v2848 = vpop.f32.mrb[0].mxu0
      %v2849 = vpop.f32.mrb[0].mxu0
      %v2850 = vadd.f32 %v746, %v2849
      %v2851 = vpop.f32.mrb[0].mxu0
      %2852 = vmatprep.mubr.bf16.mxu0 %v1565
      %2853 = vmatmul.mubr.bf16.gmra.mrb[0].mxu0 %v1564
      %v2854 = vpop.f32.mrb[0].mxu0
      %v2855 = vadd.f32 %v746, %v2854
      %v2856 = vpop.f32.mrb[0].mxu0
      %v2857 = vpop.f32.mrb[0].mxu0
      %v2858 = vadd.f32 %v746, %v2857
      %v2859 = vpop.f32.mrb[0].mxu0
      %2860 = vmatprep.mubr.bf16.mxu0 %v1581
      %2861 = vmatmul.mubr.bf16.gmra.mrb[0].mxu0 %v1580
      %v2862 = vpop.f32.mrb[0].mxu0
      %v2863 = vadd.f32 %v746, %v2862
      %v2864 = vpop.f32.mrb[0].mxu0
      %v2865 = vpop.f32.mrb[0].mxu0
      %v2866 = vadd.f32 %v746, %v2865
      %v2867 = vpop.f32.mrb[0].mxu0
      %2868 = vmatprep.mubr.bf16.mxu0 %v1597
      %2869 = vmatmul.mubr.bf16.gmra.mrb[0].mxu0 %v1596
      %v2870 = vpop.f32.mrb[0].mxu0
      %v2871 = vadd.f32 %v746, %v2870
      %v2872 = vpop.f32.mrb[0].mxu0
      %v2873 = vpop.f32.mrb[0].mxu0
      %v2874 = vadd.f32 %v746, %v2873
      %v2875 = vpop.f32.mrb[0].mxu0
      %2876 = vmatprep.mubr.bf16.mxu0 %v1613
      %2877 = vmatmul.mubr.bf16.gmra.mrb[0].mxu0 %v1612
      %v2878 = vpop.f32.mrb[0].mxu0
      %v2879 = vadd.f32 %v746, %v2878
      %v2880 = vpop.f32.mrb[0].mxu0
      %v2881 = vpop.f32.mrb[0].mxu0
      %v2882 = vadd.f32 %v746, %v2881
      %v2883 = vpop.f32.mrb[0].mxu0
      %2884 = vmatprep.mubr.bf16.mxu0 %v1629
      %2885 = vmatmul.mubr.bf16.gmra.mrb[0].mxu0 %v1628
      %v2886 = vpop.f32.mrb[0].mxu0
      %v2887 = vadd.f32 %v746, %v2886
      %v2888 = vpop.f32.mrb[0].mxu0
      %v2889 = vpop.f32.mrb[0].mxu0
      %v2890 = vadd.f32 %v746, %v2889
      %v2891 = vpop.f32.mrb[0].mxu0
      %2892 = vmatprep.mubr.bf16.mxu0 %v1645
      %2893 = vmatmul.mubr.bf16.gmra.mrb[0].mxu0 %v1644
      %v2894 = vpop.f32.mrb[0].mxu0
      %v2895 = vadd.f32 %v746, %v2894
      %v2896 = vpop.f32.mrb[0].mxu0
      %v2897 = vpop.f32.mrb[0].mxu0
      %v2898 = vadd.f32 %v746, %v2897
      %v2899 = vpop.f32.mrb[0].mxu0
      %2900 = vmatprep.mubr.bf16.mxu0 %v1661
      %2901 = vmatmul.mubr.bf16.gmra.mrb[0].mxu0 %v1660
      %v2902 = vpop.f32.mrb[0].mxu0
      %v2903 = vadd.f32 %v746, %v2902
      %v2904 = vpop.f32.mrb[0].mxu0
      %v2905 = vpop.f32.mrb[0].mxu0
      %v2906 = vadd.f32 %v746, %v2905
      %v2907 = vpop.f32.mrb[0].mxu0
      %2908 = vmatprep.mubr.bf16.mxu0 %v1677
      %2909 = vmatmul.mubr.bf16.gmra.mrb[0].mxu0 %v1676
      %v2910 = vpop.f32.mrb[0].mxu0
      %v2911 = vadd.f32 %v746, %v2910
      %v2912 = vpop.f32.mrb[0].mxu0
      %v2913 = vpop.f32.mrb[0].mxu0
      %v2914 = vadd.f32 %v746, %v2913
      %v2915 = vpop.f32.mrb[0].mxu0
      %2916 = vmatprep.mubr.bf16.mxu0 %v1693
      %2917 = vmatmul.mubr.bf16.gmra.mrb[0].mxu0 %v1692
      %v2918 = vpop.f32.mrb[0].mxu0
      %v2919 = vadd.f32 %v746, %v2918
      %v2920 = vpop.f32.mrb[0].mxu0
      %v2921 = vpop.f32.mrb[0].mxu0
      %v2922 = vadd.f32 %v746, %v2921
      %v2923 = vpop.f32.mrb[0].mxu0
      %2924 = vmatprep.mubr.bf16.mxu0 %v1709
      %2925 = vmatmul.mubr.bf16.gmra.mrb[0].mxu0 %v1708
      %v2926 = vpop.f32.mrb[0].mxu0
      %v2927 = vadd.f32 %v746, %v2926
      %v2928 = vpop.f32.mrb[0].mxu0
      %v2929 = vpop.f32.mrb[0].mxu0
      %v2930 = vadd.f32 %v746, %v2929
      %v2931 = vpop.f32.mrb[0].mxu0
      %2932 = vmatprep.mubr.bf16.mxu0 %v1725
      %2933 = vmatmul.mubr.bf16.gmra.mrb[0].mxu0 %v1724
      %v2934 = vpop.f32.mrb[0].mxu0
      %v2935 = vadd.f32 %v746, %v2934
      %v2936 = vpop.f32.mrb[0].mxu0
      %v2937 = vpop.f32.mrb[0].mxu0
      %v2938 = vadd.f32 %v746, %v2937
      %v2939 = vpop.f32.mrb[0].mxu0
      %2940 = vmatprep.mubr.bf16.mxu0 %v1741
      %2941 = vmatmul.mubr.bf16.gmra.mrb[0].mxu0 %v1740
      %v2942 = vpop.f32.mrb[0].mxu0
      %v2943 = vadd.f32 %v746, %v2942
      %v2944 = vpop.f32.mrb[0].mxu0
      %v2945 = vpop.f32.mrb[0].mxu0
      %v2946 = vadd.f32 %v746, %v2945
      %v2947 = vpop.f32.mrb[0].mxu0
      %2948 = vmatprep.mubr.bf16.mxu0 %v1757
      %2949 = vmatmul.mubr.bf16.gmra.mrb[0].mxu0 %v1756
      %v2950 = vpop.f32.mrb[0].mxu0
      %v2951 = vadd.f32 %v746, %v2950
      %v2952 = vpop.f32.mrb[0].mxu0
      %v2953 = vpop.f32.mrb[0].mxu0
      %v2954 = vadd.f32 %v746, %v2953
      %v2955 = vpop.f32.mrb[0].mxu0
      %2956 = vdwg.mxu0
      %2957 = vmatprep.subr.bf16.mxu0 0
      %2958 = vmatpush1.bf16.msra.mxu0 %v2556
      %2959 = vmatprep.subr.bf16.mxu0 0
      %2960 = vmatpush1.bf16.msra.mxu0 %v2557
      %2961 = vmatprep.subr.bf16.mxu0 0
      %2962 = vmatpush1.bf16.msra.mxu0 %v2558
      %2963 = vmatprep.subr.bf16.mxu0 0
      %2964 = vmatpush1.bf16.msra.mxu0 %v2559
      %2965 = vmatprep.subr.bf16.mxu0 0
      %2966 = vmatpush1.bf16.msra.mxu0 %v2560
      %2967 = vmatprep.subr.bf16.mxu0 0
      %2968 = vmatpush1.bf16.msra.mxu0 %v2561
      %2969 = vmatprep.subr.bf16.mxu0 0
      %2970 = vmatpush1.bf16.msra.mxu0 %v2562
      %2971 = vmatprep.subr.bf16.mxu0 0
      %2972 = vmatpush1.bf16.msra.mxu0 %v2563
      %2973 = vmatprep.subr.bf16.mxu0 0
      %2974 = vmatpush1.bf16.msra.mxu0 %v2564
      %2975 = vmatprep.subr.bf16.mxu0 0
      %2976 = vmatpush1.bf16.msra.mxu0 %v2565
      %2977 = vmatprep.subr.bf16.mxu0 0
      %2978 = vmatpush1.bf16.msra.mxu0 %v2566
      %2979 = vmatprep.subr.bf16.mxu0 0
      %2980 = vmatpush1.bf16.msra.mxu0 %v2567
      %2981 = vmatprep.subr.bf16.mxu0 0
      %2982 = vmatpush1.bf16.msra.mxu0 %v2568
      %2983 = vmatprep.subr.bf16.mxu0 0
      %2984 = vmatpush1.bf16.msra.mxu0 %v2569
      %2985 = vmatprep.subr.bf16.mxu0 0
      %2986 = vmatpush1.bf16.msra.mxu0 %v2570
      %2987 = vmatprep.subr.bf16.mxu0 0
      %2988 = vmatpush1.bf16.msra.mxu0 %v2571
      %2989 = vmatprep.mubr.bf16.mxu0 %v1519
      %2990 = vmatmul.mubr.bf16.gmra.mrb[0].mxu0 %v1518
      %v2991 = vpop.f32.mrb[0].mxu0
      %v2992 = vadd.f32 %v2831, %v2991
      %v2993 = vpop.f32.mrb[0].mxu0
      %v2994 = vpop.f32.mrb[0].mxu0
      %v2995 = vadd.f32 %v2834, %v2994
      %v2996 = vpop.f32.mrb[0].mxu0
      %2997 = vmatprep.mubr.bf16.mxu0 %v1535
      %2998 = vmatmul.mubr.bf16.gmra.mrb[0].mxu0 %v1534
      %v2999 = vpop.f32.mrb[0].mxu0
      %v3000 = vadd.f32 %v2839, %v2999
      %v3001 = vpop.f32.mrb[0].mxu0
      %v3002 = vpop.f32.mrb[0].mxu0
      %v3003 = vadd.f32 %v2842, %v3002
      %v3004 = vpop.f32.mrb[0].mxu0
      %3005 = vmatprep.mubr.bf16.mxu0 %v1551
      %3006 = vmatmul.mubr.bf16.gmra.mrb[0].mxu0 %v1550
      %v3007 = vpop.f32.mrb[0].mxu0
      %v3008 = vadd.f32 %v2847, %v3007
      %v3009 = vpop.f32.mrb[0].mxu0
      %v3010 = vpop.f32.mrb[0].mxu0
      %v3011 = vadd.f32 %v2850, %v3010
      %v3012 = vpop.f32.mrb[0].mxu0
      %3013 = vmatprep.mubr.bf16.mxu0 %v1567
      %3014 = vmatmul.mubr.bf16.gmra.mrb[0].mxu0 %v1566
      %v3015 = vpop.f32.mrb[0].mxu0
      %v3016 = vadd.f32 %v2855, %v3015
      %v3017 = vpop.f32.mrb[0].mxu0
      %v3018 = vpop.f32.mrb[0].mxu0
      %v3019 = vadd.f32 %v2858, %v3018
      %v3020 = vpop.f32.mrb[0].mxu0
      %3021 = vmatprep.mubr.bf16.mxu0 %v1583
      %3022 = vmatmul.mubr.bf16.gmra.mrb[0].mxu0 %v1582
      %v3023 = vpop.f32.mrb[0].mxu0
      %v3024 = vadd.f32 %v2863, %v3023
      %v3025 = vpop.f32.mrb[0].mxu0
      %v3026 = vpop.f32.mrb[0].mxu0
      %v3027 = vadd.f32 %v2866, %v3026
      %v3028 = vpop.f32.mrb[0].mxu0
      %3029 = vmatprep.mubr.bf16.mxu0 %v1599
      %3030 = vmatmul.mubr.bf16.gmra.mrb[0].mxu0 %v1598
      %v3031 = vpop.f32.mrb[0].mxu0
      %v3032 = vadd.f32 %v2871, %v3031
      %v3033 = vpop.f32.mrb[0].mxu0
      %v3034 = vpop.f32.mrb[0].mxu0
      %v3035 = vadd.f32 %v2874, %v3034
      %v3036 = vpop.f32.mrb[0].mxu0
      %3037 = vmatprep.mubr.bf16.mxu0 %v1615
      %3038 = vmatmul.mubr.bf16.gmra.mrb[0].mxu0 %v1614
      %v3039 = vpop.f32.mrb[0].mxu0
      %v3040 = vadd.f32 %v2879, %v3039
      %v3041 = vpop.f32.mrb[0].mxu0
      %v3042 = vpop.f32.mrb[0].mxu0
      %v3043 = vadd.f32 %v2882, %v3042
      %v3044 = vpop.f32.mrb[0].mxu0
      %3045 = vmatprep.mubr.bf16.mxu0 %v1631
      %3046 = vmatmul.mubr.bf16.gmra.mrb[0].mxu0 %v1630
      %v3047 = vpop.f32.mrb[0].mxu0
      %v3048 = vadd.f32 %v2887, %v3047
      %v3049 = vpop.f32.mrb[0].mxu0
      %v3050 = vpop.f32.mrb[0].mxu0
      %v3051 = vadd.f32 %v2890, %v3050
      %v3052 = vpop.f32.mrb[0].mxu0
      %3053 = vmatprep.mubr.bf16.mxu0 %v1647
      %3054 = vmatmul.mubr.bf16.gmra.mrb[0].mxu0 %v1646
      %v3055 = vpop.f32.mrb[0].mxu0
      %v3056 = vadd.f32 %v2895, %v3055
      %v3057 = vpop.f32.mrb[0].mxu0
      %v3058 = vpop.f32.mrb[0].mxu0
      %v3059 = vadd.f32 %v2898, %v3058
      %v3060 = vpop.f32.mrb[0].mxu0
      %3061 = vmatprep.mubr.bf16.mxu0 %v1663
      %3062 = vmatmul.mubr.bf16.gmra.mrb[0].mxu0 %v1662
      %v3063 = vpop.f32.mrb[0].mxu0
      %v3064 = vadd.f32 %v2903, %v3063
      %v3065 = vpop.f32.mrb[0].mxu0
      %v3066 = vpop.f32.mrb[0].mxu0
      %v3067 = vadd.f32 %v2906, %v3066
      %v3068 = vpop.f32.mrb[0].mxu0
      %3069 = vmatprep.mubr.bf16.mxu0 %v1679
      %3070 = vmatmul.mubr.bf16.gmra.mrb[0].mxu0 %v1678
      %v3071 = vpop.f32.mrb[0].mxu0
      %v3072 = vadd.f32 %v2911, %v3071
      %v3073 = vpop.f32.mrb[0].mxu0
      %v3074 = vpop.f32.mrb[0].mxu0
      %v3075 = vadd.f32 %v2914, %v3074
      %v3076 = vpop.f32.mrb[0].mxu0
      %3077 = vmatprep.mubr.bf16.mxu0 %v1695
      %3078 = vmatmul.mubr.bf16.gmra.mrb[0].mxu0 %v1694
      %v3079 = vpop.f32.mrb[0].mxu0
      %v3080 = vadd.f32 %v2919, %v3079
      %v3081 = vpop.f32.mrb[0].mxu0
      %v3082 = vpop.f32.mrb[0].mxu0
      %v3083 = vadd.f32 %v2922, %v3082
      %v3084 = vpop.f32.mrb[0].mxu0
      %3085 = vmatprep.mubr.bf16.mxu0 %v1711
      %3086 = vmatmul.mubr.bf16.gmra.mrb[0].mxu0 %v1710
      %v3087 = vpop.f32.mrb[0].mxu0
      %v3088 = vadd.f32 %v2927, %v3087
      %v3089 = vpop.f32.mrb[0].mxu0
      %v3090 = vpop.f32.mrb[0].mxu0
      %v3091 = vadd.f32 %v2930, %v3090
      %v3092 = vpop.f32.mrb[0].mxu0
      %3093 = vmatprep.mubr.bf16.mxu0 %v1727
      %3094 = vmatmul.mubr.bf16.gmra.mrb[0].mxu0 %v1726
      %v3095 = vpop.f32.mrb[0].mxu0
      %v3096 = vadd.f32 %v2935, %v3095
      %v3097 = vpop.f32.mrb[0].mxu0
      %v3098 = vpop.f32.mrb[0].mxu0
      %v3099 = vadd.f32 %v2938, %v3098
      %v3100 = vpop.f32.mrb[0].mxu0
      %3101 = vmatprep.mubr.bf16.mxu0 %v1743
      %3102 = vmatmul.mubr.bf16.gmra.mrb[0].mxu0 %v1742
      %v3103 = vpop.f32.mrb[0].mxu0
      %v3104 = vadd.f32 %v2943, %v3103
      %v3105 = vpop.f32.mrb[0].mxu0
      %v3106 = vpop.f32.mrb[0].mxu0
      %v3107 = vadd.f32 %v2946, %v3106
      %v3108 = vpop.f32.mrb[0].mxu0
      %3109 = vmatprep.mubr.bf16.mxu0 %v1759
      %3110 = vmatmul.mubr.bf16.gmra.mrb[0].mxu0 %v1758
      %v3111 = vpop.f32.mrb[0].mxu0
      %v3112 = vadd.f32 %v2951, %v3111
      %v3113 = vpop.f32.mrb[0].mxu0
      %v3114 = vpop.f32.mrb[0].mxu0
      %v3115 = vadd.f32 %v2954, %v3114
      %v3116 = vpop.f32.mrb[0].mxu0
      %3117 = vdwg.mxu0
      %3118 = vmatprep.subr.bf16.mxu0 0
      %3119 = vmatpush1.bf16.msra.mxu0 %v2572
      %3120 = vmatprep.subr.bf16.mxu0 0
      %3121 = vmatpush1.bf16.msra.mxu0 %v2573
      %3122 = vmatprep.subr.bf16.mxu0 0
      %3123 = vmatpush1.bf16.msra.mxu0 %v2574
      %3124 = vmatprep.subr.bf16.mxu0 0
      %3125 = vmatpush1.bf16.msra.mxu0 %v2575
      %3126 = vmatprep.subr.bf16.mxu0 0
      %3127 = vmatpush1.bf16.msra.mxu0 %v2576
      %3128 = vmatprep.subr.bf16.mxu0 0
      %3129 = vmatpush1.bf16.msra.mxu0 %v2577
      %3130 = vmatprep.subr.bf16.mxu0 0
      %3131 = vmatpush1.bf16.msra.mxu0 %v2578
      %3132 = vmatprep.subr.bf16.mxu0 0
      %3133 = vmatpush1.bf16.msra.mxu0 %v2579
      %3134 = vmatprep.subr.bf16.mxu0 0
      %3135 = vmatpush1.bf16.msra.mxu0 %v2580
      %3136 = vmatprep.subr.bf16.mxu0 0
      %3137 = vmatpush1.bf16.msra.mxu0 %v2581
      %3138 = vmatprep.subr.bf16.mxu0 0
      %3139 = vmatpush1.bf16.msra.mxu0 %v2582
      %3140 = vmatprep.subr.bf16.mxu0 0
      %3141 = vmatpush1.bf16.msra.mxu0 %v2583
      %3142 = vmatprep.subr.bf16.mxu0 0
      %3143 = vmatpush1.bf16.msra.mxu0 %v2584
      %3144 = vmatprep.subr.bf16.mxu0 0
      %3145 = vmatpush1.bf16.msra.mxu0 %v2585
      %3146 = vmatprep.subr.bf16.mxu0 0
      %3147 = vmatpush1.bf16.msra.mxu0 %v2586
      %3148 = vmatprep.subr.bf16.mxu0 0
      %3149 = vmatpush1.bf16.msra.mxu0 %v2587
      %3150 = vmatprep.mubr.bf16.mxu0 %v1521
      %3151 = vmatmul.mubr.bf16.gmra.mrb[0].mxu0 %v1520
      %v3152 = vpop.f32.mrb[0].mxu0
      %v3153 = vadd.f32 %v2992, %v3152
      %v3154 = vpop.f32.mrb[0].mxu0
      %v3155 = vpop.f32.mrb[0].mxu0
      %v3156 = vadd.f32 %v2995, %v3155
      %v3157 = vpop.f32.mrb[0].mxu0
      %3158 = vmatprep.mubr.bf16.mxu0 %v1537
      %3159 = vmatmul.mubr.bf16.gmra.mrb[0].mxu0 %v1536
      %v3160 = vpop.f32.mrb[0].mxu0
      %v3161 = vadd.f32 %v3000, %v3160
      %v3162 = vpop.f32.mrb[0].mxu0
      %v3163 = vpop.f32.mrb[0].mxu0
      %v3164 = vadd.f32 %v3003, %v3163
      %v3165 = vpop.f32.mrb[0].mxu0
      %3166 = vmatprep.mubr.bf16.mxu0 %v1553
      %3167 = vmatmul.mubr.bf16.gmra.mrb[0].mxu0 %v1552
      %v3168 = vpop.f32.mrb[0].mxu0
      %v3169 = vadd.f32 %v3008, %v3168
      %v3170 = vpop.f32.mrb[0].mxu0
      %v3171 = vpop.f32.mrb[0].mxu0
      %v3172 = vadd.f32 %v3011, %v3171
      %v3173 = vpop.f32.mrb[0].mxu0
      %3174 = vmatprep.mubr.bf16.mxu0 %v1569
      %3175 = vmatmul.mubr.bf16.gmra.mrb[0].mxu0 %v1568
      %v3176 = vpop.f32.mrb[0].mxu0
      %v3177 = vadd.f32 %v3016, %v3176
      %v3178 = vpop.f32.mrb[0].mxu0
      %v3179 = vpop.f32.mrb[0].mxu0
      %v3180 = vadd.f32 %v3019, %v3179
      %v3181 = vpop.f32.mrb[0].mxu0
      %3182 = vmatprep.mubr.bf16.mxu0 %v1585
      %3183 = vmatmul.mubr.bf16.gmra.mrb[0].mxu0 %v1584
      %v3184 = vpop.f32.mrb[0].mxu0
      %v3185 = vadd.f32 %v3024, %v3184
      %v3186 = vpop.f32.mrb[0].mxu0
      %v3187 = vpop.f32.mrb[0].mxu0
      %v3188 = vadd.f32 %v3027, %v3187
      %v3189 = vpop.f32.mrb[0].mxu0
      %3190 = vmatprep.mubr.bf16.mxu0 %v1601
      %3191 = vmatmul.mubr.bf16.gmra.mrb[0].mxu0 %v1600
      %v3192 = vpop.f32.mrb[0].mxu0
      %v3193 = vadd.f32 %v3032, %v3192
      %v3194 = vpop.f32.mrb[0].mxu0
      %v3195 = vpop.f32.mrb[0].mxu0
      %v3196 = vadd.f32 %v3035, %v3195
      %v3197 = vpop.f32.mrb[0].mxu0
      %3198 = vmatprep.mubr.bf16.mxu0 %v1617
      %3199 = vmatmul.mubr.bf16.gmra.mrb[0].mxu0 %v1616
      %v3200 = vpop.f32.mrb[0].mxu0
      %v3201 = vadd.f32 %v3040, %v3200
      %v3202 = vpop.f32.mrb[0].mxu0
      %v3203 = vpop.f32.mrb[0].mxu0
      %v3204 = vadd.f32 %v3043, %v3203
      %v3205 = vpop.f32.mrb[0].mxu0
      %3206 = vmatprep.mubr.bf16.mxu0 %v1633
      %3207 = vmatmul.mubr.bf16.gmra.mrb[0].mxu0 %v1632
      %v3208 = vpop.f32.mrb[0].mxu0
      %v3209 = vadd.f32 %v3048, %v3208
      %v3210 = vpop.f32.mrb[0].mxu0
      %v3211 = vpop.f32.mrb[0].mxu0
      %v3212 = vadd.f32 %v3051, %v3211
      %v3213 = vpop.f32.mrb[0].mxu0
      %3214 = vmatprep.mubr.bf16.mxu0 %v1649
      %3215 = vmatmul.mubr.bf16.gmra.mrb[0].mxu0 %v1648
      %v3216 = vpop.f32.mrb[0].mxu0
      %v3217 = vadd.f32 %v3056, %v3216
      %v3218 = vpop.f32.mrb[0].mxu0
      %v3219 = vpop.f32.mrb[0].mxu0
      %v3220 = vadd.f32 %v3059, %v3219
      %v3221 = vpop.f32.mrb[0].mxu0
      %3222 = vmatprep.mubr.bf16.mxu0 %v1665
      %3223 = vmatmul.mubr.bf16.gmra.mrb[0].mxu0 %v1664
      %v3224 = vpop.f32.mrb[0].mxu0
      %v3225 = vadd.f32 %v3064, %v3224
      %v3226 = vpop.f32.mrb[0].mxu0
      %v3227 = vpop.f32.mrb[0].mxu0
      %v3228 = vadd.f32 %v3067, %v3227
      %v3229 = vpop.f32.mrb[0].mxu0
      %3230 = vmatprep.mubr.bf16.mxu0 %v1681
      %3231 = vmatmul.mubr.bf16.gmra.mrb[0].mxu0 %v1680
      %v3232 = vpop.f32.mrb[0].mxu0
      %v3233 = vadd.f32 %v3072, %v3232
      %v3234 = vpop.f32.mrb[0].mxu0
      %v3235 = vpop.f32.mrb[0].mxu0
      %v3236 = vadd.f32 %v3075, %v3235
      %v3237 = vpop.f32.mrb[0].mxu0
      %3238 = vmatprep.mubr.bf16.mxu0 %v1697
      %3239 = vmatmul.mubr.bf16.gmra.mrb[0].mxu0 %v1696
      %v3240 = vpop.f32.mrb[0].mxu0
      %v3241 = vadd.f32 %v3080, %v3240
      %v3242 = vpop.f32.mrb[0].mxu0
      %v3243 = vpop.f32.mrb[0].mxu0
      %v3244 = vadd.f32 %v3083, %v3243
      %v3245 = vpop.f32.mrb[0].mxu0
      %3246 = vmatprep.mubr.bf16.mxu0 %v1713
      %3247 = vmatmul.mubr.bf16.gmra.mrb[0].mxu0 %v1712
      %v3248 = vpop.f32.mrb[0].mxu0
      %v3249 = vadd.f32 %v3088, %v3248
      %v3250 = vpop.f32.mrb[0].mxu0
      %v3251 = vpop.f32.mrb[0].mxu0
      %v3252 = vadd.f32 %v3091, %v3251
      %v3253 = vpop.f32.mrb[0].mxu0
      %3254 = vmatprep.mubr.bf16.mxu0 %v1729
      %3255 = vmatmul.mubr.bf16.gmra.mrb[0].mxu0 %v1728
      %v3256 = vpop.f32.mrb[0].mxu0
      %v3257 = vadd.f32 %v3096, %v3256
      %v3258 = vpop.f32.mrb[0].mxu0
      %v3259 = vpop.f32.mrb[0].mxu0
      %v3260 = vadd.f32 %v3099, %v3259
      %v3261 = vpop.f32.mrb[0].mxu0
      %3262 = vmatprep.mubr.bf16.mxu0 %v1745
      %3263 = vmatmul.mubr.bf16.gmra.mrb[0].mxu0 %v1744
      %v3264 = vpop.f32.mrb[0].mxu0
      %v3265 = vadd.f32 %v3104, %v3264
      %v3266 = vpop.f32.mrb[0].mxu0
      %v3267 = vpop.f32.mrb[0].mxu0
      %v3268 = vadd.f32 %v3107, %v3267
      %v3269 = vpop.f32.mrb[0].mxu0
      %3270 = vmatprep.mubr.bf16.mxu0 %v1761
      %3271 = vmatmul.mubr.bf16.gmra.mrb[0].mxu0 %v1760
      %v3272 = vpop.f32.mrb[0].mxu0
      %v3273 = vadd.f32 %v3112, %v3272
      %v3274 = vpop.f32.mrb[0].mxu0
      %v3275 = vpop.f32.mrb[0].mxu0
      %v3276 = vadd.f32 %v3115, %v3275
      %v3277 = vpop.f32.mrb[0].mxu0
      %3278 = vdwg.mxu0
      %3279 = vmatprep.subr.bf16.mxu0 0
      %3280 = vmatpush1.bf16.msra.mxu0 %v2588
      %3281 = vmatprep.subr.bf16.mxu0 0
      %3282 = vmatpush1.bf16.msra.mxu0 %v2589
      %3283 = vmatprep.subr.bf16.mxu0 0
      %3284 = vmatpush1.bf16.msra.mxu0 %v2590
      %3285 = vmatprep.subr.bf16.mxu0 0
      %3286 = vmatpush1.bf16.msra.mxu0 %v2591
      %3287 = vmatprep.subr.bf16.mxu0 0
      %3288 = vmatpush1.bf16.msra.mxu0 %v2592
      %3289 = vmatprep.subr.bf16.mxu0 0
      %3290 = vmatpush1.bf16.msra.mxu0 %v2593
      %3291 = vmatprep.subr.bf16.mxu0 0
      %3292 = vmatpush1.bf16.msra.mxu0 %v2594
      %3293 = vmatprep.subr.bf16.mxu0 0
      %3294 = vmatpush1.bf16.msra.mxu0 %v2595
      %3295 = vmatprep.subr.bf16.mxu0 0
      %3296 = vmatpush1.bf16.msra.mxu0 %v2596
      %3297 = vmatprep.subr.bf16.mxu0 0
      %3298 = vmatpush1.bf16.msra.mxu0 %v2597
      %3299 = vmatprep.subr.bf16.mxu0 0
      %3300 = vmatpush1.bf16.msra.mxu0 %v2598
      %3301 = vmatprep.subr.bf16.mxu0 0
      %3302 = vmatpush1.bf16.msra.mxu0 %v2599
      %3303 = vmatprep.subr.bf16.mxu0 0
      %3304 = vmatpush1.bf16.msra.mxu0 %v2600
      %3305 = vmatprep.subr.bf16.mxu0 0
      %3306 = vmatpush1.bf16.msra.mxu0 %v2601
      %3307 = vmatprep.subr.bf16.mxu0 0
      %3308 = vmatpush1.bf16.msra.mxu0 %v2602
      %3309 = vmatprep.subr.bf16.mxu0 0
      %3310 = vmatpush1.bf16.msra.mxu0 %v2603
      %3311 = vmatprep.mubr.bf16.mxu0 %v1523
      %3312 = vmatmul.mubr.bf16.gmra.mrb[0].mxu0 %v1522
      %v3313 = vpop.f32.mrb[0].mxu0
      %v3314 = vadd.f32 %v3153, %v3313
      %v3315 = vpop.f32.mrb[0].mxu0
      %v3316 = vpop.f32.mrb[0].mxu0
      %v3317 = vadd.f32 %v3156, %v3316
      %v3318 = vpop.f32.mrb[0].mxu0
      %3319 = vmatprep.mubr.bf16.mxu0 %v1539
      %3320 = vmatmul.mubr.bf16.gmra.mrb[0].mxu0 %v1538
      %v3321 = vpop.f32.mrb[0].mxu0
      %v3322 = vadd.f32 %v3161, %v3321
      %v3323 = vpop.f32.mrb[0].mxu0
      %v3324 = vpop.f32.mrb[0].mxu0
      %v3325 = vadd.f32 %v3164, %v3324
      %v3326 = vpop.f32.mrb[0].mxu0
      %3327 = vmatprep.mubr.bf16.mxu0 %v1555
      %3328 = vmatmul.mubr.bf16.gmra.mrb[0].mxu0 %v1554
      %v3329 = vpop.f32.mrb[0].mxu0
      %v3330 = vadd.f32 %v3169, %v3329
      %v3331 = vpop.f32.mrb[0].mxu0
      %v3332 = vpop.f32.mrb[0].mxu0
      %v3333 = vadd.f32 %v3172, %v3332
      %v3334 = vpop.f32.mrb[0].mxu0
      %3335 = vmatprep.mubr.bf16.mxu0 %v1571
      %3336 = vmatmul.mubr.bf16.gmra.mrb[0].mxu0 %v1570
      %v3337 = vpop.f32.mrb[0].mxu0
      %v3338 = vadd.f32 %v3177, %v3337
      %v3339 = vpop.f32.mrb[0].mxu0
      %v3340 = vpop.f32.mrb[0].mxu0
      %v3341 = vadd.f32 %v3180, %v3340
      %v3342 = vpop.f32.mrb[0].mxu0
      %3343 = vmatprep.mubr.bf16.mxu0 %v1587
      %3344 = vmatmul.mubr.bf16.gmra.mrb[0].mxu0 %v1586
      %v3345 = vpop.f32.mrb[0].mxu0
      %v3346 = vadd.f32 %v3185, %v3345
      %v3347 = vpop.f32.mrb[0].mxu0
      %v3348 = vpop.f32.mrb[0].mxu0
      %v3349 = vadd.f32 %v3188, %v3348
      %v3350 = vpop.f32.mrb[0].mxu0
      %3351 = vmatprep.mubr.bf16.mxu0 %v1603
      %3352 = vmatmul.mubr.bf16.gmra.mrb[0].mxu0 %v1602
      %v3353 = vpop.f32.mrb[0].mxu0
      %v3354 = vadd.f32 %v3193, %v3353
      %v3355 = vpop.f32.mrb[0].mxu0
      %v3356 = vpop.f32.mrb[0].mxu0
      %v3357 = vadd.f32 %v3196, %v3356
      %v3358 = vpop.f32.mrb[0].mxu0
      %3359 = vmatprep.mubr.bf16.mxu0 %v1619
      %3360 = vmatmul.mubr.bf16.gmra.mrb[0].mxu0 %v1618
      %v3361 = vpop.f32.mrb[0].mxu0
      %v3362 = vadd.f32 %v3201, %v3361
      %v3363 = vpop.f32.mrb[0].mxu0
      %v3364 = vpop.f32.mrb[0].mxu0
      %v3365 = vadd.f32 %v3204, %v3364
      %v3366 = vpop.f32.mrb[0].mxu0
      %3367 = vmatprep.mubr.bf16.mxu0 %v1635
      %3368 = vmatmul.mubr.bf16.gmra.mrb[0].mxu0 %v1634
      %v3369 = vpop.f32.mrb[0].mxu0
      %v3370 = vadd.f32 %v3209, %v3369
      %v3371 = vpop.f32.mrb[0].mxu0
      %v3372 = vpop.f32.mrb[0].mxu0
      %v3373 = vadd.f32 %v3212, %v3372
      %v3374 = vpop.f32.mrb[0].mxu0
      %3375 = vmatprep.mubr.bf16.mxu0 %v1651
      %3376 = vmatmul.mubr.bf16.gmra.mrb[0].mxu0 %v1650
      %v3377 = vpop.f32.mrb[0].mxu0
      %v3378 = vadd.f32 %v3217, %v3377
      %v3379 = vpop.f32.mrb[0].mxu0
      %v3380 = vpop.f32.mrb[0].mxu0
      %v3381 = vadd.f32 %v3220, %v3380
      %v3382 = vpop.f32.mrb[0].mxu0
      %3383 = vmatprep.mubr.bf16.mxu0 %v1667
      %3384 = vmatmul.mubr.bf16.gmra.mrb[0].mxu0 %v1666
      %v3385 = vpop.f32.mrb[0].mxu0
      %v3386 = vadd.f32 %v3225, %v3385
      %v3387 = vpop.f32.mrb[0].mxu0
      %v3388 = vpop.f32.mrb[0].mxu0
      %v3389 = vadd.f32 %v3228, %v3388
      %v3390 = vpop.f32.mrb[0].mxu0
      %3391 = vmatprep.mubr.bf16.mxu0 %v1683
      %3392 = vmatmul.mubr.bf16.gmra.mrb[0].mxu0 %v1682
      %v3393 = vpop.f32.mrb[0].mxu0
      %v3394 = vadd.f32 %v3233, %v3393
      %v3395 = vpop.f32.mrb[0].mxu0
      %v3396 = vpop.f32.mrb[0].mxu0
      %v3397 = vadd.f32 %v3236, %v3396
      %v3398 = vpop.f32.mrb[0].mxu0
      %3399 = vmatprep.mubr.bf16.mxu0 %v1699
      %3400 = vmatmul.mubr.bf16.gmra.mrb[0].mxu0 %v1698
      %v3401 = vpop.f32.mrb[0].mxu0
      %v3402 = vadd.f32 %v3241, %v3401
      %v3403 = vpop.f32.mrb[0].mxu0
      %v3404 = vpop.f32.mrb[0].mxu0
      %v3405 = vadd.f32 %v3244, %v3404
      %v3406 = vpop.f32.mrb[0].mxu0
      %3407 = vmatprep.mubr.bf16.mxu0 %v1715
      %3408 = vmatmul.mubr.bf16.gmra.mrb[0].mxu0 %v1714
      %v3409 = vpop.f32.mrb[0].mxu0
      %v3410 = vadd.f32 %v3249, %v3409
      %v3411 = vpop.f32.mrb[0].mxu0
      %v3412 = vpop.f32.mrb[0].mxu0
      %v3413 = vadd.f32 %v3252, %v3412
      %v3414 = vpop.f32.mrb[0].mxu0
      %3415 = vmatprep.mubr.bf16.mxu0 %v1731
      %3416 = vmatmul.mubr.bf16.gmra.mrb[0].mxu0 %v1730
      %v3417 = vpop.f32.mrb[0].mxu0
      %v3418 = vadd.f32 %v3257, %v3417
      %v3419 = vpop.f32.mrb[0].mxu0
      %v3420 = vpop.f32.mrb[0].mxu0
      %v3421 = vadd.f32 %v3260, %v3420
      %v3422 = vpop.f32.mrb[0].mxu0
      %3423 = vmatprep.mubr.bf16.mxu0 %v1747
      %3424 = vmatmul.mubr.bf16.gmra.mrb[0].mxu0 %v1746
      %v3425 = vpop.f32.mrb[0].mxu0
      %v3426 = vadd.f32 %v3265, %v3425
      %v3427 = vpop.f32.mrb[0].mxu0
      %v3428 = vpop.f32.mrb[0].mxu0
      %v3429 = vadd.f32 %v3268, %v3428
      %v3430 = vpop.f32.mrb[0].mxu0
      %3431 = vmatprep.mubr.bf16.mxu0 %v1763
      %3432 = vmatmul.mubr.bf16.gmra.mrb[0].mxu0 %v1762
      %v3433 = vpop.f32.mrb[0].mxu0
      %v3434 = vadd.f32 %v3273, %v3433
      %v3435 = vpop.f32.mrb[0].mxu0
      %v3436 = vpop.f32.mrb[0].mxu0
      %v3437 = vadd.f32 %v3276, %v3436
      %v3438 = vpop.f32.mrb[0].mxu0
      %3439 = vdwg.mxu0
      %3440 = vmatprep.subr.bf16.mxu0 0
      %3441 = vmatpush1.bf16.msra.mxu0 %v2604
      %3442 = vmatprep.subr.bf16.mxu0 0
      %3443 = vmatpush1.bf16.msra.mxu0 %v2605
      %3444 = vmatprep.subr.bf16.mxu0 0
      %3445 = vmatpush1.bf16.msra.mxu0 %v2606
      %3446 = vmatprep.subr.bf16.mxu0 0
      %3447 = vmatpush1.bf16.msra.mxu0 %v2607
      %3448 = vmatprep.subr.bf16.mxu0 0
      %3449 = vmatpush1.bf16.msra.mxu0 %v2608
      %3450 = vmatprep.subr.bf16.mxu0 0
      %3451 = vmatpush1.bf16.msra.mxu0 %v2609
      %3452 = vmatprep.subr.bf16.mxu0 0
      %3453 = vmatpush1.bf16.msra.mxu0 %v2610
      %3454 = vmatprep.subr.bf16.mxu0 0
      %3455 = vmatpush1.bf16.msra.mxu0 %v2611
      %3456 = vmatprep.subr.bf16.mxu0 0
      %3457 = vmatpush1.bf16.msra.mxu0 %v2612
      %3458 = vmatprep.subr.bf16.mxu0 0
      %3459 = vmatpush1.bf16.msra.mxu0 %v2613
      %3460 = vmatprep.subr.bf16.mxu0 0
      %3461 = vmatpush1.bf16.msra.mxu0 %v2614
      %3462 = vmatprep.subr.bf16.mxu0 0
      %3463 = vmatpush1.bf16.msra.mxu0 %v2615
      %3464 = vmatprep.subr.bf16.mxu0 0
      %3465 = vmatpush1.bf16.msra.mxu0 %v2616
      %3466 = vmatprep.subr.bf16.mxu0 0
      %3467 = vmatpush1.bf16.msra.mxu0 %v2617
      %3468 = vmatprep.subr.bf16.mxu0 0
      %3469 = vmatpush1.bf16.msra.mxu0 %v2618
      %3470 = vmatprep.subr.bf16.mxu0 0
      %3471 = vmatpush1.bf16.msra.mxu0 %v2619
      %3472 = vmatprep.mubr.bf16.mxu0 %v1525
      %3473 = vmatmul.mubr.bf16.gmra.mrb[0].mxu0 %v1524
      %v3474 = vpop.f32.mrb[0].mxu0
      %v3475 = vadd.f32 %v3314, %v3474
      %v3476 = vpop.f32.mrb[0].mxu0
      %v3477 = vpop.f32.mrb[0].mxu0
      %v3478 = vadd.f32 %v3317, %v3477
      %v3479 = vpop.f32.mrb[0].mxu0
      %3480 = vmatprep.mubr.bf16.mxu0 %v1541
      %3481 = vmatmul.mubr.bf16.gmra.mrb[0].mxu0 %v1540
      %v3482 = vpop.f32.mrb[0].mxu0
      %v3483 = vadd.f32 %v3322, %v3482
      %v3484 = vpop.f32.mrb[0].mxu0
      %v3485 = vpop.f32.mrb[0].mxu0
      %v3486 = vadd.f32 %v3325, %v3485
      %v3487 = vpop.f32.mrb[0].mxu0
      %3488 = vmatprep.mubr.bf16.mxu0 %v1557
      %3489 = vmatmul.mubr.bf16.gmra.mrb[0].mxu0 %v1556
      %v3490 = vpop.f32.mrb[0].mxu0
      %v3491 = vadd.f32 %v3330, %v3490
      %v3492 = vpop.f32.mrb[0].mxu0
      %v3493 = vpop.f32.mrb[0].mxu0
      %v3494 = vadd.f32 %v3333, %v3493
      %v3495 = vpop.f32.mrb[0].mxu0
      %3496 = vmatprep.mubr.bf16.mxu0 %v1573
      %3497 = vmatmul.mubr.bf16.gmra.mrb[0].mxu0 %v1572
      %v3498 = vpop.f32.mrb[0].mxu0
      %v3499 = vadd.f32 %v3338, %v3498
      %v3500 = vpop.f32.mrb[0].mxu0
      %v3501 = vpop.f32.mrb[0].mxu0
      %v3502 = vadd.f32 %v3341, %v3501
      %v3503 = vpop.f32.mrb[0].mxu0
      %3504 = vmatprep.mubr.bf16.mxu0 %v1589
      %3505 = vmatmul.mubr.bf16.gmra.mrb[0].mxu0 %v1588
      %v3506 = vpop.f32.mrb[0].mxu0
      %v3507 = vadd.f32 %v3346, %v3506
      %v3508 = vpop.f32.mrb[0].mxu0
      %v3509 = vpop.f32.mrb[0].mxu0
      %v3510 = vadd.f32 %v3349, %v3509
      %v3511 = vpop.f32.mrb[0].mxu0
      %3512 = vmatprep.mubr.bf16.mxu0 %v1605
      %3513 = vmatmul.mubr.bf16.gmra.mrb[0].mxu0 %v1604
      %v3514 = vpop.f32.mrb[0].mxu0
      %v3515 = vadd.f32 %v3354, %v3514
      %v3516 = vpop.f32.mrb[0].mxu0
      %v3517 = vpop.f32.mrb[0].mxu0
      %v3518 = vadd.f32 %v3357, %v3517
      %v3519 = vpop.f32.mrb[0].mxu0
      %3520 = vmatprep.mubr.bf16.mxu0 %v1621
      %3521 = vmatmul.mubr.bf16.gmra.mrb[0].mxu0 %v1620
      %v3522 = vpop.f32.mrb[0].mxu0
      %v3523 = vadd.f32 %v3362, %v3522
      %v3524 = vpop.f32.mrb[0].mxu0
      %v3525 = vpop.f32.mrb[0].mxu0
      %v3526 = vadd.f32 %v3365, %v3525
      %v3527 = vpop.f32.mrb[0].mxu0
      %3528 = vmatprep.mubr.bf16.mxu0 %v1637
      %3529 = vmatmul.mubr.bf16.gmra.mrb[0].mxu0 %v1636
      %v3530 = vpop.f32.mrb[0].mxu0
      %v3531 = vadd.f32 %v3370, %v3530
      %v3532 = vpop.f32.mrb[0].mxu0
      %v3533 = vpop.f32.mrb[0].mxu0
      %v3534 = vadd.f32 %v3373, %v3533
      %v3535 = vpop.f32.mrb[0].mxu0
      %3536 = vmatprep.mubr.bf16.mxu0 %v1653
      %3537 = vmatmul.mubr.bf16.gmra.mrb[0].mxu0 %v1652
      %v3538 = vpop.f32.mrb[0].mxu0
      %v3539 = vadd.f32 %v3378, %v3538
      %v3540 = vpop.f32.mrb[0].mxu0
      %v3541 = vpop.f32.mrb[0].mxu0
      %v3542 = vadd.f32 %v3381, %v3541
      %v3543 = vpop.f32.mrb[0].mxu0
      %3544 = vmatprep.mubr.bf16.mxu0 %v1669
      %3545 = vmatmul.mubr.bf16.gmra.mrb[0].mxu0 %v1668
      %v3546 = vpop.f32.mrb[0].mxu0
      %v3547 = vadd.f32 %v3386, %v3546
      %v3548 = vpop.f32.mrb[0].mxu0
      %v3549 = vpop.f32.mrb[0].mxu0
      %v3550 = vadd.f32 %v3389, %v3549
      %v3551 = vpop.f32.mrb[0].mxu0
      %3552 = vmatprep.mubr.bf16.mxu0 %v1685
      %3553 = vmatmul.mubr.bf16.gmra.mrb[0].mxu0 %v1684
      %v3554 = vpop.f32.mrb[0].mxu0
      %v3555 = vadd.f32 %v3394, %v3554
      %v3556 = vpop.f32.mrb[0].mxu0
      %v3557 = vpop.f32.mrb[0].mxu0
      %v3558 = vadd.f32 %v3397, %v3557
      %v3559 = vpop.f32.mrb[0].mxu0
      %3560 = vmatprep.mubr.bf16.mxu0 %v1701
      %3561 = vmatmul.mubr.bf16.gmra.mrb[0].mxu0 %v1700
      %v3562 = vpop.f32.mrb[0].mxu0
      %v3563 = vadd.f32 %v3402, %v3562
      %v3564 = vpop.f32.mrb[0].mxu0
      %v3565 = vpop.f32.mrb[0].mxu0
      %v3566 = vadd.f32 %v3405, %v3565
      %v3567 = vpop.f32.mrb[0].mxu0
      %3568 = vmatprep.mubr.bf16.mxu0 %v1717
      %3569 = vmatmul.mubr.bf16.gmra.mrb[0].mxu0 %v1716
      %v3570 = vpop.f32.mrb[0].mxu0
      %v3571 = vadd.f32 %v3410, %v3570
      %v3572 = vpop.f32.mrb[0].mxu0
      %v3573 = vpop.f32.mrb[0].mxu0
      %v3574 = vadd.f32 %v3413, %v3573
      %v3575 = vpop.f32.mrb[0].mxu0
      %3576 = vmatprep.mubr.bf16.mxu0 %v1733
      %3577 = vmatmul.mubr.bf16.gmra.mrb[0].mxu0 %v1732
      %v3578 = vpop.f32.mrb[0].mxu0
      %v3579 = vadd.f32 %v3418, %v3578
      %v3580 = vpop.f32.mrb[0].mxu0
      %v3581 = vpop.f32.mrb[0].mxu0
      %v3582 = vadd.f32 %v3421, %v3581
      %v3583 = vpop.f32.mrb[0].mxu0
      %3584 = vmatprep.mubr.bf16.mxu0 %v1749
      %3585 = vmatmul.mubr.bf16.gmra.mrb[0].mxu0 %v1748
      %v3586 = vpop.f32.mrb[0].mxu0
      %v3587 = vadd.f32 %v3426, %v3586
      %v3588 = vpop.f32.mrb[0].mxu0
      %v3589 = vpop.f32.mrb[0].mxu0
      %v3590 = vadd.f32 %v3429, %v3589
      %v3591 = vpop.f32.mrb[0].mxu0
      %3592 = vmatprep.mubr.bf16.mxu0 %v1765
      %3593 = vmatmul.mubr.bf16.gmra.mrb[0].mxu0 %v1764
      %v3594 = vpop.f32.mrb[0].mxu0
      %v3595 = vadd.f32 %v3434, %v3594
      %v3596 = vpop.f32.mrb[0].mxu0
      %v3597 = vpop.f32.mrb[0].mxu0
      %v3598 = vadd.f32 %v3437, %v3597
      %v3599 = vpop.f32.mrb[0].mxu0
      %3600 = vdwg.mxu0
      %3601 = vmatprep.subr.bf16.mxu0 0
      %3602 = vmatpush1.bf16.msra.mxu0 %v2620
      %3603 = vmatprep.subr.bf16.mxu0 0
      %3604 = vmatpush1.bf16.msra.mxu0 %v2621
      %3605 = vmatprep.subr.bf16.mxu0 0
      %3606 = vmatpush1.bf16.msra.mxu0 %v2622
      %3607 = vmatprep.subr.bf16.mxu0 0
      %3608 = vmatpush1.bf16.msra.mxu0 %v2623
      %3609 = vmatprep.subr.bf16.mxu0 0
      %3610 = vmatpush1.bf16.msra.mxu0 %v2624
      %3611 = vmatprep.subr.bf16.mxu0 0
      %3612 = vmatpush1.bf16.msra.mxu0 %v2625
      %3613 = vmatprep.subr.bf16.mxu0 0
      %3614 = vmatpush1.bf16.msra.mxu0 %v2626
      %3615 = vmatprep.subr.bf16.mxu0 0
      %3616 = vmatpush1.bf16.msra.mxu0 %v2627
      %3617 = vmatprep.subr.bf16.mxu0 0
      %3618 = vmatpush1.bf16.msra.mxu0 %v2628
      %3619 = vmatprep.subr.bf16.mxu0 0
      %3620 = vmatpush1.bf16.msra.mxu0 %v2629
      %3621 = vmatprep.subr.bf16.mxu0 0
      %3622 = vmatpush1.bf16.msra.mxu0 %v2630
      %3623 = vmatprep.subr.bf16.mxu0 0
      %3624 = vmatpush1.bf16.msra.mxu0 %v2631
      %3625 = vmatprep.subr.bf16.mxu0 0
      %3626 = vmatpush1.bf16.msra.mxu0 %v2632
      %3627 = vmatprep.subr.bf16.mxu0 0
      %3628 = vmatpush1.bf16.msra.mxu0 %v2633
      %3629 = vmatprep.subr.bf16.mxu0 0
      %3630 = vmatpush1.bf16.msra.mxu0 %v2634
      %3631 = vmatprep.subr.bf16.mxu0 0
      %3632 = vmatpush1.bf16.msra.mxu0 %v2635
      %3633 = vmatprep.mubr.bf16.mxu0 %v1527
      %3634 = vmatmul.mubr.bf16.gmra.mrb[0].mxu0 %v1526
      %v3635 = vpop.f32.mrb[0].mxu0
      %v3636 = vadd.f32 %v3475, %v3635
      %v3637 = vpop.f32.mrb[0].mxu0
      %v3638 = vpop.f32.mrb[0].mxu0
      %v3639 = vadd.f32 %v3478, %v3638
      %v3640 = vpop.f32.mrb[0].mxu0
      %3641 = vmatprep.mubr.bf16.mxu0 %v1543
      %3642 = vmatmul.mubr.bf16.gmra.mrb[0].mxu0 %v1542
      %v3643 = vpop.f32.mrb[0].mxu0
      %v3644 = vadd.f32 %v3483, %v3643
      %v3645 = vpop.f32.mrb[0].mxu0
      %v3646 = vpop.f32.mrb[0].mxu0
      %v3647 = vadd.f32 %v3486, %v3646
      %v3648 = vpop.f32.mrb[0].mxu0
      %3649 = vmatprep.mubr.bf16.mxu0 %v1559
      %3650 = vmatmul.mubr.bf16.gmra.mrb[0].mxu0 %v1558
      %v3651 = vpop.f32.mrb[0].mxu0
      %v3652 = vadd.f32 %v3491, %v3651
      %v3653 = vpop.f32.mrb[0].mxu0
      %v3654 = vpop.f32.mrb[0].mxu0
      %v3655 = vadd.f32 %v3494, %v3654
      %v3656 = vpop.f32.mrb[0].mxu0
      %3657 = vmatprep.mubr.bf16.mxu0 %v1575
      %3658 = vmatmul.mubr.bf16.gmra.mrb[0].mxu0 %v1574
      %v3659 = vpop.f32.mrb[0].mxu0
      %v3660 = vadd.f32 %v3499, %v3659
      %v3661 = vpop.f32.mrb[0].mxu0
      %v3662 = vpop.f32.mrb[0].mxu0
      %v3663 = vadd.f32 %v3502, %v3662
      %v3664 = vpop.f32.mrb[0].mxu0
      %3665 = vmatprep.mubr.bf16.mxu0 %v1591
      %3666 = vmatmul.mubr.bf16.gmra.mrb[0].mxu0 %v1590
      %v3667 = vpop.f32.mrb[0].mxu0
      %v3668 = vadd.f32 %v3507, %v3667
      %v3669 = vpop.f32.mrb[0].mxu0
      %v3670 = vpop.f32.mrb[0].mxu0
      %v3671 = vadd.f32 %v3510, %v3670
      %v3672 = vpop.f32.mrb[0].mxu0
      %3673 = vmatprep.mubr.bf16.mxu0 %v1607
      %3674 = vmatmul.mubr.bf16.gmra.mrb[0].mxu0 %v1606
      %v3675 = vpop.f32.mrb[0].mxu0
      %v3676 = vadd.f32 %v3515, %v3675
      %v3677 = vpop.f32.mrb[0].mxu0
      %v3678 = vpop.f32.mrb[0].mxu0
      %v3679 = vadd.f32 %v3518, %v3678
      %v3680 = vpop.f32.mrb[0].mxu0
      %3681 = vmatprep.mubr.bf16.mxu0 %v1623
      %3682 = vmatmul.mubr.bf16.gmra.mrb[0].mxu0 %v1622
      %v3683 = vpop.f32.mrb[0].mxu0
      %v3684 = vadd.f32 %v3523, %v3683
      %v3685 = vpop.f32.mrb[0].mxu0
      %v3686 = vpop.f32.mrb[0].mxu0
      %v3687 = vadd.f32 %v3526, %v3686
      %v3688 = vpop.f32.mrb[0].mxu0
      %3689 = vmatprep.mubr.bf16.mxu0 %v1639
      %3690 = vmatmul.mubr.bf16.gmra.mrb[0].mxu0 %v1638
      %v3691 = vpop.f32.mrb[0].mxu0
      %v3692 = vadd.f32 %v3531, %v3691
      %v3693 = vpop.f32.mrb[0].mxu0
      %v3694 = vpop.f32.mrb[0].mxu0
      %v3695 = vadd.f32 %v3534, %v3694
      %v3696 = vpop.f32.mrb[0].mxu0
      %3697 = vmatprep.mubr.bf16.mxu0 %v1655
      %3698 = vmatmul.mubr.bf16.gmra.mrb[0].mxu0 %v1654
      %v3699 = vpop.f32.mrb[0].mxu0
      %v3700 = vadd.f32 %v3539, %v3699
      %v3701 = vpop.f32.mrb[0].mxu0
      %v3702 = vpop.f32.mrb[0].mxu0
      %v3703 = vadd.f32 %v3542, %v3702
      %v3704 = vpop.f32.mrb[0].mxu0
      %3705 = vmatprep.mubr.bf16.mxu0 %v1671
      %3706 = vmatmul.mubr.bf16.gmra.mrb[0].mxu0 %v1670
      %v3707 = vpop.f32.mrb[0].mxu0
      %v3708 = vadd.f32 %v3547, %v3707
      %v3709 = vpop.f32.mrb[0].mxu0
      %v3710 = vpop.f32.mrb[0].mxu0
      %v3711 = vadd.f32 %v3550, %v3710
      %v3712 = vpop.f32.mrb[0].mxu0
      %3713 = vmatprep.mubr.bf16.mxu0 %v1687
      %3714 = vmatmul.mubr.bf16.gmra.mrb[0].mxu0 %v1686
      %v3715 = vpop.f32.mrb[0].mxu0
      %v3716 = vadd.f32 %v3555, %v3715
      %v3717 = vpop.f32.mrb[0].mxu0
      %v3718 = vpop.f32.mrb[0].mxu0
      %v3719 = vadd.f32 %v3558, %v3718
      %v3720 = vpop.f32.mrb[0].mxu0
      %3721 = vmatprep.mubr.bf16.mxu0 %v1703
      %3722 = vmatmul.mubr.bf16.gmra.mrb[0].mxu0 %v1702
      %v3723 = vpop.f32.mrb[0].mxu0
      %v3724 = vadd.f32 %v3563, %v3723
      %v3725 = vpop.f32.mrb[0].mxu0
      %v3726 = vpop.f32.mrb[0].mxu0
      %v3727 = vadd.f32 %v3566, %v3726
      %v3728 = vpop.f32.mrb[0].mxu0
      %3729 = vmatprep.mubr.bf16.mxu0 %v1719
      %3730 = vmatmul.mubr.bf16.gmra.mrb[0].mxu0 %v1718
      %v3731 = vpop.f32.mrb[0].mxu0
      %v3732 = vadd.f32 %v3571, %v3731
      %v3733 = vpop.f32.mrb[0].mxu0
      %v3734 = vpop.f32.mrb[0].mxu0
      %v3735 = vadd.f32 %v3574, %v3734
      %v3736 = vpop.f32.mrb[0].mxu0
      %3737 = vmatprep.mubr.bf16.mxu0 %v1735
      %3738 = vmatmul.mubr.bf16.gmra.mrb[0].mxu0 %v1734
      %v3739 = vpop.f32.mrb[0].mxu0
      %v3740 = vadd.f32 %v3579, %v3739
      %v3741 = vpop.f32.mrb[0].mxu0
      %v3742 = vpop.f32.mrb[0].mxu0
      %v3743 = vadd.f32 %v3582, %v3742
      %v3744 = vpop.f32.mrb[0].mxu0
      %3745 = vmatprep.mubr.bf16.mxu0 %v1751
      %3746 = vmatmul.mubr.bf16.gmra.mrb[0].mxu0 %v1750
      %v3747 = vpop.f32.mrb[0].mxu0
      %v3748 = vadd.f32 %v3587, %v3747
      %v3749 = vpop.f32.mrb[0].mxu0
      %v3750 = vpop.f32.mrb[0].mxu0
      %v3751 = vadd.f32 %v3590, %v3750
      %v3752 = vpop.f32.mrb[0].mxu0
      %3753 = vmatprep.mubr.bf16.mxu0 %v1767
      %3754 = vmatmul.mubr.bf16.gmra.mrb[0].mxu0 %v1766
      %v3755 = vpop.f32.mrb[0].mxu0
      %v3756 = vadd.f32 %v3595, %v3755
      %v3757 = vpop.f32.mrb[0].mxu0
      %v3758 = vpop.f32.mrb[0].mxu0
      %v3759 = vadd.f32 %v3598, %v3758
      %v3760 = vpop.f32.mrb[0].mxu0
      %3761 = vdwg.mxu0
      %3762 = vmatprep.subr.bf16.mxu0 0
      %3763 = vmatpush1.bf16.msra.mxu0 %v2636
      %3764 = vmatprep.subr.bf16.mxu0 0
      %3765 = vmatpush1.bf16.msra.mxu0 %v2637
      %3766 = vmatprep.subr.bf16.mxu0 0
      %3767 = vmatpush1.bf16.msra.mxu0 %v2638
      %3768 = vmatprep.subr.bf16.mxu0 0
      %3769 = vmatpush1.bf16.msra.mxu0 %v2639
      %3770 = vmatprep.subr.bf16.mxu0 0
      %3771 = vmatpush1.bf16.msra.mxu0 %v2640
      %3772 = vmatprep.subr.bf16.mxu0 0
      %3773 = vmatpush1.bf16.msra.mxu0 %v2641
      %3774 = vmatprep.subr.bf16.mxu0 0
      %3775 = vmatpush1.bf16.msra.mxu0 %v2642
      %3776 = vmatprep.subr.bf16.mxu0 0
      %3777 = vmatpush1.bf16.msra.mxu0 %v2643
      %3778 = vmatprep.subr.bf16.mxu0 0
      %3779 = vmatpush1.bf16.msra.mxu0 %v2644
      %3780 = vmatprep.subr.bf16.mxu0 0
      %3781 = vmatpush1.bf16.msra.mxu0 %v2645
      %3782 = vmatprep.subr.bf16.mxu0 0
      %3783 = vmatpush1.bf16.msra.mxu0 %v2646
      %3784 = vmatprep.subr.bf16.mxu0 0
      %3785 = vmatpush1.bf16.msra.mxu0 %v2647
      %3786 = vmatprep.subr.bf16.mxu0 0
      %3787 = vmatpush1.bf16.msra.mxu0 %v2648
      %3788 = vmatprep.subr.bf16.mxu0 0
      %3789 = vmatpush1.bf16.msra.mxu0 %v2649
      %3790 = vmatprep.subr.bf16.mxu0 0
      %3791 = vmatpush1.bf16.msra.mxu0 %v2650
      %3792 = vmatprep.subr.bf16.mxu0 0
      %3793 = vmatpush1.bf16.msra.mxu0 %v2651
      %3794 = vmatprep.mubr.bf16.mxu0 %v1529
      %3795 = vmatmul.mubr.bf16.gmra.mrb[0].mxu0 %v1528
      %v3796 = vpop.f32.mrb[0].mxu0
      %v3797 = vadd.f32 %v3636, %v3796
      %v3798 = vpop.f32.mrb[0].mxu0
      %v3799 = vpop.f32.mrb[0].mxu0
      %v3800 = vadd.f32 %v3639, %v3799
      %v3801 = vpop.f32.mrb[0].mxu0
      %3802 = vmatprep.mubr.bf16.mxu0 %v1545
      %3803 = vmatmul.mubr.bf16.gmra.mrb[0].mxu0 %v1544
      %v3804 = vpop.f32.mrb[0].mxu0
      %v3805 = vadd.f32 %v3644, %v3804
      %v3806 = vpop.f32.mrb[0].mxu0
      %v3807 = vpop.f32.mrb[0].mxu0
      %v3808 = vadd.f32 %v3647, %v3807
      %v3809 = vpop.f32.mrb[0].mxu0
      %3810 = vmatprep.mubr.bf16.mxu0 %v1561
      %3811 = vmatmul.mubr.bf16.gmra.mrb[0].mxu0 %v1560
      %v3812 = vpop.f32.mrb[0].mxu0
      %v3813 = vadd.f32 %v3652, %v3812
      %v3814 = vpop.f32.mrb[0].mxu0
      %v3815 = vpop.f32.mrb[0].mxu0
      %v3816 = vadd.f32 %v3655, %v3815
      %v3817 = vpop.f32.mrb[0].mxu0
      %3818 = vmatprep.mubr.bf16.mxu0 %v1577
      %3819 = vmatmul.mubr.bf16.gmra.mrb[0].mxu0 %v1576
      %v3820 = vpop.f32.mrb[0].mxu0
      %v3821 = vadd.f32 %v3660, %v3820
      %v3822 = vpop.f32.mrb[0].mxu0
      %v3823 = vpop.f32.mrb[0].mxu0
      %v3824 = vadd.f32 %v3663, %v3823
      %v3825 = vpop.f32.mrb[0].mxu0
      %3826 = vmatprep.mubr.bf16.mxu0 %v1593
      %3827 = vmatmul.mubr.bf16.gmra.mrb[0].mxu0 %v1592
      %v3828 = vpop.f32.mrb[0].mxu0
      %v3829 = vadd.f32 %v3668, %v3828
      %v3830 = vpop.f32.mrb[0].mxu0
      %v3831 = vpop.f32.mrb[0].mxu0
      %v3832 = vadd.f32 %v3671, %v3831
      %v3833 = vpop.f32.mrb[0].mxu0
      %3834 = vmatprep.mubr.bf16.mxu0 %v1609
      %3835 = vmatmul.mubr.bf16.gmra.mrb[0].mxu0 %v1608
      %v3836 = vpop.f32.mrb[0].mxu0
      %v3837 = vadd.f32 %v3676, %v3836
      %v3838 = vpop.f32.mrb[0].mxu0
      %v3839 = vpop.f32.mrb[0].mxu0
      %v3840 = vadd.f32 %v3679, %v3839
      %v3841 = vpop.f32.mrb[0].mxu0
      %3842 = vmatprep.mubr.bf16.mxu0 %v1625
      %3843 = vmatmul.mubr.bf16.gmra.mrb[0].mxu0 %v1624
      %v3844 = vpop.f32.mrb[0].mxu0
      %v3845 = vadd.f32 %v3684, %v3844
      %v3846 = vpop.f32.mrb[0].mxu0
      %v3847 = vpop.f32.mrb[0].mxu0
      %v3848 = vadd.f32 %v3687, %v3847
      %v3849 = vpop.f32.mrb[0].mxu0
      %3850 = vmatprep.mubr.bf16.mxu0 %v1641
      %3851 = vmatmul.mubr.bf16.gmra.mrb[0].mxu0 %v1640
      %v3852 = vpop.f32.mrb[0].mxu0
      %v3853 = vadd.f32 %v3692, %v3852
      %v3854 = vpop.f32.mrb[0].mxu0
      %v3855 = vpop.f32.mrb[0].mxu0
      %v3856 = vadd.f32 %v3695, %v3855
      %v3857 = vpop.f32.mrb[0].mxu0
      %3858 = vmatprep.mubr.bf16.mxu0 %v1657
      %3859 = vmatmul.mubr.bf16.gmra.mrb[0].mxu0 %v1656
      %v3860 = vpop.f32.mrb[0].mxu0
      %v3861 = vadd.f32 %v3700, %v3860
      %v3862 = vpop.f32.mrb[0].mxu0
      %v3863 = vpop.f32.mrb[0].mxu0
      %v3864 = vadd.f32 %v3703, %v3863
      %v3865 = vpop.f32.mrb[0].mxu0
      %3866 = vmatprep.mubr.bf16.mxu0 %v1673
      %3867 = vmatmul.mubr.bf16.gmra.mrb[0].mxu0 %v1672
      %v3868 = vpop.f32.mrb[0].mxu0
      %v3869 = vadd.f32 %v3708, %v3868
      %v3870 = vpop.f32.mrb[0].mxu0
      %v3871 = vpop.f32.mrb[0].mxu0
      %v3872 = vadd.f32 %v3711, %v3871
      %v3873 = vpop.f32.mrb[0].mxu0
      %3874 = vmatprep.mubr.bf16.mxu0 %v1689
      %3875 = vmatmul.mubr.bf16.gmra.mrb[0].mxu0 %v1688
      %v3876 = vpop.f32.mrb[0].mxu0
      %v3877 = vadd.f32 %v3716, %v3876
      %v3878 = vpop.f32.mrb[0].mxu0
      %v3879 = vpop.f32.mrb[0].mxu0
      %v3880 = vadd.f32 %v3719, %v3879
      %v3881 = vpop.f32.mrb[0].mxu0
      %3882 = vmatprep.mubr.bf16.mxu0 %v1705
      %3883 = vmatmul.mubr.bf16.gmra.mrb[0].mxu0 %v1704
      %v3884 = vpop.f32.mrb[0].mxu0
      %v3885 = vadd.f32 %v3724, %v3884
      %v3886 = vpop.f32.mrb[0].mxu0
      %v3887 = vpop.f32.mrb[0].mxu0
      %v3888 = vadd.f32 %v3727, %v3887
      %v3889 = vpop.f32.mrb[0].mxu0
      %3890 = vmatprep.mubr.bf16.mxu0 %v1721
      %3891 = vmatmul.mubr.bf16.gmra.mrb[0].mxu0 %v1720
      %v3892 = vpop.f32.mrb[0].mxu0
      %v3893 = vadd.f32 %v3732, %v3892
      %v3894 = vpop.f32.mrb[0].mxu0
      %v3895 = vpop.f32.mrb[0].mxu0
      %v3896 = vadd.f32 %v3735, %v3895
      %v3897 = vpop.f32.mrb[0].mxu0
      %3898 = vmatprep.mubr.bf16.mxu0 %v1737
      %3899 = vmatmul.mubr.bf16.gmra.mrb[0].mxu0 %v1736
      %v3900 = vpop.f32.mrb[0].mxu0
      %v3901 = vadd.f32 %v3740, %v3900
      %v3902 = vpop.f32.mrb[0].mxu0
      %v3903 = vpop.f32.mrb[0].mxu0
      %v3904 = vadd.f32 %v3743, %v3903
      %v3905 = vpop.f32.mrb[0].mxu0
      %3906 = vmatprep.mubr.bf16.mxu0 %v1753
      %3907 = vmatmul.mubr.bf16.gmra.mrb[0].mxu0 %v1752
      %v3908 = vpop.f32.mrb[0].mxu0
      %v3909 = vadd.f32 %v3748, %v3908
      %v3910 = vpop.f32.mrb[0].mxu0
      %v3911 = vpop.f32.mrb[0].mxu0
      %v3912 = vadd.f32 %v3751, %v3911
      %v3913 = vpop.f32.mrb[0].mxu0
      %3914 = vmatprep.mubr.bf16.mxu0 %v1769
      %3915 = vmatmul.mubr.bf16.gmra.mrb[0].mxu0 %v1768
      %v3916 = vpop.f32.mrb[0].mxu0
      %v3917 = vadd.f32 %v3756, %v3916
      %v3918 = vpop.f32.mrb[0].mxu0
      %v3919 = vpop.f32.mrb[0].mxu0
      %v3920 = vadd.f32 %v3759, %v3919
      %v3921 = vpop.f32.mrb[0].mxu0
      %3922 = vdwg.mxu0
      %3923 = vmatprep.subr.bf16.mxu0 0
      %3924 = vmatpush1.bf16.msra.mxu0 %v2652
      %3925 = vmatprep.subr.bf16.mxu0 0
      %3926 = vmatpush1.bf16.msra.mxu0 %v2653
      %3927 = vmatprep.subr.bf16.mxu0 0
      %3928 = vmatpush1.bf16.msra.mxu0 %v2654
      %3929 = vmatprep.subr.bf16.mxu0 0
      %3930 = vmatpush1.bf16.msra.mxu0 %v2655
      %3931 = vmatprep.subr.bf16.mxu0 0
      %3932 = vmatpush1.bf16.msra.mxu0 %v2656
      %3933 = vmatprep.subr.bf16.mxu0 0
      %3934 = vmatpush1.bf16.msra.mxu0 %v2657
      %3935 = vmatprep.subr.bf16.mxu0 0
      %3936 = vmatpush1.bf16.msra.mxu0 %v2658
      %3937 = vmatprep.subr.bf16.mxu0 0
      %3938 = vmatpush1.bf16.msra.mxu0 %v2659
      %3939 = vmatprep.subr.bf16.mxu0 0
      %3940 = vmatpush1.bf16.msra.mxu0 %v2660
      %3941 = vmatprep.subr.bf16.mxu0 0
      %3942 = vmatpush1.bf16.msra.mxu0 %v2661
      %3943 = vmatprep.subr.bf16.mxu0 0
      %3944 = vmatpush1.bf16.msra.mxu0 %v2662
      %3945 = vmatprep.subr.bf16.mxu0 0
      %3946 = vmatpush1.bf16.msra.mxu0 %v2663
      %3947 = vmatprep.subr.bf16.mxu0 0
      %3948 = vmatpush1.bf16.msra.mxu0 %v2664
      %3949 = vmatprep.subr.bf16.mxu0 0
      %3950 = vmatpush1.bf16.msra.mxu0 %v2665
      %3951 = vmatprep.subr.bf16.mxu0 0
      %3952 = vmatpush1.bf16.msra.mxu0 %v2666
      %3953 = vmatprep.subr.bf16.mxu0 0
      %3954 = vmatpush1.bf16.msra.mxu0 %v2667
      %3955 = vmatprep.mubr.bf16.mxu0 %v1531
      %3956 = vmatmul.mubr.bf16.gmra.mrb[0].mxu0 %v1530
      %v3957 = vpop.f32.mrb[0].mxu0
      %v3958 = vadd.f32 %v3797, %v3957
      %v3959 = vpop.f32.mrb[0].mxu0
      %v3960 = vpop.f32.mrb[0].mxu0
      %v3961 = vadd.f32 %v3800, %v3960
      %v3962 = vpop.f32.mrb[0].mxu0
      %3963 = vmatprep.mubr.bf16.mxu0 %v1547
      %3964 = vmatmul.mubr.bf16.gmra.mrb[0].mxu0 %v1546
      %v3965 = vpop.f32.mrb[0].mxu0
      %v3966 = vadd.f32 %v3805, %v3965
      %v3967 = vpop.f32.mrb[0].mxu0
      %v3968 = vpop.f32.mrb[0].mxu0
      %v3969 = vadd.f32 %v3808, %v3968
      %v3970 = vpop.f32.mrb[0].mxu0
      %3971 = vmatprep.mubr.bf16.mxu0 %v1563
      %3972 = vmatmul.mubr.bf16.gmra.mrb[0].mxu0 %v1562
      %v3973 = vpop.f32.mrb[0].mxu0
      %v3974 = vadd.f32 %v3813, %v3973
      %v3975 = vpop.f32.mrb[0].mxu0
      %v3976 = vpop.f32.mrb[0].mxu0
      %v3977 = vadd.f32 %v3816, %v3976
      %v3978 = vpop.f32.mrb[0].mxu0
      %3979 = vmatprep.mubr.bf16.mxu0 %v1579
      %3980 = vmatmul.mubr.bf16.gmra.mrb[0].mxu0 %v1578
      %v3981 = vpop.f32.mrb[0].mxu0
      %v3982 = vadd.f32 %v3821, %v3981
      %v3983 = vpop.f32.mrb[0].mxu0
      %v3984 = vpop.f32.mrb[0].mxu0
      %v3985 = vadd.f32 %v3824, %v3984
      %v3986 = vpop.f32.mrb[0].mxu0
      %3987 = vmatprep.mubr.bf16.mxu0 %v1595
      %3988 = vmatmul.mubr.bf16.gmra.mrb[0].mxu0 %v1594
      %v3989 = vpop.f32.mrb[0].mxu0
      %v3990 = vadd.f32 %v3829, %v3989
      %v3991 = vpop.f32.mrb[0].mxu0
      %v3992 = vpop.f32.mrb[0].mxu0
      %v3993 = vadd.f32 %v3832, %v3992
      %v3994 = vpop.f32.mrb[0].mxu0
      %3995 = vmatprep.mubr.bf16.mxu0 %v1611
      %3996 = vmatmul.mubr.bf16.gmra.mrb[0].mxu0 %v1610
      %v3997 = vpop.f32.mrb[0].mxu0
      %v3998 = vadd.f32 %v3837, %v3997
      %v3999 = vpop.f32.mrb[0].mxu0
      %v4000 = vpop.f32.mrb[0].mxu0
      %v4001 = vadd.f32 %v3840, %v4000
      %v4002 = vpop.f32.mrb[0].mxu0
      %4003 = vmatprep.mubr.bf16.mxu0 %v1627
      %4004 = vmatmul.mubr.bf16.gmra.mrb[0].mxu0 %v1626
      %v4005 = vpop.f32.mrb[0].mxu0
      %v4006 = vadd.f32 %v3845, %v4005
      %v4007 = vpop.f32.mrb[0].mxu0
      %v4008 = vpop.f32.mrb[0].mxu0
      %v4009 = vadd.f32 %v3848, %v4008
      %v4010 = vpop.f32.mrb[0].mxu0
      %4011 = vmatprep.mubr.bf16.mxu0 %v1643
      %4012 = vmatmul.mubr.bf16.gmra.mrb[0].mxu0 %v1642
      %v4013 = vpop.f32.mrb[0].mxu0
      %v4014 = vadd.f32 %v3853, %v4013
      %v4015 = vpop.f32.mrb[0].mxu0
      %v4016 = vpop.f32.mrb[0].mxu0
      %v4017 = vadd.f32 %v3856, %v4016
      %v4018 = vpop.f32.mrb[0].mxu0
      %4019 = vmatprep.mubr.bf16.mxu0 %v1659
      %4020 = vmatmul.mubr.bf16.gmra.mrb[0].mxu0 %v1658
      %v4021 = vpop.f32.mrb[0].mxu0
      %v4022 = vadd.f32 %v3861, %v4021
      %v4023 = vpop.f32.mrb[0].mxu0
      %v4024 = vpop.f32.mrb[0].mxu0
      %v4025 = vadd.f32 %v3864, %v4024
      %v4026 = vpop.f32.mrb[0].mxu0
      %4027 = vmatprep.mubr.bf16.mxu0 %v1675
      %4028 = vmatmul.mubr.bf16.gmra.mrb[0].mxu0 %v1674
      %v4029 = vpop.f32.mrb[0].mxu0
      %v4030 = vadd.f32 %v3869, %v4029
      %v4031 = vpop.f32.mrb[0].mxu0
      %v4032 = vpop.f32.mrb[0].mxu0
      %v4033 = vadd.f32 %v3872, %v4032
      %v4034 = vpop.f32.mrb[0].mxu0
      %4035 = vmatprep.mubr.bf16.mxu0 %v1691
      %4036 = vmatmul.mubr.bf16.gmra.mrb[0].mxu0 %v1690
      %v4037 = vpop.f32.mrb[0].mxu0
      %v4038 = vadd.f32 %v3877, %v4037
      %v4039 = vpop.f32.mrb[0].mxu0
      %v4040 = vpop.f32.mrb[0].mxu0
      %v4041 = vadd.f32 %v3880, %v4040
      %v4042 = vpop.f32.mrb[0].mxu0
      %4043 = vmatprep.mubr.bf16.mxu0 %v1707
      %4044 = vmatmul.mubr.bf16.gmra.mrb[0].mxu0 %v1706
      %v4045 = vpop.f32.mrb[0].mxu0
      %v4046 = vadd.f32 %v3885, %v4045
      %v4047 = vpop.f32.mrb[0].mxu0
      %v4048 = vpop.f32.mrb[0].mxu0
      %v4049 = vadd.f32 %v3888, %v4048
      %v4050 = vpop.f32.mrb[0].mxu0
      %4051 = vmatprep.mubr.bf16.mxu0 %v1723
      %4052 = vmatmul.mubr.bf16.gmra.mrb[0].mxu0 %v1722
      %v4053 = vpop.f32.mrb[0].mxu0
      %v4054 = vadd.f32 %v3893, %v4053
      %v4055 = vpop.f32.mrb[0].mxu0
      %v4056 = vpop.f32.mrb[0].mxu0
      %v4057 = vadd.f32 %v3896, %v4056
      %v4058 = vpop.f32.mrb[0].mxu0
      %4059 = vmatprep.mubr.bf16.mxu0 %v1739
      %4060 = vmatmul.mubr.bf16.gmra.mrb[0].mxu0 %v1738
      %v4061 = vpop.f32.mrb[0].mxu0
      %v4062 = vadd.f32 %v3901, %v4061
      %v4063 = vpop.f32.mrb[0].mxu0
      %v4064 = vpop.f32.mrb[0].mxu0
      %v4065 = vadd.f32 %v3904, %v4064
      %v4066 = vpop.f32.mrb[0].mxu0
      %4067 = vmatprep.mubr.bf16.mxu0 %v1755
      %4068 = vmatmul.mubr.bf16.gmra.mrb[0].mxu0 %v1754
      %v4069 = vpop.f32.mrb[0].mxu0
      %v4070 = vadd.f32 %v3909, %v4069
      %v4071 = vpop.f32.mrb[0].mxu0
      %v4072 = vpop.f32.mrb[0].mxu0
      %v4073 = vadd.f32 %v3912, %v4072
      %v4074 = vpop.f32.mrb[0].mxu0
      %4075 = vmatprep.mubr.bf16.mxu0 %v1771
      %4076 = vmatmul.mubr.bf16.gmra.mrb[0].mxu0 %v1770
      %v4077 = vpop.f32.mrb[0].mxu0
      %v4078 = vadd.f32 %v3917, %v4077
      %v4079 = vpop.f32.mrb[0].mxu0
      %v4080 = vpop.f32.mrb[0].mxu0
      %v4081 = vadd.f32 %v3920, %v4080
      %v4082 = vpop.f32.mrb[0].mxu0
      %4083 = vdwg.mxu0
      %vm4084 = vcmp.ge.f32.partialorder %v3958, 0.0
      %vm4085 = vcmp.ge.f32.partialorder %v3961, 0.0
      %vm4086 = vcmp.ge.f32.partialorder %v3966, 0.0
      %vm4087 = vcmp.ge.f32.partialorder %v3969, 0.0
      %vm4088 = vcmp.ge.f32.partialorder %v3974, 0.0
      %vm4089 = vcmp.ge.f32.partialorder %v3977, 0.0
      %vm4090 = vcmp.ge.f32.partialorder %v3982, 0.0
      %vm4091 = vcmp.ge.f32.partialorder %v3985, 0.0
      %vm4092 = vcmp.ge.f32.partialorder %v3990, 0.0
      %vm4093 = vcmp.ge.f32.partialorder %v3993, 0.0
      %vm4094 = vcmp.ge.f32.partialorder %v3998, 0.0
      %vm4095 = vcmp.ge.f32.partialorder %v4001, 0.0
      %vm4096 = vcmp.ge.f32.partialorder %v4006, 0.0
      %vm4097 = vcmp.ge.f32.partialorder %v4009, 0.0
      %vm4098 = vcmp.ge.f32.partialorder %v4014, 0.0
      %vm4099 = vcmp.ge.f32.partialorder %v4017, 0.0
      %vm4100 = vcmp.ge.f32.partialorder %v4022, 0.0
      %vm4101 = vcmp.ge.f32.partialorder %v4025, 0.0
      %vm4102 = vcmp.ge.f32.partialorder %v4030, 0.0
      %vm4103 = vcmp.ge.f32.partialorder %v4033, 0.0
      %vm4104 = vcmp.ge.f32.partialorder %v4038, 0.0
      %vm4105 = vcmp.ge.f32.partialorder %v4041, 0.0
      %vm4106 = vcmp.ge.f32.partialorder %v4046, 0.0
      %vm4107 = vcmp.ge.f32.partialorder %v4049, 0.0
      %vm4108 = vcmp.ge.f32.partialorder %v4054, 0.0
      %vm4109 = vcmp.ge.f32.partialorder %v4057, 0.0
      %vm4110 = vcmp.ge.f32.partialorder %v4062, 0.0
      %vm4111 = vcmp.ge.f32.partialorder %v4065, 0.0
      %vm4112 = vcmp.ge.f32.partialorder %v4070, 0.0
      %vm4113 = vcmp.ge.f32.partialorder %v4073, 0.0
      %vm4114 = vcmp.ge.f32.partialorder %v4078, 0.0
      %vm4115 = vcmp.ge.f32.partialorder %v4081, 0.0
      %v4116 = vmul.f32 %v3958, 0.2
      %v4117 = vmul.f32 %v3961, 0.2
      %v4118 = vmul.f32 %v3966, 0.2
      %v4119 = vmul.f32 %v3969, 0.2
      %v4120 = vmul.f32 %v3974, 0.2
      %v4121 = vmul.f32 %v3977, 0.2
      %v4122 = vmul.f32 %v3982, 0.2
      %v4123 = vmul.f32 %v3985, 0.2
      %v4124 = vmul.f32 %v3990, 0.2
      %v4125 = vmul.f32 %v3993, 0.2
      %v4126 = vmul.f32 %v3998, 0.2
      %v4127 = vmul.f32 %v4001, 0.2
      %v4128 = vmul.f32 %v4006, 0.2
      %v4129 = vmul.f32 %v4009, 0.2
      %v4130 = vmul.f32 %v4014, 0.2
      %v4131 = vmul.f32 %v4017, 0.2
      %v4132 = vmul.f32 %v4022, 0.2
      %v4133 = vmul.f32 %v4025, 0.2
      %v4134 = vmul.f32 %v4030, 0.2
      %v4135 = vmul.f32 %v4033, 0.2
      %v4136 = vmul.f32 %v4038, 0.2
      %v4137 = vmul.f32 %v4041, 0.2
      %v4138 = vmul.f32 %v4046, 0.2
      %v4139 = vmul.f32 %v4049, 0.2
      %v4140 = vmul.f32 %v4054, 0.2
      %v4141 = vmul.f32 %v4057, 0.2
      %v4142 = vmul.f32 %v4062, 0.2
      %v4143 = vmul.f32 %v4065, 0.2
      %v4144 = vmul.f32 %v4070, 0.2
      %v4145 = vmul.f32 %v4073, 0.2
      %v4146 = vmul.f32 %v4078, 0.2
      %v4147 = vmul.f32 %v4081, 0.2
      %v4148 = vsel %vm4084, %v3958, %v4116
      %v4149 = vsel %vm4085, %v3961, %v4117
      %v4150 = vsel %vm4086, %v3966, %v4118
      %v4151 = vsel %vm4087, %v3969, %v4119
      %v4152 = vsel %vm4088, %v3974, %v4120
      %v4153 = vsel %vm4089, %v3977, %v4121
      %v4154 = vsel %vm4090, %v3982, %v4122
      %v4155 = vsel %vm4091, %v3985, %v4123
      %v4156 = vsel %vm4092, %v3990, %v4124
      %v4157 = vsel %vm4093, %v3993, %v4125
      %v4158 = vsel %vm4094, %v3998, %v4126
      %v4159 = vsel %vm4095, %v4001, %v4127
      %v4160 = vsel %vm4096, %v4006, %v4128
      %v4161 = vsel %vm4097, %v4009, %v4129
      %v4162 = vsel %vm4098, %v4014, %v4130
      %v4163 = vsel %vm4099, %v4017, %v4131
      %v4164 = vsel %vm4100, %v4022, %v4132
      %v4165 = vsel %vm4101, %v4025, %v4133
      %v4166 = vsel %vm4102, %v4030, %v4134
      %v4167 = vsel %vm4103, %v4033, %v4135
      %v4168 = vsel %vm4104, %v4038, %v4136
      %v4169 = vsel %vm4105, %v4041, %v4137
      %v4170 = vsel %vm4106, %v4046, %v4138
      %v4171 = vsel %vm4107, %v4049, %v4139
      %v4172 = vsel %vm4108, %v4054, %v4140
      %v4173 = vsel %vm4109, %v4057, %v4141
      %v4174 = vsel %vm4110, %v4062, %v4142
      %v4175 = vsel %vm4111, %v4065, %v4143
      %v4176 = vsel %vm4112, %v4070, %v4144
      %v4177 = vsel %vm4113, %v4073, %v4145
      %v4178 = vsel %vm4114, %v4078, %v4146
      %v4179 = vsel %vm4115, %v4081, %v4147
      %4180 = vst [vmem:[%s226] sm:$0xff] %v4148
      %4181 = vst [vmem:[%s226 + $0x8] sm:$0xff] %v4149
      %4182 = vst [vmem:[%s226 + $0x10] sm:$0xff] %v4150
      %4183 = vst [vmem:[%s226 + $0x18] sm:$0xff] %v4151
      %4184 = vst [vmem:[%s226 + $0x20] sm:$0xff] %v4152
      %4185 = vst [vmem:[%s226 + $0x28] sm:$0xff] %v4153
      %4186 = vst [vmem:[%s226 + $0x30] sm:$0xff] %v4154
      %4187 = vst [vmem:[%s226 + $0x38] sm:$0xff] %v4155
      %4188 = vst [vmem:[%s226 + $0x40] sm:$0xff] %v4156
      %4189 = vst [vmem:[%s226 + $0x48] sm:$0xff] %v4157
      %4190 = vst [vmem:[%s226 + $0x50] sm:$0xff] %v4158
      %4191 = vst [vmem:[%s226 + $0x58] sm:$0xff] %v4159
      %4192 = vst [vmem:[%s226 + $0x60] sm:$0xff] %v4160
      %4193 = vst [vmem:[%s226 + $0x68] sm:$0xff] %v4161
      %4194 = vst [vmem:[%s226 + $0x70] sm:$0xff] %v4162
      %4195 = vst [vmem:[%s226 + $0x78] sm:$0xff] %v4163
      %4196 = vst [vmem:[%s226 + $0x80] sm:$0xff] %v4164
      %4197 = vst [vmem:[%s226 + $0x88] sm:$0xff] %v4165
      %4198 = vst [vmem:[%s226 + $0x90] sm:$0xff] %v4166
      %4199 = vst [vmem:[%s226 + $0x98] sm:$0xff] %v4167
      %4200 = vst [vmem:[%s226 + $0xa0] sm:$0xff] %v4168
      %4201 = vst [vmem:[%s226 + $0xa8] sm:$0xff] %v4169
      %4202 = vst [vmem:[%s226 + $0xb0] sm:$0xff] %v4170
      %4203 = vst [vmem:[%s226 + $0xb8] sm:$0xff] %v4171
      %4204 = vst [vmem:[%s226 + $0xc0] sm:$0xff] %v4172
      %4205 = vst [vmem:[%s226 + $0xc8] sm:$0xff] %v4173
      %4206 = vst [vmem:[%s226 + $0xd0] sm:$0xff] %v4174
      %4207 = vst [vmem:[%s226 + $0xd8] sm:$0xff] %v4175
      %4208 = vst [vmem:[%s226 + $0xe0] sm:$0xff] %v4176
      %4209 = vst [vmem:[%s226 + $0xe8] sm:$0xff] %v4177
      %4210 = vst [vmem:[%s226 + $0xf0] sm:$0xff] %v4178
      %4211 = vst [vmem:[%s226 + $0xf8] sm:$0xff] %v4179
      %s4212 = smul.u32 32, %s18
      %p4213 = scmp.lt.s32.totalorder %s4212, 63
      %s4214 = scalar_select %p4213, %s4212, 63
      %p4215 = scmp.lt.s32.totalorder %s19, 0
      %s4216 = scalar_select %p4215, %s19, 0
      %s4217 = sadd.s32 %s4216, %s4214
      %s4218 = smul.addr %s4217, 8
      %s4219 = scalar_lea.vmem %s3, %s4218
      // Predicated region
      $region33: #{forward.7} parent=31 // pred_check
        %p4220 = pneg %p124
      $region34: #{forward.7} parent=31 // pred_check_branch
        %4222 = sbr.rel (%p4220) target = $region36
      $region35: #{forward.7} parent=31 // pred_region
        %s4223 = smul.u32 32, %s18
      $region36: #{forward.7} parent=31 // pred_fallthru
        _
    $region32: #{forward.7} parent=5 // pred_fallthru
      _
    %p4224 = scmp.le.s32.totalorder 2, %s9
    // Predicated region
    $region37: #{forward.7} parent=5 // pred_check
      %p4225 = pneg %p4224
    $region38: #{forward.7} parent=5 // pred_check_branch
      %4227 = sbr.rel (%p4225) target = $region40
    $region39: #{forward.7} parent=5 // pred_region
      %s4228 = ssub.s32 %s9, 2
      // Predicated region
      $region41: #{forward.7} parent=39 // pred_check
        %p4229 = pneg %p130
      $region42: #{forward.7} parent=39 // pred_check_branch
        %4231 = sbr.rel (%p4229) target = $region44
      $region43: #{forward.7} parent=39 // pred_region
        %s4232 = smul.u32 32, %s20
        %p4233 = scmp.lt.s32.totalorder %s4232, 63
        %s4234 = scalar_select %p4233, %s4232, 63
        %p4235 = scmp.lt.s32.totalorder %s21, 0
        %s4236 = scalar_select %p4235, %s21, 0
        %s4237 = sadd.s32 %s4236, %s4234
        %s4238 = smul.addr %s4237, 8
        %s4239 = scalar_lea.vmem %s3, %s4238
      $region44: #{forward.7} parent=39 // pred_fallthru
        _
    $region40: #{forward.7} parent=5 // pred_fallthru
      _
  $region6: #{forward.7} parent=0 // loop_footer
    %s13 = sadd.s32 1, %s9
  $region7: #{forward.7} parent=0 // loop_footer_branch
    %8 = sbr.rel target = $region3
  $region8: #{forward.7} parent=0 // loop_exit
    _

// kernel: forward.9
$region0: #{forward.9}
  #allocation0 [shape = 'u32[]', space=smem, size = 0x4, offset = 0x4, fixed_abs, tag = 'smem constant byte address 0x4 - core index']
  #allocation1 [shape = 'u32[144,128]{1,0:T(1,128)}', space=vmem, size = 0x12000, scoped, tag = 'internal scratch']
  %s0 = inlined_call_operand.vmem [shape: bf16[2048,128], index: 0, kind: input, shape index: {}]
  %s1 = inlined_call_operand.vmem [shape: bf16[128,128], index: 1, kind: input, shape index: {}]
  %s2 = inlined_call_operand.vmem [shape: f32[1,128], index: 2, kind: input, shape index: {}]
  %s3 = inlined_call_operand.vmem [shape: f32[2048,128], index: 3, kind: output, shape index: {}]
  %s4 = sld [smem:[#allocation0]]
  $region45: #{forward.9} parent=0
    _
  %s6 = ssub.s32 1, %s4
  %s7 = scalar_select 0, %s6, %s4
  loop: start=0, step=1, limit=10
  $region2: #{forward.9} parent=0 // loop_pre_header
    _
  $region3: #{forward.9} parent=0 // loop_header
    %s9 = sphi 0, %s13
    %p10 = scmp.ge.s32.totalorder %s9, 10
    %s16 = sphi 0, %s28
    %s17 = sphi 0, %s24
    %s18 = sphi 0, %s16
    %s19 = sphi 0, %s17
    %s20 = sphi 0, %s18
    %s21 = sphi 0, %s19
    %s31 = sphi 0, %s33
    %s34 = sphi 0, %s31
    %s35 = sphi 0, %s34
    %s51 = sphi 0, %s35
    %s57 = sphi 0, %s59
    %s60 = sphi 0, %s57
    %s61 = sphi 0, %s60
    %s77 = sphi 0, %s61
    %s83 = sphi 0, %s85
    %s86 = sphi 0, %s83
    %s87 = sphi 0, %s86
    %s103 = sphi 0, %s87
    %s111 = sphi 0, %s113
    %s114 = sphi 0, %s111
    %s115 = sphi 0, %s114
    %s131 = sphi 0, %s115
  $region4: #{forward.9} parent=0 // loop_header_branch
    %12 = sbr.rel (%p10) target = $region8
  $region5: #{forward.9} parent=0 // loop_body
    %s14 = ssub.s32 %s9, 1
    %s15 = ssub.s32 %s9, 2
    %s22 = sadd.s32 1, %s17
    %p23 = scmp.ge.s32.totalorder %s22, 1
    %s24 = scalar_select %p23, 0, %s22
    %s25 = sadd.s32 1, %s16
    %s26 = scalar_select %p23, %s25, %s16
    %p27 = scmp.ge.s32.totalorder %s26, 8
    %s28 = scalar_select %p27, 0, %s26
    %s29 = ssub.s32 %s16, %s28
    %p30 = scmp.eq.s32.totalorder %s29, 0
    %s32 = sadd.s32 %s31, 1
    %s33 = scalar_select %p30, %s31, %s32
    %p36 = pneg %p30
    %p37 = scmp.eq.s32.totalorder %s9, 7
    %p38 = por %p36, %p37
    %p39 = scmp.ne.s32.totalorder %s31, %s34
    %p40 = scmp.eq.s32.totalorder %s9, 0
    %p41 = por %p39, %p40
    %p42 = scmp.ne.s32.totalorder %s31, %s34
    %p43 = scmp.eq.s32.totalorder %s14, 7
    %p44 = por %p42, %p43
    %p45 = scmp.ne.s32.totalorder %s34, %s35
    %p46 = scmp.eq.s32.totalorder %s14, 0
    %p47 = por %p45, %p46
    %p48 = scmp.ne.s32.totalorder %s34, %s35
    %p49 = scmp.eq.s32.totalorder %s15, 7
    %p50 = por %p48, %p49
    %p52 = scmp.ne.s32.totalorder %s35, %s51
    %p53 = scmp.eq.s32.totalorder %s15, 0
    %p54 = por %p52, %p53
    %s55 = ssub.s32 %s17, %s24
    %p56 = scmp.eq.s32.totalorder %s55, 0
    %s58 = sadd.s32 %s57, 1
    %s59 = scalar_select %p56, %s57, %s58
    %p62 = pneg %p56
    %p63 = scmp.eq.s32.totalorder %s9, 7
    %p64 = por %p62, %p63
    %p65 = scmp.ne.s32.totalorder %s57, %s60
    %p66 = scmp.eq.s32.totalorder %s9, 0
    %p67 = por %p65, %p66
    %p68 = scmp.ne.s32.totalorder %s57, %s60
    %p69 = scmp.eq.s32.totalorder %s14, 7
    %p70 = por %p68, %p69
    %p71 = scmp.ne.s32.totalorder %s60, %s61
    %p72 = scmp.eq.s32.totalorder %s14, 0
    %p73 = por %p71, %p72
    %p74 = scmp.ne.s32.totalorder %s60, %s61
    %p75 = scmp.eq.s32.totalorder %s15, 7
    %p76 = por %p74, %p75
    %p78 = scmp.ne.s32.totalorder %s61, %s77
    %p79 = scmp.eq.s32.totalorder %s15, 0
    %p80 = por %p78, %p79
    %s81 = ssub.s32 %s17, %s24
    %p82 = scmp.eq.s32.totalorder %s81, 0
    %s84 = sadd.s32 %s83, 1
    %s85 = scalar_select %p82, %s83, %s84
    %p88 = pneg %p82
    %p89 = scmp.eq.s32.totalorder %s9, 7
    %p90 = por %p88, %p89
    %p91 = scmp.ne.s32.totalorder %s83, %s86
    %p92 = scmp.eq.s32.totalorder %s9, 0
    %p93 = por %p91, %p92
    %p94 = scmp.ne.s32.totalorder %s83, %s86
    %p95 = scmp.eq.s32.totalorder %s14, 7
    %p96 = por %p94, %p95
    %p97 = scmp.ne.s32.totalorder %s86, %s87
    %p98 = scmp.eq.s32.totalorder %s14, 0
    %p99 = por %p97, %p98
    %p100 = scmp.ne.s32.totalorder %s86, %s87
    %p101 = scmp.eq.s32.totalorder %s15, 7
    %p102 = por %p100, %p101
    %p104 = scmp.ne.s32.totalorder %s87, %s103
    %p105 = scmp.eq.s32.totalorder %s15, 0
    %p106 = por %p104, %p105
    %s107 = ssub.s32 %s16, %s28
    %s108 = ssub.s32 %s17, %s24
    %s109 = sor.u32 %s107, %s108
    %p110 = scmp.eq.s32.totalorder %s109, 0
    %s112 = sadd.s32 %s111, 1
    %s113 = scalar_select %p110, %s111, %s112
    %p116 = pneg %p110
    %p117 = scmp.eq.s32.totalorder %s9, 7
    %p118 = por %p116, %p117
    %p119 = scmp.ne.s32.totalorder %s111, %s114
    %p120 = scmp.eq.s32.totalorder %s9, 0
    %p121 = por %p119, %p120
    %p122 = scmp.ne.s32.totalorder %s111, %s114
    %p123 = scmp.eq.s32.totalorder %s14, 7
    %p124 = por %p122, %p123
    %p125 = scmp.ne.s32.totalorder %s114, %s115
    %p126 = scmp.eq.s32.totalorder %s14, 0
    %p127 = por %p125, %p126
    %p128 = scmp.ne.s32.totalorder %s114, %s115
    %p129 = scmp.eq.s32.totalorder %s15, 7
    %p130 = por %p128, %p129
    %p132 = scmp.ne.s32.totalorder %s115, %s131
    %p133 = scmp.eq.s32.totalorder %s15, 0
    %p134 = por %p132, %p133
    %p135 = scmp.le.s32.totalorder 1, %s9
    %p136 = scmp.lt.s32.totalorder %s9, 9
    %p137 = pnand %p135, %p136
    %p138 = pneg %p137
    // Predicated region
    $region9: #{forward.9} parent=5 // pred_check
      _
    $region10: #{forward.9} parent=5 // pred_check_branch
      %140 = sbr.rel (%p137) target = $region12
    $region11: #{forward.9} parent=5 // pred_region
      %s141 = ssub.s32 %s9, 1
      // Predicated region
      $region13: #{forward.9} parent=11 // pred_check
        %p142 = pneg %p73
      $region14: #{forward.9} parent=11 // pred_check_branch
        %144 = sbr.rel (%p142) target = $region16
      $region15: #{forward.9} parent=11 // pred_region
        %p145 = scmp.lt.s32.totalorder %s19, 0
        %s146 = scalar_select %p145, %s19, 0
        %s147 = smul.addr %s146, 4
        %s148 = scalar_lea.vmem %s1, %s147
      $region16: #{forward.9} parent=11 // pred_fallthru
        _
      // Predicated region
      $region17: #{forward.9} parent=11 // pred_check
        %p149 = pneg %p99
      $region18: #{forward.9} parent=11 // pred_check_branch
        %151 = sbr.rel (%p149) target = $region20
      $region19: #{forward.9} parent=11 // pred_region
        %p152 = scmp.lt.s32.totalorder %s19, 0
        %s153 = scalar_select %p152, %s19, 0
        %s154 = scalar_lea.vmem %s2, %s153
      $region20: #{forward.9} parent=11 // pred_fallthru
        _
    $region12: #{forward.9} parent=5 // pred_fallthru
      _
    %p155 = scmp.lt.s32.totalorder %s9, 8
    // Predicated region
    $region21: #{forward.9} parent=5 // pred_check
      %p156 = pneg %p155
    $region22: #{forward.9} parent=5 // pred_check_branch
      %158 = sbr.rel (%p156) target = $region24
    $region23: #{forward.9} parent=5 // pred_region
      // Predicated region
      $region25: #{forward.9} parent=23 // pred_check
        %p159 = pneg %p41
      $region26: #{forward.9} parent=23 // pred_check_branch
        %161 = sbr.rel (%p159) target = $region28
      $region27: #{forward.9} parent=23 // pred_region
        %s162 = smul.u32 32, %s16
        %p163 = scmp.lt.s32.totalorder %s162, 255
        %s164 = scalar_select %p163, %s162, 255
        %s165 = smul.addr %s164, 4
        %s166 = scalar_lea.vmem %s0, %s165
        %s167 = smul.u32 32, %s16
      $region28: #{forward.9} parent=23 // pred_fallthru
        _
    $region24: #{forward.9} parent=5 // pred_fallthru
      _
    %p168 = scmp.le.s32.totalorder 1, %s9
    %p169 = scmp.lt.s32.totalorder %s9, 9
    %p170 = pnand %p168, %p169
    %p171 = pneg %p170
    // Predicated region
    $region29: #{forward.9} parent=5 // pred_check
      _
    $region30: #{forward.9} parent=5 // pred_check_branch
      %173 = sbr.rel (%p170) target = $region32
    $region31: #{forward.9} parent=5 // pred_region
      %s174 = ssub.s32 %s9, 1
      %s175 = smul.u32 32, %s18
      %p176 = scmp.lt.s32.totalorder %s175, 255
      %s177 = scalar_select %p176, %s175, 255
      %s178 = smul.addr %s177, 4
      %s179 = scalar_lea.vmem %s0, %s178
      %p180 = pneg %p47
      %p181 = pneg %p44
      %p182 = scmp.lt.s32.totalorder %s19, 0
      %s183 = scalar_select %p182, %s19, 0
      %s184 = smul.addr %s183, 4
      %s185 = scalar_lea.vmem %s1, %s184
      %p186 = pneg %p73
      %p187 = pneg %p70
      %p188 = scmp.lt.s32.totalorder %s19, 0
      %s189 = scalar_select %p188, %s19, 0
      %s190 = scalar_lea.vmem %s2, %s189
      %p191 = pneg %p99
      %p192 = pneg %p96
      %p193 = pneg %p127
      %p194 = pneg %p124
      %s195 = smul.u32 32, %s18
      %p196 = scmp.lt.s32.totalorder %s195, 255
      %s197 = scalar_select %p196, %s195, 255
      %p198 = scmp.lt.s32.totalorder %s19, 0
      %s199 = scalar_select %p198, %s19, 0
      %s200 = sadd.s32 %s199, %s197
      %s201 = smul.addr %s200, 8
      %s202 = scalar_lea.vmem %s3, %s201
      %s203 = smul.u32 32, %s18
      %p204 = scmp.lt.s32.totalorder %s203, 255
      %s205 = scalar_select %p204, %s203, 255
      %s206 = smul.addr %s205, 4
      %s207 = scalar_lea.vmem %s0, %s206
      %s208 = smul.u32 32, %s18
      %p209 = scmp.lt.s32.totalorder %s19, 0
      %s210 = scalar_select %p209, %s19, 0
      %s211 = smul.addr %s210, 4
      %s212 = scalar_lea.vmem %s1, %s211
      %p213 = scmp.lt.s32.totalorder %s19, 0
      %s214 = scalar_select %p213, %s19, 0
      %s215 = scalar_lea.vmem %s2, %s214
      %s216 = smul.u32 32, %s18
      %p217 = scmp.lt.s32.totalorder %s216, 255
      %s218 = scalar_select %p217, %s216, 255
      %p219 = scmp.lt.s32.totalorder %s19, 0
      %s220 = scalar_select %p219, %s19, 0
      %s221 = sadd.s32 %s220, %s218
      %s222 = smul.addr %s221, 8
      %s223 = scalar_lea.vmem %s3, %s222
      %s224 = smul.u32 32, %s18
      %v226 = vld [vmem:[%s207] sm:$0xf]
      %v227 = vld [vmem:[%s207 + $0x4] sm:$0xf]
      %v228 = vld [vmem:[%s207 + $0x8] sm:$0xf]
      %v229 = vld [vmem:[%s207 + $0xc] sm:$0xf]
      %v230 = vld [vmem:[%s207 + $0x10] sm:$0xf]
      %v231 = vld [vmem:[%s207 + $0x14] sm:$0xf]
      %v232 = vld [vmem:[%s207 + $0x18] sm:$0xf]
      %v233 = vld [vmem:[%s207 + $0x1c] sm:$0xf]
      %v234 = vld [vmem:[%s207 + $0x20] sm:$0xf]
      %v235 = vld [vmem:[%s207 + $0x24] sm:$0xf]
      %v236 = vld [vmem:[%s207 + $0x28] sm:$0xf]
      %v237 = vld [vmem:[%s207 + $0x2c] sm:$0xf]
      %v238 = vld [vmem:[%s207 + $0x30] sm:$0xf]
      %v239 = vld [vmem:[%s207 + $0x34] sm:$0xf]
      %v240 = vld [vmem:[%s207 + $0x38] sm:$0xf]
      %v241 = vld [vmem:[%s207 + $0x3c] sm:$0xf]
      %v242 = vld [vmem:[%s207 + $0x40] sm:$0xf]
      %v243 = vld [vmem:[%s207 + $0x44] sm:$0xf]
      %v244 = vld [vmem:[%s207 + $0x48] sm:$0xf]
      %v245 = vld [vmem:[%s207 + $0x4c] sm:$0xf]
      %v246 = vld [vmem:[%s207 + $0x50] sm:$0xf]
      %v247 = vld [vmem:[%s207 + $0x54] sm:$0xf]
      %v248 = vld [vmem:[%s207 + $0x58] sm:$0xf]
      %v249 = vld [vmem:[%s207 + $0x5c] sm:$0xf]
      %v250 = vld [vmem:[%s207 + $0x60] sm:$0xf]
      %v251 = vld [vmem:[%s207 + $0x64] sm:$0xf]
      %v252 = vld [vmem:[%s207 + $0x68] sm:$0xf]
      %v253 = vld [vmem:[%s207 + $0x6c] sm:$0xf]
      %v254 = vld [vmem:[%s207 + $0x70] sm:$0xf]
      %v255 = vld [vmem:[%s207 + $0x74] sm:$0xf]
      %v256 = vld [vmem:[%s207 + $0x78] sm:$0xf]
      %v257 = vld [vmem:[%s207 + $0x7c] sm:$0xf]
      %v258 = vld [vmem:[%s212] sm:$0xf]
      %v259 = vld [vmem:[%s212 + $0x4] sm:$0xf]
      %v260 = vld [vmem:[%s212 + $0x8] sm:$0xf]
      %v261 = vld [vmem:[%s212 + $0xc] sm:$0xf]
      %v262 = vld [vmem:[%s212 + $0x10] sm:$0xf]
      %v263 = vld [vmem:[%s212 + $0x14] sm:$0xf]
      %v264 = vld [vmem:[%s212 + $0x18] sm:$0xf]
      %v265 = vld [vmem:[%s212 + $0x1c] sm:$0xf]
      %v266 = vld [vmem:[%s212 + $0x20] sm:$0xf]
      %v267 = vld [vmem:[%s212 + $0x24] sm:$0xf]
      %v268 = vld [vmem:[%s212 + $0x28] sm:$0xf]
      %v269 = vld [vmem:[%s212 + $0x2c] sm:$0xf]
      %v270 = vld [vmem:[%s212 + $0x30] sm:$0xf]
      %v271 = vld [vmem:[%s212 + $0x34] sm:$0xf]
      %v272 = vld [vmem:[%s212 + $0x38] sm:$0xf]
      %v273 = vld [vmem:[%s212 + $0x3c] sm:$0xf]
      %v274 = vld [vmem:[%s215] sm:$0x1]
      %v276 = vlaneseq
      %v277 = vshrl.u32 %v276, 7
      %v278 = vsub.s32 0, %v277
      %v279 = vrot.slane %v274, %v278
      %v313 = vunpack.c.l.b16 %v226
      %v314 = vunpack.c.l.b16 %v227
      %v315 = vunpack.c.l.b16 %v228
      %v316 = vunpack.c.l.b16 %v229
      %v317 = vunpack.c.l.b16 %v230
      %v318 = vunpack.c.l.b16 %v231
      %v319 = vunpack.c.l.b16 %v232
      %v320 = vunpack.c.l.b16 %v233
      %v321 = vunpack.c.l.b16 %v234
      %v322 = vunpack.c.l.b16 %v235
      %v323 = vunpack.c.l.b16 %v236
      %v324 = vunpack.c.l.b16 %v237
      %v325 = vunpack.c.l.b16 %v238
      %v326 = vunpack.c.l.b16 %v239
      %v327 = vunpack.c.l.b16 %v240
      %v328 = vunpack.c.l.b16 %v241
      %v329 = vunpack.c.l.b16 %v242
      %v330 = vunpack.c.l.b16 %v243
      %v331 = vunpack.c.l.b16 %v244
      %v332 = vunpack.c.l.b16 %v245
      %v333 = vunpack.c.l.b16 %v246
      %v334 = vunpack.c.l.b16 %v247
      %v335 = vunpack.c.l.b16 %v248
      %v336 = vunpack.c.l.b16 %v249
      %v337 = vunpack.c.l.b16 %v250
      %v338 = vunpack.c.l.b16 %v251
      %v339 = vunpack.c.l.b16 %v252
      %v340 = vunpack.c.l.b16 %v253
      %v341 = vunpack.c.l.b16 %v254
      %v342 = vunpack.c.l.b16 %v255
      %v343 = vunpack.c.l.b16 %v256
      %v344 = vunpack.c.l.b16 %v257
      %v345 = vpack.c.b16 %v314, %v313
      %v346 = vpack.c.b16 %v316, %v315
      %v347 = vpack.c.b16 %v318, %v317
      %v348 = vpack.c.b16 %v320, %v319
      %v349 = vpack.c.b16 %v322, %v321
      %v350 = vpack.c.b16 %v324, %v323
      %v351 = vpack.c.b16 %v326, %v325
      %v352 = vpack.c.b16 %v328, %v327
      %v353 = vpack.c.b16 %v330, %v329
      %v354 = vpack.c.b16 %v332, %v331
      %v355 = vpack.c.b16 %v334, %v333
      %v356 = vpack.c.b16 %v336, %v335
      %v357 = vpack.c.b16 %v338, %v337
      %v358 = vpack.c.b16 %v340, %v339
      %v359 = vpack.c.b16 %v342, %v341
      %v360 = vpack.c.b16 %v344, %v343
      %v393 = vunpack.c.l.b16 %v258
      %v394 = vunpack.c.l.b16 %v259
      %v395 = vunpack.c.l.b16 %v260
      %v396 = vunpack.c.l.b16 %v261
      %v397 = vunpack.c.l.b16 %v262
      %v398 = vunpack.c.l.b16 %v263
      %v399 = vunpack.c.l.b16 %v264
      %v400 = vunpack.c.l.b16 %v265
      %v401 = vunpack.c.l.b16 %v266
      %v402 = vunpack.c.l.b16 %v267
      %v403 = vunpack.c.l.b16 %v268
      %v404 = vunpack.c.l.b16 %v269
      %v405 = vunpack.c.l.b16 %v270
      %v406 = vunpack.c.l.b16 %v271
      %v407 = vunpack.c.l.b16 %v272
      %v408 = vunpack.c.l.b16 %v273
      %v409 = vpack.c.b16 %v394, %v393
      %v410 = vpack.c.b16 %v396, %v395
      %v411 = vpack.c.b16 %v398, %v397
      %v412 = vpack.c.b16 %v400, %v399
      %v413 = vpack.c.b16 %v402, %v401
      %v414 = vpack.c.b16 %v404, %v403
      %v415 = vpack.c.b16 %v406, %v405
      %v416 = vpack.c.b16 %v408, %v407
      %425 = vmatprep.subr.bf16.mxu0 0
      %426 = vmatpush1.bf16.msra.mxu0 %v409
      %427 = vmatprep.subr.bf16.mxu0 0
      %428 = vmatpush1.bf16.msra.mxu0 %v410
      %429 = vmatprep.subr.bf16.mxu0 0
      %430 = vmatpush1.bf16.msra.mxu0 %v411
      %431 = vmatprep.subr.bf16.mxu0 0
      %432 = vmatpush1.bf16.msra.mxu0 %v412
      %433 = vmatprep.subr.bf16.mxu0 0
      %434 = vmatpush1.bf16.msra.mxu0 %v413
      %435 = vmatprep.subr.bf16.mxu0 0
      %436 = vmatpush1.bf16.msra.mxu0 %v414
      %437 = vmatprep.subr.bf16.mxu0 0
      %438 = vmatpush1.bf16.msra.mxu0 %v415
      %439 = vmatprep.subr.bf16.mxu0 0
      %440 = vmatpush1.bf16.msra.mxu0 %v416
      %441 = vmatprep.subr.bf16.mxu0 0
      %442 = vmatpush1.bf16.msra.mxu0 0
      %443 = vmatprep.subr.bf16.mxu0 0
      %444 = vmatpush1.bf16.msra.mxu0 0
      %445 = vmatprep.subr.bf16.mxu0 0
      %446 = vmatpush1.bf16.msra.mxu0 0
      %447 = vmatprep.subr.bf16.mxu0 0
      %448 = vmatpush1.bf16.msra.mxu0 0
      %449 = vmatprep.subr.bf16.mxu0 0
      %450 = vmatpush1.bf16.msra.mxu0 0
      %451 = vmatprep.subr.bf16.mxu0 0
      %452 = vmatpush1.bf16.msra.mxu0 0
      %453 = vmatprep.subr.bf16.mxu0 0
      %454 = vmatpush1.bf16.msra.mxu0 0
      %455 = vmatprep.subr.bf16.mxu0 0
      %456 = vmatpush1.bf16.msra.mxu0 0
      %457 = vmatprep.mubr.bf16.mxu0 0
      %458 = vmatmul.mubr.bf16.gmra.mrb[0].mxu0 %v345
      %v459 = vpop.f32.mrb[0].mxu0
      %v460 = vadd.f32 %v279, %v459
      %v461 = vpop.f32.mrb[0].mxu0
      %v462 = vpop.f32.mrb[0].mxu0
      %v463 = vadd.f32 %v279, %v462
      %v464 = vpop.f32.mrb[0].mxu0
      %465 = vmatprep.mubr.bf16.mxu0 0
      %466 = vmatmul.mubr.bf16.gmra.mrb[0].mxu0 %v346
      %v467 = vpop.f32.mrb[0].mxu0
      %v468 = vadd.f32 %v279, %v467
      %v469 = vpop.f32.mrb[0].mxu0
      %v470 = vpop.f32.mrb[0].mxu0
      %v471 = vadd.f32 %v279, %v470
      %v472 = vpop.f32.mrb[0].mxu0
      %473 = vmatprep.mubr.bf16.mxu0 0
      %474 = vmatmul.mubr.bf16.gmra.mrb[0].mxu0 %v347
      %v475 = vpop.f32.mrb[0].mxu0
      %v476 = vadd.f32 %v279, %v475
      %v477 = vpop.f32.mrb[0].mxu0
      %v478 = vpop.f32.mrb[0].mxu0
      %v479 = vadd.f32 %v279, %v478
      %v480 = vpop.f32.mrb[0].mxu0
      %481 = vmatprep.mubr.bf16.mxu0 0
      %482 = vmatmul.mubr.bf16.gmra.mrb[0].mxu0 %v348
      %v483 = vpop.f32.mrb[0].mxu0
      %v484 = vadd.f32 %v279, %v483
      %v485 = vpop.f32.mrb[0].mxu0
      %v486 = vpop.f32.mrb[0].mxu0
      %v487 = vadd.f32 %v279, %v486
      %v488 = vpop.f32.mrb[0].mxu0
      %489 = vmatprep.mubr.bf16.mxu0 0
      %490 = vmatmul.mubr.bf16.gmra.mrb[0].mxu0 %v349
      %v491 = vpop.f32.mrb[0].mxu0
      %v492 = vadd.f32 %v279, %v491
      %v493 = vpop.f32.mrb[0].mxu0
      %v494 = vpop.f32.mrb[0].mxu0
      %v495 = vadd.f32 %v279, %v494
      %v496 = vpop.f32.mrb[0].mxu0
      %497 = vmatprep.mubr.bf16.mxu0 0
      %498 = vmatmul.mubr.bf16.gmra.mrb[0].mxu0 %v350
      %v499 = vpop.f32.mrb[0].mxu0
      %v500 = vadd.f32 %v279, %v499
      %v501 = vpop.f32.mrb[0].mxu0
      %v502 = vpop.f32.mrb[0].mxu0
      %v503 = vadd.f32 %v279, %v502
      %v504 = vpop.f32.mrb[0].mxu0
      %505 = vmatprep.mubr.bf16.mxu0 0
      %506 = vmatmul.mubr.bf16.gmra.mrb[0].mxu0 %v351
      %v507 = vpop.f32.mrb[0].mxu0
      %v508 = vadd.f32 %v279, %v507
      %v509 = vpop.f32.mrb[0].mxu0
      %v510 = vpop.f32.mrb[0].mxu0
      %v511 = vadd.f32 %v279, %v510
      %v512 = vpop.f32.mrb[0].mxu0
      %513 = vmatprep.mubr.bf16.mxu0 0
      %514 = vmatmul.mubr.bf16.gmra.mrb[0].mxu0 %v352
      %v515 = vpop.f32.mrb[0].mxu0
      %v516 = vadd.f32 %v279, %v515
      %v517 = vpop.f32.mrb[0].mxu0
      %v518 = vpop.f32.mrb[0].mxu0
      %v519 = vadd.f32 %v279, %v518
      %v520 = vpop.f32.mrb[0].mxu0
      %521 = vmatprep.mubr.bf16.mxu0 0
      %522 = vmatmul.mubr.bf16.gmra.mrb[0].mxu0 %v353
      %v523 = vpop.f32.mrb[0].mxu0
      %v524 = vadd.f32 %v279, %v523
      %v525 = vpop.f32.mrb[0].mxu0
      %v526 = vpop.f32.mrb[0].mxu0
      %v527 = vadd.f32 %v279, %v526
      %v528 = vpop.f32.mrb[0].mxu0
      %529 = vmatprep.mubr.bf16.mxu0 0
      %530 = vmatmul.mubr.bf16.gmra.mrb[0].mxu0 %v354
      %v531 = vpop.f32.mrb[0].mxu0
      %v532 = vadd.f32 %v279, %v531
      %v533 = vpop.f32.mrb[0].mxu0
      %v534 = vpop.f32.mrb[0].mxu0
      %v535 = vadd.f32 %v279, %v534
      %v536 = vpop.f32.mrb[0].mxu0
      %537 = vmatprep.mubr.bf16.mxu0 0
      %538 = vmatmul.mubr.bf16.gmra.mrb[0].mxu0 %v355
      %v539 = vpop.f32.mrb[0].mxu0
      %v540 = vadd.f32 %v279, %v539
      %v541 = vpop.f32.mrb[0].mxu0
      %v542 = vpop.f32.mrb[0].mxu0
      %v543 = vadd.f32 %v279, %v542
      %v544 = vpop.f32.mrb[0].mxu0
      %545 = vmatprep.mubr.bf16.mxu0 0
      %546 = vmatmul.mubr.bf16.gmra.mrb[0].mxu0 %v356
      %v547 = vpop.f32.mrb[0].mxu0
      %v548 = vadd.f32 %v279, %v547
      %v549 = vpop.f32.mrb[0].mxu0
      %v550 = vpop.f32.mrb[0].mxu0
      %v551 = vadd.f32 %v279, %v550
      %v552 = vpop.f32.mrb[0].mxu0
      %553 = vmatprep.mubr.bf16.mxu0 0
      %554 = vmatmul.mubr.bf16.gmra.mrb[0].mxu0 %v357
      %v555 = vpop.f32.mrb[0].mxu0
      %v556 = vadd.f32 %v279, %v555
      %v557 = vpop.f32.mrb[0].mxu0
      %v558 = vpop.f32.mrb[0].mxu0
      %v559 = vadd.f32 %v279, %v558
      %v560 = vpop.f32.mrb[0].mxu0
      %561 = vmatprep.mubr.bf16.mxu0 0
      %562 = vmatmul.mubr.bf16.gmra.mrb[0].mxu0 %v358
      %v563 = vpop.f32.mrb[0].mxu0
      %v564 = vadd.f32 %v279, %v563
      %v565 = vpop.f32.mrb[0].mxu0
      %v566 = vpop.f32.mrb[0].mxu0
      %v567 = vadd.f32 %v279, %v566
      %v568 = vpop.f32.mrb[0].mxu0
      %569 = vmatprep.mubr.bf16.mxu0 0
      %570 = vmatmul.mubr.bf16.gmra.mrb[0].mxu0 %v359
      %v571 = vpop.f32.mrb[0].mxu0
      %v572 = vadd.f32 %v279, %v571
      %v573 = vpop.f32.mrb[0].mxu0
      %v574 = vpop.f32.mrb[0].mxu0
      %v575 = vadd.f32 %v279, %v574
      %v576 = vpop.f32.mrb[0].mxu0
      %577 = vmatprep.mubr.bf16.mxu0 0
      %578 = vmatmul.mubr.bf16.gmra.mrb[0].mxu0 %v360
      %v579 = vpop.f32.mrb[0].mxu0
      %v580 = vadd.f32 %v279, %v579
      %v581 = vpop.f32.mrb[0].mxu0
      %v582 = vpop.f32.mrb[0].mxu0
      %v583 = vadd.f32 %v279, %v582
      %v584 = vpop.f32.mrb[0].mxu0
      %585 = vdwg.mxu0
      %v586 = vsub.f32 0.0, %v460
      %v587 = vsub.f32 0.0, %v463
      %v588 = vsub.f32 0.0, %v468
      %v589 = vsub.f32 0.0, %v471
      %v590 = vsub.f32 0.0, %v476
      %v591 = vsub.f32 0.0, %v479
      %v592 = vsub.f32 0.0, %v484
      %v593 = vsub.f32 0.0, %v487
      %v594 = vsub.f32 0.0, %v492
      %v595 = vsub.f32 0.0, %v495
      %v596 = vsub.f32 0.0, %v500
      %v597 = vsub.f32 0.0, %v503
      %v598 = vsub.f32 0.0, %v508
      %v599 = vsub.f32 0.0, %v511
      %v600 = vsub.f32 0.0, %v516
      %v601 = vsub.f32 0.0, %v519
      %v602 = vsub.f32 0.0, %v524
      %v603 = vsub.f32 0.0, %v527
      %v604 = vsub.f32 0.0, %v532
      %v605 = vsub.f32 0.0, %v535
      %v606 = vsub.f32 0.0, %v540
      %v607 = vsub.f32 0.0, %v543
      %v608 = vsub.f32 0.0, %v548
      %v609 = vsub.f32 0.0, %v551
      %v610 = vsub.f32 0.0, %v556
      %v611 = vsub.f32 0.0, %v559
      %v612 = vsub.f32 0.0, %v564
      %v613 = vsub.f32 0.0, %v567
      %v614 = vsub.f32 0.0, %v572
      %v615 = vsub.f32 0.0, %v575
      %v616 = vsub.f32 0.0, %v580
      %v617 = vsub.f32 0.0, %v583
      %v618 = vmul.f32 %v586, 1.442695
      %v619 = vpow.pop %v618
      %v620 = vmul.f32 %v587, 1.442695
      %v621 = vpow.pop %v620
      %v622 = vmul.f32 %v588, 1.442695
      %v623 = vpow.pop %v622
      %v624 = vmul.f32 %v589, 1.442695
      %v625 = vpow.pop %v624
      %v626 = vmul.f32 %v590, 1.442695
      %v627 = vpow.pop %v626
      %v628 = vmul.f32 %v591, 1.442695
      %v629 = vpow.pop %v628
      %v630 = vmul.f32 %v592, 1.442695
      %v631 = vpow.pop %v630
      %v632 = vmul.f32 %v593, 1.442695
      %v633 = vpow.pop %v632
      %v634 = vmul.f32 %v594, 1.442695
      %v635 = vpow.pop %v634
      %v636 = vmul.f32 %v595, 1.442695
      %v637 = vpow.pop %v636
      %v638 = vmul.f32 %v596, 1.442695
      %v639 = vpow.pop %v638
      %v640 = vmul.f32 %v597, 1.442695
      %v641 = vpow.pop %v640
      %v642 = vmul.f32 %v598, 1.442695
      %v643 = vpow.pop %v642
      %v644 = vmul.f32 %v599, 1.442695
      %v645 = vpow.pop %v644
      %v646 = vmul.f32 %v600, 1.442695
      %v647 = vpow.pop %v646
      %v648 = vmul.f32 %v601, 1.442695
      %v649 = vpow.pop %v648
      %v650 = vmul.f32 %v602, 1.442695
      %v651 = vpow.pop %v650
      %v652 = vmul.f32 %v603, 1.442695
      %v653 = vpow.pop %v652
      %v654 = vmul.f32 %v604, 1.442695
      %v655 = vpow.pop %v654
      %v656 = vmul.f32 %v605, 1.442695
      %v657 = vpow.pop %v656
      %v658 = vmul.f32 %v606, 1.442695
      %v659 = vpow.pop %v658
      %v660 = vmul.f32 %v607, 1.442695
      %v661 = vpow.pop %v660
      %v662 = vmul.f32 %v608, 1.442695
      %v663 = vpow.pop %v662
      %v664 = vmul.f32 %v609, 1.442695
      %v665 = vpow.pop %v664
      %v666 = vmul.f32 %v610, 1.442695
      %v667 = vpow.pop %v666
      %v668 = vmul.f32 %v611, 1.442695
      %v669 = vpow.pop %v668
      %v670 = vmul.f32 %v612, 1.442695
      %v671 = vpow.pop %v670
      %v672 = vmul.f32 %v613, 1.442695
      %v673 = vpow.pop %v672
      %v674 = vmul.f32 %v614, 1.442695
      %v675 = vpow.pop %v674
      %v676 = vmul.f32 %v615, 1.442695
      %v677 = vpow.pop %v676
      %v678 = vmul.f32 %v616, 1.442695
      %v679 = vpow.pop %v678
      %v680 = vmul.f32 %v617, 1.442695
      %v681 = vpow.pop %v680
      %v682 = vadd.f32 %v619, 1.0
      %v683 = vadd.f32 %v621, 1.0
      %v684 = vadd.f32 %v623, 1.0
      %v685 = vadd.f32 %v625, 1.0
      %v686 = vadd.f32 %v627, 1.0
      %v687 = vadd.f32 %v629, 1.0
      %v688 = vadd.f32 %v631, 1.0
      %v689 = vadd.f32 %v633, 1.0
      %v690 = vadd.f32 %v635, 1.0
      %v691 = vadd.f32 %v637, 1.0
      %v692 = vadd.f32 %v639, 1.0
      %v693 = vadd.f32 %v641, 1.0
      %v694 = vadd.f32 %v643, 1.0
      %v695 = vadd.f32 %v645, 1.0
      %v696 = vadd.f32 %v647, 1.0
      %v697 = vadd.f32 %v649, 1.0
      %v698 = vadd.f32 %v651, 1.0
      %v699 = vadd.f32 %v653, 1.0
      %v700 = vadd.f32 %v655, 1.0
      %v701 = vadd.f32 %v657, 1.0
      %v702 = vadd.f32 %v659, 1.0
      %v703 = vadd.f32 %v661, 1.0
      %v704 = vadd.f32 %v663, 1.0
      %v705 = vadd.f32 %v665, 1.0
      %v706 = vadd.f32 %v667, 1.0
      %v707 = vadd.f32 %v669, 1.0
      %v708 = vadd.f32 %v671, 1.0
      %v709 = vadd.f32 %v673, 1.0
      %v710 = vadd.f32 %v675, 1.0
      %v711 = vadd.f32 %v677, 1.0
      %v712 = vadd.f32 %v679, 1.0
      %v713 = vadd.f32 %v681, 1.0
      %v714 = vrcp.pop %v682
      %v715 = vmul.f32 1.0, %v714
      %v716 = vrcp.pop %v683
      %v717 = vmul.f32 1.0, %v716
      %v718 = vrcp.pop %v684
      %v719 = vmul.f32 1.0, %v718
      %v720 = vrcp.pop %v685
      %v721 = vmul.f32 1.0, %v720
      %v722 = vrcp.pop %v686
      %v723 = vmul.f32 1.0, %v722
      %v724 = vrcp.pop %v687
      %v725 = vmul.f32 1.0, %v724
      %v726 = vrcp.pop %v688
      %v727 = vmul.f32 1.0, %v726
      %v728 = vrcp.pop %v689
      %v729 = vmul.f32 1.0, %v728
      %v730 = vrcp.pop %v690
      %v731 = vmul.f32 1.0, %v730
      %v732 = vrcp.pop %v691
      %v733 = vmul.f32 1.0, %v732
      %v734 = vrcp.pop %v692
      %v735 = vmul.f32 1.0, %v734
      %v736 = vrcp.pop %v693
      %v737 = vmul.f32 1.0, %v736
      %v738 = vrcp.pop %v694
      %v739 = vmul.f32 1.0, %v738
      %v740 = vrcp.pop %v695
      %v741 = vmul.f32 1.0, %v740
      %v742 = vrcp.pop %v696
      %v743 = vmul.f32 1.0, %v742
      %v744 = vrcp.pop %v697
      %v745 = vmul.f32 1.0, %v744
      %v746 = vrcp.pop %v698
      %v747 = vmul.f32 1.0, %v746
      %v748 = vrcp.pop %v699
      %v749 = vmul.f32 1.0, %v748
      %v750 = vrcp.pop %v700
      %v751 = vmul.f32 1.0, %v750
      %v752 = vrcp.pop %v701
      %v753 = vmul.f32 1.0, %v752
      %v754 = vrcp.pop %v702
      %v755 = vmul.f32 1.0, %v754
      %v756 = vrcp.pop %v703
      %v757 = vmul.f32 1.0, %v756
      %v758 = vrcp.pop %v704
      %v759 = vmul.f32 1.0, %v758
      %v760 = vrcp.pop %v705
      %v761 = vmul.f32 1.0, %v760
      %v762 = vrcp.pop %v706
      %v763 = vmul.f32 1.0, %v762
      %v764 = vrcp.pop %v707
      %v765 = vmul.f32 1.0, %v764
      %v766 = vrcp.pop %v708
      %v767 = vmul.f32 1.0, %v766
      %v768 = vrcp.pop %v709
      %v769 = vmul.f32 1.0, %v768
      %v770 = vrcp.pop %v710
      %v771 = vmul.f32 1.0, %v770
      %v772 = vrcp.pop %v711
      %v773 = vmul.f32 1.0, %v772
      %v774 = vrcp.pop %v712
      %v775 = vmul.f32 1.0, %v774
      %v776 = vrcp.pop %v713
      %v777 = vmul.f32 1.0, %v776
      %778 = vst [vmem:[%s223] sm:$0xff] %v715
      %779 = vst [vmem:[%s223 + $0x8] sm:$0xff] %v717
      %780 = vst [vmem:[%s223 + $0x10] sm:$0xff] %v719
      %781 = vst [vmem:[%s223 + $0x18] sm:$0xff] %v721
      %782 = vst [vmem:[%s223 + $0x20] sm:$0xff] %v723
      %783 = vst [vmem:[%s223 + $0x28] sm:$0xff] %v725
      %784 = vst [vmem:[%s223 + $0x30] sm:$0xff] %v727
      %785 = vst [vmem:[%s223 + $0x38] sm:$0xff] %v729
      %786 = vst [vmem:[%s223 + $0x40] sm:$0xff] %v731
      %787 = vst [vmem:[%s223 + $0x48] sm:$0xff] %v733
      %788 = vst [vmem:[%s223 + $0x50] sm:$0xff] %v735
      %789 = vst [vmem:[%s223 + $0x58] sm:$0xff] %v737
      %790 = vst [vmem:[%s223 + $0x60] sm:$0xff] %v739
      %791 = vst [vmem:[%s223 + $0x68] sm:$0xff] %v741
      %792 = vst [vmem:[%s223 + $0x70] sm:$0xff] %v743
      %793 = vst [vmem:[%s223 + $0x78] sm:$0xff] %v745
      %794 = vst [vmem:[%s223 + $0x80] sm:$0xff] %v747
      %795 = vst [vmem:[%s223 + $0x88] sm:$0xff] %v749
      %796 = vst [vmem:[%s223 + $0x90] sm:$0xff] %v751
      %797 = vst [vmem:[%s223 + $0x98] sm:$0xff] %v753
      %798 = vst [vmem:[%s223 + $0xa0] sm:$0xff] %v755
      %799 = vst [vmem:[%s223 + $0xa8] sm:$0xff] %v757
      %800 = vst [vmem:[%s223 + $0xb0] sm:$0xff] %v759
      %801 = vst [vmem:[%s223 + $0xb8] sm:$0xff] %v761
      %802 = vst [vmem:[%s223 + $0xc0] sm:$0xff] %v763
      %803 = vst [vmem:[%s223 + $0xc8] sm:$0xff] %v765
      %804 = vst [vmem:[%s223 + $0xd0] sm:$0xff] %v767
      %805 = vst [vmem:[%s223 + $0xd8] sm:$0xff] %v769
      %806 = vst [vmem:[%s223 + $0xe0] sm:$0xff] %v771
      %807 = vst [vmem:[%s223 + $0xe8] sm:$0xff] %v773
      %808 = vst [vmem:[%s223 + $0xf0] sm:$0xff] %v775
      %809 = vst [vmem:[%s223 + $0xf8] sm:$0xff] %v777
      %s810 = smul.u32 32, %s18
      %p811 = scmp.lt.s32.totalorder %s810, 255
      %s812 = scalar_select %p811, %s810, 255
      %p813 = scmp.lt.s32.totalorder %s19, 0
      %s814 = scalar_select %p813, %s19, 0
      %s815 = sadd.s32 %s814, %s812
      %s816 = smul.addr %s815, 8
      %s817 = scalar_lea.vmem %s3, %s816
      // Predicated region
      $region33: #{forward.9} parent=31 // pred_check
        %p818 = pneg %p124
      $region34: #{forward.9} parent=31 // pred_check_branch
        %820 = sbr.rel (%p818) target = $region36
      $region35: #{forward.9} parent=31 // pred_region
        %s821 = smul.u32 32, %s18
      $region36: #{forward.9} parent=31 // pred_fallthru
        _
    $region32: #{forward.9} parent=5 // pred_fallthru
      _
    %p822 = scmp.le.s32.totalorder 2, %s9
    // Predicated region
    $region37: #{forward.9} parent=5 // pred_check
      %p823 = pneg %p822
    $region38: #{forward.9} parent=5 // pred_check_branch
      %825 = sbr.rel (%p823) target = $region40
    $region39: #{forward.9} parent=5 // pred_region
      %s826 = ssub.s32 %s9, 2
      // Predicated region
      $region41: #{forward.9} parent=39 // pred_check
        %p827 = pneg %p130
      $region42: #{forward.9} parent=39 // pred_check_branch
        %829 = sbr.rel (%p827) target = $region44
      $region43: #{forward.9} parent=39 // pred_region
        %s830 = smul.u32 32, %s20
        %p831 = scmp.lt.s32.totalorder %s830, 255
        %s832 = scalar_select %p831, %s830, 255
        %p833 = scmp.lt.s32.totalorder %s21, 0
        %s834 = scalar_select %p833, %s21, 0
        %s835 = sadd.s32 %s834, %s832
        %s836 = smul.addr %s835, 8
        %s837 = scalar_lea.vmem %s3, %s836
      $region44: #{forward.9} parent=39 // pred_fallthru
        _
    $region40: #{forward.9} parent=5 // pred_fallthru
      _
  $region6: #{forward.9} parent=0 // loop_footer
    %s13 = sadd.s32 1, %s9
  $region7: #{forward.9} parent=0 // loop_footer_branch
    %8 = sbr.rel target = $region3
  $region8: #{forward.9} parent=0 // loop_exit
    _

</llo_original>
